<compile_context>
chip_gen: v7x
topology: tpu7x:2x2x1
jax: 0.10.0
libtpu: 0.0.40
codegen_flags: <defaults>
</compile_context>

<pallas_src>
import functools

import jax
import jax.numpy as jnp
from jax.experimental import pallas as pl
from jax.experimental.pallas import tpu as pltpu


# ----------------------------------------------------------------------------
# Fused forward kernel
# ----------------------------------------------------------------------------
def _basicnet_kernel(x_ref,
                     w1_ref, b1_ref,
                     w2_ref, b2_ref,
                     w3_ref, b3_ref,
                     w4_ref, b4_ref,
                     wf1_ref, bf1_ref,
                     wf2_ref, bf2_ref,
                     o_ref,
                     g1_ref, p2_ref, p3_ref,
                     *, tb):
    f32 = jnp.float32
    bf16 = jnp.bfloat16

    def tap_conv(pad_ref, w_ref, b_ref, kh, kw, oh, ow, cin, relu):
        """Stride-1 conv as per-tap GEMM accumulation (bf16 MXU, f32 acc).

        pad_ref: [tb, oh+kh-1, ow+kw-1, cin] zero-padded activation (VMEM).
        w_ref  : [kh*kw, cin, cout] bf16 (BN scale folded in).
        b_ref  : [1, cout] f32 (conv bias + BN shift folded).
        returns: [tb*oh*ow, cout] f32.
        """
        acc = None
        for ky in range(kh):
            for kx in range(kw):
                patch = pad_ref[:, ky:ky + oh, kx:kx + ow, :]      # window load
                lhs = patch.reshape(tb * oh * ow, cin).astype(bf16)
                part = jnp.dot(lhs, w_ref[ky * kw + kx],
                               preferred_element_type=f32)
                acc = part if acc is None else acc + part
        y = acc + b_ref[...]
        if relu:
            y = jnp.maximum(y, 0.0)
        return y

    # ---- conv1: 5x5, stride 3, dilation 3, pad 1 -> equivalent to a 5x5
    # stride-1 conv on the 12x12 down-sampled grid (wrapper pre-selects the
    # 10x10 interior samples; border stays zero = original padding).
    g1_ref[...] = jnp.zeros_like(g1_ref)
    g1_ref[:, 1:11, 1:11, :] = x_ref[...]
    a1 = tap_conv(g1_ref, w1_ref, b1_ref, kh=5, kw=5, oh=8, ow=8, cin=3,
                  relu=True)                                     # [tb*64, 12]

    # ---- conv2: 3x3, stride 1, pad 1 ------------------------------------
    p2_ref[...] = jnp.zeros_like(p2_ref)
    p2_ref[:, 1:9, 1:9, :] = a1.reshape(tb, 8, 8, 12)
    a2 = tap_conv(p2_ref, w2_ref, b2_ref, kh=3, kw=3, oh=8, ow=8, cin=12,
                  relu=True)                                     # [tb*64, 32]

    # ---- conv3: 3x3, stride 1, pad 1 ------------------------------------
    p3_ref[...] = jnp.zeros_like(p3_ref)
    p3_ref[:, 1:9, 1:9, :] = a2.reshape(tb, 8, 8, 32)
    a3 = tap_conv(p3_ref, w3_ref, b3_ref, kh=3, kw=3, oh=8, ow=8, cin=32,
                  relu=True).reshape(tb, 8, 8, 32)

    # ---- conv4: 3x3, stride 3, dilation 3, pad 1 + BN (no ReLU) ---------
    # With stride == dilation == 3 on an 8x8 input (pad 1), only rows/cols
    # {2, 5} of a3 are ever sampled and every 2x2 output position sees all
    # four samples:  out4[oy,ox] = sum_{a,b} a3[3a+2, 3b+2] @ W4[a+1-oy, b+1-ox].
    d = [[a3[:, 2, 2, :].astype(bf16), a3[:, 2, 5, :].astype(bf16)],
         [a3[:, 5, 2, :].astype(bf16), a3[:, 5, 5, :].astype(bf16)]]

    # ---- classifier (fc1 fused with conv4, then ReLU, then fc2) ---------
    # torch flattens conv4's output in (C, H, W) order; instead of
    # transposing the activation we use per-(h,w) column blocks of the fc1
    # weight (constant permutation done at prep time).
    fc1_acc = None
    for oy in range(2):
        for ox in range(2):
            o4 = None
            for a in range(2):
                for b in range(2):
                    ky = a + 1 - oy
                    kx = b + 1 - ox
                    part = jnp.dot(d[a][b], w4_ref[ky * 3 + kx],
                                   preferred_element_type=f32)
                    o4 = part if o4 is None else o4 + part
            o4 = o4 + b4_ref[...]                       # [tb, 32], BN, no ReLU
            part = jnp.dot(o4.astype(bf16), wf1_ref[oy * 2 + ox],
                           preferred_element_type=f32)
            fc1_acc = part if fc1_acc is None else fc1_acc + part
    h = jnp.maximum(fc1_acc + bf1_ref[...], 0.0)                  # [tb, 50]
    out = jnp.dot(h.astype(bf16), wf2_ref[...],
                  preferred_element_type=f32) + bf2_ref[...]      # [tb, 10]
    o_ref[...] = out.astype(o_ref.dtype)


def _resident_spec(arr):
    """Full-array block kept resident in VMEM across the whole grid."""
    zeros = (0,) * arr.ndim
    return pl.BlockSpec(arr.shape, lambda i, z=zeros: z)


def _fused_forward(x_core, consts, *, tb):
    n = x_core.shape[0]
    assert n % tb == 0
    grid = (n // tb,)

    weight_args = (consts["w1"], consts["b1"], consts["w2"], consts["b2"],
                   consts["w3"], consts["b3"], consts["w4"], consts["b4"],
                   consts["wf1"], consts["bf1"], consts["wf2"], consts["bf2"])

    in_specs = [pl.BlockSpec((tb, 10, 10, 3), lambda i: (i, 0, 0, 0))]
    in_specs += [_resident_spec(a) for a in weight_args]

    return pl.pallas_call(
        functools.partial(_basicnet_kernel, tb=tb),
        out_shape=jax.ShapeDtypeStruct((n, 10), jnp.float32),
        grid=grid,
        in_specs=in_specs,
        out_specs=pl.BlockSpec((tb, 10), lambda i: (i, 0)),
        scratch_shapes=[
            pltpu.VMEM((tb, 12, 12, 3), jnp.float32),    # conv1 padded grid
            pltpu.VMEM((tb, 10, 10, 12), jnp.float32),   # conv2 padded input
            pltpu.VMEM((tb, 10, 10, 32), jnp.float32),   # conv3 padded input
        ],
        compiler_params=pltpu.CompilerParams(
            dimension_semantics=("parallel",),
            vmem_limit_bytes=32 * 1024 * 1024,
        ),
    )(x_core, *weight_args)


# ----------------------------------------------------------------------------
# Constant folding / weight prep (runs ONCE, never per forward pass)
# ----------------------------------------------------------------------------
def _fold_conv(p):
    w, b = p["w"], p["b"]
    cout, cin, kh, kw = w.shape
    eps = 1e-5
    s = p["gamma"] / jnp.sqrt(p["var"] + eps)
    # [KH*KW, Cin, Cout] per-tap matrices, BN scale folded into the weights.
    w_taps = jnp.transpose(w, (2, 3, 1, 0)).reshape(kh * kw, cin, cout)
    w_taps = (w_taps * s[None, None, :]).astype(jnp.bfloat16)
    bias = ((b - p["mean"]) * s + p["beta"]).reshape(1, cout).astype(jnp.float32)
    return w_taps, bias


def prepare_constants(params):
    c = {}
    c["w1"], c["b1"] = _fold_conv(params["conv1"])
    c["w2"], c["b2"] = _fold_conv(params["conv2"])
    c["w3"], c["b3"] = _fold_conv(params["conv3"])
    c["w4"], c["b4"] = _fold_conv(params["conv4"])

    # fc1 consumes the torch-order (C, H, W) flatten of the [N, 2, 2, 32]
    # conv4 output; split its weight into per-(h, w) [32, 50] blocks so the
    # kernel never has to transpose/reshape the activation.
    w_fc1 = params["fc1"]["w"].reshape(50, 32, 2, 2)
    c["wf1"] = jnp.stack(
        [w_fc1[:, :, h, w].T for h in range(2) for w in range(2)], axis=0
    ).astype(jnp.bfloat16)                                       # [4, 32, 50]
    c["bf1"] = params["fc1"]["b"].reshape(1, 50).astype(jnp.float32)

    c["wf2"] = params["fc2"]["w"].T.astype(jnp.bfloat16)         # [50, 10]
    c["bf2"] = params["fc2"]["b"].reshape(1, 10).astype(jnp.float32)
    return c


# ----------------------------------------------------------------------------
# Parameter initialization (deterministic, PyTorch-default-style)
# ----------------------------------------------------------------------------
def _uniform(key, shape, fan_in):
    k = 1.0 / jnp.sqrt(jnp.float32(fan_in))
    return jax.random.uniform(key, shape, jnp.float32, -k, k)


def init_params(key):
    ks = jax.random.split(key, 12)

    def conv(kw_key, kb_key, cout, cin, k):
        fan_in = cin * k * k
        return {
            "w": _uniform(kw_key, (cout, cin, k, k), fan_in),
            "b": _uniform(kb_key, (cout,), fan_in),
            "gamma": jnp.ones((cout,), jnp.float32),
            "beta": jnp.zeros((cout,), jnp.float32),
            "mean": jnp.zeros((cout,), jnp.float32),
            "var": jnp.ones((cout,), jnp.float32),
        }

    p = {}
    p["conv1"] = conv(ks[0], ks[1], 12, 3, 5)
    p["conv2"] = conv(ks[2], ks[3], 32, 12, 3)
    p["conv3"] = conv(ks[4], ks[5], 32, 32, 3)
    p["conv4"] = conv(ks[6], ks[7], 32, 32, 3)
    p["fc1"] = {"w": _uniform(ks[8], (50, 128), 128), "b": _uniform(ks[9], (50,), 128)}
    p["fc2"] = {"w": _uniform(ks[10], (10, 50), 50), "b": _uniform(ks[11], (10,), 50)}
    return p


# ----------------------------------------------------------------------------
# Forward pass (matches BasicNet.forward, NCHW input)
# ----------------------------------------------------------------------------
def basicnet_forward(x_nchw, consts):
    n = x_nchw.shape[0]
    # conv1 has stride == dilation == 3 with padding 1 on a 32x32 input, so it
    # only ever samples padded rows/cols {0, 3, ..., 33}; keep just the
    # interior samples (original rows/cols 2, 5, ..., 29) -> [N, 10, 10, 3].
    x_core = x_nchw[:, :, 2:30:3, 2:30:3]
    x_core = jnp.transpose(x_core, (0, 2, 3, 1)).astype(jnp.float32)

    tb = n if n <= 8 else 8
    pad = (-n) % tb
    if pad:
        x_core = jnp.concatenate(
            [x_core, jnp.zeros((pad,) + x_core.shape[1:], x_core.dtype)], axis=0)
    out = _fused_forward(x_core, consts, tb=tb)
    return out[:n]


if __name__ == "__main__":
    key = jax.random.PRNGKey(0)
    k_params, k_x = jax.random.split(key)
    params = init_params(k_params)
    consts = prepare_constants(params)   # one-time fold/transpose of weights

    # Input shape is forced by the architecture: Linear(128) <- 32*2*2 <- 32x32.
    x = jax.random.normal(k_x, (2, 3, 32, 32), jnp.float32)

    fwd = jax.jit(basicnet_forward)
    out = jax.block_until_ready(fwd(x, consts))
    assert out.shape == (2, 10), out.shape
    print("KERNEL_OK")
</pallas_src>

<mosaic_0001>
module attributes {stable_mosaic.version = 11 : i64} {
  func.func @_basicnet_kernel(%arg0: i32, %arg1: memref<2x10x10x3xf32, #tpu.memory_space<vmem>>, %arg2: memref<25x3x12xbf16, #tpu.memory_space<vmem>>, %arg3: memref<1x12xf32, #tpu.memory_space<vmem>>, %arg4: memref<9x12x32xbf16, #tpu.memory_space<vmem>>, %arg5: memref<1x32xf32, #tpu.memory_space<vmem>>, %arg6: memref<9x32x32xbf16, #tpu.memory_space<vmem>>, %arg7: memref<1x32xf32, #tpu.memory_space<vmem>>, %arg8: memref<9x32x32xbf16, #tpu.memory_space<vmem>>, %arg9: memref<1x32xf32, #tpu.memory_space<vmem>>, %arg10: memref<4x32x50xbf16, #tpu.memory_space<vmem>>, %arg11: memref<1x50xf32, #tpu.memory_space<vmem>>, %arg12: memref<50x10xbf16, #tpu.memory_space<vmem>>, %arg13: memref<1x10xf32, #tpu.memory_space<vmem>>, %arg14: memref<2x10xf32, #tpu.memory_space<vmem>>, %arg15: memref<2x12x12x3xf32, #tpu.memory_space<vmem>>, %arg16: memref<2x10x10x12xf32, #tpu.memory_space<vmem>>, %arg17: memref<2x10x10x32xf32, #tpu.memory_space<vmem>>) attributes {dimension_semantics = [#tpu.dimension_semantics<parallel>], iteration_bounds = array<i64: 1>, scalar_prefetch = 0 : i64, scratch_operands = 3 : i64, tpu.core_type = #tpu.core_type<tc>, window_params = [{transform_indices = @transform_0, window_bounds = array<i64: 2, 10, 10, 3>}, {pipeline_mode = #tpu.pipeline_mode<synchronous>, transform_indices = @transform_1, window_bounds = array<i64: 25, 3, 12>}, {pipeline_mode = #tpu.pipeline_mode<synchronous>, transform_indices = @transform_2, window_bounds = array<i64: 1, 12>}, {pipeline_mode = #tpu.pipeline_mode<synchronous>, transform_indices = @transform_3, window_bounds = array<i64: 9, 12, 32>}, {pipeline_mode = #tpu.pipeline_mode<synchronous>, transform_indices = @transform_4, window_bounds = array<i64: 1, 32>}, {pipeline_mode = #tpu.pipeline_mode<synchronous>, transform_indices = @transform_5, window_bounds = array<i64: 9, 32, 32>}, {pipeline_mode = #tpu.pipeline_mode<synchronous>, transform_indices = @transform_6, window_bounds = array<i64: 1, 32>}, {pipeline_mode = #tpu.pipeline_mode<synchronous>, transform_indices = @transform_7, window_bounds = array<i64: 9, 32, 32>}, {pipeline_mode = #tpu.pipeline_mode<synchronous>, transform_indices = @transform_8, window_bounds = array<i64: 1, 32>}, {pipeline_mode = #tpu.pipeline_mode<synchronous>, transform_indices = @transform_9, window_bounds = array<i64: 4, 32, 50>}, {pipeline_mode = #tpu.pipeline_mode<synchronous>, transform_indices = @transform_10, window_bounds = array<i64: 1, 50>}, {pipeline_mode = #tpu.pipeline_mode<synchronous>, transform_indices = @transform_11, window_bounds = array<i64: 50, 10>}, {pipeline_mode = #tpu.pipeline_mode<synchronous>, transform_indices = @transform_12, window_bounds = array<i64: 1, 10>}, {transform_indices = @transform_13, window_bounds = array<i64: 2, 10>}]} {
    %cst = arith.constant 0.000000e+00 : f32
    %0 = vector.broadcast %cst : f32 to vector<2x12x12x3xf32>
    %c0 = arith.constant 0 : index
    %c0_0 = arith.constant 0 : index
    %c0_1 = arith.constant 0 : index
    %c0_2 = arith.constant 0 : index
    %1 = vector.load %arg15[%c0, %c0_0, %c0_1, %c0_2] : memref<2x12x12x3xf32, #tpu.memory_space<vmem>>, vector<2x12x12x3xf32>
    tpu.vector_store %arg15[%c0, %c0_0, %c0_1, %c0_2], %0 {strides = array<i32>} : memref<2x12x12x3xf32, #tpu.memory_space<vmem>>, vector<2x12x12x3xf32>,
    %c0_3 = arith.constant 0 : index
    %c0_4 = arith.constant 0 : index
    %c0_5 = arith.constant 0 : index
    %c0_6 = arith.constant 0 : index
    %2 = vector.load %arg1[%c0_3, %c0_4, %c0_5, %c0_6] : memref<2x10x10x3xf32, #tpu.memory_space<vmem>>, vector<2x10x10x3xf32>
    %c0_7 = arith.constant 0 : index
    %c1 = arith.constant 1 : index
    %c1_8 = arith.constant 1 : index
    %c0_9 = arith.constant 0 : index
    %3 = vector.load %arg15[%c0_7, %c1, %c1_8, %c0_9] : memref<2x12x12x3xf32, #tpu.memory_space<vmem>>, vector<2x10x10x3xf32>
    tpu.vector_store %arg15[%c0_7, %c1, %c1_8, %c0_9], %2 {strides = array<i32>} : memref<2x12x12x3xf32, #tpu.memory_space<vmem>>, vector<2x10x10x3xf32>,
    %c0_10 = arith.constant 0 : index
    %c0_11 = arith.constant 0 : index
    %c0_12 = arith.constant 0 : index
    %c0_13 = arith.constant 0 : index
    %4 = vector.load %arg15[%c0_10, %c0_11, %c0_12, %c0_13] : memref<2x12x12x3xf32, #tpu.memory_space<vmem>>, vector<2x8x8x3xf32>
    %5 = vector.shape_cast %4 : vector<2x8x8x3xf32> to vector<128x3xf32>
    %6 = arith.truncf %5 : vector<128x3xf32> to vector<128x3xbf16>
    %c0_14 = arith.constant 0 : index
    %c0_15 = arith.constant 0 : index
    %c0_16 = arith.constant 0 : index
    %7 = vector.load %arg2[%c0_14, %c0_15, %c0_16] : memref<25x3x12xbf16, #tpu.memory_space<vmem>>, vector<1x3x12xbf16>
    %8 = vector.shape_cast %7 : vector<1x3x12xbf16> to vector<3x12xbf16>
    %cst_17 = arith.constant dense<0.000000e+00> : vector<128x12xf32>
    %9 = tpu.matmul %6, %8, %cst_17 {dimension_numbers = #tpu.dot_dimension_numbers<[1], [0], [0], [1], [0, 0, 1, 1], [], []>} : vector<128x3xbf16>, vector<3x12xbf16>, vector<128x12xf32> -> vector<128x12xf32>
    %c0_18 = arith.constant 0 : index
    %c0_19 = arith.constant 0 : index
    %c1_20 = arith.constant 1 : index
    %c0_21 = arith.constant 0 : index
    %10 = vector.load %arg15[%c0_18, %c0_19, %c1_20, %c0_21] : memref<2x12x12x3xf32, #tpu.memory_space<vmem>>, vector<2x8x8x3xf32>
    %11 = vector.shape_cast %10 : vector<2x8x8x3xf32> to vector<128x3xf32>
    %12 = arith.truncf %11 : vector<128x3xf32> to vector<128x3xbf16>
    %c1_22 = arith.constant 1 : index
    %c0_23 = arith.constant 0 : index
    %c0_24 = arith.constant 0 : index
    %13 = vector.load %arg2[%c1_22, %c0_23, %c0_24] : memref<25x3x12xbf16, #tpu.memory_space<vmem>>, vector<1x3x12xbf16>
    %14 = vector.shape_cast %13 : vector<1x3x12xbf16> to vector<3x12xbf16>
    %cst_25 = arith.constant dense<0.000000e+00> : vector<128x12xf32>
    %15 = tpu.matmul %12, %14, %cst_25 {dimension_numbers = #tpu.dot_dimension_numbers<[1], [0], [0], [1], [0, 0, 1, 1], [], []>} : vector<128x3xbf16>, vector<3x12xbf16>, vector<128x12xf32> -> vector<128x12xf32>
    %16 = arith.addf %9, %15 : vector<128x12xf32>
    %c0_26 = arith.constant 0 : index
    %c0_27 = arith.constant 0 : index
    %c2 = arith.constant 2 : index
    %c0_28 = arith.constant 0 : index
    %17 = vector.load %arg15[%c0_26, %c0_27, %c2, %c0_28] : memref<2x12x12x3xf32, #tpu.memory_space<vmem>>, vector<2x8x8x3xf32>
    %18 = vector.shape_cast %17 : vector<2x8x8x3xf32> to vector<128x3xf32>
    %19 = arith.truncf %18 : vector<128x3xf32> to vector<128x3xbf16>
    %c2_29 = arith.constant 2 : index
    %c0_30 = arith.constant 0 : index
    %c0_31 = arith.constant 0 : index
    %20 = vector.load %arg2[%c2_29, %c0_30, %c0_31] : memref<25x3x12xbf16, #tpu.memory_space<vmem>>, vector<1x3x12xbf16>
    %21 = vector.shape_cast %20 : vector<1x3x12xbf16> to vector<3x12xbf16>
    %cst_32 = arith.constant dense<0.000000e+00> : vector<128x12xf32>
    %22 = tpu.matmul %19, %21, %cst_32 {dimension_numbers = #tpu.dot_dimension_numbers<[1], [0], [0], [1], [0, 0, 1, 1], [], []>} : vector<128x3xbf16>, vector<3x12xbf16>, vector<128x12xf32> -> vector<128x12xf32>
    %23 = arith.addf %16, %22 : vector<128x12xf32>
    %c0_33 = arith.constant 0 : index
    %c0_34 = arith.constant 0 : index
    %c3 = arith.constant 3 : index
    %c0_35 = arith.constant 0 : index
    %24 = vector.load %arg15[%c0_33, %c0_34, %c3, %c0_35] : memref<2x12x12x3xf32, #tpu.memory_space<vmem>>, vector<2x8x8x3xf32>
    %25 = vector.shape_cast %24 : vector<2x8x8x3xf32> to vector<128x3xf32>
    %26 = arith.truncf %25 : vector<128x3xf32> to vector<128x3xbf16>
    %c3_36 = arith.constant 3 : index
    %c0_37 = arith.constant 0 : index
    %c0_38 = arith.constant 0 : index
    %27 = vector.load %arg2[%c3_36, %c0_37, %c0_38] : memref<25x3x12xbf16, #tpu.memory_space<vmem>>, vector<1x3x12xbf16>
    %28 = vector.shape_cast %27 : vector<1x3x12xbf16> to vector<3x12xbf16>
    %cst_39 = arith.constant dense<0.000000e+00> : vector<128x12xf32>
    %29 = tpu.matmul %26, %28, %cst_39 {dimension_numbers = #tpu.dot_dimension_numbers<[1], [0], [0], [1], [0, 0, 1, 1], [], []>} : vector<128x3xbf16>, vector<3x12xbf16>, vector<128x12xf32> -> vector<128x12xf32>
    %30 = arith.addf %23, %29 : vector<128x12xf32>
    %c0_40 = arith.constant 0 : index
    %c0_41 = arith.constant 0 : index
    %c4 = arith.constant 4 : index
    %c0_42 = arith.constant 0 : index
    %31 = vector.load %arg15[%c0_40, %c0_41, %c4, %c0_42] : memref<2x12x12x3xf32, #tpu.memory_space<vmem>>, vector<2x8x8x3xf32>
    %32 = vector.shape_cast %31 : vector<2x8x8x3xf32> to vector<128x3xf32>
    %33 = arith.truncf %32 : vector<128x3xf32> to vector<128x3xbf16>
    %c4_43 = arith.constant 4 : index
    %c0_44 = arith.constant 0 : index
    %c0_45 = arith.constant 0 : index
    %34 = vector.load %arg2[%c4_43, %c0_44, %c0_45] : memref<25x3x12xbf16, #tpu.memory_space<vmem>>, vector<1x3x12xbf16>
    %35 = vector.shape_cast %34 : vector<1x3x12xbf16> to vector<3x12xbf16>
    %cst_46 = arith.constant dense<0.000000e+00> : vector<128x12xf32>
    %36 = tpu.matmul %33, %35, %cst_46 {dimension_numbers = #tpu.dot_dimension_numbers<[1], [0], [0], [1], [0, 0, 1, 1], [], []>} : vector<128x3xbf16>, vector<3x12xbf16>, vector<128x12xf32> -> vector<128x12xf32>
    %37 = arith.addf %30, %36 : vector<128x12xf32>
    %c0_47 = arith.constant 0 : index
    %c1_48 = arith.constant 1 : index
    %c0_49 = arith.constant 0 : index
    %c0_50 = arith.constant 0 : index
    %38 = vector.load %arg15[%c0_47, %c1_48, %c0_49, %c0_50] : memref<2x12x12x3xf32, #tpu.memory_space<vmem>>, vector<2x8x8x3xf32>
    %39 = vector.shape_cast %38 : vector<2x8x8x3xf32> to vector<128x3xf32>
    %40 = arith.truncf %39 : vector<128x3xf32> to vector<128x3xbf16>
    %c5 = arith.constant 5 : index
    %c0_51 = arith.constant 0 : index
    %c0_52 = arith.constant 0 : index
    %41 = vector.load %arg2[%c5, %c0_51, %c0_52] : memref<25x3x12xbf16, #tpu.memory_space<vmem>>, vector<1x3x12xbf16>
    %42 = vector.shape_cast %41 : vector<1x3x12xbf16> to vector<3x12xbf16>
    %cst_53 = arith.constant dense<0.000000e+00> : vector<128x12xf32>
    %43 = tpu.matmul %40, %42, %cst_53 {dimension_numbers = #tpu.dot_dimension_numbers<[1], [0], [0], [1], [0, 0, 1, 1], [], []>} : vector<128x3xbf16>, vector<3x12xbf16>, vector<128x12xf32> -> vector<128x12xf32>
    %44 = arith.addf %37, %43 : vector<128x12xf32>
    %c0_54 = arith.constant 0 : index
    %c1_55 = arith.constant 1 : index
    %c1_56 = arith.constant 1 : index
    %c0_57 = arith.constant 0 : index
    %45 = vector.load %arg15[%c0_54, %c1_55, %c1_56, %c0_57] : memref<2x12x12x3xf32, #tpu.memory_space<vmem>>, vector<2x8x8x3xf32>
    %46 = vector.shape_cast %45 : vector<2x8x8x3xf32> to vector<128x3xf32>
    %47 = arith.truncf %46 : vector<128x3xf32> to vector<128x3xbf16>
    %c6 = arith.constant 6 : index
    %c0_58 = arith.constant 0 : index
    %c0_59 = arith.constant 0 : index
    %48 = vector.load %arg2[%c6, %c0_58, %c0_59] : memref<25x3x12xbf16, #tpu.memory_space<vmem>>, vector<1x3x12xbf16>
    %49 = vector.shape_cast %48 : vector<1x3x12xbf16> to vector<3x12xbf16>
    %cst_60 = arith.constant dense<0.000000e+00> : vector<128x12xf32>
    %50 = tpu.matmul %47, %49, %cst_60 {dimension_numbers = #tpu.dot_dimension_numbers<[1], [0], [0], [1], [0, 0, 1, 1], [], []>} : vector<128x3xbf16>, vector<3x12xbf16>, vector<128x12xf32> -> vector<128x12xf32>
    %51 = arith.addf %44, %50 : vector<128x12xf32>
    %c0_61 = arith.constant 0 : index
    %c1_62 = arith.constant 1 : index
    %c2_63 = arith.constant 2 : index
    %c0_64 = arith.constant 0 : index
    %52 = vector.load %arg15[%c0_61, %c1_62, %c2_63, %c0_64] : memref<2x12x12x3xf32, #tpu.memory_space<vmem>>, vector<2x8x8x3xf32>
    %53 = vector.shape_cast %52 : vector<2x8x8x3xf32> to vector<128x3xf32>
    %54 = arith.truncf %53 : vector<128x3xf32> to vector<128x3xbf16>
    %c7 = arith.constant 7 : index
    %c0_65 = arith.constant 0 : index
    %c0_66 = arith.constant 0 : index
    %55 = vector.load %arg2[%c7, %c0_65, %c0_66] : memref<25x3x12xbf16, #tpu.memory_space<vmem>>, vector<1x3x12xbf16>
    %56 = vector.shape_cast %55 : vector<1x3x12xbf16> to vector<3x12xbf16>
    %cst_67 = arith.constant dense<0.000000e+00> : vector<128x12xf32>
    %57 = tpu.matmul %54, %56, %cst_67 {dimension_numbers = #tpu.dot_dimension_numbers<[1], [0], [0], [1], [0, 0, 1, 1], [], []>} : vector<128x3xbf16>, vector<3x12xbf16>, vector<128x12xf32> -> vector<128x12xf32>
    %58 = arith.addf %51, %57 : vector<128x12xf32>
    %c0_68 = arith.constant 0 : index
    %c1_69 = arith.constant 1 : index
    %c3_70 = arith.constant 3 : index
    %c0_71 = arith.constant 0 : index
    %59 = vector.load %arg15[%c0_68, %c1_69, %c3_70, %c0_71] : memref<2x12x12x3xf32, #tpu.memory_space<vmem>>, vector<2x8x8x3xf32>
    %60 = vector.shape_cast %59 : vector<2x8x8x3xf32> to vector<128x3xf32>
    %61 = arith.truncf %60 : vector<128x3xf32> to vector<128x3xbf16>
    %c8 = arith.constant 8 : index
    %c0_72 = arith.constant 0 : index
    %c0_73 = arith.constant 0 : index
    %62 = vector.load %arg2[%c8, %c0_72, %c0_73] : memref<25x3x12xbf16, #tpu.memory_space<vmem>>, vector<1x3x12xbf16>
    %63 = vector.shape_cast %62 : vector<1x3x12xbf16> to vector<3x12xbf16>
    %cst_74 = arith.constant dense<0.000000e+00> : vector<128x12xf32>
    %64 = tpu.matmul %61, %63, %cst_74 {dimension_numbers = #tpu.dot_dimension_numbers<[1], [0], [0], [1], [0, 0, 1, 1], [], []>} : vector<128x3xbf16>, vector<3x12xbf16>, vector<128x12xf32> -> vector<128x12xf32>
    %65 = arith.addf %58, %64 : vector<128x12xf32>
    %c0_75 = arith.constant 0 : index
    %c1_76 = arith.constant 1 : index
    %c4_77 = arith.constant 4 : index
    %c0_78 = arith.constant 0 : index
    %66 = vector.load %arg15[%c0_75, %c1_76, %c4_77, %c0_78] : memref<2x12x12x3xf32, #tpu.memory_space<vmem>>, vector<2x8x8x3xf32>
    %67 = vector.shape_cast %66 : vector<2x8x8x3xf32> to vector<128x3xf32>
    %68 = arith.truncf %67 : vector<128x3xf32> to vector<128x3xbf16>
    %c9 = arith.constant 9 : index
    %c0_79 = arith.constant 0 : index
    %c0_80 = arith.constant 0 : index
    %69 = vector.load %arg2[%c9, %c0_79, %c0_80] : memref<25x3x12xbf16, #tpu.memory_space<vmem>>, vector<1x3x12xbf16>
    %70 = vector.shape_cast %69 : vector<1x3x12xbf16> to vector<3x12xbf16>
    %cst_81 = arith.constant dense<0.000000e+00> : vector<128x12xf32>
    %71 = tpu.matmul %68, %70, %cst_81 {dimension_numbers = #tpu.dot_dimension_numbers<[1], [0], [0], [1], [0, 0, 1, 1], [], []>} : vector<128x3xbf16>, vector<3x12xbf16>, vector<128x12xf32> -> vector<128x12xf32>
    %72 = arith.addf %65, %71 : vector<128x12xf32>
    %c0_82 = arith.constant 0 : index
    %c2_83 = arith.constant 2 : index
    %c0_84 = arith.constant 0 : index
    %c0_85 = arith.constant 0 : index
    %73 = vector.load %arg15[%c0_82, %c2_83, %c0_84, %c0_85] : memref<2x12x12x3xf32, #tpu.memory_space<vmem>>, vector<2x8x8x3xf32>
    %74 = vector.shape_cast %73 : vector<2x8x8x3xf32> to vector<128x3xf32>
    %75 = arith.truncf %74 : vector<128x3xf32> to vector<128x3xbf16>
    %c10 = arith.constant 10 : index
    %c0_86 = arith.constant 0 : index
    %c0_87 = arith.constant 0 : index
    %76 = vector.load %arg2[%c10, %c0_86, %c0_87] : memref<25x3x12xbf16, #tpu.memory_space<vmem>>, vector<1x3x12xbf16>
    %77 = vector.shape_cast %76 : vector<1x3x12xbf16> to vector<3x12xbf16>
    %cst_88 = arith.constant dense<0.000000e+00> : vector<128x12xf32>
    %78 = tpu.matmul %75, %77, %cst_88 {dimension_numbers = #tpu.dot_dimension_numbers<[1], [0], [0], [1], [0, 0, 1, 1], [], []>} : vector<128x3xbf16>, vector<3x12xbf16>, vector<128x12xf32> -> vector<128x12xf32>
    %79 = arith.addf %72, %78 : vector<128x12xf32>
    %c0_89 = arith.constant 0 : index
    %c2_90 = arith.constant 2 : index
    %c1_91 = arith.constant 1 : index
    %c0_92 = arith.constant 0 : index
    %80 = vector.load %arg15[%c0_89, %c2_90, %c1_91, %c0_92] : memref<2x12x12x3xf32, #tpu.memory_space<vmem>>, vector<2x8x8x3xf32>
    %81 = vector.shape_cast %80 : vector<2x8x8x3xf32> to vector<128x3xf32>
    %82 = arith.truncf %81 : vector<128x3xf32> to vector<128x3xbf16>
    %c11 = arith.constant 11 : index
    %c0_93 = arith.constant 0 : index
    %c0_94 = arith.constant 0 : index
    %83 = vector.load %arg2[%c11, %c0_93, %c0_94] : memref<25x3x12xbf16, #tpu.memory_space<vmem>>, vector<1x3x12xbf16>
    %84 = vector.shape_cast %83 : vector<1x3x12xbf16> to vector<3x12xbf16>
    %cst_95 = arith.constant dense<0.000000e+00> : vector<128x12xf32>
    %85 = tpu.matmul %82, %84, %cst_95 {dimension_numbers = #tpu.dot_dimension_numbers<[1], [0], [0], [1], [0, 0, 1, 1], [], []>} : vector<128x3xbf16>, vector<3x12xbf16>, vector<128x12xf32> -> vector<128x12xf32>
    %86 = arith.addf %79, %85 : vector<128x12xf32>
    %c0_96 = arith.constant 0 : index
    %c2_97 = arith.constant 2 : index
    %c2_98 = arith.constant 2 : index
    %c0_99 = arith.constant 0 : index
    %87 = vector.load %arg15[%c0_96, %c2_97, %c2_98, %c0_99] : memref<2x12x12x3xf32, #tpu.memory_space<vmem>>, vector<2x8x8x3xf32>
    %88 = vector.shape_cast %87 : vector<2x8x8x3xf32> to vector<128x3xf32>
    %89 = arith.truncf %88 : vector<128x3xf32> to vector<128x3xbf16>
    %c12 = arith.constant 12 : index
    %c0_100 = arith.constant 0 : index
    %c0_101 = arith.constant 0 : index
    %90 = vector.load %arg2[%c12, %c0_100, %c0_101] : memref<25x3x12xbf16, #tpu.memory_space<vmem>>, vector<1x3x12xbf16>
    %91 = vector.shape_cast %90 : vector<1x3x12xbf16> to vector<3x12xbf16>
    %cst_102 = arith.constant dense<0.000000e+00> : vector<128x12xf32>
    %92 = tpu.matmul %89, %91, %cst_102 {dimension_numbers = #tpu.dot_dimension_numbers<[1], [0], [0], [1], [0, 0, 1, 1], [], []>} : vector<128x3xbf16>, vector<3x12xbf16>, vector<128x12xf32> -> vector<128x12xf32>
    %93 = arith.addf %86, %92 : vector<128x12xf32>
    %c0_103 = arith.constant 0 : index
    %c2_104 = arith.constant 2 : index
    %c3_105 = arith.constant 3 : index
    %c0_106 = arith.constant 0 : index
    %94 = vector.load %arg15[%c0_103, %c2_104, %c3_105, %c0_106] : memref<2x12x12x3xf32, #tpu.memory_space<vmem>>, vector<2x8x8x3xf32>
    %95 = vector.shape_cast %94 : vector<2x8x8x3xf32> to vector<128x3xf32>
    %96 = arith.truncf %95 : vector<128x3xf32> to vector<128x3xbf16>
    %c13 = arith.constant 13 : index
    %c0_107 = arith.constant 0 : index
    %c0_108 = arith.constant 0 : index
    %97 = vector.load %arg2[%c13, %c0_107, %c0_108] : memref<25x3x12xbf16, #tpu.memory_space<vmem>>, vector<1x3x12xbf16>
    %98 = vector.shape_cast %97 : vector<1x3x12xbf16> to vector<3x12xbf16>
    %cst_109 = arith.constant dense<0.000000e+00> : vector<128x12xf32>
    %99 = tpu.matmul %96, %98, %cst_109 {dimension_numbers = #tpu.dot_dimension_numbers<[1], [0], [0], [1], [0, 0, 1, 1], [], []>} : vector<128x3xbf16>, vector<3x12xbf16>, vector<128x12xf32> -> vector<128x12xf32>
    %100 = arith.addf %93, %99 : vector<128x12xf32>
    %c0_110 = arith.constant 0 : index
    %c2_111 = arith.constant 2 : index
    %c4_112 = arith.constant 4 : index
    %c0_113 = arith.constant 0 : index
    %101 = vector.load %arg15[%c0_110, %c2_111, %c4_112, %c0_113] : memref<2x12x12x3xf32, #tpu.memory_space<vmem>>, vector<2x8x8x3xf32>
    %102 = vector.shape_cast %101 : vector<2x8x8x3xf32> to vector<128x3xf32>
    %103 = arith.truncf %102 : vector<128x3xf32> to vector<128x3xbf16>
    %c14 = arith.constant 14 : index
    %c0_114 = arith.constant 0 : index
    %c0_115 = arith.constant 0 : index
    %104 = vector.load %arg2[%c14, %c0_114, %c0_115] : memref<25x3x12xbf16, #tpu.memory_space<vmem>>, vector<1x3x12xbf16>
    %105 = vector.shape_cast %104 : vector<1x3x12xbf16> to vector<3x12xbf16>
    %cst_116 = arith.constant dense<0.000000e+00> : vector<128x12xf32>
    %106 = tpu.matmul %103, %105, %cst_116 {dimension_numbers = #tpu.dot_dimension_numbers<[1], [0], [0], [1], [0, 0, 1, 1], [], []>} : vector<128x3xbf16>, vector<3x12xbf16>, vector<128x12xf32> -> vector<128x12xf32>
    %107 = arith.addf %100, %106 : vector<128x12xf32>
    %c0_117 = arith.constant 0 : index
    %c3_118 = arith.constant 3 : index
    %c0_119 = arith.constant 0 : index
    %c0_120 = arith.constant 0 : index
    %108 = vector.load %arg15[%c0_117, %c3_118, %c0_119, %c0_120] : memref<2x12x12x3xf32, #tpu.memory_space<vmem>>, vector<2x8x8x3xf32>
    %109 = vector.shape_cast %108 : vector<2x8x8x3xf32> to vector<128x3xf32>
    %110 = arith.truncf %109 : vector<128x3xf32> to vector<128x3xbf16>
    %c15 = arith.constant 15 : index
    %c0_121 = arith.constant 0 : index
    %c0_122 = arith.constant 0 : index
    %111 = vector.load %arg2[%c15, %c0_121, %c0_122] : memref<25x3x12xbf16, #tpu.memory_space<vmem>>, vector<1x3x12xbf16>
    %112 = vector.shape_cast %111 : vector<1x3x12xbf16> to vector<3x12xbf16>
    %cst_123 = arith.constant dense<0.000000e+00> : vector<128x12xf32>
    %113 = tpu.matmul %110, %112, %cst_123 {dimension_numbers = #tpu.dot_dimension_numbers<[1], [0], [0], [1], [0, 0, 1, 1], [], []>} : vector<128x3xbf16>, vector<3x12xbf16>, vector<128x12xf32> -> vector<128x12xf32>
    %114 = arith.addf %107, %113 : vector<128x12xf32>
    %c0_124 = arith.constant 0 : index
    %c3_125 = arith.constant 3 : index
    %c1_126 = arith.constant 1 : index
    %c0_127 = arith.constant 0 : index
    %115 = vector.load %arg15[%c0_124, %c3_125, %c1_126, %c0_127] : memref<2x12x12x3xf32, #tpu.memory_space<vmem>>, vector<2x8x8x3xf32>
    %116 = vector.shape_cast %115 : vector<2x8x8x3xf32> to vector<128x3xf32>
    %117 = arith.truncf %116 : vector<128x3xf32> to vector<128x3xbf16>
    %c16 = arith.constant 16 : index
    %c0_128 = arith.constant 0 : index
    %c0_129 = arith.constant 0 : index
    %118 = vector.load %arg2[%c16, %c0_128, %c0_129] : memref<25x3x12xbf16, #tpu.memory_space<vmem>>, vector<1x3x12xbf16>
    %119 = vector.shape_cast %118 : vector<1x3x12xbf16> to vector<3x12xbf16>
    %cst_130 = arith.constant dense<0.000000e+00> : vector<128x12xf32>
    %120 = tpu.matmul %117, %119, %cst_130 {dimension_numbers = #tpu.dot_dimension_numbers<[1], [0], [0], [1], [0, 0, 1, 1], [], []>} : vector<128x3xbf16>, vector<3x12xbf16>, vector<128x12xf32> -> vector<128x12xf32>
    %121 = arith.addf %114, %120 : vector<128x12xf32>
    %c0_131 = arith.constant 0 : index
    %c3_132 = arith.constant 3 : index
    %c2_133 = arith.constant 2 : index
    %c0_134 = arith.constant 0 : index
    %122 = vector.load %arg15[%c0_131, %c3_132, %c2_133, %c0_134] : memref<2x12x12x3xf32, #tpu.memory_space<vmem>>, vector<2x8x8x3xf32>
    %123 = vector.shape_cast %122 : vector<2x8x8x3xf32> to vector<128x3xf32>
    %124 = arith.truncf %123 : vector<128x3xf32> to vector<128x3xbf16>
    %c17 = arith.constant 17 : index
    %c0_135 = arith.constant 0 : index
    %c0_136 = arith.constant 0 : index
    %125 = vector.load %arg2[%c17, %c0_135, %c0_136] : memref<25x3x12xbf16, #tpu.memory_space<vmem>>, vector<1x3x12xbf16>
    %126 = vector.shape_cast %125 : vector<1x3x12xbf16> to vector<3x12xbf16>
    %cst_137 = arith.constant dense<0.000000e+00> : vector<128x12xf32>
    %127 = tpu.matmul %124, %126, %cst_137 {dimension_numbers = #tpu.dot_dimension_numbers<[1], [0], [0], [1], [0, 0, 1, 1], [], []>} : vector<128x3xbf16>, vector<3x12xbf16>, vector<128x12xf32> -> vector<128x12xf32>
    %128 = arith.addf %121, %127 : vector<128x12xf32>
    %c0_138 = arith.constant 0 : index
    %c3_139 = arith.constant 3 : index
    %c3_140 = arith.constant 3 : index
    %c0_141 = arith.constant 0 : index
    %129 = vector.load %arg15[%c0_138, %c3_139, %c3_140, %c0_141] : memref<2x12x12x3xf32, #tpu.memory_space<vmem>>, vector<2x8x8x3xf32>
    %130 = vector.shape_cast %129 : vector<2x8x8x3xf32> to vector<128x3xf32>
    %131 = arith.truncf %130 : vector<128x3xf32> to vector<128x3xbf16>
    %c18 = arith.constant 18 : index
    %c0_142 = arith.constant 0 : index
    %c0_143 = arith.constant 0 : index
    %132 = vector.load %arg2[%c18, %c0_142, %c0_143] : memref<25x3x12xbf16, #tpu.memory_space<vmem>>, vector<1x3x12xbf16>
    %133 = vector.shape_cast %132 : vector<1x3x12xbf16> to vector<3x12xbf16>
    %cst_144 = arith.constant dense<0.000000e+00> : vector<128x12xf32>
    %134 = tpu.matmul %131, %133, %cst_144 {dimension_numbers = #tpu.dot_dimension_numbers<[1], [0], [0], [1], [0, 0, 1, 1], [], []>} : vector<128x3xbf16>, vector<3x12xbf16>, vector<128x12xf32> -> vector<128x12xf32>
    %135 = arith.addf %128, %134 : vector<128x12xf32>
    %c0_145 = arith.constant 0 : index
    %c3_146 = arith.constant 3 : index
    %c4_147 = arith.constant 4 : index
    %c0_148 = arith.constant 0 : index
    %136 = vector.load %arg15[%c0_145, %c3_146, %c4_147, %c0_148] : memref<2x12x12x3xf32, #tpu.memory_space<vmem>>, vector<2x8x8x3xf32>
    %137 = vector.shape_cast %136 : vector<2x8x8x3xf32> to vector<128x3xf32>
    %138 = arith.truncf %137 : vector<128x3xf32> to vector<128x3xbf16>
    %c19 = arith.constant 19 : index
    %c0_149 = arith.constant 0 : index
    %c0_150 = arith.constant 0 : index
    %139 = vector.load %arg2[%c19, %c0_149, %c0_150] : memref<25x3x12xbf16, #tpu.memory_space<vmem>>, vector<1x3x12xbf16>
    %140 = vector.shape_cast %139 : vector<1x3x12xbf16> to vector<3x12xbf16>
    %cst_151 = arith.constant dense<0.000000e+00> : vector<128x12xf32>
    %141 = tpu.matmul %138, %140, %cst_151 {dimension_numbers = #tpu.dot_dimension_numbers<[1], [0], [0], [1], [0, 0, 1, 1], [], []>} : vector<128x3xbf16>, vector<3x12xbf16>, vector<128x12xf32> -> vector<128x12xf32>
    %142 = arith.addf %135, %141 : vector<128x12xf32>
    %c0_152 = arith.constant 0 : index
    %c4_153 = arith.constant 4 : index
    %c0_154 = arith.constant 0 : index
    %c0_155 = arith.constant 0 : index
    %143 = vector.load %arg15[%c0_152, %c4_153, %c0_154, %c0_155] : memref<2x12x12x3xf32, #tpu.memory_space<vmem>>, vector<2x8x8x3xf32>
    %144 = vector.shape_cast %143 : vector<2x8x8x3xf32> to vector<128x3xf32>
    %145 = arith.truncf %144 : vector<128x3xf32> to vector<128x3xbf16>
    %c20 = arith.constant 20 : index
    %c0_156 = arith.constant 0 : index
    %c0_157 = arith.constant 0 : index
    %146 = vector.load %arg2[%c20, %c0_156, %c0_157] : memref<25x3x12xbf16, #tpu.memory_space<vmem>>, vector<1x3x12xbf16>
    %147 = vector.shape_cast %146 : vector<1x3x12xbf16> to vector<3x12xbf16>
    %cst_158 = arith.constant dense<0.000000e+00> : vector<128x12xf32>
    %148 = tpu.matmul %145, %147, %cst_158 {dimension_numbers = #tpu.dot_dimension_numbers<[1], [0], [0], [1], [0, 0, 1, 1], [], []>} : vector<128x3xbf16>, vector<3x12xbf16>, vector<128x12xf32> -> vector<128x12xf32>
    %149 = arith.addf %142, %148 : vector<128x12xf32>
    %c0_159 = arith.constant 0 : index
    %c4_160 = arith.constant 4 : index
    %c1_161 = arith.constant 1 : index
    %c0_162 = arith.constant 0 : index
    %150 = vector.load %arg15[%c0_159, %c4_160, %c1_161, %c0_162] : memref<2x12x12x3xf32, #tpu.memory_space<vmem>>, vector<2x8x8x3xf32>
    %151 = vector.shape_cast %150 : vector<2x8x8x3xf32> to vector<128x3xf32>
    %152 = arith.truncf %151 : vector<128x3xf32> to vector<128x3xbf16>
    %c21 = arith.constant 21 : index
    %c0_163 = arith.constant 0 : index
    %c0_164 = arith.constant 0 : index
    %153 = vector.load %arg2[%c21, %c0_163, %c0_164] : memref<25x3x12xbf16, #tpu.memory_space<vmem>>, vector<1x3x12xbf16>
    %154 = vector.shape_cast %153 : vector<1x3x12xbf16> to vector<3x12xbf16>
    %cst_165 = arith.constant dense<0.000000e+00> : vector<128x12xf32>
    %155 = tpu.matmul %152, %154, %cst_165 {dimension_numbers = #tpu.dot_dimension_numbers<[1], [0], [0], [1], [0, 0, 1, 1], [], []>} : vector<128x3xbf16>, vector<3x12xbf16>, vector<128x12xf32> -> vector<128x12xf32>
    %156 = arith.addf %149, %155 : vector<128x12xf32>
    %c0_166 = arith.constant 0 : index
    %c4_167 = arith.constant 4 : index
    %c2_168 = arith.constant 2 : index
    %c0_169 = arith.constant 0 : index
    %157 = vector.load %arg15[%c0_166, %c4_167, %c2_168, %c0_169] : memref<2x12x12x3xf32, #tpu.memory_space<vmem>>, vector<2x8x8x3xf32>
    %158 = vector.shape_cast %157 : vector<2x8x8x3xf32> to vector<128x3xf32>
    %159 = arith.truncf %158 : vector<128x3xf32> to vector<128x3xbf16>
    %c22 = arith.constant 22 : index
    %c0_170 = arith.constant 0 : index
    %c0_171 = arith.constant 0 : index
    %160 = vector.load %arg2[%c22, %c0_170, %c0_171] : memref<25x3x12xbf16, #tpu.memory_space<vmem>>, vector<1x3x12xbf16>
    %161 = vector.shape_cast %160 : vector<1x3x12xbf16> to vector<3x12xbf16>
    %cst_172 = arith.constant dense<0.000000e+00> : vector<128x12xf32>
    %162 = tpu.matmul %159, %161, %cst_172 {dimension_numbers = #tpu.dot_dimension_numbers<[1], [0], [0], [1], [0, 0, 1, 1], [], []>} : vector<128x3xbf16>, vector<3x12xbf16>, vector<128x12xf32> -> vector<128x12xf32>
    %163 = arith.addf %156, %162 : vector<128x12xf32>
    %c0_173 = arith.constant 0 : index
    %c4_174 = arith.constant 4 : index
    %c3_175 = arith.constant 3 : index
    %c0_176 = arith.constant 0 : index
    %164 = vector.load %arg15[%c0_173, %c4_174, %c3_175, %c0_176] : memref<2x12x12x3xf32, #tpu.memory_space<vmem>>, vector<2x8x8x3xf32>
    %165 = vector.shape_cast %164 : vector<2x8x8x3xf32> to vector<128x3xf32>
    %166 = arith.truncf %165 : vector<128x3xf32> to vector<128x3xbf16>
    %c23 = arith.constant 23 : index
    %c0_177 = arith.constant 0 : index
    %c0_178 = arith.constant 0 : index
    %167 = vector.load %arg2[%c23, %c0_177, %c0_178] : memref<25x3x12xbf16, #tpu.memory_space<vmem>>, vector<1x3x12xbf16>
    %168 = vector.shape_cast %167 : vector<1x3x12xbf16> to vector<3x12xbf16>
    %cst_179 = arith.constant dense<0.000000e+00> : vector<128x12xf32>
    %169 = tpu.matmul %166, %168, %cst_179 {dimension_numbers = #tpu.dot_dimension_numbers<[1], [0], [0], [1], [0, 0, 1, 1], [], []>} : vector<128x3xbf16>, vector<3x12xbf16>, vector<128x12xf32> -> vector<128x12xf32>
    %170 = arith.addf %163, %169 : vector<128x12xf32>
    %c0_180 = arith.constant 0 : index
    %c4_181 = arith.constant 4 : index
    %c4_182 = arith.constant 4 : index
    %c0_183 = arith.constant 0 : index
    %171 = vector.load %arg15[%c0_180, %c4_181, %c4_182, %c0_183] : memref<2x12x12x3xf32, #tpu.memory_space<vmem>>, vector<2x8x8x3xf32>
    %172 = vector.shape_cast %171 : vector<2x8x8x3xf32> to vector<128x3xf32>
    %173 = arith.truncf %172 : vector<128x3xf32> to vector<128x3xbf16>
    %c24 = arith.constant 24 : index
    %c0_184 = arith.constant 0 : index
    %c0_185 = arith.constant 0 : index
    %174 = vector.load %arg2[%c24, %c0_184, %c0_185] : memref<25x3x12xbf16, #tpu.memory_space<vmem>>, vector<1x3x12xbf16>
    %175 = vector.shape_cast %174 : vector<1x3x12xbf16> to vector<3x12xbf16>
    %cst_186 = arith.constant dense<0.000000e+00> : vector<128x12xf32>
    %176 = tpu.matmul %173, %175, %cst_186 {dimension_numbers = #tpu.dot_dimension_numbers<[1], [0], [0], [1], [0, 0, 1, 1], [], []>} : vector<128x3xbf16>, vector<3x12xbf16>, vector<128x12xf32> -> vector<128x12xf32>
    %177 = arith.addf %170, %176 : vector<128x12xf32>
    %c0_187 = arith.constant 0 : index
    %c0_188 = arith.constant 0 : index
    %178 = vector.load %arg3[%c0_187, %c0_188] : memref<1x12xf32, #tpu.memory_space<vmem>>, vector<1x12xf32>
    %179 = vector.broadcast %178 : vector<1x12xf32> to vector<128x12xf32>
    %180 = arith.addf %177, %179 : vector<128x12xf32>
    %cst_189 = arith.constant 0.000000e+00 : f32
    %181 = vector.broadcast %cst_189 : f32 to vector<128x12xf32>
    %182 = arith.maximumf %180, %181 : vector<128x12xf32>
    %cst_190 = arith.constant 0.000000e+00 : f32
    %183 = vector.broadcast %cst_190 : f32 to vector<2x10x10x12xf32>
    %c0_191 = arith.constant 0 : index
    %c0_192 = arith.constant 0 : index
    %c0_193 = arith.constant 0 : index
    %c0_194 = arith.constant 0 : index
    %184 = vector.load %arg16[%c0_191, %c0_192, %c0_193, %c0_194] : memref<2x10x10x12xf32, #tpu.memory_space<vmem>>, vector<2x10x10x12xf32>
    tpu.vector_store %arg16[%c0_191, %c0_192, %c0_193, %c0_194], %183 {strides = array<i32>} : memref<2x10x10x12xf32, #tpu.memory_space<vmem>>, vector<2x10x10x12xf32>,
    %185 = vector.shape_cast %182 : vector<128x12xf32> to vector<2x8x8x12xf32>
    %c0_195 = arith.constant 0 : index
    %c1_196 = arith.constant 1 : index
    %c1_197 = arith.constant 1 : index
    %c0_198 = arith.constant 0 : index
    %186 = vector.load %arg16[%c0_195, %c1_196, %c1_197, %c0_198] : memref<2x10x10x12xf32, #tpu.memory_space<vmem>>, vector<2x8x8x12xf32>
    tpu.vector_store %arg16[%c0_195, %c1_196, %c1_197, %c0_198], %185 {strides = array<i32>} : memref<2x10x10x12xf32, #tpu.memory_space<vmem>>, vector<2x8x8x12xf32>,
    %c0_199 = arith.constant 0 : index
    %c0_200 = arith.constant 0 : index
    %c0_201 = arith.constant 0 : index
    %c0_202 = arith.constant 0 : index
    %187 = vector.load %arg16[%c0_199, %c0_200, %c0_201, %c0_202] : memref<2x10x10x12xf32, #tpu.memory_space<vmem>>, vector<2x8x8x12xf32>
    %188 = vector.shape_cast %187 : vector<2x8x8x12xf32> to vector<128x12xf32>
    %189 = arith.truncf %188 : vector<128x12xf32> to vector<128x12xbf16>
    %c0_203 = arith.constant 0 : index
    %c0_204 = arith.constant 0 : index
    %c0_205 = arith.constant 0 : index
    %190 = vector.load %arg4[%c0_203, %c0_204, %c0_205] : memref<9x12x32xbf16, #tpu.memory_space<vmem>>, vector<1x12x32xbf16>
    %191 = vector.shape_cast %190 : vector<1x12x32xbf16> to vector<12x32xbf16>
    %cst_206 = arith.constant dense<0.000000e+00> : vector<128x32xf32>
    %192 = tpu.matmul %189, %191, %cst_206 {dimension_numbers = #tpu.dot_dimension_numbers<[1], [0], [0], [1], [0, 0, 1, 1], [], []>} : vector<128x12xbf16>, vector<12x32xbf16>, vector<128x32xf32> -> vector<128x32xf32>
    %c0_207 = arith.constant 0 : index
    %c0_208 = arith.constant 0 : index
    %c1_209 = arith.constant 1 : index
    %c0_210 = arith.constant 0 : index
    %193 = vector.load %arg16[%c0_207, %c0_208, %c1_209, %c0_210] : memref<2x10x10x12xf32, #tpu.memory_space<vmem>>, vector<2x8x8x12xf32>
    %194 = vector.shape_cast %193 : vector<2x8x8x12xf32> to vector<128x12xf32>
    %195 = arith.truncf %194 : vector<128x12xf32> to vector<128x12xbf16>
    %c1_211 = arith.constant 1 : index
    %c0_212 = arith.constant 0 : index
    %c0_213 = arith.constant 0 : index
    %196 = vector.load %arg4[%c1_211, %c0_212, %c0_213] : memref<9x12x32xbf16, #tpu.memory_space<vmem>>, vector<1x12x32xbf16>
    %197 = vector.shape_cast %196 : vector<1x12x32xbf16> to vector<12x32xbf16>
    %cst_214 = arith.constant dense<0.000000e+00> : vector<128x32xf32>
    %198 = tpu.matmul %195, %197, %cst_214 {dimension_numbers = #tpu.dot_dimension_numbers<[1], [0], [0], [1], [0, 0, 1, 1], [], []>} : vector<128x12xbf16>, vector<12x32xbf16>, vector<128x32xf32> -> vector<128x32xf32>
    %199 = arith.addf %192, %198 : vector<128x32xf32>
    %c0_215 = arith.constant 0 : index
    %c0_216 = arith.constant 0 : index
    %c2_217 = arith.constant 2 : index
    %c0_218 = arith.constant 0 : index
    %200 = vector.load %arg16[%c0_215, %c0_216, %c2_217, %c0_218] : memref<2x10x10x12xf32, #tpu.memory_space<vmem>>, vector<2x8x8x12xf32>
    %201 = vector.shape_cast %200 : vector<2x8x8x12xf32> to vector<128x12xf32>
    %202 = arith.truncf %201 : vector<128x12xf32> to vector<128x12xbf16>
    %c2_219 = arith.constant 2 : index
    %c0_220 = arith.constant 0 : index
    %c0_221 = arith.constant 0 : index
    %203 = vector.load %arg4[%c2_219, %c0_220, %c0_221] : memref<9x12x32xbf16, #tpu.memory_space<vmem>>, vector<1x12x32xbf16>
    %204 = vector.shape_cast %203 : vector<1x12x32xbf16> to vector<12x32xbf16>
    %cst_222 = arith.constant dense<0.000000e+00> : vector<128x32xf32>
    %205 = tpu.matmul %202, %204, %cst_222 {dimension_numbers = #tpu.dot_dimension_numbers<[1], [0], [0], [1], [0, 0, 1, 1], [], []>} : vector<128x12xbf16>, vector<12x32xbf16>, vector<128x32xf32> -> vector<128x32xf32>
    %206 = arith.addf %199, %205 : vector<128x32xf32>
    %c0_223 = arith.constant 0 : index
    %c1_224 = arith.constant 1 : index
    %c0_225 = arith.constant 0 : index
    %c0_226 = arith.constant 0 : index
    %207 = vector.load %arg16[%c0_223, %c1_224, %c0_225, %c0_226] : memref<2x10x10x12xf32, #tpu.memory_space<vmem>>, vector<2x8x8x12xf32>
    %208 = vector.shape_cast %207 : vector<2x8x8x12xf32> to vector<128x12xf32>
    %209 = arith.truncf %208 : vector<128x12xf32> to vector<128x12xbf16>
    %c3_227 = arith.constant 3 : index
    %c0_228 = arith.constant 0 : index
    %c0_229 = arith.constant 0 : index
    %210 = vector.load %arg4[%c3_227, %c0_228, %c0_229] : memref<9x12x32xbf16, #tpu.memory_space<vmem>>, vector<1x12x32xbf16>
    %211 = vector.shape_cast %210 : vector<1x12x32xbf16> to vector<12x32xbf16>
    %cst_230 = arith.constant dense<0.000000e+00> : vector<128x32xf32>
    %212 = tpu.matmul %209, %211, %cst_230 {dimension_numbers = #tpu.dot_dimension_numbers<[1], [0], [0], [1], [0, 0, 1, 1], [], []>} : vector<128x12xbf16>, vector<12x32xbf16>, vector<128x32xf32> -> vector<128x32xf32>
    %213 = arith.addf %206, %212 : vector<128x32xf32>
    %c0_231 = arith.constant 0 : index
    %c1_232 = arith.constant 1 : index
    %c1_233 = arith.constant 1 : index
    %c0_234 = arith.constant 0 : index
    %214 = vector.load %arg16[%c0_231, %c1_232, %c1_233, %c0_234] : memref<2x10x10x12xf32, #tpu.memory_space<vmem>>, vector<2x8x8x12xf32>
    %215 = vector.shape_cast %214 : vector<2x8x8x12xf32> to vector<128x12xf32>
    %216 = arith.truncf %215 : vector<128x12xf32> to vector<128x12xbf16>
    %c4_235 = arith.constant 4 : index
    %c0_236 = arith.constant 0 : index
    %c0_237 = arith.constant 0 : index
    %217 = vector.load %arg4[%c4_235, %c0_236, %c0_237] : memref<9x12x32xbf16, #tpu.memory_space<vmem>>, vector<1x12x32xbf16>
    %218 = vector.shape_cast %217 : vector<1x12x32xbf16> to vector<12x32xbf16>
    %cst_238 = arith.constant dense<0.000000e+00> : vector<128x32xf32>
    %219 = tpu.matmul %216, %218, %cst_238 {dimension_numbers = #tpu.dot_dimension_numbers<[1], [0], [0], [1], [0, 0, 1, 1], [], []>} : vector<128x12xbf16>, vector<12x32xbf16>, vector<128x32xf32> -> vector<128x32xf32>
    %220 = arith.addf %213, %219 : vector<128x32xf32>
    %c0_239 = arith.constant 0 : index
    %c1_240 = arith.constant 1 : index
    %c2_241 = arith.constant 2 : index
    %c0_242 = arith.constant 0 : index
    %221 = vector.load %arg16[%c0_239, %c1_240, %c2_241, %c0_242] : memref<2x10x10x12xf32, #tpu.memory_space<vmem>>, vector<2x8x8x12xf32>
    %222 = vector.shape_cast %221 : vector<2x8x8x12xf32> to vector<128x12xf32>
    %223 = arith.truncf %222 : vector<128x12xf32> to vector<128x12xbf16>
    %c5_243 = arith.constant 5 : index
    %c0_244 = arith.constant 0 : index
    %c0_245 = arith.constant 0 : index
    %224 = vector.load %arg4[%c5_243, %c0_244, %c0_245] : memref<9x12x32xbf16, #tpu.memory_space<vmem>>, vector<1x12x32xbf16>
    %225 = vector.shape_cast %224 : vector<1x12x32xbf16> to vector<12x32xbf16>
    %cst_246 = arith.constant dense<0.000000e+00> : vector<128x32xf32>
    %226 = tpu.matmul %223, %225, %cst_246 {dimension_numbers = #tpu.dot_dimension_numbers<[1], [0], [0], [1], [0, 0, 1, 1], [], []>} : vector<128x12xbf16>, vector<12x32xbf16>, vector<128x32xf32> -> vector<128x32xf32>
    %227 = arith.addf %220, %226 : vector<128x32xf32>
    %c0_247 = arith.constant 0 : index
    %c2_248 = arith.constant 2 : index
    %c0_249 = arith.constant 0 : index
    %c0_250 = arith.constant 0 : index
    %228 = vector.load %arg16[%c0_247, %c2_248, %c0_249, %c0_250] : memref<2x10x10x12xf32, #tpu.memory_space<vmem>>, vector<2x8x8x12xf32>
    %229 = vector.shape_cast %228 : vector<2x8x8x12xf32> to vector<128x12xf32>
    %230 = arith.truncf %229 : vector<128x12xf32> to vector<128x12xbf16>
    %c6_251 = arith.constant 6 : index
    %c0_252 = arith.constant 0 : index
    %c0_253 = arith.constant 0 : index
    %231 = vector.load %arg4[%c6_251, %c0_252, %c0_253] : memref<9x12x32xbf16, #tpu.memory_space<vmem>>, vector<1x12x32xbf16>
    %232 = vector.shape_cast %231 : vector<1x12x32xbf16> to vector<12x32xbf16>
    %cst_254 = arith.constant dense<0.000000e+00> : vector<128x32xf32>
    %233 = tpu.matmul %230, %232, %cst_254 {dimension_numbers = #tpu.dot_dimension_numbers<[1], [0], [0], [1], [0, 0, 1, 1], [], []>} : vector<128x12xbf16>, vector<12x32xbf16>, vector<128x32xf32> -> vector<128x32xf32>
    %234 = arith.addf %227, %233 : vector<128x32xf32>
    %c0_255 = arith.constant 0 : index
    %c2_256 = arith.constant 2 : index
    %c1_257 = arith.constant 1 : index
    %c0_258 = arith.constant 0 : index
    %235 = vector.load %arg16[%c0_255, %c2_256, %c1_257, %c0_258] : memref<2x10x10x12xf32, #tpu.memory_space<vmem>>, vector<2x8x8x12xf32>
    %236 = vector.shape_cast %235 : vector<2x8x8x12xf32> to vector<128x12xf32>
    %237 = arith.truncf %236 : vector<128x12xf32> to vector<128x12xbf16>
    %c7_259 = arith.constant 7 : index
    %c0_260 = arith.constant 0 : index
    %c0_261 = arith.constant 0 : index
    %238 = vector.load %arg4[%c7_259, %c0_260, %c0_261] : memref<9x12x32xbf16, #tpu.memory_space<vmem>>, vector<1x12x32xbf16>
    %239 = vector.shape_cast %238 : vector<1x12x32xbf16> to vector<12x32xbf16>
    %cst_262 = arith.constant dense<0.000000e+00> : vector<128x32xf32>
    %240 = tpu.matmul %237, %239, %cst_262 {dimension_numbers = #tpu.dot_dimension_numbers<[1], [0], [0], [1], [0, 0, 1, 1], [], []>} : vector<128x12xbf16>, vector<12x32xbf16>, vector<128x32xf32> -> vector<128x32xf32>
    %241 = arith.addf %234, %240 : vector<128x32xf32>
    %c0_263 = arith.constant 0 : index
    %c2_264 = arith.constant 2 : index
    %c2_265 = arith.constant 2 : index
    %c0_266 = arith.constant 0 : index
    %242 = vector.load %arg16[%c0_263, %c2_264, %c2_265, %c0_266] : memref<2x10x10x12xf32, #tpu.memory_space<vmem>>, vector<2x8x8x12xf32>
    %243 = vector.shape_cast %242 : vector<2x8x8x12xf32> to vector<128x12xf32>
    %244 = arith.truncf %243 : vector<128x12xf32> to vector<128x12xbf16>
    %c8_267 = arith.constant 8 : index
    %c0_268 = arith.constant 0 : index
    %c0_269 = arith.constant 0 : index
    %245 = vector.load %arg4[%c8_267, %c0_268, %c0_269] : memref<9x12x32xbf16, #tpu.memory_space<vmem>>, vector<1x12x32xbf16>
    %246 = vector.shape_cast %245 : vector<1x12x32xbf16> to vector<12x32xbf16>
    %cst_270 = arith.constant dense<0.000000e+00> : vector<128x32xf32>
    %247 = tpu.matmul %244, %246, %cst_270 {dimension_numbers = #tpu.dot_dimension_numbers<[1], [0], [0], [1], [0, 0, 1, 1], [], []>} : vector<128x12xbf16>, vector<12x32xbf16>, vector<128x32xf32> -> vector<128x32xf32>
    %248 = arith.addf %241, %247 : vector<128x32xf32>
    %c0_271 = arith.constant 0 : index
    %c0_272 = arith.constant 0 : index
    %249 = vector.load %arg5[%c0_271, %c0_272] : memref<1x32xf32, #tpu.memory_space<vmem>>, vector<1x32xf32>
    %250 = vector.broadcast %249 : vector<1x32xf32> to vector<128x32xf32>
    %251 = arith.addf %248, %250 : vector<128x32xf32>
    %cst_273 = arith.constant 0.000000e+00 : f32
    %252 = vector.broadcast %cst_273 : f32 to vector<128x32xf32>
    %253 = arith.maximumf %251, %252 : vector<128x32xf32>
    %cst_274 = arith.constant 0.000000e+00 : f32
    %254 = vector.broadcast %cst_274 : f32 to vector<2x10x10x32xf32>
    %c0_275 = arith.constant 0 : index
    %c0_276 = arith.constant 0 : index
    %c0_277 = arith.constant 0 : index
    %c0_278 = arith.constant 0 : index
    %255 = vector.load %arg17[%c0_275, %c0_276, %c0_277, %c0_278] : memref<2x10x10x32xf32, #tpu.memory_space<vmem>>, vector<2x10x10x32xf32>
    tpu.vector_store %arg17[%c0_275, %c0_276, %c0_277, %c0_278], %254 {strides = array<i32>} : memref<2x10x10x32xf32, #tpu.memory_space<vmem>>, vector<2x10x10x32xf32>,
    %256 = vector.shape_cast %253 : vector<128x32xf32> to vector<2x8x8x32xf32>
    %c0_279 = arith.constant 0 : index
    %c1_280 = arith.constant 1 : index
    %c1_281 = arith.constant 1 : index
    %c0_282 = arith.constant 0 : index
    %257 = vector.load %arg17[%c0_279, %c1_280, %c1_281, %c0_282] : memref<2x10x10x32xf32, #tpu.memory_space<vmem>>, vector<2x8x8x32xf32>
    tpu.vector_store %arg17[%c0_279, %c1_280, %c1_281, %c0_282], %256 {strides = array<i32>} : memref<2x10x10x32xf32, #tpu.memory_space<vmem>>, vector<2x8x8x32xf32>,
    %c0_283 = arith.constant 0 : index
    %c0_284 = arith.constant 0 : index
    %c0_285 = arith.constant 0 : index
    %c0_286 = arith.constant 0 : index
    %258 = vector.load %arg17[%c0_283, %c0_284, %c0_285, %c0_286] : memref<2x10x10x32xf32, #tpu.memory_space<vmem>>, vector<2x8x8x32xf32>
    %259 = vector.shape_cast %258 : vector<2x8x8x32xf32> to vector<128x32xf32>
    %260 = arith.truncf %259 : vector<128x32xf32> to vector<128x32xbf16>
    %c0_287 = arith.constant 0 : index
    %c0_288 = arith.constant 0 : index
    %c0_289 = arith.constant 0 : index
    %261 = vector.load %arg6[%c0_287, %c0_288, %c0_289] : memref<9x32x32xbf16, #tpu.memory_space<vmem>>, vector<1x32x32xbf16>
    %262 = vector.shape_cast %261 : vector<1x32x32xbf16> to vector<32x32xbf16>
    %cst_290 = arith.constant dense<0.000000e+00> : vector<128x32xf32>
    %263 = tpu.matmul %260, %262, %cst_290 {dimension_numbers = #tpu.dot_dimension_numbers<[1], [0], [0], [1], [0, 0, 1, 1], [], []>} : vector<128x32xbf16>, vector<32x32xbf16>, vector<128x32xf32> -> vector<128x32xf32>
    %c0_291 = arith.constant 0 : index
    %c0_292 = arith.constant 0 : index
    %c1_293 = arith.constant 1 : index
    %c0_294 = arith.constant 0 : index
    %264 = vector.load %arg17[%c0_291, %c0_292, %c1_293, %c0_294] : memref<2x10x10x32xf32, #tpu.memory_space<vmem>>, vector<2x8x8x32xf32>
    %265 = vector.shape_cast %264 : vector<2x8x8x32xf32> to vector<128x32xf32>
    %266 = arith.truncf %265 : vector<128x32xf32> to vector<128x32xbf16>
    %c1_295 = arith.constant 1 : index
    %c0_296 = arith.constant 0 : index
    %c0_297 = arith.constant 0 : index
    %267 = vector.load %arg6[%c1_295, %c0_296, %c0_297] : memref<9x32x32xbf16, #tpu.memory_space<vmem>>, vector<1x32x32xbf16>
    %268 = vector.shape_cast %267 : vector<1x32x32xbf16> to vector<32x32xbf16>
    %cst_298 = arith.constant dense<0.000000e+00> : vector<128x32xf32>
    %269 = tpu.matmul %266, %268, %cst_298 {dimension_numbers = #tpu.dot_dimension_numbers<[1], [0], [0], [1], [0, 0, 1, 1], [], []>} : vector<128x32xbf16>, vector<32x32xbf16>, vector<128x32xf32> -> vector<128x32xf32>
    %270 = arith.addf %263, %269 : vector<128x32xf32>
    %c0_299 = arith.constant 0 : index
    %c0_300 = arith.constant 0 : index
    %c2_301 = arith.constant 2 : index
    %c0_302 = arith.constant 0 : index
    %271 = vector.load %arg17[%c0_299, %c0_300, %c2_301, %c0_302] : memref<2x10x10x32xf32, #tpu.memory_space<vmem>>, vector<2x8x8x32xf32>
    %272 = vector.shape_cast %271 : vector<2x8x8x32xf32> to vector<128x32xf32>
    %273 = arith.truncf %272 : vector<128x32xf32> to vector<128x32xbf16>
    %c2_303 = arith.constant 2 : index
    %c0_304 = arith.constant 0 : index
    %c0_305 = arith.constant 0 : index
    %274 = vector.load %arg6[%c2_303, %c0_304, %c0_305] : memref<9x32x32xbf16, #tpu.memory_space<vmem>>, vector<1x32x32xbf16>
    %275 = vector.shape_cast %274 : vector<1x32x32xbf16> to vector<32x32xbf16>
    %cst_306 = arith.constant dense<0.000000e+00> : vector<128x32xf32>
    %276 = tpu.matmul %273, %275, %cst_306 {dimension_numbers = #tpu.dot_dimension_numbers<[1], [0], [0], [1], [0, 0, 1, 1], [], []>} : vector<128x32xbf16>, vector<32x32xbf16>, vector<128x32xf32> -> vector<128x32xf32>
    %277 = arith.addf %270, %276 : vector<128x32xf32>
    %c0_307 = arith.constant 0 : index
    %c1_308 = arith.constant 1 : index
    %c0_309 = arith.constant 0 : index
    %c0_310 = arith.constant 0 : index
    %278 = vector.load %arg17[%c0_307, %c1_308, %c0_309, %c0_310] : memref<2x10x10x32xf32, #tpu.memory_space<vmem>>, vector<2x8x8x32xf32>
    %279 = vector.shape_cast %278 : vector<2x8x8x32xf32> to vector<128x32xf32>
    %280 = arith.truncf %279 : vector<128x32xf32> to vector<128x32xbf16>
    %c3_311 = arith.constant 3 : index
    %c0_312 = arith.constant 0 : index
    %c0_313 = arith.constant 0 : index
    %281 = vector.load %arg6[%c3_311, %c0_312, %c0_313] : memref<9x32x32xbf16, #tpu.memory_space<vmem>>, vector<1x32x32xbf16>
    %282 = vector.shape_cast %281 : vector<1x32x32xbf16> to vector<32x32xbf16>
    %cst_314 = arith.constant dense<0.000000e+00> : vector<128x32xf32>
    %283 = tpu.matmul %280, %282, %cst_314 {dimension_numbers = #tpu.dot_dimension_numbers<[1], [0], [0], [1], [0, 0, 1, 1], [], []>} : vector<128x32xbf16>, vector<32x32xbf16>, vector<128x32xf32> -> vector<128x32xf32>
    %284 = arith.addf %277, %283 : vector<128x32xf32>
    %c0_315 = arith.constant 0 : index
    %c1_316 = arith.constant 1 : index
    %c1_317 = arith.constant 1 : index
    %c0_318 = arith.constant 0 : index
    %285 = vector.load %arg17[%c0_315, %c1_316, %c1_317, %c0_318] : memref<2x10x10x32xf32, #tpu.memory_space<vmem>>, vector<2x8x8x32xf32>
    %286 = vector.shape_cast %285 : vector<2x8x8x32xf32> to vector<128x32xf32>
    %287 = arith.truncf %286 : vector<128x32xf32> to vector<128x32xbf16>
    %c4_319 = arith.constant 4 : index
    %c0_320 = arith.constant 0 : index
    %c0_321 = arith.constant 0 : index
    %288 = vector.load %arg6[%c4_319, %c0_320, %c0_321] : memref<9x32x32xbf16, #tpu.memory_space<vmem>>, vector<1x32x32xbf16>
    %289 = vector.shape_cast %288 : vector<1x32x32xbf16> to vector<32x32xbf16>
    %cst_322 = arith.constant dense<0.000000e+00> : vector<128x32xf32>
    %290 = tpu.matmul %287, %289, %cst_322 {dimension_numbers = #tpu.dot_dimension_numbers<[1], [0], [0], [1], [0, 0, 1, 1], [], []>} : vector<128x32xbf16>, vector<32x32xbf16>, vector<128x32xf32> -> vector<128x32xf32>
    %291 = arith.addf %284, %290 : vector<128x32xf32>
    %c0_323 = arith.constant 0 : index
    %c1_324 = arith.constant 1 : index
    %c2_325 = arith.constant 2 : index
    %c0_326 = arith.constant 0 : index
    %292 = vector.load %arg17[%c0_323, %c1_324, %c2_325, %c0_326] : memref<2x10x10x32xf32, #tpu.memory_space<vmem>>, vector<2x8x8x32xf32>
    %293 = vector.shape_cast %292 : vector<2x8x8x32xf32> to vector<128x32xf32>
    %294 = arith.truncf %293 : vector<128x32xf32> to vector<128x32xbf16>
    %c5_327 = arith.constant 5 : index
    %c0_328 = arith.constant 0 : index
    %c0_329 = arith.constant 0 : index
    %295 = vector.load %arg6[%c5_327, %c0_328, %c0_329] : memref<9x32x32xbf16, #tpu.memory_space<vmem>>, vector<1x32x32xbf16>
    %296 = vector.shape_cast %295 : vector<1x32x32xbf16> to vector<32x32xbf16>
    %cst_330 = arith.constant dense<0.000000e+00> : vector<128x32xf32>
    %297 = tpu.matmul %294, %296, %cst_330 {dimension_numbers = #tpu.dot_dimension_numbers<[1], [0], [0], [1], [0, 0, 1, 1], [], []>} : vector<128x32xbf16>, vector<32x32xbf16>, vector<128x32xf32> -> vector<128x32xf32>
    %298 = arith.addf %291, %297 : vector<128x32xf32>
    %c0_331 = arith.constant 0 : index
    %c2_332 = arith.constant 2 : index
    %c0_333 = arith.constant 0 : index
    %c0_334 = arith.constant 0 : index
    %299 = vector.load %arg17[%c0_331, %c2_332, %c0_333, %c0_334] : memref<2x10x10x32xf32, #tpu.memory_space<vmem>>, vector<2x8x8x32xf32>
    %300 = vector.shape_cast %299 : vector<2x8x8x32xf32> to vector<128x32xf32>
    %301 = arith.truncf %300 : vector<128x32xf32> to vector<128x32xbf16>
    %c6_335 = arith.constant 6 : index
    %c0_336 = arith.constant 0 : index
    %c0_337 = arith.constant 0 : index
    %302 = vector.load %arg6[%c6_335, %c0_336, %c0_337] : memref<9x32x32xbf16, #tpu.memory_space<vmem>>, vector<1x32x32xbf16>
    %303 = vector.shape_cast %302 : vector<1x32x32xbf16> to vector<32x32xbf16>
    %cst_338 = arith.constant dense<0.000000e+00> : vector<128x32xf32>
    %304 = tpu.matmul %301, %303, %cst_338 {dimension_numbers = #tpu.dot_dimension_numbers<[1], [0], [0], [1], [0, 0, 1, 1], [], []>} : vector<128x32xbf16>, vector<32x32xbf16>, vector<128x32xf32> -> vector<128x32xf32>
    %305 = arith.addf %298, %304 : vector<128x32xf32>
    %c0_339 = arith.constant 0 : index
    %c2_340 = arith.constant 2 : index
    %c1_341 = arith.constant 1 : index
    %c0_342 = arith.constant 0 : index
    %306 = vector.load %arg17[%c0_339, %c2_340, %c1_341, %c0_342] : memref<2x10x10x32xf32, #tpu.memory_space<vmem>>, vector<2x8x8x32xf32>
    %307 = vector.shape_cast %306 : vector<2x8x8x32xf32> to vector<128x32xf32>
    %308 = arith.truncf %307 : vector<128x32xf32> to vector<128x32xbf16>
    %c7_343 = arith.constant 7 : index
    %c0_344 = arith.constant 0 : index
    %c0_345 = arith.constant 0 : index
    %309 = vector.load %arg6[%c7_343, %c0_344, %c0_345] : memref<9x32x32xbf16, #tpu.memory_space<vmem>>, vector<1x32x32xbf16>
    %310 = vector.shape_cast %309 : vector<1x32x32xbf16> to vector<32x32xbf16>
    %cst_346 = arith.constant dense<0.000000e+00> : vector<128x32xf32>
    %311 = tpu.matmul %308, %310, %cst_346 {dimension_numbers = #tpu.dot_dimension_numbers<[1], [0], [0], [1], [0, 0, 1, 1], [], []>} : vector<128x32xbf16>, vector<32x32xbf16>, vector<128x32xf32> -> vector<128x32xf32>
    %312 = arith.addf %305, %311 : vector<128x32xf32>
    %c0_347 = arith.constant 0 : index
    %c2_348 = arith.constant 2 : index
    %c2_349 = arith.constant 2 : index
    %c0_350 = arith.constant 0 : index
    %313 = vector.load %arg17[%c0_347, %c2_348, %c2_349, %c0_350] : memref<2x10x10x32xf32, #tpu.memory_space<vmem>>, vector<2x8x8x32xf32>
    %314 = vector.shape_cast %313 : vector<2x8x8x32xf32> to vector<128x32xf32>
    %315 = arith.truncf %314 : vector<128x32xf32> to vector<128x32xbf16>
    %c8_351 = arith.constant 8 : index
    %c0_352 = arith.constant 0 : index
    %c0_353 = arith.constant 0 : index
    %316 = vector.load %arg6[%c8_351, %c0_352, %c0_353] : memref<9x32x32xbf16, #tpu.memory_space<vmem>>, vector<1x32x32xbf16>
    %317 = vector.shape_cast %316 : vector<1x32x32xbf16> to vector<32x32xbf16>
    %cst_354 = arith.constant dense<0.000000e+00> : vector<128x32xf32>
    %318 = tpu.matmul %315, %317, %cst_354 {dimension_numbers = #tpu.dot_dimension_numbers<[1], [0], [0], [1], [0, 0, 1, 1], [], []>} : vector<128x32xbf16>, vector<32x32xbf16>, vector<128x32xf32> -> vector<128x32xf32>
    %319 = arith.addf %312, %318 : vector<128x32xf32>
    %c0_355 = arith.constant 0 : index
    %c0_356 = arith.constant 0 : index
    %320 = vector.load %arg7[%c0_355, %c0_356] : memref<1x32xf32, #tpu.memory_space<vmem>>, vector<1x32xf32>
    %321 = vector.broadcast %320 : vector<1x32xf32> to vector<128x32xf32>
    %322 = arith.addf %319, %321 : vector<128x32xf32>
    %cst_357 = arith.constant 0.000000e+00 : f32
    %323 = vector.broadcast %cst_357 : f32 to vector<128x32xf32>
    %324 = arith.maximumf %322, %323 : vector<128x32xf32>
    %325 = vector.shape_cast %324 : vector<128x32xf32> to vector<2x8x8x32xf32>
    %326 = vector.extract_strided_slice %325 {offsets = [0, 2, 2, 0], sizes = [2, 1, 1, 32], strides = [1, 1, 1, 1]} : vector<2x8x8x32xf32> to vector<2x1x1x32xf32>
    %327 = vector.shape_cast %326 : vector<2x1x1x32xf32> to vector<2x32xf32>
    %328 = arith.truncf %327 : vector<2x32xf32> to vector<2x32xbf16>
    %329 = vector.extract_strided_slice %325 {offsets = [0, 2, 5, 0], sizes = [2, 1, 1, 32], strides = [1, 1, 1, 1]} : vector<2x8x8x32xf32> to vector<2x1x1x32xf32>
    %330 = vector.shape_cast %329 : vector<2x1x1x32xf32> to vector<2x32xf32>
    %331 = arith.truncf %330 : vector<2x32xf32> to vector<2x32xbf16>
    %332 = vector.extract_strided_slice %325 {offsets = [0, 5, 2, 0], sizes = [2, 1, 1, 32], strides = [1, 1, 1, 1]} : vector<2x8x8x32xf32> to vector<2x1x1x32xf32>
    %333 = vector.shape_cast %332 : vector<2x1x1x32xf32> to vector<2x32xf32>
    %334 = arith.truncf %333 : vector<2x32xf32> to vector<2x32xbf16>
    %335 = vector.extract_strided_slice %325 {offsets = [0, 5, 5, 0], sizes = [2, 1, 1, 32], strides = [1, 1, 1, 1]} : vector<2x8x8x32xf32> to vector<2x1x1x32xf32>
    %336 = vector.shape_cast %335 : vector<2x1x1x32xf32> to vector<2x32xf32>
    %337 = arith.truncf %336 : vector<2x32xf32> to vector<2x32xbf16>
    %c4_358 = arith.constant 4 : index
    %c0_359 = arith.constant 0 : index
    %c0_360 = arith.constant 0 : index
    %338 = vector.load %arg8[%c4_358, %c0_359, %c0_360] : memref<9x32x32xbf16, #tpu.memory_space<vmem>>, vector<1x32x32xbf16>
    %339 = vector.shape_cast %338 : vector<1x32x32xbf16> to vector<32x32xbf16>
    %cst_361 = arith.constant dense<0.000000e+00> : vector<2x32xf32>
    %340 = tpu.matmul %328, %339, %cst_361 {dimension_numbers = #tpu.dot_dimension_numbers<[1], [0], [0], [1], [0, 0, 1, 1], [], []>} : vector<2x32xbf16>, vector<32x32xbf16>, vector<2x32xf32> -> vector<2x32xf32>
    %c5_362 = arith.constant 5 : index
    %c0_363 = arith.constant 0 : index
    %c0_364 = arith.constant 0 : index
    %341 = vector.load %arg8[%c5_362, %c0_363, %c0_364] : memref<9x32x32xbf16, #tpu.memory_space<vmem>>, vector<1x32x32xbf16>
    %342 = vector.shape_cast %341 : vector<1x32x32xbf16> to vector<32x32xbf16>
    %cst_365 = arith.constant dense<0.000000e+00> : vector<2x32xf32>
    %343 = tpu.matmul %331, %342, %cst_365 {dimension_numbers = #tpu.dot_dimension_numbers<[1], [0], [0], [1], [0, 0, 1, 1], [], []>} : vector<2x32xbf16>, vector<32x32xbf16>, vector<2x32xf32> -> vector<2x32xf32>
    %344 = arith.addf %340, %343 : vector<2x32xf32>
    %c7_366 = arith.constant 7 : index
    %c0_367 = arith.constant 0 : index
    %c0_368 = arith.constant 0 : index
    %345 = vector.load %arg8[%c7_366, %c0_367, %c0_368] : memref<9x32x32xbf16, #tpu.memory_space<vmem>>, vector<1x32x32xbf16>
    %346 = vector.shape_cast %345 : vector<1x32x32xbf16> to vector<32x32xbf16>
    %cst_369 = arith.constant dense<0.000000e+00> : vector<2x32xf32>
    %347 = tpu.matmul %334, %346, %cst_369 {dimension_numbers = #tpu.dot_dimension_numbers<[1], [0], [0], [1], [0, 0, 1, 1], [], []>} : vector<2x32xbf16>, vector<32x32xbf16>, vector<2x32xf32> -> vector<2x32xf32>
    %348 = arith.addf %344, %347 : vector<2x32xf32>
    %c8_370 = arith.constant 8 : index
    %c0_371 = arith.constant 0 : index
    %c0_372 = arith.constant 0 : index
    %349 = vector.load %arg8[%c8_370, %c0_371, %c0_372] : memref<9x32x32xbf16, #tpu.memory_space<vmem>>, vector<1x32x32xbf16>
    %350 = vector.shape_cast %349 : vector<1x32x32xbf16> to vector<32x32xbf16>
    %cst_373 = arith.constant dense<0.000000e+00> : vector<2x32xf32>
    %351 = tpu.matmul %337, %350, %cst_373 {dimension_numbers = #tpu.dot_dimension_numbers<[1], [0], [0], [1], [0, 0, 1, 1], [], []>} : vector<2x32xbf16>, vector<32x32xbf16>, vector<2x32xf32> -> vector<2x32xf32>
    %352 = arith.addf %348, %351 : vector<2x32xf32>
    %c0_374 = arith.constant 0 : index
    %c0_375 = arith.constant 0 : index
    %353 = vector.load %arg9[%c0_374, %c0_375] : memref<1x32xf32, #tpu.memory_space<vmem>>, vector<1x32xf32>
    %354 = vector.broadcast %353 : vector<1x32xf32> to vector<2x32xf32>
    %355 = arith.addf %352, %354 : vector<2x32xf32>
    %356 = arith.truncf %355 : vector<2x32xf32> to vector<2x32xbf16>
    %c0_376 = arith.constant 0 : index
    %c0_377 = arith.constant 0 : index
    %c0_378 = arith.constant 0 : index
    %357 = vector.load %arg10[%c0_376, %c0_377, %c0_378] : memref<4x32x50xbf16, #tpu.memory_space<vmem>>, vector<1x32x50xbf16>
    %358 = vector.shape_cast %357 : vector<1x32x50xbf16> to vector<32x50xbf16>
    %cst_379 = arith.constant dense<0.000000e+00> : vector<2x50xf32>
    %359 = tpu.matmul %356, %358, %cst_379 {dimension_numbers = #tpu.dot_dimension_numbers<[1], [0], [0], [1], [0, 0, 1, 1], [], []>} : vector<2x32xbf16>, vector<32x50xbf16>, vector<2x50xf32> -> vector<2x50xf32>
    %c3_380 = arith.constant 3 : index
    %c0_381 = arith.constant 0 : index
    %c0_382 = arith.constant 0 : index
    %360 = vector.load %arg8[%c3_380, %c0_381, %c0_382] : memref<9x32x32xbf16, #tpu.memory_space<vmem>>, vector<1x32x32xbf16>
    %361 = vector.shape_cast %360 : vector<1x32x32xbf16> to vector<32x32xbf16>
    %cst_383 = arith.constant dense<0.000000e+00> : vector<2x32xf32>
    %362 = tpu.matmul %328, %361, %cst_383 {dimension_numbers = #tpu.dot_dimension_numbers<[1], [0], [0], [1], [0, 0, 1, 1], [], []>} : vector<2x32xbf16>, vector<32x32xbf16>, vector<2x32xf32> -> vector<2x32xf32>
    %c4_384 = arith.constant 4 : index
    %c0_385 = arith.constant 0 : index
    %c0_386 = arith.constant 0 : index
    %363 = vector.load %arg8[%c4_384, %c0_385, %c0_386] : memref<9x32x32xbf16, #tpu.memory_space<vmem>>, vector<1x32x32xbf16>
    %364 = vector.shape_cast %363 : vector<1x32x32xbf16> to vector<32x32xbf16>
    %cst_387 = arith.constant dense<0.000000e+00> : vector<2x32xf32>
    %365 = tpu.matmul %331, %364, %cst_387 {dimension_numbers = #tpu.dot_dimension_numbers<[1], [0], [0], [1], [0, 0, 1, 1], [], []>} : vector<2x32xbf16>, vector<32x32xbf16>, vector<2x32xf32> -> vector<2x32xf32>
    %366 = arith.addf %362, %365 : vector<2x32xf32>
    %c6_388 = arith.constant 6 : index
    %c0_389 = arith.constant 0 : index
    %c0_390 = arith.constant 0 : index
    %367 = vector.load %arg8[%c6_388, %c0_389, %c0_390] : memref<9x32x32xbf16, #tpu.memory_space<vmem>>, vector<1x32x32xbf16>
    %368 = vector.shape_cast %367 : vector<1x32x32xbf16> to vector<32x32xbf16>
    %cst_391 = arith.constant dense<0.000000e+00> : vector<2x32xf32>
    %369 = tpu.matmul %334, %368, %cst_391 {dimension_numbers = #tpu.dot_dimension_numbers<[1], [0], [0], [1], [0, 0, 1, 1], [], []>} : vector<2x32xbf16>, vector<32x32xbf16>, vector<2x32xf32> -> vector<2x32xf32>
    %370 = arith.addf %366, %369 : vector<2x32xf32>
    %c7_392 = arith.constant 7 : index
    %c0_393 = arith.constant 0 : index
    %c0_394 = arith.constant 0 : index
    %371 = vector.load %arg8[%c7_392, %c0_393, %c0_394] : memref<9x32x32xbf16, #tpu.memory_space<vmem>>, vector<1x32x32xbf16>
    %372 = vector.shape_cast %371 : vector<1x32x32xbf16> to vector<32x32xbf16>
    %cst_395 = arith.constant dense<0.000000e+00> : vector<2x32xf32>
    %373 = tpu.matmul %337, %372, %cst_395 {dimension_numbers = #tpu.dot_dimension_numbers<[1], [0], [0], [1], [0, 0, 1, 1], [], []>} : vector<2x32xbf16>, vector<32x32xbf16>, vector<2x32xf32> -> vector<2x32xf32>
    %374 = arith.addf %370, %373 : vector<2x32xf32>
    %c0_396 = arith.constant 0 : index
    %c0_397 = arith.constant 0 : index
    %375 = vector.load %arg9[%c0_396, %c0_397] : memref<1x32xf32, #tpu.memory_space<vmem>>, vector<1x32xf32>
    %376 = vector.broadcast %375 : vector<1x32xf32> to vector<2x32xf32>
    %377 = arith.addf %374, %376 : vector<2x32xf32>
    %378 = arith.truncf %377 : vector<2x32xf32> to vector<2x32xbf16>
    %c1_398 = arith.constant 1 : index
    %c0_399 = arith.constant 0 : index
    %c0_400 = arith.constant 0 : index
    %379 = vector.load %arg10[%c1_398, %c0_399, %c0_400] : memref<4x32x50xbf16, #tpu.memory_space<vmem>>, vector<1x32x50xbf16>
    %380 = vector.shape_cast %379 : vector<1x32x50xbf16> to vector<32x50xbf16>
    %cst_401 = arith.constant dense<0.000000e+00> : vector<2x50xf32>
    %381 = tpu.matmul %378, %380, %cst_401 {dimension_numbers = #tpu.dot_dimension_numbers<[1], [0], [0], [1], [0, 0, 1, 1], [], []>} : vector<2x32xbf16>, vector<32x50xbf16>, vector<2x50xf32> -> vector<2x50xf32>
    %382 = arith.addf %359, %381 : vector<2x50xf32>
    %c1_402 = arith.constant 1 : index
    %c0_403 = arith.constant 0 : index
    %c0_404 = arith.constant 0 : index
    %383 = vector.load %arg8[%c1_402, %c0_403, %c0_404] : memref<9x32x32xbf16, #tpu.memory_space<vmem>>, vector<1x32x32xbf16>
    %384 = vector.shape_cast %383 : vector<1x32x32xbf16> to vector<32x32xbf16>
    %cst_405 = arith.constant dense<0.000000e+00> : vector<2x32xf32>
    %385 = tpu.matmul %328, %384, %cst_405 {dimension_numbers = #tpu.dot_dimension_numbers<[1], [0], [0], [1], [0, 0, 1, 1], [], []>} : vector<2x32xbf16>, vector<32x32xbf16>, vector<2x32xf32> -> vector<2x32xf32>
    %c2_406 = arith.constant 2 : index
    %c0_407 = arith.constant 0 : index
    %c0_408 = arith.constant 0 : index
    %386 = vector.load %arg8[%c2_406, %c0_407, %c0_408] : memref<9x32x32xbf16, #tpu.memory_space<vmem>>, vector<1x32x32xbf16>
    %387 = vector.shape_cast %386 : vector<1x32x32xbf16> to vector<32x32xbf16>
    %cst_409 = arith.constant dense<0.000000e+00> : vector<2x32xf32>
    %388 = tpu.matmul %331, %387, %cst_409 {dimension_numbers = #tpu.dot_dimension_numbers<[1], [0], [0], [1], [0, 0, 1, 1], [], []>} : vector<2x32xbf16>, vector<32x32xbf16>, vector<2x32xf32> -> vector<2x32xf32>
    %389 = arith.addf %385, %388 : vector<2x32xf32>
    %c4_410 = arith.constant 4 : index
    %c0_411 = arith.constant 0 : index
    %c0_412 = arith.constant 0 : index
    %390 = vector.load %arg8[%c4_410, %c0_411, %c0_412] : memref<9x32x32xbf16, #tpu.memory_space<vmem>>, vector<1x32x32xbf16>
    %391 = vector.shape_cast %390 : vector<1x32x32xbf16> to vector<32x32xbf16>
    %cst_413 = arith.constant dense<0.000000e+00> : vector<2x32xf32>
    %392 = tpu.matmul %334, %391, %cst_413 {dimension_numbers = #tpu.dot_dimension_numbers<[1], [0], [0], [1], [0, 0, 1, 1], [], []>} : vector<2x32xbf16>, vector<32x32xbf16>, vector<2x32xf32> -> vector<2x32xf32>
    %393 = arith.addf %389, %392 : vector<2x32xf32>
    %c5_414 = arith.constant 5 : index
    %c0_415 = arith.constant 0 : index
    %c0_416 = arith.constant 0 : index
    %394 = vector.load %arg8[%c5_414, %c0_415, %c0_416] : memref<9x32x32xbf16, #tpu.memory_space<vmem>>, vector<1x32x32xbf16>
    %395 = vector.shape_cast %394 : vector<1x32x32xbf16> to vector<32x32xbf16>
    %cst_417 = arith.constant dense<0.000000e+00> : vector<2x32xf32>
    %396 = tpu.matmul %337, %395, %cst_417 {dimension_numbers = #tpu.dot_dimension_numbers<[1], [0], [0], [1], [0, 0, 1, 1], [], []>} : vector<2x32xbf16>, vector<32x32xbf16>, vector<2x32xf32> -> vector<2x32xf32>
    %397 = arith.addf %393, %396 : vector<2x32xf32>
    %c0_418 = arith.constant 0 : index
    %c0_419 = arith.constant 0 : index
    %398 = vector.load %arg9[%c0_418, %c0_419] : memref<1x32xf32, #tpu.memory_space<vmem>>, vector<1x32xf32>
    %399 = vector.broadcast %398 : vector<1x32xf32> to vector<2x32xf32>
    %400 = arith.addf %397, %399 : vector<2x32xf32>
    %401 = arith.truncf %400 : vector<2x32xf32> to vector<2x32xbf16>
    %c2_420 = arith.constant 2 : index
    %c0_421 = arith.constant 0 : index
    %c0_422 = arith.constant 0 : index
    %402 = vector.load %arg10[%c2_420, %c0_421, %c0_422] : memref<4x32x50xbf16, #tpu.memory_space<vmem>>, vector<1x32x50xbf16>
    %403 = vector.shape_cast %402 : vector<1x32x50xbf16> to vector<32x50xbf16>
    %cst_423 = arith.constant dense<0.000000e+00> : vector<2x50xf32>
    %404 = tpu.matmul %401, %403, %cst_423 {dimension_numbers = #tpu.dot_dimension_numbers<[1], [0], [0], [1], [0, 0, 1, 1], [], []>} : vector<2x32xbf16>, vector<32x50xbf16>, vector<2x50xf32> -> vector<2x50xf32>
    %405 = arith.addf %382, %404 : vector<2x50xf32>
    %c0_424 = arith.constant 0 : index
    %c0_425 = arith.constant 0 : index
    %c0_426 = arith.constant 0 : index
    %406 = vector.load %arg8[%c0_424, %c0_425, %c0_426] : memref<9x32x32xbf16, #tpu.memory_space<vmem>>, vector<1x32x32xbf16>
    %407 = vector.shape_cast %406 : vector<1x32x32xbf16> to vector<32x32xbf16>
    %cst_427 = arith.constant dense<0.000000e+00> : vector<2x32xf32>
    %408 = tpu.matmul %328, %407, %cst_427 {dimension_numbers = #tpu.dot_dimension_numbers<[1], [0], [0], [1], [0, 0, 1, 1], [], []>} : vector<2x32xbf16>, vector<32x32xbf16>, vector<2x32xf32> -> vector<2x32xf32>
    %c1_428 = arith.constant 1 : index
    %c0_429 = arith.constant 0 : index
    %c0_430 = arith.constant 0 : index
    %409 = vector.load %arg8[%c1_428, %c0_429, %c0_430] : memref<9x32x32xbf16, #tpu.memory_space<vmem>>, vector<1x32x32xbf16>
    %410 = vector.shape_cast %409 : vector<1x32x32xbf16> to vector<32x32xbf16>
    %cst_431 = arith.constant dense<0.000000e+00> : vector<2x32xf32>
    %411 = tpu.matmul %331, %410, %cst_431 {dimension_numbers = #tpu.dot_dimension_numbers<[1], [0], [0], [1], [0, 0, 1, 1], [], []>} : vector<2x32xbf16>, vector<32x32xbf16>, vector<2x32xf32> -> vector<2x32xf32>
    %412 = arith.addf %408, %411 : vector<2x32xf32>
    %c3_432 = arith.constant 3 : index
    %c0_433 = arith.constant 0 : index
    %c0_434 = arith.constant 0 : index
    %413 = vector.load %arg8[%c3_432, %c0_433, %c0_434] : memref<9x32x32xbf16, #tpu.memory_space<vmem>>, vector<1x32x32xbf16>
    %414 = vector.shape_cast %413 : vector<1x32x32xbf16> to vector<32x32xbf16>
    %cst_435 = arith.constant dense<0.000000e+00> : vector<2x32xf32>
    %415 = tpu.matmul %334, %414, %cst_435 {dimension_numbers = #tpu.dot_dimension_numbers<[1], [0], [0], [1], [0, 0, 1, 1], [], []>} : vector<2x32xbf16>, vector<32x32xbf16>, vector<2x32xf32> -> vector<2x32xf32>
    %416 = arith.addf %412, %415 : vector<2x32xf32>
    %c4_436 = arith.constant 4 : index
    %c0_437 = arith.constant 0 : index
    %c0_438 = arith.constant 0 : index
    %417 = vector.load %arg8[%c4_436, %c0_437, %c0_438] : memref<9x32x32xbf16, #tpu.memory_space<vmem>>, vector<1x32x32xbf16>
    %418 = vector.shape_cast %417 : vector<1x32x32xbf16> to vector<32x32xbf16>
    %cst_439 = arith.constant dense<0.000000e+00> : vector<2x32xf32>
    %419 = tpu.matmul %337, %418, %cst_439 {dimension_numbers = #tpu.dot_dimension_numbers<[1], [0], [0], [1], [0, 0, 1, 1], [], []>} : vector<2x32xbf16>, vector<32x32xbf16>, vector<2x32xf32> -> vector<2x32xf32>
    %420 = arith.addf %416, %419 : vector<2x32xf32>
    %c0_440 = arith.constant 0 : index
    %c0_441 = arith.constant 0 : index
    %421 = vector.load %arg9[%c0_440, %c0_441] : memref<1x32xf32, #tpu.memory_space<vmem>>, vector<1x32xf32>
    %422 = vector.broadcast %421 : vector<1x32xf32> to vector<2x32xf32>
    %423 = arith.addf %420, %422 : vector<2x32xf32>
    %424 = arith.truncf %423 : vector<2x32xf32> to vector<2x32xbf16>
    %c3_442 = arith.constant 3 : index
    %c0_443 = arith.constant 0 : index
    %c0_444 = arith.constant 0 : index
    %425 = vector.load %arg10[%c3_442, %c0_443, %c0_444] : memref<4x32x50xbf16, #tpu.memory_space<vmem>>, vector<1x32x50xbf16>
    %426 = vector.shape_cast %425 : vector<1x32x50xbf16> to vector<32x50xbf16>
    %cst_445 = arith.constant dense<0.000000e+00> : vector<2x50xf32>
    %427 = tpu.matmul %424, %426, %cst_445 {dimension_numbers = #tpu.dot_dimension_numbers<[1], [0], [0], [1], [0, 0, 1, 1], [], []>} : vector<2x32xbf16>, vector<32x50xbf16>, vector<2x50xf32> -> vector<2x50xf32>
    %428 = arith.addf %405, %427 : vector<2x50xf32>
    %c0_446 = arith.constant 0 : index
    %c0_447 = arith.constant 0 : index
    %429 = vector.load %arg11[%c0_446, %c0_447] : memref<1x50xf32, #tpu.memory_space<vmem>>, vector<1x50xf32>
    %430 = vector.broadcast %429 : vector<1x50xf32> to vector<2x50xf32>
    %431 = arith.addf %428, %430 : vector<2x50xf32>
    %cst_448 = arith.constant 0.000000e+00 : f32
    %432 = vector.broadcast %cst_448 : f32 to vector<2x50xf32>
    %433 = arith.maximumf %431, %432 : vector<2x50xf32>
    %434 = arith.truncf %433 : vector<2x50xf32> to vector<2x50xbf16>
    %c0_449 = arith.constant 0 : index
    %c0_450 = arith.constant 0 : index
    %435 = vector.load %arg12[%c0_449, %c0_450] : memref<50x10xbf16, #tpu.memory_space<vmem>>, vector<50x10xbf16>
    %cst_451 = arith.constant dense<0.000000e+00> : vector<2x10xf32>
    %436 = tpu.matmul %434, %435, %cst_451 {dimension_numbers = #tpu.dot_dimension_numbers<[1], [0], [0], [1], [0, 0, 1, 1], [], []>} : vector<2x50xbf16>, vector<50x10xbf16>, vector<2x10xf32> -> vector<2x10xf32>
    %c0_452 = arith.constant 0 : index
    %c0_453 = arith.constant 0 : index
    %437 = vector.load %arg13[%c0_452, %c0_453] : memref<1x10xf32, #tpu.memory_space<vmem>>, vector<1x10xf32>
    %438 = vector.broadcast %437 : vector<1x10xf32> to vector<2x10xf32>
    %439 = arith.addf %436, %438 : vector<2x10xf32>
    %c0_454 = arith.constant 0 : index
    %c0_455 = arith.constant 0 : index
    %440 = vector.load %arg14[%c0_454, %c0_455] : memref<2x10xf32, #tpu.memory_space<vmem>>, vector<2x10xf32>
    tpu.vector_store %arg14[%c0_454, %c0_455], %439 {strides = array<i32>} : memref<2x10xf32, #tpu.memory_space<vmem>>, vector<2x10xf32>,
    return
  }
  func.func @transform_0(%arg0: i32) -> (i32, i32, i32, i32) {
    %c0_i32 = arith.constant 0 : i32
    %c0_i32_0 = arith.constant 0 : i32
    %c0_i32_1 = arith.constant 0 : i32
    %c0_i32_2 = arith.constant 0 : i32
    return %arg0, %c0_i32, %c0_i32_0, %c0_i32_1 : i32, i32, i32, i32
  }
  func.func @transform_1(%arg0: i32) -> (i32, i32, i32) {
    %c0_i32 = arith.constant 0 : i32
    %c0_i32_0 = arith.constant 0 : i32
    %c0_i32_1 = arith.constant 0 : i32
    %c0_i32_2 = arith.constant 0 : i32
    return %c0_i32, %c0_i32_0, %c0_i32_1 : i32, i32, i32
  }
  func.func @transform_2(%arg0: i32) -> (i32, i32) {
    %c0_i32 = arith.constant 0 : i32
    %c0_i32_0 = arith.constant 0 : i32
    %c0_i32_1 = arith.constant 0 : i32
    return %c0_i32, %c0_i32_0 : i32, i32
  }
  func.func @transform_3(%arg0: i32) -> (i32, i32, i32) {
    %c0_i32 = arith.constant 0 : i32
    %c0_i32_0 = arith.constant 0 : i32
    %c0_i32_1 = arith.constant 0 : i32
    %c0_i32_2 = arith.constant 0 : i32
    return %c0_i32, %c0_i32_0, %c0_i32_1 : i32, i32, i32
  }
  func.func @transform_4(%arg0: i32) -> (i32, i32) {
    %c0_i32 = arith.constant 0 : i32
    %c0_i32_0 = arith.constant 0 : i32
    %c0_i32_1 = arith.constant 0 : i32
    return %c0_i32, %c0_i32_0 : i32, i32
  }
  func.func @transform_5(%arg0: i32) -> (i32, i32, i32) {
    %c0_i32 = arith.constant 0 : i32
    %c0_i32_0 = arith.constant 0 : i32
    %c0_i32_1 = arith.constant 0 : i32
    %c0_i32_2 = arith.constant 0 : i32
    return %c0_i32, %c0_i32_0, %c0_i32_1 : i32, i32, i32
  }
  func.func @transform_6(%arg0: i32) -> (i32, i32) {
    %c0_i32 = arith.constant 0 : i32
    %c0_i32_0 = arith.constant 0 : i32
    %c0_i32_1 = arith.constant 0 : i32
    return %c0_i32, %c0_i32_0 : i32, i32
  }
  func.func @transform_7(%arg0: i32) -> (i32, i32, i32) {
    %c0_i32 = arith.constant 0 : i32
    %c0_i32_0 = arith.constant 0 : i32
    %c0_i32_1 = arith.constant 0 : i32
    %c0_i32_2 = arith.constant 0 : i32
    return %c0_i32, %c0_i32_0, %c0_i32_1 : i32, i32, i32
  }
  func.func @transform_8(%arg0: i32) -> (i32, i32) {
    %c0_i32 = arith.constant 0 : i32
    %c0_i32_0 = arith.constant 0 : i32
    %c0_i32_1 = arith.constant 0 : i32
    return %c0_i32, %c0_i32_0 : i32, i32
  }
  func.func @transform_9(%arg0: i32) -> (i32, i32, i32) {
    %c0_i32 = arith.constant 0 : i32
    %c0_i32_0 = arith.constant 0 : i32
    %c0_i32_1 = arith.constant 0 : i32
    %c0_i32_2 = arith.constant 0 : i32
    return %c0_i32, %c0_i32_0, %c0_i32_1 : i32, i32, i32
  }
  func.func @transform_10(%arg0: i32) -> (i32, i32) {
    %c0_i32 = arith.constant 0 : i32
    %c0_i32_0 = arith.constant 0 : i32
    %c0_i32_1 = arith.constant 0 : i32
    return %c0_i32, %c0_i32_0 : i32, i32
  }
  func.func @transform_11(%arg0: i32) -> (i32, i32) {
    %c0_i32 = arith.constant 0 : i32
    %c0_i32_0 = arith.constant 0 : i32
    %c0_i32_1 = arith.constant 0 : i32
    return %c0_i32, %c0_i32_0 : i32, i32
  }
  func.func @transform_12(%arg0: i32) -> (i32, i32) {
    %c0_i32 = arith.constant 0 : i32
    %c0_i32_0 = arith.constant 0 : i32
    %c0_i32_1 = arith.constant 0 : i32
    return %c0_i32, %c0_i32_0 : i32, i32
  }
  func.func @transform_13(%arg0: i32) -> (i32, i32) {
    %c0_i32 = arith.constant 0 : i32
    %c0_i32_0 = arith.constant 0 : i32
    return %arg0, %c0_i32 : i32, i32
  }
}

</mosaic_0001>

<llo_original>
// kernel: basicnet_forward.1
$region0: #{basicnet_forward.1}
  #allocation0 [shape = 'u32[]', space=smem, size = 0x4, offset = 0x4, fixed_abs, tag = 'smem constant byte address 0x4 - core index']
  #allocation1 [shape = 'u32[144,128]{1,0:T(1,128)}', space=vmem, size = 0x12000, scoped, tag = 'internal scratch']
  #allocation2 [shape = 'f32[2,12,12,3]{3,2,1,0:T(8,128)}', space=vmem, size = 0x30000, scoped, tag = 'scratch operand']
  #allocation3 [shape = 'f32[2,10,10,12]{3,2,1,0:T(8,128)}', space=vmem, size = 0x28000, scoped, tag = 'scratch operand']
  #allocation4 [shape = 'f32[2,10,10,32]{3,2,1,0:T(8,128)}', space=vmem, size = 0x28000, scoped, tag = 'scratch operand']
  %s0 = inlined_call_operand.vmem [shape: f32[2,10,10,3], index: 0, kind: input, shape index: {}]
  %s1 = inlined_call_operand.vmem [shape: bf16[25,3,12], index: 1, kind: input, shape index: {}]
  %s2 = inlined_call_operand.vmem [shape: f32[1,12], index: 2, kind: input, shape index: {}]
  %s3 = inlined_call_operand.vmem [shape: bf16[9,12,32], index: 3, kind: input, shape index: {}]
  %s4 = inlined_call_operand.vmem [shape: f32[1,32], index: 4, kind: input, shape index: {}]
  %s5 = inlined_call_operand.vmem [shape: bf16[9,32,32], index: 5, kind: input, shape index: {}]
  %s6 = inlined_call_operand.vmem [shape: f32[1,32], index: 6, kind: input, shape index: {}]
  %s7 = inlined_call_operand.vmem [shape: bf16[9,32,32], index: 7, kind: input, shape index: {}]
  %s8 = inlined_call_operand.vmem [shape: f32[1,32], index: 8, kind: input, shape index: {}]
  %s9 = inlined_call_operand.vmem [shape: bf16[4,32,50], index: 9, kind: input, shape index: {}]
  %s10 = inlined_call_operand.vmem [shape: f32[1,50], index: 10, kind: input, shape index: {}]
  %s11 = inlined_call_operand.vmem [shape: bf16[50,10], index: 11, kind: input, shape index: {}]
  %s12 = inlined_call_operand.vmem [shape: f32[1,10], index: 12, kind: input, shape index: {}]
  %s13 = inlined_call_operand.hbm [shape: f32[2,10], index: 13, kind: output, shape index: {}]
  %s14 = sld [smem:[#allocation0]]
  $region62: #{basicnet_forward.1} parent=0
    _
  %s16 = ssub.s32 1, %s14
  %s17 = scalar_select 0, %s16, %s14
  $region1: #{basicnet_forward.1} parent=0
    #allocation5 [shape = 'u8[1024]{0}', space=vmem, size = 0x400, scoped, tag = 'output window, operand 0, single buffered']
    #allocation6 [shape = 's32[1]{0}', space=sflag, size = 0x4, scoped, tag = 'scoped memory for basicnet_forward.1']
    %18 = vsyncpa [#allocation6], 0
    // Predicated region
    $region2: #{basicnet_forward.1} parent=1 // pred_check
      _
    $region3: #{basicnet_forward.1} parent=1 // pred_check_branch
      %20 = sbr.rel (0) target = $region5
    $region4: #{basicnet_forward.1} parent=1 // pred_region
      _
    $region5: #{basicnet_forward.1} parent=1 // pred_fallthru
      _
    // Predicated region
    $region6: #{basicnet_forward.1} parent=1 // pred_check
      _
    $region7: #{basicnet_forward.1} parent=1 // pred_check_branch
      %22 = sbr.rel (0) target = $region9
    $region8: #{basicnet_forward.1} parent=1 // pred_region
      _
    $region9: #{basicnet_forward.1} parent=1 // pred_fallthru
      _
    // Predicated region
    $region10: #{basicnet_forward.1} parent=1 // pred_check
      _
    $region11: #{basicnet_forward.1} parent=1 // pred_check_branch
      %24 = sbr.rel (0) target = $region13
    $region12: #{basicnet_forward.1} parent=1 // pred_region
      _
    $region13: #{basicnet_forward.1} parent=1 // pred_fallthru
      _
    // Predicated region
    $region14: #{basicnet_forward.1} parent=1 // pred_check
      _
    $region15: #{basicnet_forward.1} parent=1 // pred_check_branch
      %26 = sbr.rel (0) target = $region17
    $region16: #{basicnet_forward.1} parent=1 // pred_region
      _
    $region17: #{basicnet_forward.1} parent=1 // pred_fallthru
      _
    // Predicated region
    $region18: #{basicnet_forward.1} parent=1 // pred_check
      _
    $region19: #{basicnet_forward.1} parent=1 // pred_check_branch
      %28 = sbr.rel (0) target = $region21
    $region20: #{basicnet_forward.1} parent=1 // pred_region
      _
    $region21: #{basicnet_forward.1} parent=1 // pred_fallthru
      _
    // Predicated region
    $region22: #{basicnet_forward.1} parent=1 // pred_check
      _
    $region23: #{basicnet_forward.1} parent=1 // pred_check_branch
      %30 = sbr.rel (0) target = $region25
    $region24: #{basicnet_forward.1} parent=1 // pred_region
      _
    $region25: #{basicnet_forward.1} parent=1 // pred_fallthru
      _
    // Predicated region
    $region26: #{basicnet_forward.1} parent=1 // pred_check
      _
    $region27: #{basicnet_forward.1} parent=1 // pred_check_branch
      %32 = sbr.rel (0) target = $region29
    $region28: #{basicnet_forward.1} parent=1 // pred_region
      _
    $region29: #{basicnet_forward.1} parent=1 // pred_fallthru
      _
    // Predicated region
    $region30: #{basicnet_forward.1} parent=1 // pred_check
      _
    $region31: #{basicnet_forward.1} parent=1 // pred_check_branch
      %34 = sbr.rel (0) target = $region33
    $region32: #{basicnet_forward.1} parent=1 // pred_region
      _
    $region33: #{basicnet_forward.1} parent=1 // pred_fallthru
      _
    // Predicated region
    $region34: #{basicnet_forward.1} parent=1 // pred_check
      _
    $region35: #{basicnet_forward.1} parent=1 // pred_check_branch
      %36 = sbr.rel (0) target = $region37
    $region36: #{basicnet_forward.1} parent=1 // pred_region
      _
    $region37: #{basicnet_forward.1} parent=1 // pred_fallthru
      _
    // Predicated region
    $region38: #{basicnet_forward.1} parent=1 // pred_check
      _
    $region39: #{basicnet_forward.1} parent=1 // pred_check_branch
      %38 = sbr.rel (0) target = $region41
    $region40: #{basicnet_forward.1} parent=1 // pred_region
      _
    $region41: #{basicnet_forward.1} parent=1 // pred_fallthru
      _
    // Predicated region
    $region42: #{basicnet_forward.1} parent=1 // pred_check
      _
    $region43: #{basicnet_forward.1} parent=1 // pred_check_branch
      %40 = sbr.rel (0) target = $region45
    $region44: #{basicnet_forward.1} parent=1 // pred_region
      _
    $region45: #{basicnet_forward.1} parent=1 // pred_fallthru
      _
    // Predicated region
    $region46: #{basicnet_forward.1} parent=1 // pred_check
      _
    $region47: #{basicnet_forward.1} parent=1 // pred_check_branch
      %42 = sbr.rel (0) target = $region49
    $region48: #{basicnet_forward.1} parent=1 // pred_region
      _
    $region49: #{basicnet_forward.1} parent=1 // pred_fallthru
      _
    // Predicated region
    $region50: #{basicnet_forward.1} parent=1 // pred_check
      _
    $region51: #{basicnet_forward.1} parent=1 // pred_check_branch
      %44 = sbr.rel (0) target = $region53
    $region52: #{basicnet_forward.1} parent=1 // pred_region
      _
    $region53: #{basicnet_forward.1} parent=1 // pred_fallthru
      _
    %vm46 = vcmask 23552
    %47 = vst.msk [vmem:[#allocation2] sm:$0xff] %vm46, 0.0
    %vm48 = vcmask 19456
    %49 = vst.msk [vmem:[#allocation2 + $0x8] sm:$0xf] %vm48, 0.0
    %50 = vst.msk [vmem:[#allocation2 + $0x10] sm:$0xff] %vm46, 0.0
    %51 = vst.msk [vmem:[#allocation2 + $0x18] sm:$0xf] %vm48, 0.0
    %52 = vst.msk [vmem:[#allocation2 + $0x20] sm:$0xff] %vm46, 0.0
    %53 = vst.msk [vmem:[#allocation2 + $0x28] sm:$0xf] %vm48, 0.0
    %54 = vst.msk [vmem:[#allocation2 + $0x30] sm:$0xff] %vm46, 0.0
    %55 = vst.msk [vmem:[#allocation2 + $0x38] sm:$0xf] %vm48, 0.0
    %56 = vst.msk [vmem:[#allocation2 + $0x40] sm:$0xff] %vm46, 0.0
    %57 = vst.msk [vmem:[#allocation2 + $0x48] sm:$0xf] %vm48, 0.0
    %58 = vst.msk [vmem:[#allocation2 + $0x50] sm:$0xff] %vm46, 0.0
    %59 = vst.msk [vmem:[#allocation2 + $0x58] sm:$0xf] %vm48, 0.0
    %60 = vst.msk [vmem:[#allocation2 + $0x60] sm:$0xff] %vm46, 0.0
    %61 = vst.msk [vmem:[#allocation2 + $0x68] sm:$0xf] %vm48, 0.0
    %62 = vst.msk [vmem:[#allocation2 + $0x70] sm:$0xff] %vm46, 0.0
    %63 = vst.msk [vmem:[#allocation2 + $0x78] sm:$0xf] %vm48, 0.0
    %64 = vst.msk [vmem:[#allocation2 + $0x80] sm:$0xff] %vm46, 0.0
    %65 = vst.msk [vmem:[#allocation2 + $0x88] sm:$0xf] %vm48, 0.0
    %66 = vst.msk [vmem:[#allocation2 + $0x90] sm:$0xff] %vm46, 0.0
    %67 = vst.msk [vmem:[#allocation2 + $0x98] sm:$0xf] %vm48, 0.0
    %68 = vst.msk [vmem:[#allocation2 + $0xa0] sm:$0xff] %vm46, 0.0
    %69 = vst.msk [vmem:[#allocation2 + $0xa8] sm:$0xf] %vm48, 0.0
    %70 = vst.msk [vmem:[#allocation2 + $0xb0] sm:$0xff] %vm46, 0.0
    %71 = vst.msk [vmem:[#allocation2 + $0xb8] sm:$0xf] %vm48, 0.0
    %72 = vst.msk [vmem:[#allocation2 + $0xc0] sm:$0xff] %vm46, 0.0
    %73 = vst.msk [vmem:[#allocation2 + $0xc8] sm:$0xf] %vm48, 0.0
    %74 = vst.msk [vmem:[#allocation2 + $0xd0] sm:$0xff] %vm46, 0.0
    %75 = vst.msk [vmem:[#allocation2 + $0xd8] sm:$0xf] %vm48, 0.0
    %76 = vst.msk [vmem:[#allocation2 + $0xe0] sm:$0xff] %vm46, 0.0
    %77 = vst.msk [vmem:[#allocation2 + $0xe8] sm:$0xf] %vm48, 0.0
    %78 = vst.msk [vmem:[#allocation2 + $0xf0] sm:$0xff] %vm46, 0.0
    %79 = vst.msk [vmem:[#allocation2 + $0xf8] sm:$0xf] %vm48, 0.0
    %80 = vst.msk [vmem:[#allocation2 + $0x100] sm:$0xff] %vm46, 0.0
    %81 = vst.msk [vmem:[#allocation2 + $0x108] sm:$0xf] %vm48, 0.0
    %82 = vst.msk [vmem:[#allocation2 + $0x110] sm:$0xff] %vm46, 0.0
    %83 = vst.msk [vmem:[#allocation2 + $0x118] sm:$0xf] %vm48, 0.0
    %84 = vst.msk [vmem:[#allocation2 + $0x120] sm:$0xff] %vm46, 0.0
    %85 = vst.msk [vmem:[#allocation2 + $0x128] sm:$0xf] %vm48, 0.0
    %86 = vst.msk [vmem:[#allocation2 + $0x130] sm:$0xff] %vm46, 0.0
    %87 = vst.msk [vmem:[#allocation2 + $0x138] sm:$0xf] %vm48, 0.0
    %88 = vst.msk [vmem:[#allocation2 + $0x140] sm:$0xff] %vm46, 0.0
    %89 = vst.msk [vmem:[#allocation2 + $0x148] sm:$0xf] %vm48, 0.0
    %90 = vst.msk [vmem:[#allocation2 + $0x150] sm:$0xff] %vm46, 0.0
    %91 = vst.msk [vmem:[#allocation2 + $0x158] sm:$0xf] %vm48, 0.0
    %92 = vst.msk [vmem:[#allocation2 + $0x160] sm:$0xff] %vm46, 0.0
    %93 = vst.msk [vmem:[#allocation2 + $0x168] sm:$0xf] %vm48, 0.0
    %94 = vst.msk [vmem:[#allocation2 + $0x170] sm:$0xff] %vm46, 0.0
    %95 = vst.msk [vmem:[#allocation2 + $0x178] sm:$0xf] %vm48, 0.0
    %v96 = vld [vmem:[%s0] sm:$0xff]
    %v97 = vld [vmem:[%s0 + $0x8] sm:$0x3]
    %v98 = vld [vmem:[%s0 + $0x10] sm:$0xff]
    %v99 = vld [vmem:[%s0 + $0x18] sm:$0x3]
    %v100 = vld [vmem:[%s0 + $0x20] sm:$0xff]
    %v101 = vld [vmem:[%s0 + $0x28] sm:$0x3]
    %v102 = vld [vmem:[%s0 + $0x30] sm:$0xff]
    %v103 = vld [vmem:[%s0 + $0x38] sm:$0x3]
    %v104 = vld [vmem:[%s0 + $0x40] sm:$0xff]
    %v105 = vld [vmem:[%s0 + $0x48] sm:$0x3]
    %v106 = vld [vmem:[%s0 + $0x50] sm:$0xff]
    %v107 = vld [vmem:[%s0 + $0x58] sm:$0x3]
    %v108 = vld [vmem:[%s0 + $0x60] sm:$0xff]
    %v109 = vld [vmem:[%s0 + $0x68] sm:$0x3]
    %v110 = vld [vmem:[%s0 + $0x70] sm:$0xff]
    %v111 = vld [vmem:[%s0 + $0x78] sm:$0x3]
    %v112 = vld [vmem:[%s0 + $0x80] sm:$0xff]
    %v113 = vld [vmem:[%s0 + $0x88] sm:$0x3]
    %v114 = vld [vmem:[%s0 + $0x90] sm:$0xff]
    %v115 = vld [vmem:[%s0 + $0x98] sm:$0x3]
    %v116 = vld [vmem:[%s0 + $0xa0] sm:$0xff]
    %v117 = vld [vmem:[%s0 + $0xa8] sm:$0x3]
    %v118 = vld [vmem:[%s0 + $0xb0] sm:$0xff]
    %v119 = vld [vmem:[%s0 + $0xb8] sm:$0x3]
    %v120 = vld [vmem:[%s0 + $0xc0] sm:$0xff]
    %v121 = vld [vmem:[%s0 + $0xc8] sm:$0x3]
    %v122 = vld [vmem:[%s0 + $0xd0] sm:$0xff]
    %v123 = vld [vmem:[%s0 + $0xd8] sm:$0x3]
    %v124 = vld [vmem:[%s0 + $0xe0] sm:$0xff]
    %v125 = vld [vmem:[%s0 + $0xe8] sm:$0x3]
    %v126 = vld [vmem:[%s0 + $0xf0] sm:$0xff]
    %v127 = vld [vmem:[%s0 + $0xf8] sm:$0x3]
    %v128 = vld [vmem:[%s0 + $0x100] sm:$0xff]
    %v129 = vld [vmem:[%s0 + $0x108] sm:$0x3]
    %v130 = vld [vmem:[%s0 + $0x110] sm:$0xff]
    %v131 = vld [vmem:[%s0 + $0x118] sm:$0x3]
    %v132 = vld [vmem:[%s0 + $0x120] sm:$0xff]
    %v133 = vld [vmem:[%s0 + $0x128] sm:$0x3]
    %v134 = vld [vmem:[%s0 + $0x130] sm:$0xff]
    %v135 = vld [vmem:[%s0 + $0x138] sm:$0x3]
    %s136 = scalar_lea.vmem [#allocation2], 16
    %137 = vst.msk [vmem:[%s136 + $0x1] sm:$0xff] %vm46, %v96
    %vm138 = vcmask 17408
    %139 = vst.msk [vmem:[%s136 + $0x9] sm:$0x3] %vm138, %v97
    %140 = vst.msk [vmem:[%s136 + $0x11] sm:$0xff] %vm46, %v98
    %141 = vst.msk [vmem:[%s136 + $0x19] sm:$0x3] %vm138, %v99
    %142 = vst.msk [vmem:[%s136 + $0x21] sm:$0xff] %vm46, %v100
    %143 = vst.msk [vmem:[%s136 + $0x29] sm:$0x3] %vm138, %v101
    %144 = vst.msk [vmem:[%s136 + $0x31] sm:$0xff] %vm46, %v102
    %145 = vst.msk [vmem:[%s136 + $0x39] sm:$0x3] %vm138, %v103
    %146 = vst.msk [vmem:[%s136 + $0x41] sm:$0xff] %vm46, %v104
    %147 = vst.msk [vmem:[%s136 + $0x49] sm:$0x3] %vm138, %v105
    %148 = vst.msk [vmem:[%s136 + $0x51] sm:$0xff] %vm46, %v106
    %149 = vst.msk [vmem:[%s136 + $0x59] sm:$0x3] %vm138, %v107
    %150 = vst.msk [vmem:[%s136 + $0x61] sm:$0xff] %vm46, %v108
    %151 = vst.msk [vmem:[%s136 + $0x69] sm:$0x3] %vm138, %v109
    %152 = vst.msk [vmem:[%s136 + $0x71] sm:$0xff] %vm46, %v110
    %153 = vst.msk [vmem:[%s136 + $0x79] sm:$0x3] %vm138, %v111
    %154 = vst.msk [vmem:[%s136 + $0x81] sm:$0xff] %vm46, %v112
    %155 = vst.msk [vmem:[%s136 + $0x89] sm:$0x3] %vm138, %v113
    %156 = vst.msk [vmem:[%s136 + $0x91] sm:$0xff] %vm46, %v114
    %157 = vst.msk [vmem:[%s136 + $0x99] sm:$0x3] %vm138, %v115
    %158 = vst.msk [vmem:[%s136 + $0xc1] sm:$0xff] %vm46, %v116
    %159 = vst.msk [vmem:[%s136 + $0xc9] sm:$0x3] %vm138, %v117
    %160 = vst.msk [vmem:[%s136 + $0xd1] sm:$0xff] %vm46, %v118
    %161 = vst.msk [vmem:[%s136 + $0xd9] sm:$0x3] %vm138, %v119
    %162 = vst.msk [vmem:[%s136 + $0xe1] sm:$0xff] %vm46, %v120
    %163 = vst.msk [vmem:[%s136 + $0xe9] sm:$0x3] %vm138, %v121
    %164 = vst.msk [vmem:[%s136 + $0xf1] sm:$0xff] %vm46, %v122
    %165 = vst.msk [vmem:[%s136 + $0xf9] sm:$0x3] %vm138, %v123
    %166 = vst.msk [vmem:[%s136 + $0x101] sm:$0xff] %vm46, %v124
    %167 = vst.msk [vmem:[%s136 + $0x109] sm:$0x3] %vm138, %v125
    %168 = vst.msk [vmem:[%s136 + $0x111] sm:$0xff] %vm46, %v126
    %169 = vst.msk [vmem:[%s136 + $0x119] sm:$0x3] %vm138, %v127
    %170 = vst.msk [vmem:[%s136 + $0x121] sm:$0xff] %vm46, %v128
    %171 = vst.msk [vmem:[%s136 + $0x129] sm:$0x3] %vm138, %v129
    %172 = vst.msk [vmem:[%s136 + $0x131] sm:$0xff] %vm46, %v130
    %173 = vst.msk [vmem:[%s136 + $0x139] sm:$0x3] %vm138, %v131
    %174 = vst.msk [vmem:[%s136 + $0x141] sm:$0xff] %vm46, %v132
    %175 = vst.msk [vmem:[%s136 + $0x149] sm:$0x3] %vm138, %v133
    %176 = vst.msk [vmem:[%s136 + $0x151] sm:$0xff] %vm46, %v134
    %177 = vst.msk [vmem:[%s136 + $0x159] sm:$0x3] %vm138, %v135
    %v178 = vld [vmem:[#allocation2] sm:$0xff]
    %v179 = vld [vmem:[#allocation2 + $0x10] sm:$0xff]
    %v180 = vld [vmem:[#allocation2 + $0x20] sm:$0xff]
    %v181 = vld [vmem:[#allocation2 + $0x30] sm:$0xff]
    %v182 = vld [vmem:[#allocation2 + $0x40] sm:$0xff]
    %v183 = vld [vmem:[#allocation2 + $0x50] sm:$0xff]
    %v184 = vld [vmem:[#allocation2 + $0x60] sm:$0xff]
    %v185 = vld [vmem:[#allocation2 + $0x70] sm:$0xff]
    %v186 = vld [vmem:[#allocation2 + $0xc0] sm:$0xff]
    %v187 = vld [vmem:[#allocation2 + $0xd0] sm:$0xff]
    %v188 = vld [vmem:[#allocation2 + $0xe0] sm:$0xff]
    %v189 = vld [vmem:[#allocation2 + $0xf0] sm:$0xff]
    %v190 = vld [vmem:[#allocation2 + $0x100] sm:$0xff]
    %v191 = vld [vmem:[#allocation2 + $0x110] sm:$0xff]
    %v192 = vld [vmem:[#allocation2 + $0x120] sm:$0xff]
    %v193 = vld [vmem:[#allocation2 + $0x130] sm:$0xff]
    %v194 = vpack.c.bf16 %v179, %v178
    %v195 = vpack.c.bf16 %v181, %v180
    %v196 = vpack.c.bf16 %v183, %v182
    %v197 = vpack.c.bf16 %v185, %v184
    %v198 = vpack.c.bf16 %v187, %v186
    %v199 = vpack.c.bf16 %v189, %v188
    %v200 = vpack.c.bf16 %v191, %v190
    %v201 = vpack.c.bf16 %v193, %v192
    %v202 = vld [vmem:[%s1] sm:$0x3]
    %v203 = vld [vmem:[#allocation2 + $0x1] sm:$0xff]
    %v204 = vld [vmem:[#allocation2 + $0x11] sm:$0xff]
    %v205 = vld [vmem:[#allocation2 + $0x21] sm:$0xff]
    %v206 = vld [vmem:[#allocation2 + $0x31] sm:$0xff]
    %v207 = vld [vmem:[#allocation2 + $0x41] sm:$0xff]
    %v208 = vld [vmem:[#allocation2 + $0x51] sm:$0xff]
    %v209 = vld [vmem:[#allocation2 + $0x61] sm:$0xff]
    %v210 = vld [vmem:[#allocation2 + $0x71] sm:$0xff]
    %v211 = vld [vmem:[#allocation2 + $0xc1] sm:$0xff]
    %v212 = vld [vmem:[#allocation2 + $0xd1] sm:$0xff]
    %v213 = vld [vmem:[#allocation2 + $0xe1] sm:$0xff]
    %v214 = vld [vmem:[#allocation2 + $0xf1] sm:$0xff]
    %v215 = vld [vmem:[#allocation2 + $0x101] sm:$0xff]
    %v216 = vld [vmem:[#allocation2 + $0x111] sm:$0xff]
    %v217 = vld [vmem:[#allocation2 + $0x121] sm:$0xff]
    %v218 = vld [vmem:[#allocation2 + $0x131] sm:$0xff]
    %v219 = vpack.c.bf16 %v204, %v203
    %v220 = vpack.c.bf16 %v206, %v205
    %v221 = vpack.c.bf16 %v208, %v207
    %v222 = vpack.c.bf16 %v210, %v209
    %v223 = vpack.c.bf16 %v212, %v211
    %v224 = vpack.c.bf16 %v214, %v213
    %v225 = vpack.c.bf16 %v216, %v215
    %v226 = vpack.c.bf16 %v218, %v217
    %s227 = scalar_lea.vmem %s1, 2
    %v228 = vld [vmem:[%s227] sm:$0x3]
    %v230 = vsel %vm46, %v219, 0
    %v233 = vsel %vm46, %v220, 0
    %v236 = vsel %vm46, %v221, 0
    %v239 = vsel %vm46, %v222, 0
    %v242 = vsel %vm46, %v223, 0
    %v245 = vsel %vm46, %v224, 0
    %v248 = vsel %vm46, %v225, 0
    %v251 = vsel %vm46, %v226, 0
    %vm253 = vcmask 1040384
    %vm254 = vcmask 1041408
    %v255 = vsel %vm253, 4294967295, 65535
    %v256 = vsel %vm254, %v255, 0
    %v258 = vand.u32 %v228, %v256
    %260 = vmatprep.subr.bf16.mxu0 0
    %261 = vmatpush1.bf16.msra.mxu0 %v258
    %262 = vmatprep.subr.bf16.mxu0 0
    %263 = vmatpush1.bf16.msra.mxu0 0
    %264 = vmatprep.subr.bf16.mxu0 0
    %265 = vmatpush1.bf16.msra.mxu0 0
    %266 = vmatprep.subr.bf16.mxu0 0
    %267 = vmatpush1.bf16.msra.mxu0 0
    %268 = vmatprep.subr.bf16.mxu0 0
    %269 = vmatpush1.bf16.msra.mxu0 0
    %270 = vmatprep.subr.bf16.mxu0 0
    %271 = vmatpush1.bf16.msra.mxu0 0
    %272 = vmatprep.subr.bf16.mxu0 0
    %273 = vmatpush1.bf16.msra.mxu0 0
    %274 = vmatprep.subr.bf16.mxu0 0
    %275 = vmatpush1.bf16.msra.mxu0 0
    %276 = vmatprep.subr.bf16.mxu0 0
    %277 = vmatpush1.bf16.msra.mxu0 0
    %278 = vmatprep.subr.bf16.mxu0 0
    %279 = vmatpush1.bf16.msra.mxu0 0
    %280 = vmatprep.subr.bf16.mxu0 0
    %281 = vmatpush1.bf16.msra.mxu0 0
    %282 = vmatprep.subr.bf16.mxu0 0
    %283 = vmatpush1.bf16.msra.mxu0 0
    %284 = vmatprep.subr.bf16.mxu0 0
    %285 = vmatpush1.bf16.msra.mxu0 0
    %286 = vmatprep.subr.bf16.mxu0 0
    %287 = vmatpush1.bf16.msra.mxu0 0
    %288 = vmatprep.subr.bf16.mxu0 0
    %289 = vmatpush1.bf16.msra.mxu0 0
    %290 = vmatprep.subr.bf16.mxu0 0
    %291 = vmatpush1.bf16.msra.mxu0 0
    %292 = vmatprep.mubr.bf16.mxu0 0
    %293 = vmatmul.mubr.bf16.gmra.mrb[0].mxu0 %v230
    %v294 = vpop.f32.mrb[0].mxu0
    %v295 = vadd.f32 0.0, %v294
    %v296 = vpop.f32.mrb[0].mxu0
    %v297 = vpop.f32.mrb[0].mxu0
    %v298 = vadd.f32 0.0, %v297
    %v299 = vpop.f32.mrb[0].mxu0
    %300 = vmatprep.mubr.bf16.mxu0 0
    %301 = vmatmul.mubr.bf16.gmra.mrb[0].mxu0 %v233
    %v302 = vpop.f32.mrb[0].mxu0
    %v303 = vadd.f32 0.0, %v302
    %v304 = vpop.f32.mrb[0].mxu0
    %v305 = vpop.f32.mrb[0].mxu0
    %v306 = vadd.f32 0.0, %v305
    %v307 = vpop.f32.mrb[0].mxu0
    %308 = vmatprep.mubr.bf16.mxu0 0
    %309 = vmatmul.mubr.bf16.gmra.mrb[0].mxu0 %v236
    %v310 = vpop.f32.mrb[0].mxu0
    %v311 = vadd.f32 0.0, %v310
    %v312 = vpop.f32.mrb[0].mxu0
    %v313 = vpop.f32.mrb[0].mxu0
    %v314 = vadd.f32 0.0, %v313
    %v315 = vpop.f32.mrb[0].mxu0
    %316 = vmatprep.mubr.bf16.mxu0 0
    %317 = vmatmul.mubr.bf16.gmra.mrb[0].mxu0 %v239
    %v318 = vpop.f32.mrb[0].mxu0
    %v319 = vadd.f32 0.0, %v318
    %v320 = vpop.f32.mrb[0].mxu0
    %v321 = vpop.f32.mrb[0].mxu0
    %v322 = vadd.f32 0.0, %v321
    %v323 = vpop.f32.mrb[0].mxu0
    %324 = vmatprep.mubr.bf16.mxu0 0
    %325 = vmatmul.mubr.bf16.gmra.mrb[0].mxu0 %v242
    %v326 = vpop.f32.mrb[0].mxu0
    %v327 = vadd.f32 0.0, %v326
    %v328 = vpop.f32.mrb[0].mxu0
    %v329 = vpop.f32.mrb[0].mxu0
    %v330 = vadd.f32 0.0, %v329
    %v331 = vpop.f32.mrb[0].mxu0
    %332 = vmatprep.mubr.bf16.mxu0 0
    %333 = vmatmul.mubr.bf16.gmra.mrb[0].mxu0 %v245
    %v334 = vpop.f32.mrb[0].mxu0
    %v335 = vadd.f32 0.0, %v334
    %v336 = vpop.f32.mrb[0].mxu0
    %v337 = vpop.f32.mrb[0].mxu0
    %v338 = vadd.f32 0.0, %v337
    %v339 = vpop.f32.mrb[0].mxu0
    %340 = vmatprep.mubr.bf16.mxu0 0
    %341 = vmatmul.mubr.bf16.gmra.mrb[0].mxu0 %v248
    %v342 = vpop.f32.mrb[0].mxu0
    %v343 = vadd.f32 0.0, %v342
    %v344 = vpop.f32.mrb[0].mxu0
    %v345 = vpop.f32.mrb[0].mxu0
    %v346 = vadd.f32 0.0, %v345
    %v347 = vpop.f32.mrb[0].mxu0
    %348 = vmatprep.mubr.bf16.mxu0 0
    %349 = vmatmul.mubr.bf16.gmra.mrb[0].mxu0 %v251
    %v350 = vpop.f32.mrb[0].mxu0
    %v351 = vadd.f32 0.0, %v350
    %v352 = vpop.f32.mrb[0].mxu0
    %v353 = vpop.f32.mrb[0].mxu0
    %v354 = vadd.f32 0.0, %v353
    %v355 = vpop.f32.mrb[0].mxu0
    %356 = vdwg.mxu0
    %v358 = vsel %vm46, %v194, 0
    %v361 = vsel %vm46, %v195, 0
    %v364 = vsel %vm46, %v196, 0
    %v367 = vsel %vm46, %v197, 0
    %v370 = vsel %vm46, %v198, 0
    %v373 = vsel %vm46, %v199, 0
    %v376 = vsel %vm46, %v200, 0
    %v379 = vsel %vm46, %v201, 0
    %v382 = vand.u32 %v202, %v256
    %384 = vmatprep.subr.bf16.mxu0 0
    %385 = vmatpush1.bf16.msra.mxu0 %v382
    %386 = vmatprep.subr.bf16.mxu0 0
    %387 = vmatpush1.bf16.msra.mxu0 0
    %388 = vmatprep.subr.bf16.mxu0 0
    %389 = vmatpush1.bf16.msra.mxu0 0
    %390 = vmatprep.subr.bf16.mxu0 0
    %391 = vmatpush1.bf16.msra.mxu0 0
    %392 = vmatprep.subr.bf16.mxu0 0
    %393 = vmatpush1.bf16.msra.mxu0 0
    %394 = vmatprep.subr.bf16.mxu0 0
    %395 = vmatpush1.bf16.msra.mxu0 0
    %396 = vmatprep.subr.bf16.mxu0 0
    %397 = vmatpush1.bf16.msra.mxu0 0
    %398 = vmatprep.subr.bf16.mxu0 0
    %399 = vmatpush1.bf16.msra.mxu0 0
    %400 = vmatprep.subr.bf16.mxu0 0
    %401 = vmatpush1.bf16.msra.mxu0 0
    %402 = vmatprep.subr.bf16.mxu0 0
    %403 = vmatpush1.bf16.msra.mxu0 0
    %404 = vmatprep.subr.bf16.mxu0 0
    %405 = vmatpush1.bf16.msra.mxu0 0
    %406 = vmatprep.subr.bf16.mxu0 0
    %407 = vmatpush1.bf16.msra.mxu0 0
    %408 = vmatprep.subr.bf16.mxu0 0
    %409 = vmatpush1.bf16.msra.mxu0 0
    %410 = vmatprep.subr.bf16.mxu0 0
    %411 = vmatpush1.bf16.msra.mxu0 0
    %412 = vmatprep.subr.bf16.mxu0 0
    %413 = vmatpush1.bf16.msra.mxu0 0
    %414 = vmatprep.subr.bf16.mxu0 0
    %415 = vmatpush1.bf16.msra.mxu0 0
    %416 = vmatprep.mubr.bf16.mxu0 0
    %417 = vmatmul.mubr.bf16.gmra.mrb[0].mxu0 %v358
    %v418 = vpop.f32.mrb[0].mxu0
    %v419 = vadd.f32 %v295, %v418
    %v420 = vpop.f32.mrb[0].mxu0
    %v421 = vpop.f32.mrb[0].mxu0
    %v422 = vadd.f32 %v298, %v421
    %v423 = vpop.f32.mrb[0].mxu0
    %424 = vmatprep.mubr.bf16.mxu0 0
    %425 = vmatmul.mubr.bf16.gmra.mrb[0].mxu0 %v361
    %v426 = vpop.f32.mrb[0].mxu0
    %v427 = vadd.f32 %v303, %v426
    %v428 = vpop.f32.mrb[0].mxu0
    %v429 = vpop.f32.mrb[0].mxu0
    %v430 = vadd.f32 %v306, %v429
    %v431 = vpop.f32.mrb[0].mxu0
    %432 = vmatprep.mubr.bf16.mxu0 0
    %433 = vmatmul.mubr.bf16.gmra.mrb[0].mxu0 %v364
    %v434 = vpop.f32.mrb[0].mxu0
    %v435 = vadd.f32 %v311, %v434
    %v436 = vpop.f32.mrb[0].mxu0
    %v437 = vpop.f32.mrb[0].mxu0
    %v438 = vadd.f32 %v314, %v437
    %v439 = vpop.f32.mrb[0].mxu0
    %440 = vmatprep.mubr.bf16.mxu0 0
    %441 = vmatmul.mubr.bf16.gmra.mrb[0].mxu0 %v367
    %v442 = vpop.f32.mrb[0].mxu0
    %v443 = vadd.f32 %v319, %v442
    %v444 = vpop.f32.mrb[0].mxu0
    %v445 = vpop.f32.mrb[0].mxu0
    %v446 = vadd.f32 %v322, %v445
    %v447 = vpop.f32.mrb[0].mxu0
    %448 = vmatprep.mubr.bf16.mxu0 0
    %449 = vmatmul.mubr.bf16.gmra.mrb[0].mxu0 %v370
    %v450 = vpop.f32.mrb[0].mxu0
    %v451 = vadd.f32 %v327, %v450
    %v452 = vpop.f32.mrb[0].mxu0
    %v453 = vpop.f32.mrb[0].mxu0
    %v454 = vadd.f32 %v330, %v453
    %v455 = vpop.f32.mrb[0].mxu0
    %456 = vmatprep.mubr.bf16.mxu0 0
    %457 = vmatmul.mubr.bf16.gmra.mrb[0].mxu0 %v373
    %v458 = vpop.f32.mrb[0].mxu0
    %v459 = vadd.f32 %v335, %v458
    %v460 = vpop.f32.mrb[0].mxu0
    %v461 = vpop.f32.mrb[0].mxu0
    %v462 = vadd.f32 %v338, %v461
    %v463 = vpop.f32.mrb[0].mxu0
    %464 = vmatprep.mubr.bf16.mxu0 0
    %465 = vmatmul.mubr.bf16.gmra.mrb[0].mxu0 %v376
    %v466 = vpop.f32.mrb[0].mxu0
    %v467 = vadd.f32 %v343, %v466
    %v468 = vpop.f32.mrb[0].mxu0
    %v469 = vpop.f32.mrb[0].mxu0
    %v470 = vadd.f32 %v346, %v469
    %v471 = vpop.f32.mrb[0].mxu0
    %472 = vmatprep.mubr.bf16.mxu0 0
    %473 = vmatmul.mubr.bf16.gmra.mrb[0].mxu0 %v379
    %v474 = vpop.f32.mrb[0].mxu0
    %v475 = vadd.f32 %v351, %v474
    %v476 = vpop.f32.mrb[0].mxu0
    %v477 = vpop.f32.mrb[0].mxu0
    %v478 = vadd.f32 %v354, %v477
    %v479 = vpop.f32.mrb[0].mxu0
    %480 = vdwg.mxu0
    %v481 = vld [vmem:[#allocation2 + $0x2] sm:$0xff]
    %v482 = vld [vmem:[#allocation2 + $0x12] sm:$0xff]
    %v483 = vld [vmem:[#allocation2 + $0x22] sm:$0xff]
    %v484 = vld [vmem:[#allocation2 + $0x32] sm:$0xff]
    %v485 = vld [vmem:[#allocation2 + $0x42] sm:$0xff]
    %v486 = vld [vmem:[#allocation2 + $0x52] sm:$0xff]
    %v487 = vld [vmem:[#allocation2 + $0x62] sm:$0xff]
    %v488 = vld [vmem:[#allocation2 + $0x72] sm:$0xff]
    %v489 = vld [vmem:[#allocation2 + $0xc2] sm:$0xff]
    %v490 = vld [vmem:[#allocation2 + $0xd2] sm:$0xff]
    %v491 = vld [vmem:[#allocation2 + $0xe2] sm:$0xff]
    %v492 = vld [vmem:[#allocation2 + $0xf2] sm:$0xff]
    %v493 = vld [vmem:[#allocation2 + $0x102] sm:$0xff]
    %v494 = vld [vmem:[#allocation2 + $0x112] sm:$0xff]
    %v495 = vld [vmem:[#allocation2 + $0x122] sm:$0xff]
    %v496 = vld [vmem:[#allocation2 + $0x132] sm:$0xff]
    %v497 = vpack.c.bf16 %v482, %v481
    %v498 = vpack.c.bf16 %v484, %v483
    %v499 = vpack.c.bf16 %v486, %v485
    %v500 = vpack.c.bf16 %v488, %v487
    %v501 = vpack.c.bf16 %v490, %v489
    %v502 = vpack.c.bf16 %v492, %v491
    %v503 = vpack.c.bf16 %v494, %v493
    %v504 = vpack.c.bf16 %v496, %v495
    %s505 = scalar_lea.vmem %s1, 4
    %v506 = vld [vmem:[%s505] sm:$0x3]
    %v508 = vsel %vm46, %v497, 0
    %v511 = vsel %vm46, %v498, 0
    %v514 = vsel %vm46, %v499, 0
    %v517 = vsel %vm46, %v500, 0
    %v520 = vsel %vm46, %v501, 0
    %v523 = vsel %vm46, %v502, 0
    %v526 = vsel %vm46, %v503, 0
    %v529 = vsel %vm46, %v504, 0
    %v532 = vand.u32 %v506, %v256
    %534 = vmatprep.subr.bf16.mxu0 0
    %535 = vmatpush1.bf16.msra.mxu0 %v532
    %536 = vmatprep.subr.bf16.mxu0 0
    %537 = vmatpush1.bf16.msra.mxu0 0
    %538 = vmatprep.subr.bf16.mxu0 0
    %539 = vmatpush1.bf16.msra.mxu0 0
    %540 = vmatprep.subr.bf16.mxu0 0
    %541 = vmatpush1.bf16.msra.mxu0 0
    %542 = vmatprep.subr.bf16.mxu0 0
    %543 = vmatpush1.bf16.msra.mxu0 0
    %544 = vmatprep.subr.bf16.mxu0 0
    %545 = vmatpush1.bf16.msra.mxu0 0
    %546 = vmatprep.subr.bf16.mxu0 0
    %547 = vmatpush1.bf16.msra.mxu0 0
    %548 = vmatprep.subr.bf16.mxu0 0
    %549 = vmatpush1.bf16.msra.mxu0 0
    %550 = vmatprep.subr.bf16.mxu0 0
    %551 = vmatpush1.bf16.msra.mxu0 0
    %552 = vmatprep.subr.bf16.mxu0 0
    %553 = vmatpush1.bf16.msra.mxu0 0
    %554 = vmatprep.subr.bf16.mxu0 0
    %555 = vmatpush1.bf16.msra.mxu0 0
    %556 = vmatprep.subr.bf16.mxu0 0
    %557 = vmatpush1.bf16.msra.mxu0 0
    %558 = vmatprep.subr.bf16.mxu0 0
    %559 = vmatpush1.bf16.msra.mxu0 0
    %560 = vmatprep.subr.bf16.mxu0 0
    %561 = vmatpush1.bf16.msra.mxu0 0
    %562 = vmatprep.subr.bf16.mxu0 0
    %563 = vmatpush1.bf16.msra.mxu0 0
    %564 = vmatprep.subr.bf16.mxu0 0
    %565 = vmatpush1.bf16.msra.mxu0 0
    %566 = vmatprep.mubr.bf16.mxu0 0
    %567 = vmatmul.mubr.bf16.gmra.mrb[0].mxu0 %v508
    %v568 = vpop.f32.mrb[0].mxu0
    %v569 = vadd.f32 0.0, %v568
    %v570 = vpop.f32.mrb[0].mxu0
    %v571 = vpop.f32.mrb[0].mxu0
    %v572 = vadd.f32 0.0, %v571
    %v573 = vpop.f32.mrb[0].mxu0
    %574 = vmatprep.mubr.bf16.mxu0 0
    %575 = vmatmul.mubr.bf16.gmra.mrb[0].mxu0 %v511
    %v576 = vpop.f32.mrb[0].mxu0
    %v577 = vadd.f32 0.0, %v576
    %v578 = vpop.f32.mrb[0].mxu0
    %v579 = vpop.f32.mrb[0].mxu0
    %v580 = vadd.f32 0.0, %v579
    %v581 = vpop.f32.mrb[0].mxu0
    %582 = vmatprep.mubr.bf16.mxu0 0
    %583 = vmatmul.mubr.bf16.gmra.mrb[0].mxu0 %v514
    %v584 = vpop.f32.mrb[0].mxu0
    %v585 = vadd.f32 0.0, %v584
    %v586 = vpop.f32.mrb[0].mxu0
    %v587 = vpop.f32.mrb[0].mxu0
    %v588 = vadd.f32 0.0, %v587
    %v589 = vpop.f32.mrb[0].mxu0
    %590 = vmatprep.mubr.bf16.mxu0 0
    %591 = vmatmul.mubr.bf16.gmra.mrb[0].mxu0 %v517
    %v592 = vpop.f32.mrb[0].mxu0
    %v593 = vadd.f32 0.0, %v592
    %v594 = vpop.f32.mrb[0].mxu0
    %v595 = vpop.f32.mrb[0].mxu0
    %v596 = vadd.f32 0.0, %v595
    %v597 = vpop.f32.mrb[0].mxu0
    %598 = vmatprep.mubr.bf16.mxu0 0
    %599 = vmatmul.mubr.bf16.gmra.mrb[0].mxu0 %v520
    %v600 = vpop.f32.mrb[0].mxu0
    %v601 = vadd.f32 0.0, %v600
    %v602 = vpop.f32.mrb[0].mxu0
    %v603 = vpop.f32.mrb[0].mxu0
    %v604 = vadd.f32 0.0, %v603
    %v605 = vpop.f32.mrb[0].mxu0
    %606 = vmatprep.mubr.bf16.mxu0 0
    %607 = vmatmul.mubr.bf16.gmra.mrb[0].mxu0 %v523
    %v608 = vpop.f32.mrb[0].mxu0
    %v609 = vadd.f32 0.0, %v608
    %v610 = vpop.f32.mrb[0].mxu0
    %v611 = vpop.f32.mrb[0].mxu0
    %v612 = vadd.f32 0.0, %v611
    %v613 = vpop.f32.mrb[0].mxu0
    %614 = vmatprep.mubr.bf16.mxu0 0
    %615 = vmatmul.mubr.bf16.gmra.mrb[0].mxu0 %v526
    %v616 = vpop.f32.mrb[0].mxu0
    %v617 = vadd.f32 0.0, %v616
    %v618 = vpop.f32.mrb[0].mxu0
    %v619 = vpop.f32.mrb[0].mxu0
    %v620 = vadd.f32 0.0, %v619
    %v621 = vpop.f32.mrb[0].mxu0
    %622 = vmatprep.mubr.bf16.mxu0 0
    %623 = vmatmul.mubr.bf16.gmra.mrb[0].mxu0 %v529
    %v624 = vpop.f32.mrb[0].mxu0
    %v625 = vadd.f32 0.0, %v624
    %v626 = vpop.f32.mrb[0].mxu0
    %v627 = vpop.f32.mrb[0].mxu0
    %v628 = vadd.f32 0.0, %v627
    %v629 = vpop.f32.mrb[0].mxu0
    %630 = vdwg.mxu0
    %v631 = vadd.f32 %v419, %v569
    %v632 = vadd.f32 %v422, %v572
    %v633 = vadd.f32 %v427, %v577
    %v634 = vadd.f32 %v430, %v580
    %v635 = vadd.f32 %v435, %v585
    %v636 = vadd.f32 %v438, %v588
    %v637 = vadd.f32 %v443, %v593
    %v638 = vadd.f32 %v446, %v596
    %v639 = vadd.f32 %v451, %v601
    %v640 = vadd.f32 %v454, %v604
    %v641 = vadd.f32 %v459, %v609
    %v642 = vadd.f32 %v462, %v612
    %v643 = vadd.f32 %v467, %v617
    %v644 = vadd.f32 %v470, %v620
    %v645 = vadd.f32 %v475, %v625
    %v646 = vadd.f32 %v478, %v628
    %v647 = vld [vmem:[#allocation2 + $0x3] sm:$0xff]
    %v648 = vld [vmem:[#allocation2 + $0x13] sm:$0xff]
    %v649 = vld [vmem:[#allocation2 + $0x23] sm:$0xff]
    %v650 = vld [vmem:[#allocation2 + $0x33] sm:$0xff]
    %v651 = vld [vmem:[#allocation2 + $0x43] sm:$0xff]
    %v652 = vld [vmem:[#allocation2 + $0x53] sm:$0xff]
    %v653 = vld [vmem:[#allocation2 + $0x63] sm:$0xff]
    %v654 = vld [vmem:[#allocation2 + $0x73] sm:$0xff]
    %v655 = vld [vmem:[#allocation2 + $0xc3] sm:$0xff]
    %v656 = vld [vmem:[#allocation2 + $0xd3] sm:$0xff]
    %v657 = vld [vmem:[#allocation2 + $0xe3] sm:$0xff]
    %v658 = vld [vmem:[#allocation2 + $0xf3] sm:$0xff]
    %v659 = vld [vmem:[#allocation2 + $0x103] sm:$0xff]
    %v660 = vld [vmem:[#allocation2 + $0x113] sm:$0xff]
    %v661 = vld [vmem:[#allocation2 + $0x123] sm:$0xff]
    %v662 = vld [vmem:[#allocation2 + $0x133] sm:$0xff]
    %v663 = vpack.c.bf16 %v648, %v647
    %v664 = vpack.c.bf16 %v650, %v649
    %v665 = vpack.c.bf16 %v652, %v651
    %v666 = vpack.c.bf16 %v654, %v653
    %v667 = vpack.c.bf16 %v656, %v655
    %v668 = vpack.c.bf16 %v658, %v657
    %v669 = vpack.c.bf16 %v660, %v659
    %v670 = vpack.c.bf16 %v662, %v661
    %s671 = scalar_lea.vmem %s1, 6
    %v672 = vld [vmem:[%s671] sm:$0x3]
    %v674 = vsel %vm46, %v663, 0
    %v677 = vsel %vm46, %v664, 0
    %v680 = vsel %vm46, %v665, 0
    %v683 = vsel %vm46, %v666, 0
    %v686 = vsel %vm46, %v667, 0
    %v689 = vsel %vm46, %v668, 0
    %v692 = vsel %vm46, %v669, 0
    %v695 = vsel %vm46, %v670, 0
    %v698 = vand.u32 %v672, %v256
    %700 = vmatprep.subr.bf16.mxu0 0
    %701 = vmatpush1.bf16.msra.mxu0 %v698
    %702 = vmatprep.subr.bf16.mxu0 0
    %703 = vmatpush1.bf16.msra.mxu0 0
    %704 = vmatprep.subr.bf16.mxu0 0
    %705 = vmatpush1.bf16.msra.mxu0 0
    %706 = vmatprep.subr.bf16.mxu0 0
    %707 = vmatpush1.bf16.msra.mxu0 0
    %708 = vmatprep.subr.bf16.mxu0 0
    %709 = vmatpush1.bf16.msra.mxu0 0
    %710 = vmatprep.subr.bf16.mxu0 0
    %711 = vmatpush1.bf16.msra.mxu0 0
    %712 = vmatprep.subr.bf16.mxu0 0
    %713 = vmatpush1.bf16.msra.mxu0 0
    %714 = vmatprep.subr.bf16.mxu0 0
    %715 = vmatpush1.bf16.msra.mxu0 0
    %716 = vmatprep.subr.bf16.mxu0 0
    %717 = vmatpush1.bf16.msra.mxu0 0
    %718 = vmatprep.subr.bf16.mxu0 0
    %719 = vmatpush1.bf16.msra.mxu0 0
    %720 = vmatprep.subr.bf16.mxu0 0
    %721 = vmatpush1.bf16.msra.mxu0 0
    %722 = vmatprep.subr.bf16.mxu0 0
    %723 = vmatpush1.bf16.msra.mxu0 0
    %724 = vmatprep.subr.bf16.mxu0 0
    %725 = vmatpush1.bf16.msra.mxu0 0
    %726 = vmatprep.subr.bf16.mxu0 0
    %727 = vmatpush1.bf16.msra.mxu0 0
    %728 = vmatprep.subr.bf16.mxu0 0
    %729 = vmatpush1.bf16.msra.mxu0 0
    %730 = vmatprep.subr.bf16.mxu0 0
    %731 = vmatpush1.bf16.msra.mxu0 0
    %732 = vmatprep.mubr.bf16.mxu0 0
    %733 = vmatmul.mubr.bf16.gmra.mrb[0].mxu0 %v674
    %v734 = vpop.f32.mrb[0].mxu0
    %v735 = vadd.f32 0.0, %v734
    %v736 = vpop.f32.mrb[0].mxu0
    %v737 = vpop.f32.mrb[0].mxu0
    %v738 = vadd.f32 0.0, %v737
    %v739 = vpop.f32.mrb[0].mxu0
    %740 = vmatprep.mubr.bf16.mxu0 0
    %741 = vmatmul.mubr.bf16.gmra.mrb[0].mxu0 %v677
    %v742 = vpop.f32.mrb[0].mxu0
    %v743 = vadd.f32 0.0, %v742
    %v744 = vpop.f32.mrb[0].mxu0
    %v745 = vpop.f32.mrb[0].mxu0
    %v746 = vadd.f32 0.0, %v745
    %v747 = vpop.f32.mrb[0].mxu0
    %748 = vmatprep.mubr.bf16.mxu0 0
    %749 = vmatmul.mubr.bf16.gmra.mrb[0].mxu0 %v680
    %v750 = vpop.f32.mrb[0].mxu0
    %v751 = vadd.f32 0.0, %v750
    %v752 = vpop.f32.mrb[0].mxu0
    %v753 = vpop.f32.mrb[0].mxu0
    %v754 = vadd.f32 0.0, %v753
    %v755 = vpop.f32.mrb[0].mxu0
    %756 = vmatprep.mubr.bf16.mxu0 0
    %757 = vmatmul.mubr.bf16.gmra.mrb[0].mxu0 %v683
    %v758 = vpop.f32.mrb[0].mxu0
    %v759 = vadd.f32 0.0, %v758
    %v760 = vpop.f32.mrb[0].mxu0
    %v761 = vpop.f32.mrb[0].mxu0
    %v762 = vadd.f32 0.0, %v761
    %v763 = vpop.f32.mrb[0].mxu0
    %764 = vmatprep.mubr.bf16.mxu0 0
    %765 = vmatmul.mubr.bf16.gmra.mrb[0].mxu0 %v686
    %v766 = vpop.f32.mrb[0].mxu0
    %v767 = vadd.f32 0.0, %v766
    %v768 = vpop.f32.mrb[0].mxu0
    %v769 = vpop.f32.mrb[0].mxu0
    %v770 = vadd.f32 0.0, %v769
    %v771 = vpop.f32.mrb[0].mxu0
    %772 = vmatprep.mubr.bf16.mxu0 0
    %773 = vmatmul.mubr.bf16.gmra.mrb[0].mxu0 %v689
    %v774 = vpop.f32.mrb[0].mxu0
    %v775 = vadd.f32 0.0, %v774
    %v776 = vpop.f32.mrb[0].mxu0
    %v777 = vpop.f32.mrb[0].mxu0
    %v778 = vadd.f32 0.0, %v777
    %v779 = vpop.f32.mrb[0].mxu0
    %780 = vmatprep.mubr.bf16.mxu0 0
    %781 = vmatmul.mubr.bf16.gmra.mrb[0].mxu0 %v692
    %v782 = vpop.f32.mrb[0].mxu0
    %v783 = vadd.f32 0.0, %v782
    %v784 = vpop.f32.mrb[0].mxu0
    %v785 = vpop.f32.mrb[0].mxu0
    %v786 = vadd.f32 0.0, %v785
    %v787 = vpop.f32.mrb[0].mxu0
    %788 = vmatprep.mubr.bf16.mxu0 0
    %789 = vmatmul.mubr.bf16.gmra.mrb[0].mxu0 %v695
    %v790 = vpop.f32.mrb[0].mxu0
    %v791 = vadd.f32 0.0, %v790
    %v792 = vpop.f32.mrb[0].mxu0
    %v793 = vpop.f32.mrb[0].mxu0
    %v794 = vadd.f32 0.0, %v793
    %v795 = vpop.f32.mrb[0].mxu0
    %796 = vdwg.mxu0
    %v797 = vadd.f32 %v631, %v735
    %v798 = vadd.f32 %v632, %v738
    %v799 = vadd.f32 %v633, %v743
    %v800 = vadd.f32 %v634, %v746
    %v801 = vadd.f32 %v635, %v751
    %v802 = vadd.f32 %v636, %v754
    %v803 = vadd.f32 %v637, %v759
    %v804 = vadd.f32 %v638, %v762
    %v805 = vadd.f32 %v639, %v767
    %v806 = vadd.f32 %v640, %v770
    %v807 = vadd.f32 %v641, %v775
    %v808 = vadd.f32 %v642, %v778
    %v809 = vadd.f32 %v643, %v783
    %v810 = vadd.f32 %v644, %v786
    %v811 = vadd.f32 %v645, %v791
    %v812 = vadd.f32 %v646, %v794
    %v813 = vld [vmem:[#allocation2 + $0x4] sm:$0xff]
    %v814 = vld [vmem:[#allocation2 + $0x14] sm:$0xff]
    %v815 = vld [vmem:[#allocation2 + $0x24] sm:$0xff]
    %v816 = vld [vmem:[#allocation2 + $0x34] sm:$0xff]
    %v817 = vld [vmem:[#allocation2 + $0x44] sm:$0xff]
    %v818 = vld [vmem:[#allocation2 + $0x54] sm:$0xff]
    %v819 = vld [vmem:[#allocation2 + $0x64] sm:$0xff]
    %v820 = vld [vmem:[#allocation2 + $0x74] sm:$0xff]
    %v821 = vld [vmem:[#allocation2 + $0xc4] sm:$0xff]
    %v822 = vld [vmem:[#allocation2 + $0xd4] sm:$0xff]
    %v823 = vld [vmem:[#allocation2 + $0xe4] sm:$0xff]
    %v824 = vld [vmem:[#allocation2 + $0xf4] sm:$0xff]
    %v825 = vld [vmem:[#allocation2 + $0x104] sm:$0xff]
    %v826 = vld [vmem:[#allocation2 + $0x114] sm:$0xff]
    %v827 = vld [vmem:[#allocation2 + $0x124] sm:$0xff]
    %v828 = vld [vmem:[#allocation2 + $0x134] sm:$0xff]
    %v829 = vpack.c.bf16 %v814, %v813
    %v830 = vpack.c.bf16 %v816, %v815
    %v831 = vpack.c.bf16 %v818, %v817
    %v832 = vpack.c.bf16 %v820, %v819
    %v833 = vpack.c.bf16 %v822, %v821
    %v834 = vpack.c.bf16 %v824, %v823
    %v835 = vpack.c.bf16 %v826, %v825
    %v836 = vpack.c.bf16 %v828, %v827
    %s837 = scalar_lea.vmem %s1, 8
    %v838 = vld [vmem:[%s837] sm:$0x3]
    %v840 = vsel %vm46, %v829, 0
    %v843 = vsel %vm46, %v830, 0
    %v846 = vsel %vm46, %v831, 0
    %v849 = vsel %vm46, %v832, 0
    %v852 = vsel %vm46, %v833, 0
    %v855 = vsel %vm46, %v834, 0
    %v858 = vsel %vm46, %v835, 0
    %v861 = vsel %vm46, %v836, 0
    %v864 = vand.u32 %v838, %v256
    %866 = vmatprep.subr.bf16.mxu0 0
    %867 = vmatpush1.bf16.msra.mxu0 %v864
    %868 = vmatprep.subr.bf16.mxu0 0
    %869 = vmatpush1.bf16.msra.mxu0 0
    %870 = vmatprep.subr.bf16.mxu0 0
    %871 = vmatpush1.bf16.msra.mxu0 0
    %872 = vmatprep.subr.bf16.mxu0 0
    %873 = vmatpush1.bf16.msra.mxu0 0
    %874 = vmatprep.subr.bf16.mxu0 0
    %875 = vmatpush1.bf16.msra.mxu0 0
    %876 = vmatprep.subr.bf16.mxu0 0
    %877 = vmatpush1.bf16.msra.mxu0 0
    %878 = vmatprep.subr.bf16.mxu0 0
    %879 = vmatpush1.bf16.msra.mxu0 0
    %880 = vmatprep.subr.bf16.mxu0 0
    %881 = vmatpush1.bf16.msra.mxu0 0
    %882 = vmatprep.subr.bf16.mxu0 0
    %883 = vmatpush1.bf16.msra.mxu0 0
    %884 = vmatprep.subr.bf16.mxu0 0
    %885 = vmatpush1.bf16.msra.mxu0 0
    %886 = vmatprep.subr.bf16.mxu0 0
    %887 = vmatpush1.bf16.msra.mxu0 0
    %888 = vmatprep.subr.bf16.mxu0 0
    %889 = vmatpush1.bf16.msra.mxu0 0
    %890 = vmatprep.subr.bf16.mxu0 0
    %891 = vmatpush1.bf16.msra.mxu0 0
    %892 = vmatprep.subr.bf16.mxu0 0
    %893 = vmatpush1.bf16.msra.mxu0 0
    %894 = vmatprep.subr.bf16.mxu0 0
    %895 = vmatpush1.bf16.msra.mxu0 0
    %896 = vmatprep.subr.bf16.mxu0 0
    %897 = vmatpush1.bf16.msra.mxu0 0
    %898 = vmatprep.mubr.bf16.mxu0 0
    %899 = vmatmul.mubr.bf16.gmra.mrb[0].mxu0 %v840
    %v900 = vpop.f32.mrb[0].mxu0
    %v901 = vadd.f32 0.0, %v900
    %v902 = vpop.f32.mrb[0].mxu0
    %v903 = vpop.f32.mrb[0].mxu0
    %v904 = vadd.f32 0.0, %v903
    %v905 = vpop.f32.mrb[0].mxu0
    %906 = vmatprep.mubr.bf16.mxu0 0
    %907 = vmatmul.mubr.bf16.gmra.mrb[0].mxu0 %v843
    %v908 = vpop.f32.mrb[0].mxu0
    %v909 = vadd.f32 0.0, %v908
    %v910 = vpop.f32.mrb[0].mxu0
    %v911 = vpop.f32.mrb[0].mxu0
    %v912 = vadd.f32 0.0, %v911
    %v913 = vpop.f32.mrb[0].mxu0
    %914 = vmatprep.mubr.bf16.mxu0 0
    %915 = vmatmul.mubr.bf16.gmra.mrb[0].mxu0 %v846
    %v916 = vpop.f32.mrb[0].mxu0
    %v917 = vadd.f32 0.0, %v916
    %v918 = vpop.f32.mrb[0].mxu0
    %v919 = vpop.f32.mrb[0].mxu0
    %v920 = vadd.f32 0.0, %v919
    %v921 = vpop.f32.mrb[0].mxu0
    %922 = vmatprep.mubr.bf16.mxu0 0
    %923 = vmatmul.mubr.bf16.gmra.mrb[0].mxu0 %v849
    %v924 = vpop.f32.mrb[0].mxu0
    %v925 = vadd.f32 0.0, %v924
    %v926 = vpop.f32.mrb[0].mxu0
    %v927 = vpop.f32.mrb[0].mxu0
    %v928 = vadd.f32 0.0, %v927
    %v929 = vpop.f32.mrb[0].mxu0
    %930 = vmatprep.mubr.bf16.mxu0 0
    %931 = vmatmul.mubr.bf16.gmra.mrb[0].mxu0 %v852
    %v932 = vpop.f32.mrb[0].mxu0
    %v933 = vadd.f32 0.0, %v932
    %v934 = vpop.f32.mrb[0].mxu0
    %v935 = vpop.f32.mrb[0].mxu0
    %v936 = vadd.f32 0.0, %v935
    %v937 = vpop.f32.mrb[0].mxu0
    %938 = vmatprep.mubr.bf16.mxu0 0
    %939 = vmatmul.mubr.bf16.gmra.mrb[0].mxu0 %v855
    %v940 = vpop.f32.mrb[0].mxu0
    %v941 = vadd.f32 0.0, %v940
    %v942 = vpop.f32.mrb[0].mxu0
    %v943 = vpop.f32.mrb[0].mxu0
    %v944 = vadd.f32 0.0, %v943
    %v945 = vpop.f32.mrb[0].mxu0
    %946 = vmatprep.mubr.bf16.mxu0 0
    %947 = vmatmul.mubr.bf16.gmra.mrb[0].mxu0 %v858
    %v948 = vpop.f32.mrb[0].mxu0
    %v949 = vadd.f32 0.0, %v948
    %v950 = vpop.f32.mrb[0].mxu0
    %v951 = vpop.f32.mrb[0].mxu0
    %v952 = vadd.f32 0.0, %v951
    %v953 = vpop.f32.mrb[0].mxu0
    %954 = vmatprep.mubr.bf16.mxu0 0
    %955 = vmatmul.mubr.bf16.gmra.mrb[0].mxu0 %v861
    %v956 = vpop.f32.mrb[0].mxu0
    %v957 = vadd.f32 0.0, %v956
    %v958 = vpop.f32.mrb[0].mxu0
    %v959 = vpop.f32.mrb[0].mxu0
    %v960 = vadd.f32 0.0, %v959
    %v961 = vpop.f32.mrb[0].mxu0
    %962 = vdwg.mxu0
    %v963 = vadd.f32 %v797, %v901
    %v964 = vadd.f32 %v798, %v904
    %v965 = vadd.f32 %v799, %v909
    %v966 = vadd.f32 %v800, %v912
    %v967 = vadd.f32 %v801, %v917
    %v968 = vadd.f32 %v802, %v920
    %v969 = vadd.f32 %v803, %v925
    %v970 = vadd.f32 %v804, %v928
    %v971 = vadd.f32 %v805, %v933
    %v972 = vadd.f32 %v806, %v936
    %v973 = vadd.f32 %v807, %v941
    %v974 = vadd.f32 %v808, %v944
    %v975 = vadd.f32 %v809, %v949
    %v976 = vadd.f32 %v810, %v952
    %v977 = vadd.f32 %v811, %v957
    %v978 = vadd.f32 %v812, %v960
    %v979 = vld [vmem:[%s136] sm:$0xff]
    %v980 = vld [vmem:[%s136 + $0x10] sm:$0xff]
    %v981 = vld [vmem:[%s136 + $0x20] sm:$0xff]
    %v982 = vld [vmem:[%s136 + $0x30] sm:$0xff]
    %v983 = vld [vmem:[%s136 + $0x40] sm:$0xff]
    %v984 = vld [vmem:[%s136 + $0x50] sm:$0xff]
    %v985 = vld [vmem:[%s136 + $0x60] sm:$0xff]
    %v986 = vld [vmem:[%s136 + $0x70] sm:$0xff]
    %v987 = vld [vmem:[%s136 + $0xc0] sm:$0xff]
    %v988 = vld [vmem:[%s136 + $0xd0] sm:$0xff]
    %v989 = vld [vmem:[%s136 + $0xe0] sm:$0xff]
    %v990 = vld [vmem:[%s136 + $0xf0] sm:$0xff]
    %v991 = vld [vmem:[%s136 + $0x100] sm:$0xff]
    %v992 = vld [vmem:[%s136 + $0x110] sm:$0xff]
    %v993 = vld [vmem:[%s136 + $0x120] sm:$0xff]
    %v994 = vld [vmem:[%s136 + $0x130] sm:$0xff]
    %v995 = vpack.c.bf16 %v980, %v979
    %v996 = vpack.c.bf16 %v982, %v981
    %v997 = vpack.c.bf16 %v984, %v983
    %v998 = vpack.c.bf16 %v986, %v985
    %v999 = vpack.c.bf16 %v988, %v987
    %v1000 = vpack.c.bf16 %v990, %v989
    %v1001 = vpack.c.bf16 %v992, %v991
    %v1002 = vpack.c.bf16 %v994, %v993
    %s1003 = scalar_lea.vmem %s1, 10
    %v1004 = vld [vmem:[%s1003] sm:$0x3]
    %v1006 = vsel %vm46, %v995, 0
    %v1009 = vsel %vm46, %v996, 0
    %v1012 = vsel %vm46, %v997, 0
    %v1015 = vsel %vm46, %v998, 0
    %v1018 = vsel %vm46, %v999, 0
    %v1021 = vsel %vm46, %v1000, 0
    %v1024 = vsel %vm46, %v1001, 0
    %v1027 = vsel %vm46, %v1002, 0
    %v1030 = vand.u32 %v1004, %v256
    %1032 = vmatprep.subr.bf16.mxu0 0
    %1033 = vmatpush1.bf16.msra.mxu0 %v1030
    %1034 = vmatprep.subr.bf16.mxu0 0
    %1035 = vmatpush1.bf16.msra.mxu0 0
    %1036 = vmatprep.subr.bf16.mxu0 0
    %1037 = vmatpush1.bf16.msra.mxu0 0
    %1038 = vmatprep.subr.bf16.mxu0 0
    %1039 = vmatpush1.bf16.msra.mxu0 0
    %1040 = vmatprep.subr.bf16.mxu0 0
    %1041 = vmatpush1.bf16.msra.mxu0 0
    %1042 = vmatprep.subr.bf16.mxu0 0
    %1043 = vmatpush1.bf16.msra.mxu0 0
    %1044 = vmatprep.subr.bf16.mxu0 0
    %1045 = vmatpush1.bf16.msra.mxu0 0
    %1046 = vmatprep.subr.bf16.mxu0 0
    %1047 = vmatpush1.bf16.msra.mxu0 0
    %1048 = vmatprep.subr.bf16.mxu0 0
    %1049 = vmatpush1.bf16.msra.mxu0 0
    %1050 = vmatprep.subr.bf16.mxu0 0
    %1051 = vmatpush1.bf16.msra.mxu0 0
    %1052 = vmatprep.subr.bf16.mxu0 0
    %1053 = vmatpush1.bf16.msra.mxu0 0
    %1054 = vmatprep.subr.bf16.mxu0 0
    %1055 = vmatpush1.bf16.msra.mxu0 0
    %1056 = vmatprep.subr.bf16.mxu0 0
    %1057 = vmatpush1.bf16.msra.mxu0 0
    %1058 = vmatprep.subr.bf16.mxu0 0
    %1059 = vmatpush1.bf16.msra.mxu0 0
    %1060 = vmatprep.subr.bf16.mxu0 0
    %1061 = vmatpush1.bf16.msra.mxu0 0
    %1062 = vmatprep.subr.bf16.mxu0 0
    %1063 = vmatpush1.bf16.msra.mxu0 0
    %1064 = vmatprep.mubr.bf16.mxu0 0
    %1065 = vmatmul.mubr.bf16.gmra.mrb[0].mxu0 %v1006
    %v1066 = vpop.f32.mrb[0].mxu0
    %v1067 = vadd.f32 0.0, %v1066
    %v1068 = vpop.f32.mrb[0].mxu0
    %v1069 = vpop.f32.mrb[0].mxu0
    %v1070 = vadd.f32 0.0, %v1069
    %v1071 = vpop.f32.mrb[0].mxu0
    %1072 = vmatprep.mubr.bf16.mxu0 0
    %1073 = vmatmul.mubr.bf16.gmra.mrb[0].mxu0 %v1009
    %v1074 = vpop.f32.mrb[0].mxu0
    %v1075 = vadd.f32 0.0, %v1074
    %v1076 = vpop.f32.mrb[0].mxu0
    %v1077 = vpop.f32.mrb[0].mxu0
    %v1078 = vadd.f32 0.0, %v1077
    %v1079 = vpop.f32.mrb[0].mxu0
    %1080 = vmatprep.mubr.bf16.mxu0 0
    %1081 = vmatmul.mubr.bf16.gmra.mrb[0].mxu0 %v1012
    %v1082 = vpop.f32.mrb[0].mxu0
    %v1083 = vadd.f32 0.0, %v1082
    %v1084 = vpop.f32.mrb[0].mxu0
    %v1085 = vpop.f32.mrb[0].mxu0
    %v1086 = vadd.f32 0.0, %v1085
    %v1087 = vpop.f32.mrb[0].mxu0
    %1088 = vmatprep.mubr.bf16.mxu0 0
    %1089 = vmatmul.mubr.bf16.gmra.mrb[0].mxu0 %v1015
    %v1090 = vpop.f32.mrb[0].mxu0
    %v1091 = vadd.f32 0.0, %v1090
    %v1092 = vpop.f32.mrb[0].mxu0
    %v1093 = vpop.f32.mrb[0].mxu0
    %v1094 = vadd.f32 0.0, %v1093
    %v1095 = vpop.f32.mrb[0].mxu0
    %1096 = vmatprep.mubr.bf16.mxu0 0
    %1097 = vmatmul.mubr.bf16.gmra.mrb[0].mxu0 %v1018
    %v1098 = vpop.f32.mrb[0].mxu0
    %v1099 = vadd.f32 0.0, %v1098
    %v1100 = vpop.f32.mrb[0].mxu0
    %v1101 = vpop.f32.mrb[0].mxu0
    %v1102 = vadd.f32 0.0, %v1101
    %v1103 = vpop.f32.mrb[0].mxu0
    %1104 = vmatprep.mubr.bf16.mxu0 0
    %1105 = vmatmul.mubr.bf16.gmra.mrb[0].mxu0 %v1021
    %v1106 = vpop.f32.mrb[0].mxu0
    %v1107 = vadd.f32 0.0, %v1106
    %v1108 = vpop.f32.mrb[0].mxu0
    %v1109 = vpop.f32.mrb[0].mxu0
    %v1110 = vadd.f32 0.0, %v1109
    %v1111 = vpop.f32.mrb[0].mxu0
    %1112 = vmatprep.mubr.bf16.mxu0 0
    %1113 = vmatmul.mubr.bf16.gmra.mrb[0].mxu0 %v1024
    %v1114 = vpop.f32.mrb[0].mxu0
    %v1115 = vadd.f32 0.0, %v1114
    %v1116 = vpop.f32.mrb[0].mxu0
    %v1117 = vpop.f32.mrb[0].mxu0
    %v1118 = vadd.f32 0.0, %v1117
    %v1119 = vpop.f32.mrb[0].mxu0
    %1120 = vmatprep.mubr.bf16.mxu0 0
    %1121 = vmatmul.mubr.bf16.gmra.mrb[0].mxu0 %v1027
    %v1122 = vpop.f32.mrb[0].mxu0
    %v1123 = vadd.f32 0.0, %v1122
    %v1124 = vpop.f32.mrb[0].mxu0
    %v1125 = vpop.f32.mrb[0].mxu0
    %v1126 = vadd.f32 0.0, %v1125
    %v1127 = vpop.f32.mrb[0].mxu0
    %1128 = vdwg.mxu0
    %v1129 = vadd.f32 %v963, %v1067
    %v1130 = vadd.f32 %v964, %v1070
    %v1131 = vadd.f32 %v965, %v1075
    %v1132 = vadd.f32 %v966, %v1078
    %v1133 = vadd.f32 %v967, %v1083
    %v1134 = vadd.f32 %v968, %v1086
    %v1135 = vadd.f32 %v969, %v1091
    %v1136 = vadd.f32 %v970, %v1094
    %v1137 = vadd.f32 %v971, %v1099
    %v1138 = vadd.f32 %v972, %v1102
    %v1139 = vadd.f32 %v973, %v1107
    %v1140 = vadd.f32 %v974, %v1110
    %v1141 = vadd.f32 %v975, %v1115
    %v1142 = vadd.f32 %v976, %v1118
    %v1143 = vadd.f32 %v977, %v1123
    %v1144 = vadd.f32 %v978, %v1126
    %v1145 = vld [vmem:[%s136 + $0x1] sm:$0xff]
    %v1146 = vld [vmem:[%s136 + $0x11] sm:$0xff]
    %v1147 = vld [vmem:[%s136 + $0x21] sm:$0xff]
    %v1148 = vld [vmem:[%s136 + $0x31] sm:$0xff]
    %v1149 = vld [vmem:[%s136 + $0x41] sm:$0xff]
    %v1150 = vld [vmem:[%s136 + $0x51] sm:$0xff]
    %v1151 = vld [vmem:[%s136 + $0x61] sm:$0xff]
    %v1152 = vld [vmem:[%s136 + $0x71] sm:$0xff]
    %v1153 = vld [vmem:[%s136 + $0xc1] sm:$0xff]
    %v1154 = vld [vmem:[%s136 + $0xd1] sm:$0xff]
    %v1155 = vld [vmem:[%s136 + $0xe1] sm:$0xff]
    %v1156 = vld [vmem:[%s136 + $0xf1] sm:$0xff]
    %v1157 = vld [vmem:[%s136 + $0x101] sm:$0xff]
    %v1158 = vld [vmem:[%s136 + $0x111] sm:$0xff]
    %v1159 = vld [vmem:[%s136 + $0x121] sm:$0xff]
    %v1160 = vld [vmem:[%s136 + $0x131] sm:$0xff]
    %v1161 = vpack.c.bf16 %v1146, %v1145
    %v1162 = vpack.c.bf16 %v1148, %v1147
    %v1163 = vpack.c.bf16 %v1150, %v1149
    %v1164 = vpack.c.bf16 %v1152, %v1151
    %v1165 = vpack.c.bf16 %v1154, %v1153
    %v1166 = vpack.c.bf16 %v1156, %v1155
    %v1167 = vpack.c.bf16 %v1158, %v1157
    %v1168 = vpack.c.bf16 %v1160, %v1159
    %s1169 = scalar_lea.vmem %s1, 12
    %v1170 = vld [vmem:[%s1169] sm:$0x3]
    %v1172 = vsel %vm46, %v1161, 0
    %v1175 = vsel %vm46, %v1162, 0
    %v1178 = vsel %vm46, %v1163, 0
    %v1181 = vsel %vm46, %v1164, 0
    %v1184 = vsel %vm46, %v1165, 0
    %v1187 = vsel %vm46, %v1166, 0
    %v1190 = vsel %vm46, %v1167, 0
    %v1193 = vsel %vm46, %v1168, 0
    %v1196 = vand.u32 %v1170, %v256
    %1198 = vmatprep.subr.bf16.mxu0 0
    %1199 = vmatpush1.bf16.msra.mxu0 %v1196
    %1200 = vmatprep.subr.bf16.mxu0 0
    %1201 = vmatpush1.bf16.msra.mxu0 0
    %1202 = vmatprep.subr.bf16.mxu0 0
    %1203 = vmatpush1.bf16.msra.mxu0 0
    %1204 = vmatprep.subr.bf16.mxu0 0
    %1205 = vmatpush1.bf16.msra.mxu0 0
    %1206 = vmatprep.subr.bf16.mxu0 0
    %1207 = vmatpush1.bf16.msra.mxu0 0
    %1208 = vmatprep.subr.bf16.mxu0 0
    %1209 = vmatpush1.bf16.msra.mxu0 0
    %1210 = vmatprep.subr.bf16.mxu0 0
    %1211 = vmatpush1.bf16.msra.mxu0 0
    %1212 = vmatprep.subr.bf16.mxu0 0
    %1213 = vmatpush1.bf16.msra.mxu0 0
    %1214 = vmatprep.subr.bf16.mxu0 0
    %1215 = vmatpush1.bf16.msra.mxu0 0
    %1216 = vmatprep.subr.bf16.mxu0 0
    %1217 = vmatpush1.bf16.msra.mxu0 0
    %1218 = vmatprep.subr.bf16.mxu0 0
    %1219 = vmatpush1.bf16.msra.mxu0 0
    %1220 = vmatprep.subr.bf16.mxu0 0
    %1221 = vmatpush1.bf16.msra.mxu0 0
    %1222 = vmatprep.subr.bf16.mxu0 0
    %1223 = vmatpush1.bf16.msra.mxu0 0
    %1224 = vmatprep.subr.bf16.mxu0 0
    %1225 = vmatpush1.bf16.msra.mxu0 0
    %1226 = vmatprep.subr.bf16.mxu0 0
    %1227 = vmatpush1.bf16.msra.mxu0 0
    %1228 = vmatprep.subr.bf16.mxu0 0
    %1229 = vmatpush1.bf16.msra.mxu0 0
    %1230 = vmatprep.mubr.bf16.mxu0 0
    %1231 = vmatmul.mubr.bf16.gmra.mrb[0].mxu0 %v1172
    %v1232 = vpop.f32.mrb[0].mxu0
    %v1233 = vadd.f32 0.0, %v1232
    %v1234 = vpop.f32.mrb[0].mxu0
    %v1235 = vpop.f32.mrb[0].mxu0
    %v1236 = vadd.f32 0.0, %v1235
    %v1237 = vpop.f32.mrb[0].mxu0
    %1238 = vmatprep.mubr.bf16.mxu0 0
    %1239 = vmatmul.mubr.bf16.gmra.mrb[0].mxu0 %v1175
    %v1240 = vpop.f32.mrb[0].mxu0
    %v1241 = vadd.f32 0.0, %v1240
    %v1242 = vpop.f32.mrb[0].mxu0
    %v1243 = vpop.f32.mrb[0].mxu0
    %v1244 = vadd.f32 0.0, %v1243
    %v1245 = vpop.f32.mrb[0].mxu0
    %1246 = vmatprep.mubr.bf16.mxu0 0
    %1247 = vmatmul.mubr.bf16.gmra.mrb[0].mxu0 %v1178
    %v1248 = vpop.f32.mrb[0].mxu0
    %v1249 = vadd.f32 0.0, %v1248
    %v1250 = vpop.f32.mrb[0].mxu0
    %v1251 = vpop.f32.mrb[0].mxu0
    %v1252 = vadd.f32 0.0, %v1251
    %v1253 = vpop.f32.mrb[0].mxu0
    %1254 = vmatprep.mubr.bf16.mxu0 0
    %1255 = vmatmul.mubr.bf16.gmra.mrb[0].mxu0 %v1181
    %v1256 = vpop.f32.mrb[0].mxu0
    %v1257 = vadd.f32 0.0, %v1256
    %v1258 = vpop.f32.mrb[0].mxu0
    %v1259 = vpop.f32.mrb[0].mxu0
    %v1260 = vadd.f32 0.0, %v1259
    %v1261 = vpop.f32.mrb[0].mxu0
    %1262 = vmatprep.mubr.bf16.mxu0 0
    %1263 = vmatmul.mubr.bf16.gmra.mrb[0].mxu0 %v1184
    %v1264 = vpop.f32.mrb[0].mxu0
    %v1265 = vadd.f32 0.0, %v1264
    %v1266 = vpop.f32.mrb[0].mxu0
    %v1267 = vpop.f32.mrb[0].mxu0
    %v1268 = vadd.f32 0.0, %v1267
    %v1269 = vpop.f32.mrb[0].mxu0
    %1270 = vmatprep.mubr.bf16.mxu0 0
    %1271 = vmatmul.mubr.bf16.gmra.mrb[0].mxu0 %v1187
    %v1272 = vpop.f32.mrb[0].mxu0
    %v1273 = vadd.f32 0.0, %v1272
    %v1274 = vpop.f32.mrb[0].mxu0
    %v1275 = vpop.f32.mrb[0].mxu0
    %v1276 = vadd.f32 0.0, %v1275
    %v1277 = vpop.f32.mrb[0].mxu0
    %1278 = vmatprep.mubr.bf16.mxu0 0
    %1279 = vmatmul.mubr.bf16.gmra.mrb[0].mxu0 %v1190
    %v1280 = vpop.f32.mrb[0].mxu0
    %v1281 = vadd.f32 0.0, %v1280
    %v1282 = vpop.f32.mrb[0].mxu0
    %v1283 = vpop.f32.mrb[0].mxu0
    %v1284 = vadd.f32 0.0, %v1283
    %v1285 = vpop.f32.mrb[0].mxu0
    %1286 = vmatprep.mubr.bf16.mxu0 0
    %1287 = vmatmul.mubr.bf16.gmra.mrb[0].mxu0 %v1193
    %v1288 = vpop.f32.mrb[0].mxu0
    %v1289 = vadd.f32 0.0, %v1288
    %v1290 = vpop.f32.mrb[0].mxu0
    %v1291 = vpop.f32.mrb[0].mxu0
    %v1292 = vadd.f32 0.0, %v1291
    %v1293 = vpop.f32.mrb[0].mxu0
    %1294 = vdwg.mxu0
    %v1295 = vadd.f32 %v1129, %v1233
    %v1296 = vadd.f32 %v1130, %v1236
    %v1297 = vadd.f32 %v1131, %v1241
    %v1298 = vadd.f32 %v1132, %v1244
    %v1299 = vadd.f32 %v1133, %v1249
    %v1300 = vadd.f32 %v1134, %v1252
    %v1301 = vadd.f32 %v1135, %v1257
    %v1302 = vadd.f32 %v1136, %v1260
    %v1303 = vadd.f32 %v1137, %v1265
    %v1304 = vadd.f32 %v1138, %v1268
    %v1305 = vadd.f32 %v1139, %v1273
    %v1306 = vadd.f32 %v1140, %v1276
    %v1307 = vadd.f32 %v1141, %v1281
    %v1308 = vadd.f32 %v1142, %v1284
    %v1309 = vadd.f32 %v1143, %v1289
    %v1310 = vadd.f32 %v1144, %v1292
    %v1311 = vld [vmem:[%s136 + $0x2] sm:$0xff]
    %v1312 = vld [vmem:[%s136 + $0x12] sm:$0xff]
    %v1313 = vld [vmem:[%s136 + $0x22] sm:$0xff]
    %v1314 = vld [vmem:[%s136 + $0x32] sm:$0xff]
    %v1315 = vld [vmem:[%s136 + $0x42] sm:$0xff]
    %v1316 = vld [vmem:[%s136 + $0x52] sm:$0xff]
    %v1317 = vld [vmem:[%s136 + $0x62] sm:$0xff]
    %v1318 = vld [vmem:[%s136 + $0x72] sm:$0xff]
    %v1319 = vld [vmem:[%s136 + $0xc2] sm:$0xff]
    %v1320 = vld [vmem:[%s136 + $0xd2] sm:$0xff]
    %v1321 = vld [vmem:[%s136 + $0xe2] sm:$0xff]
    %v1322 = vld [vmem:[%s136 + $0xf2] sm:$0xff]
    %v1323 = vld [vmem:[%s136 + $0x102] sm:$0xff]
    %v1324 = vld [vmem:[%s136 + $0x112] sm:$0xff]
    %v1325 = vld [vmem:[%s136 + $0x122] sm:$0xff]
    %v1326 = vld [vmem:[%s136 + $0x132] sm:$0xff]
    %v1327 = vpack.c.bf16 %v1312, %v1311
    %v1328 = vpack.c.bf16 %v1314, %v1313
    %v1329 = vpack.c.bf16 %v1316, %v1315
    %v1330 = vpack.c.bf16 %v1318, %v1317
    %v1331 = vpack.c.bf16 %v1320, %v1319
    %v1332 = vpack.c.bf16 %v1322, %v1321
    %v1333 = vpack.c.bf16 %v1324, %v1323
    %v1334 = vpack.c.bf16 %v1326, %v1325
    %s1335 = scalar_lea.vmem %s1, 14
    %v1336 = vld [vmem:[%s1335] sm:$0x3]
    %v1338 = vsel %vm46, %v1327, 0
    %v1341 = vsel %vm46, %v1328, 0
    %v1344 = vsel %vm46, %v1329, 0
    %v1347 = vsel %vm46, %v1330, 0
    %v1350 = vsel %vm46, %v1331, 0
    %v1353 = vsel %vm46, %v1332, 0
    %v1356 = vsel %vm46, %v1333, 0
    %v1359 = vsel %vm46, %v1334, 0
    %v1362 = vand.u32 %v1336, %v256
    %1364 = vmatprep.subr.bf16.mxu0 0
    %1365 = vmatpush1.bf16.msra.mxu0 %v1362
    %1366 = vmatprep.subr.bf16.mxu0 0
    %1367 = vmatpush1.bf16.msra.mxu0 0
    %1368 = vmatprep.subr.bf16.mxu0 0
    %1369 = vmatpush1.bf16.msra.mxu0 0
    %1370 = vmatprep.subr.bf16.mxu0 0
    %1371 = vmatpush1.bf16.msra.mxu0 0
    %1372 = vmatprep.subr.bf16.mxu0 0
    %1373 = vmatpush1.bf16.msra.mxu0 0
    %1374 = vmatprep.subr.bf16.mxu0 0
    %1375 = vmatpush1.bf16.msra.mxu0 0
    %1376 = vmatprep.subr.bf16.mxu0 0
    %1377 = vmatpush1.bf16.msra.mxu0 0
    %1378 = vmatprep.subr.bf16.mxu0 0
    %1379 = vmatpush1.bf16.msra.mxu0 0
    %1380 = vmatprep.subr.bf16.mxu0 0
    %1381 = vmatpush1.bf16.msra.mxu0 0
    %1382 = vmatprep.subr.bf16.mxu0 0
    %1383 = vmatpush1.bf16.msra.mxu0 0
    %1384 = vmatprep.subr.bf16.mxu0 0
    %1385 = vmatpush1.bf16.msra.mxu0 0
    %1386 = vmatprep.subr.bf16.mxu0 0
    %1387 = vmatpush1.bf16.msra.mxu0 0
    %1388 = vmatprep.subr.bf16.mxu0 0
    %1389 = vmatpush1.bf16.msra.mxu0 0
    %1390 = vmatprep.subr.bf16.mxu0 0
    %1391 = vmatpush1.bf16.msra.mxu0 0
    %1392 = vmatprep.subr.bf16.mxu0 0
    %1393 = vmatpush1.bf16.msra.mxu0 0
    %1394 = vmatprep.subr.bf16.mxu0 0
    %1395 = vmatpush1.bf16.msra.mxu0 0
    %1396 = vmatprep.mubr.bf16.mxu0 0
    %1397 = vmatmul.mubr.bf16.gmra.mrb[0].mxu0 %v1338
    %v1398 = vpop.f32.mrb[0].mxu0
    %v1399 = vadd.f32 0.0, %v1398
    %v1400 = vpop.f32.mrb[0].mxu0
    %v1401 = vpop.f32.mrb[0].mxu0
    %v1402 = vadd.f32 0.0, %v1401
    %v1403 = vpop.f32.mrb[0].mxu0
    %1404 = vmatprep.mubr.bf16.mxu0 0
    %1405 = vmatmul.mubr.bf16.gmra.mrb[0].mxu0 %v1341
    %v1406 = vpop.f32.mrb[0].mxu0
    %v1407 = vadd.f32 0.0, %v1406
    %v1408 = vpop.f32.mrb[0].mxu0
    %v1409 = vpop.f32.mrb[0].mxu0
    %v1410 = vadd.f32 0.0, %v1409
    %v1411 = vpop.f32.mrb[0].mxu0
    %1412 = vmatprep.mubr.bf16.mxu0 0
    %1413 = vmatmul.mubr.bf16.gmra.mrb[0].mxu0 %v1344
    %v1414 = vpop.f32.mrb[0].mxu0
    %v1415 = vadd.f32 0.0, %v1414
    %v1416 = vpop.f32.mrb[0].mxu0
    %v1417 = vpop.f32.mrb[0].mxu0
    %v1418 = vadd.f32 0.0, %v1417
    %v1419 = vpop.f32.mrb[0].mxu0
    %1420 = vmatprep.mubr.bf16.mxu0 0
    %1421 = vmatmul.mubr.bf16.gmra.mrb[0].mxu0 %v1347
    %v1422 = vpop.f32.mrb[0].mxu0
    %v1423 = vadd.f32 0.0, %v1422
    %v1424 = vpop.f32.mrb[0].mxu0
    %v1425 = vpop.f32.mrb[0].mxu0
    %v1426 = vadd.f32 0.0, %v1425
    %v1427 = vpop.f32.mrb[0].mxu0
    %1428 = vmatprep.mubr.bf16.mxu0 0
    %1429 = vmatmul.mubr.bf16.gmra.mrb[0].mxu0 %v1350
    %v1430 = vpop.f32.mrb[0].mxu0
    %v1431 = vadd.f32 0.0, %v1430
    %v1432 = vpop.f32.mrb[0].mxu0
    %v1433 = vpop.f32.mrb[0].mxu0
    %v1434 = vadd.f32 0.0, %v1433
    %v1435 = vpop.f32.mrb[0].mxu0
    %1436 = vmatprep.mubr.bf16.mxu0 0
    %1437 = vmatmul.mubr.bf16.gmra.mrb[0].mxu0 %v1353
    %v1438 = vpop.f32.mrb[0].mxu0
    %v1439 = vadd.f32 0.0, %v1438
    %v1440 = vpop.f32.mrb[0].mxu0
    %v1441 = vpop.f32.mrb[0].mxu0
    %v1442 = vadd.f32 0.0, %v1441
    %v1443 = vpop.f32.mrb[0].mxu0
    %1444 = vmatprep.mubr.bf16.mxu0 0
    %1445 = vmatmul.mubr.bf16.gmra.mrb[0].mxu0 %v1356
    %v1446 = vpop.f32.mrb[0].mxu0
    %v1447 = vadd.f32 0.0, %v1446
    %v1448 = vpop.f32.mrb[0].mxu0
    %v1449 = vpop.f32.mrb[0].mxu0
    %v1450 = vadd.f32 0.0, %v1449
    %v1451 = vpop.f32.mrb[0].mxu0
    %1452 = vmatprep.mubr.bf16.mxu0 0
    %1453 = vmatmul.mubr.bf16.gmra.mrb[0].mxu0 %v1359
    %v1454 = vpop.f32.mrb[0].mxu0
    %v1455 = vadd.f32 0.0, %v1454
    %v1456 = vpop.f32.mrb[0].mxu0
    %v1457 = vpop.f32.mrb[0].mxu0
    %v1458 = vadd.f32 0.0, %v1457
    %v1459 = vpop.f32.mrb[0].mxu0
    %1460 = vdwg.mxu0
    %v1461 = vadd.f32 %v1295, %v1399
    %v1462 = vadd.f32 %v1296, %v1402
    %v1463 = vadd.f32 %v1297, %v1407
    %v1464 = vadd.f32 %v1298, %v1410
    %v1465 = vadd.f32 %v1299, %v1415
    %v1466 = vadd.f32 %v1300, %v1418
    %v1467 = vadd.f32 %v1301, %v1423
    %v1468 = vadd.f32 %v1302, %v1426
    %v1469 = vadd.f32 %v1303, %v1431
    %v1470 = vadd.f32 %v1304, %v1434
    %v1471 = vadd.f32 %v1305, %v1439
    %v1472 = vadd.f32 %v1306, %v1442
    %v1473 = vadd.f32 %v1307, %v1447
    %v1474 = vadd.f32 %v1308, %v1450
    %v1475 = vadd.f32 %v1309, %v1455
    %v1476 = vadd.f32 %v1310, %v1458
    %v1477 = vld [vmem:[%s136 + $0x3] sm:$0xff]
    %v1478 = vld [vmem:[%s136 + $0x13] sm:$0xff]
    %v1479 = vld [vmem:[%s136 + $0x23] sm:$0xff]
    %v1480 = vld [vmem:[%s136 + $0x33] sm:$0xff]
    %v1481 = vld [vmem:[%s136 + $0x43] sm:$0xff]
    %v1482 = vld [vmem:[%s136 + $0x53] sm:$0xff]
    %v1483 = vld [vmem:[%s136 + $0x63] sm:$0xff]
    %v1484 = vld [vmem:[%s136 + $0x73] sm:$0xff]
    %v1485 = vld [vmem:[%s136 + $0xc3] sm:$0xff]
    %v1486 = vld [vmem:[%s136 + $0xd3] sm:$0xff]
    %v1487 = vld [vmem:[%s136 + $0xe3] sm:$0xff]
    %v1488 = vld [vmem:[%s136 + $0xf3] sm:$0xff]
    %v1489 = vld [vmem:[%s136 + $0x103] sm:$0xff]
    %v1490 = vld [vmem:[%s136 + $0x113] sm:$0xff]
    %v1491 = vld [vmem:[%s136 + $0x123] sm:$0xff]
    %v1492 = vld [vmem:[%s136 + $0x133] sm:$0xff]
    %v1493 = vpack.c.bf16 %v1478, %v1477
    %v1494 = vpack.c.bf16 %v1480, %v1479
    %v1495 = vpack.c.bf16 %v1482, %v1481
    %v1496 = vpack.c.bf16 %v1484, %v1483
    %v1497 = vpack.c.bf16 %v1486, %v1485
    %v1498 = vpack.c.bf16 %v1488, %v1487
    %v1499 = vpack.c.bf16 %v1490, %v1489
    %v1500 = vpack.c.bf16 %v1492, %v1491
    %s1501 = scalar_lea.vmem %s1, 16
    %v1502 = vld [vmem:[%s1501] sm:$0x3]
    %v1504 = vsel %vm46, %v1493, 0
    %v1507 = vsel %vm46, %v1494, 0
    %v1510 = vsel %vm46, %v1495, 0
    %v1513 = vsel %vm46, %v1496, 0
    %v1516 = vsel %vm46, %v1497, 0
    %v1519 = vsel %vm46, %v1498, 0
    %v1522 = vsel %vm46, %v1499, 0
    %v1525 = vsel %vm46, %v1500, 0
    %v1528 = vand.u32 %v1502, %v256
    %1530 = vmatprep.subr.bf16.mxu0 0
    %1531 = vmatpush1.bf16.msra.mxu0 %v1528
    %1532 = vmatprep.subr.bf16.mxu0 0
    %1533 = vmatpush1.bf16.msra.mxu0 0
    %1534 = vmatprep.subr.bf16.mxu0 0
    %1535 = vmatpush1.bf16.msra.mxu0 0
    %1536 = vmatprep.subr.bf16.mxu0 0
    %1537 = vmatpush1.bf16.msra.mxu0 0
    %1538 = vmatprep.subr.bf16.mxu0 0
    %1539 = vmatpush1.bf16.msra.mxu0 0
    %1540 = vmatprep.subr.bf16.mxu0 0
    %1541 = vmatpush1.bf16.msra.mxu0 0
    %1542 = vmatprep.subr.bf16.mxu0 0
    %1543 = vmatpush1.bf16.msra.mxu0 0
    %1544 = vmatprep.subr.bf16.mxu0 0
    %1545 = vmatpush1.bf16.msra.mxu0 0
    %1546 = vmatprep.subr.bf16.mxu0 0
    %1547 = vmatpush1.bf16.msra.mxu0 0
    %1548 = vmatprep.subr.bf16.mxu0 0
    %1549 = vmatpush1.bf16.msra.mxu0 0
    %1550 = vmatprep.subr.bf16.mxu0 0
    %1551 = vmatpush1.bf16.msra.mxu0 0
    %1552 = vmatprep.subr.bf16.mxu0 0
    %1553 = vmatpush1.bf16.msra.mxu0 0
    %1554 = vmatprep.subr.bf16.mxu0 0
    %1555 = vmatpush1.bf16.msra.mxu0 0
    %1556 = vmatprep.subr.bf16.mxu0 0
    %1557 = vmatpush1.bf16.msra.mxu0 0
    %1558 = vmatprep.subr.bf16.mxu0 0
    %1559 = vmatpush1.bf16.msra.mxu0 0
    %1560 = vmatprep.subr.bf16.mxu0 0
    %1561 = vmatpush1.bf16.msra.mxu0 0
    %1562 = vmatprep.mubr.bf16.mxu0 0
    %1563 = vmatmul.mubr.bf16.gmra.mrb[0].mxu0 %v1504
    %v1564 = vpop.f32.mrb[0].mxu0
    %v1565 = vadd.f32 0.0, %v1564
    %v1566 = vpop.f32.mrb[0].mxu0
    %v1567 = vpop.f32.mrb[0].mxu0
    %v1568 = vadd.f32 0.0, %v1567
    %v1569 = vpop.f32.mrb[0].mxu0
    %1570 = vmatprep.mubr.bf16.mxu0 0
    %1571 = vmatmul.mubr.bf16.gmra.mrb[0].mxu0 %v1507
    %v1572 = vpop.f32.mrb[0].mxu0
    %v1573 = vadd.f32 0.0, %v1572
    %v1574 = vpop.f32.mrb[0].mxu0
    %v1575 = vpop.f32.mrb[0].mxu0
    %v1576 = vadd.f32 0.0, %v1575
    %v1577 = vpop.f32.mrb[0].mxu0
    %1578 = vmatprep.mubr.bf16.mxu0 0
    %1579 = vmatmul.mubr.bf16.gmra.mrb[0].mxu0 %v1510
    %v1580 = vpop.f32.mrb[0].mxu0
    %v1581 = vadd.f32 0.0, %v1580
    %v1582 = vpop.f32.mrb[0].mxu0
    %v1583 = vpop.f32.mrb[0].mxu0
    %v1584 = vadd.f32 0.0, %v1583
    %v1585 = vpop.f32.mrb[0].mxu0
    %1586 = vmatprep.mubr.bf16.mxu0 0
    %1587 = vmatmul.mubr.bf16.gmra.mrb[0].mxu0 %v1513
    %v1588 = vpop.f32.mrb[0].mxu0
    %v1589 = vadd.f32 0.0, %v1588
    %v1590 = vpop.f32.mrb[0].mxu0
    %v1591 = vpop.f32.mrb[0].mxu0
    %v1592 = vadd.f32 0.0, %v1591
    %v1593 = vpop.f32.mrb[0].mxu0
    %1594 = vmatprep.mubr.bf16.mxu0 0
    %1595 = vmatmul.mubr.bf16.gmra.mrb[0].mxu0 %v1516
    %v1596 = vpop.f32.mrb[0].mxu0
    %v1597 = vadd.f32 0.0, %v1596
    %v1598 = vpop.f32.mrb[0].mxu0
    %v1599 = vpop.f32.mrb[0].mxu0
    %v1600 = vadd.f32 0.0, %v1599
    %v1601 = vpop.f32.mrb[0].mxu0
    %1602 = vmatprep.mubr.bf16.mxu0 0
    %1603 = vmatmul.mubr.bf16.gmra.mrb[0].mxu0 %v1519
    %v1604 = vpop.f32.mrb[0].mxu0
    %v1605 = vadd.f32 0.0, %v1604
    %v1606 = vpop.f32.mrb[0].mxu0
    %v1607 = vpop.f32.mrb[0].mxu0
    %v1608 = vadd.f32 0.0, %v1607
    %v1609 = vpop.f32.mrb[0].mxu0
    %1610 = vmatprep.mubr.bf16.mxu0 0
    %1611 = vmatmul.mubr.bf16.gmra.mrb[0].mxu0 %v1522
    %v1612 = vpop.f32.mrb[0].mxu0
    %v1613 = vadd.f32 0.0, %v1612
    %v1614 = vpop.f32.mrb[0].mxu0
    %v1615 = vpop.f32.mrb[0].mxu0
    %v1616 = vadd.f32 0.0, %v1615
    %v1617 = vpop.f32.mrb[0].mxu0
    %1618 = vmatprep.mubr.bf16.mxu0 0
    %1619 = vmatmul.mubr.bf16.gmra.mrb[0].mxu0 %v1525
    %v1620 = vpop.f32.mrb[0].mxu0
    %v1621 = vadd.f32 0.0, %v1620
    %v1622 = vpop.f32.mrb[0].mxu0
    %v1623 = vpop.f32.mrb[0].mxu0
    %v1624 = vadd.f32 0.0, %v1623
    %v1625 = vpop.f32.mrb[0].mxu0
    %1626 = vdwg.mxu0
    %v1627 = vadd.f32 %v1461, %v1565
    %v1628 = vadd.f32 %v1462, %v1568
    %v1629 = vadd.f32 %v1463, %v1573
    %v1630 = vadd.f32 %v1464, %v1576
    %v1631 = vadd.f32 %v1465, %v1581
    %v1632 = vadd.f32 %v1466, %v1584
    %v1633 = vadd.f32 %v1467, %v1589
    %v1634 = vadd.f32 %v1468, %v1592
    %v1635 = vadd.f32 %v1469, %v1597
    %v1636 = vadd.f32 %v1470, %v1600
    %v1637 = vadd.f32 %v1471, %v1605
    %v1638 = vadd.f32 %v1472, %v1608
    %v1639 = vadd.f32 %v1473, %v1613
    %v1640 = vadd.f32 %v1474, %v1616
    %v1641 = vadd.f32 %v1475, %v1621
    %v1642 = vadd.f32 %v1476, %v1624
    %v1643 = vld [vmem:[%s136 + $0x4] sm:$0xff]
    %v1644 = vld [vmem:[%s136 + $0x14] sm:$0xff]
    %v1645 = vld [vmem:[%s136 + $0x24] sm:$0xff]
    %v1646 = vld [vmem:[%s136 + $0x34] sm:$0xff]
    %v1647 = vld [vmem:[%s136 + $0x44] sm:$0xff]
    %v1648 = vld [vmem:[%s136 + $0x54] sm:$0xff]
    %v1649 = vld [vmem:[%s136 + $0x64] sm:$0xff]
    %v1650 = vld [vmem:[%s136 + $0x74] sm:$0xff]
    %v1651 = vld [vmem:[%s136 + $0xc4] sm:$0xff]
    %v1652 = vld [vmem:[%s136 + $0xd4] sm:$0xff]
    %v1653 = vld [vmem:[%s136 + $0xe4] sm:$0xff]
    %v1654 = vld [vmem:[%s136 + $0xf4] sm:$0xff]
    %v1655 = vld [vmem:[%s136 + $0x104] sm:$0xff]
    %v1656 = vld [vmem:[%s136 + $0x114] sm:$0xff]
    %v1657 = vld [vmem:[%s136 + $0x124] sm:$0xff]
    %v1658 = vld [vmem:[%s136 + $0x134] sm:$0xff]
    %v1659 = vpack.c.bf16 %v1644, %v1643
    %v1660 = vpack.c.bf16 %v1646, %v1645
    %v1661 = vpack.c.bf16 %v1648, %v1647
    %v1662 = vpack.c.bf16 %v1650, %v1649
    %v1663 = vpack.c.bf16 %v1652, %v1651
    %v1664 = vpack.c.bf16 %v1654, %v1653
    %v1665 = vpack.c.bf16 %v1656, %v1655
    %v1666 = vpack.c.bf16 %v1658, %v1657
    %s1667 = scalar_lea.vmem %s1, 18
    %v1668 = vld [vmem:[%s1667] sm:$0x3]
    %v1670 = vsel %vm46, %v1659, 0
    %v1673 = vsel %vm46, %v1660, 0
    %v1676 = vsel %vm46, %v1661, 0
    %v1679 = vsel %vm46, %v1662, 0
    %v1682 = vsel %vm46, %v1663, 0
    %v1685 = vsel %vm46, %v1664, 0
    %v1688 = vsel %vm46, %v1665, 0
    %v1691 = vsel %vm46, %v1666, 0
    %v1694 = vand.u32 %v1668, %v256
    %1696 = vmatprep.subr.bf16.mxu0 0
    %1697 = vmatpush1.bf16.msra.mxu0 %v1694
    %1698 = vmatprep.subr.bf16.mxu0 0
    %1699 = vmatpush1.bf16.msra.mxu0 0
    %1700 = vmatprep.subr.bf16.mxu0 0
    %1701 = vmatpush1.bf16.msra.mxu0 0
    %1702 = vmatprep.subr.bf16.mxu0 0
    %1703 = vmatpush1.bf16.msra.mxu0 0
    %1704 = vmatprep.subr.bf16.mxu0 0
    %1705 = vmatpush1.bf16.msra.mxu0 0
    %1706 = vmatprep.subr.bf16.mxu0 0
    %1707 = vmatpush1.bf16.msra.mxu0 0
    %1708 = vmatprep.subr.bf16.mxu0 0
    %1709 = vmatpush1.bf16.msra.mxu0 0
    %1710 = vmatprep.subr.bf16.mxu0 0
    %1711 = vmatpush1.bf16.msra.mxu0 0
    %1712 = vmatprep.subr.bf16.mxu0 0
    %1713 = vmatpush1.bf16.msra.mxu0 0
    %1714 = vmatprep.subr.bf16.mxu0 0
    %1715 = vmatpush1.bf16.msra.mxu0 0
    %1716 = vmatprep.subr.bf16.mxu0 0
    %1717 = vmatpush1.bf16.msra.mxu0 0
    %1718 = vmatprep.subr.bf16.mxu0 0
    %1719 = vmatpush1.bf16.msra.mxu0 0
    %1720 = vmatprep.subr.bf16.mxu0 0
    %1721 = vmatpush1.bf16.msra.mxu0 0
    %1722 = vmatprep.subr.bf16.mxu0 0
    %1723 = vmatpush1.bf16.msra.mxu0 0
    %1724 = vmatprep.subr.bf16.mxu0 0
    %1725 = vmatpush1.bf16.msra.mxu0 0
    %1726 = vmatprep.subr.bf16.mxu0 0
    %1727 = vmatpush1.bf16.msra.mxu0 0
    %1728 = vmatprep.mubr.bf16.mxu0 0
    %1729 = vmatmul.mubr.bf16.gmra.mrb[0].mxu0 %v1670
    %v1730 = vpop.f32.mrb[0].mxu0
    %v1731 = vadd.f32 0.0, %v1730
    %v1732 = vpop.f32.mrb[0].mxu0
    %v1733 = vpop.f32.mrb[0].mxu0
    %v1734 = vadd.f32 0.0, %v1733
    %v1735 = vpop.f32.mrb[0].mxu0
    %1736 = vmatprep.mubr.bf16.mxu0 0
    %1737 = vmatmul.mubr.bf16.gmra.mrb[0].mxu0 %v1673
    %v1738 = vpop.f32.mrb[0].mxu0
    %v1739 = vadd.f32 0.0, %v1738
    %v1740 = vpop.f32.mrb[0].mxu0
    %v1741 = vpop.f32.mrb[0].mxu0
    %v1742 = vadd.f32 0.0, %v1741
    %v1743 = vpop.f32.mrb[0].mxu0
    %1744 = vmatprep.mubr.bf16.mxu0 0
    %1745 = vmatmul.mubr.bf16.gmra.mrb[0].mxu0 %v1676
    %v1746 = vpop.f32.mrb[0].mxu0
    %v1747 = vadd.f32 0.0, %v1746
    %v1748 = vpop.f32.mrb[0].mxu0
    %v1749 = vpop.f32.mrb[0].mxu0
    %v1750 = vadd.f32 0.0, %v1749
    %v1751 = vpop.f32.mrb[0].mxu0
    %1752 = vmatprep.mubr.bf16.mxu0 0
    %1753 = vmatmul.mubr.bf16.gmra.mrb[0].mxu0 %v1679
    %v1754 = vpop.f32.mrb[0].mxu0
    %v1755 = vadd.f32 0.0, %v1754
    %v1756 = vpop.f32.mrb[0].mxu0
    %v1757 = vpop.f32.mrb[0].mxu0
    %v1758 = vadd.f32 0.0, %v1757
    %v1759 = vpop.f32.mrb[0].mxu0
    %1760 = vmatprep.mubr.bf16.mxu0 0
    %1761 = vmatmul.mubr.bf16.gmra.mrb[0].mxu0 %v1682
    %v1762 = vpop.f32.mrb[0].mxu0
    %v1763 = vadd.f32 0.0, %v1762
    %v1764 = vpop.f32.mrb[0].mxu0
    %v1765 = vpop.f32.mrb[0].mxu0
    %v1766 = vadd.f32 0.0, %v1765
    %v1767 = vpop.f32.mrb[0].mxu0
    %1768 = vmatprep.mubr.bf16.mxu0 0
    %1769 = vmatmul.mubr.bf16.gmra.mrb[0].mxu0 %v1685
    %v1770 = vpop.f32.mrb[0].mxu0
    %v1771 = vadd.f32 0.0, %v1770
    %v1772 = vpop.f32.mrb[0].mxu0
    %v1773 = vpop.f32.mrb[0].mxu0
    %v1774 = vadd.f32 0.0, %v1773
    %v1775 = vpop.f32.mrb[0].mxu0
    %1776 = vmatprep.mubr.bf16.mxu0 0
    %1777 = vmatmul.mubr.bf16.gmra.mrb[0].mxu0 %v1688
    %v1778 = vpop.f32.mrb[0].mxu0
    %v1779 = vadd.f32 0.0, %v1778
    %v1780 = vpop.f32.mrb[0].mxu0
    %v1781 = vpop.f32.mrb[0].mxu0
    %v1782 = vadd.f32 0.0, %v1781
    %v1783 = vpop.f32.mrb[0].mxu0
    %1784 = vmatprep.mubr.bf16.mxu0 0
    %1785 = vmatmul.mubr.bf16.gmra.mrb[0].mxu0 %v1691
    %v1786 = vpop.f32.mrb[0].mxu0
    %v1787 = vadd.f32 0.0, %v1786
    %v1788 = vpop.f32.mrb[0].mxu0
    %v1789 = vpop.f32.mrb[0].mxu0
    %v1790 = vadd.f32 0.0, %v1789
    %v1791 = vpop.f32.mrb[0].mxu0
    %1792 = vdwg.mxu0
    %v1793 = vadd.f32 %v1627, %v1731
    %v1794 = vadd.f32 %v1628, %v1734
    %v1795 = vadd.f32 %v1629, %v1739
    %v1796 = vadd.f32 %v1630, %v1742
    %v1797 = vadd.f32 %v1631, %v1747
    %v1798 = vadd.f32 %v1632, %v1750
    %v1799 = vadd.f32 %v1633, %v1755
    %v1800 = vadd.f32 %v1634, %v1758
    %v1801 = vadd.f32 %v1635, %v1763
    %v1802 = vadd.f32 %v1636, %v1766
    %v1803 = vadd.f32 %v1637, %v1771
    %v1804 = vadd.f32 %v1638, %v1774
    %v1805 = vadd.f32 %v1639, %v1779
    %v1806 = vadd.f32 %v1640, %v1782
    %v1807 = vadd.f32 %v1641, %v1787
    %v1808 = vadd.f32 %v1642, %v1790
    %s1809 = scalar_lea.vmem [#allocation2], 32
    %v1810 = vld [vmem:[%s1809] sm:$0xff]
    %v1811 = vld [vmem:[%s1809 + $0x10] sm:$0xff]
    %v1812 = vld [vmem:[%s1809 + $0x20] sm:$0xff]
    %v1813 = vld [vmem:[%s1809 + $0x30] sm:$0xff]
    %v1814 = vld [vmem:[%s1809 + $0x40] sm:$0xff]
    %v1815 = vld [vmem:[%s1809 + $0x50] sm:$0xff]
    %v1816 = vld [vmem:[%s1809 + $0x60] sm:$0xff]
    %v1817 = vld [vmem:[%s1809 + $0x70] sm:$0xff]
    %v1818 = vld [vmem:[%s1809 + $0xc0] sm:$0xff]
    %v1819 = vld [vmem:[%s1809 + $0xd0] sm:$0xff]
    %v1820 = vld [vmem:[%s1809 + $0xe0] sm:$0xff]
    %v1821 = vld [vmem:[%s1809 + $0xf0] sm:$0xff]
    %v1822 = vld [vmem:[%s1809 + $0x100] sm:$0xff]
    %v1823 = vld [vmem:[%s1809 + $0x110] sm:$0xff]
    %v1824 = vld [vmem:[%s1809 + $0x120] sm:$0xff]
    %v1825 = vld [vmem:[%s1809 + $0x130] sm:$0xff]
    %v1826 = vpack.c.bf16 %v1811, %v1810
    %v1827 = vpack.c.bf16 %v1813, %v1812
    %v1828 = vpack.c.bf16 %v1815, %v1814
    %v1829 = vpack.c.bf16 %v1817, %v1816
    %v1830 = vpack.c.bf16 %v1819, %v1818
    %v1831 = vpack.c.bf16 %v1821, %v1820
    %v1832 = vpack.c.bf16 %v1823, %v1822
    %v1833 = vpack.c.bf16 %v1825, %v1824
    %s1834 = scalar_lea.vmem %s1, 20
    %v1835 = vld [vmem:[%s1834] sm:$0x3]
    %v1837 = vsel %vm46, %v1826, 0
    %v1840 = vsel %vm46, %v1827, 0
    %v1843 = vsel %vm46, %v1828, 0
    %v1846 = vsel %vm46, %v1829, 0
    %v1849 = vsel %vm46, %v1830, 0
    %v1852 = vsel %vm46, %v1831, 0
    %v1855 = vsel %vm46, %v1832, 0
    %v1858 = vsel %vm46, %v1833, 0
    %v1861 = vand.u32 %v1835, %v256
    %1863 = vmatprep.subr.bf16.mxu0 0
    %1864 = vmatpush1.bf16.msra.mxu0 %v1861
    %1865 = vmatprep.subr.bf16.mxu0 0
    %1866 = vmatpush1.bf16.msra.mxu0 0
    %1867 = vmatprep.subr.bf16.mxu0 0
    %1868 = vmatpush1.bf16.msra.mxu0 0
    %1869 = vmatprep.subr.bf16.mxu0 0
    %1870 = vmatpush1.bf16.msra.mxu0 0
    %1871 = vmatprep.subr.bf16.mxu0 0
    %1872 = vmatpush1.bf16.msra.mxu0 0
    %1873 = vmatprep.subr.bf16.mxu0 0
    %1874 = vmatpush1.bf16.msra.mxu0 0
    %1875 = vmatprep.subr.bf16.mxu0 0
    %1876 = vmatpush1.bf16.msra.mxu0 0
    %1877 = vmatprep.subr.bf16.mxu0 0
    %1878 = vmatpush1.bf16.msra.mxu0 0
    %1879 = vmatprep.subr.bf16.mxu0 0
    %1880 = vmatpush1.bf16.msra.mxu0 0
    %1881 = vmatprep.subr.bf16.mxu0 0
    %1882 = vmatpush1.bf16.msra.mxu0 0
    %1883 = vmatprep.subr.bf16.mxu0 0
    %1884 = vmatpush1.bf16.msra.mxu0 0
    %1885 = vmatprep.subr.bf16.mxu0 0
    %1886 = vmatpush1.bf16.msra.mxu0 0
    %1887 = vmatprep.subr.bf16.mxu0 0
    %1888 = vmatpush1.bf16.msra.mxu0 0
    %1889 = vmatprep.subr.bf16.mxu0 0
    %1890 = vmatpush1.bf16.msra.mxu0 0
    %1891 = vmatprep.subr.bf16.mxu0 0
    %1892 = vmatpush1.bf16.msra.mxu0 0
    %1893 = vmatprep.subr.bf16.mxu0 0
    %1894 = vmatpush1.bf16.msra.mxu0 0
    %1895 = vmatprep.mubr.bf16.mxu0 0
    %1896 = vmatmul.mubr.bf16.gmra.mrb[0].mxu0 %v1837
    %v1897 = vpop.f32.mrb[0].mxu0
    %v1898 = vadd.f32 0.0, %v1897
    %v1899 = vpop.f32.mrb[0].mxu0
    %v1900 = vpop.f32.mrb[0].mxu0
    %v1901 = vadd.f32 0.0, %v1900
    %v1902 = vpop.f32.mrb[0].mxu0
    %1903 = vmatprep.mubr.bf16.mxu0 0
    %1904 = vmatmul.mubr.bf16.gmra.mrb[0].mxu0 %v1840
    %v1905 = vpop.f32.mrb[0].mxu0
    %v1906 = vadd.f32 0.0, %v1905
    %v1907 = vpop.f32.mrb[0].mxu0
    %v1908 = vpop.f32.mrb[0].mxu0
    %v1909 = vadd.f32 0.0, %v1908
    %v1910 = vpop.f32.mrb[0].mxu0
    %1911 = vmatprep.mubr.bf16.mxu0 0
    %1912 = vmatmul.mubr.bf16.gmra.mrb[0].mxu0 %v1843
    %v1913 = vpop.f32.mrb[0].mxu0
    %v1914 = vadd.f32 0.0, %v1913
    %v1915 = vpop.f32.mrb[0].mxu0
    %v1916 = vpop.f32.mrb[0].mxu0
    %v1917 = vadd.f32 0.0, %v1916
    %v1918 = vpop.f32.mrb[0].mxu0
    %1919 = vmatprep.mubr.bf16.mxu0 0
    %1920 = vmatmul.mubr.bf16.gmra.mrb[0].mxu0 %v1846
    %v1921 = vpop.f32.mrb[0].mxu0
    %v1922 = vadd.f32 0.0, %v1921
    %v1923 = vpop.f32.mrb[0].mxu0
    %v1924 = vpop.f32.mrb[0].mxu0
    %v1925 = vadd.f32 0.0, %v1924
    %v1926 = vpop.f32.mrb[0].mxu0
    %1927 = vmatprep.mubr.bf16.mxu0 0
    %1928 = vmatmul.mubr.bf16.gmra.mrb[0].mxu0 %v1849
    %v1929 = vpop.f32.mrb[0].mxu0
    %v1930 = vadd.f32 0.0, %v1929
    %v1931 = vpop.f32.mrb[0].mxu0
    %v1932 = vpop.f32.mrb[0].mxu0
    %v1933 = vadd.f32 0.0, %v1932
    %v1934 = vpop.f32.mrb[0].mxu0
    %1935 = vmatprep.mubr.bf16.mxu0 0
    %1936 = vmatmul.mubr.bf16.gmra.mrb[0].mxu0 %v1852
    %v1937 = vpop.f32.mrb[0].mxu0
    %v1938 = vadd.f32 0.0, %v1937
    %v1939 = vpop.f32.mrb[0].mxu0
    %v1940 = vpop.f32.mrb[0].mxu0
    %v1941 = vadd.f32 0.0, %v1940
    %v1942 = vpop.f32.mrb[0].mxu0
    %1943 = vmatprep.mubr.bf16.mxu0 0
    %1944 = vmatmul.mubr.bf16.gmra.mrb[0].mxu0 %v1855
    %v1945 = vpop.f32.mrb[0].mxu0
    %v1946 = vadd.f32 0.0, %v1945
    %v1947 = vpop.f32.mrb[0].mxu0
    %v1948 = vpop.f32.mrb[0].mxu0
    %v1949 = vadd.f32 0.0, %v1948
    %v1950 = vpop.f32.mrb[0].mxu0
    %1951 = vmatprep.mubr.bf16.mxu0 0
    %1952 = vmatmul.mubr.bf16.gmra.mrb[0].mxu0 %v1858
    %v1953 = vpop.f32.mrb[0].mxu0
    %v1954 = vadd.f32 0.0, %v1953
    %v1955 = vpop.f32.mrb[0].mxu0
    %v1956 = vpop.f32.mrb[0].mxu0
    %v1957 = vadd.f32 0.0, %v1956
    %v1958 = vpop.f32.mrb[0].mxu0
    %1959 = vdwg.mxu0
    %v1960 = vadd.f32 %v1793, %v1898
    %v1961 = vadd.f32 %v1794, %v1901
    %v1962 = vadd.f32 %v1795, %v1906
    %v1963 = vadd.f32 %v1796, %v1909
    %v1964 = vadd.f32 %v1797, %v1914
    %v1965 = vadd.f32 %v1798, %v1917
    %v1966 = vadd.f32 %v1799, %v1922
    %v1967 = vadd.f32 %v1800, %v1925
    %v1968 = vadd.f32 %v1801, %v1930
    %v1969 = vadd.f32 %v1802, %v1933
    %v1970 = vadd.f32 %v1803, %v1938
    %v1971 = vadd.f32 %v1804, %v1941
    %v1972 = vadd.f32 %v1805, %v1946
    %v1973 = vadd.f32 %v1806, %v1949
    %v1974 = vadd.f32 %v1807, %v1954
    %v1975 = vadd.f32 %v1808, %v1957
    %v1976 = vld [vmem:[%s1809 + $0x1] sm:$0xff]
    %v1977 = vld [vmem:[%s1809 + $0x11] sm:$0xff]
    %v1978 = vld [vmem:[%s1809 + $0x21] sm:$0xff]
    %v1979 = vld [vmem:[%s1809 + $0x31] sm:$0xff]
    %v1980 = vld [vmem:[%s1809 + $0x41] sm:$0xff]
    %v1981 = vld [vmem:[%s1809 + $0x51] sm:$0xff]
    %v1982 = vld [vmem:[%s1809 + $0x61] sm:$0xff]
    %v1983 = vld [vmem:[%s1809 + $0x71] sm:$0xff]
    %v1984 = vld [vmem:[%s1809 + $0xc1] sm:$0xff]
    %v1985 = vld [vmem:[%s1809 + $0xd1] sm:$0xff]
    %v1986 = vld [vmem:[%s1809 + $0xe1] sm:$0xff]
    %v1987 = vld [vmem:[%s1809 + $0xf1] sm:$0xff]
    %v1988 = vld [vmem:[%s1809 + $0x101] sm:$0xff]
    %v1989 = vld [vmem:[%s1809 + $0x111] sm:$0xff]
    %v1990 = vld [vmem:[%s1809 + $0x121] sm:$0xff]
    %v1991 = vld [vmem:[%s1809 + $0x131] sm:$0xff]
    %v1992 = vpack.c.bf16 %v1977, %v1976
    %v1993 = vpack.c.bf16 %v1979, %v1978
    %v1994 = vpack.c.bf16 %v1981, %v1980
    %v1995 = vpack.c.bf16 %v1983, %v1982
    %v1996 = vpack.c.bf16 %v1985, %v1984
    %v1997 = vpack.c.bf16 %v1987, %v1986
    %v1998 = vpack.c.bf16 %v1989, %v1988
    %v1999 = vpack.c.bf16 %v1991, %v1990
    %s2000 = scalar_lea.vmem %s1, 22
    %v2001 = vld [vmem:[%s2000] sm:$0x3]
    %v2003 = vsel %vm46, %v1992, 0
    %v2006 = vsel %vm46, %v1993, 0
    %v2009 = vsel %vm46, %v1994, 0
    %v2012 = vsel %vm46, %v1995, 0
    %v2015 = vsel %vm46, %v1996, 0
    %v2018 = vsel %vm46, %v1997, 0
    %v2021 = vsel %vm46, %v1998, 0
    %v2024 = vsel %vm46, %v1999, 0
    %v2027 = vand.u32 %v2001, %v256
    %2029 = vmatprep.subr.bf16.mxu0 0
    %2030 = vmatpush1.bf16.msra.mxu0 %v2027
    %2031 = vmatprep.subr.bf16.mxu0 0
    %2032 = vmatpush1.bf16.msra.mxu0 0
    %2033 = vmatprep.subr.bf16.mxu0 0
    %2034 = vmatpush1.bf16.msra.mxu0 0
    %2035 = vmatprep.subr.bf16.mxu0 0
    %2036 = vmatpush1.bf16.msra.mxu0 0
    %2037 = vmatprep.subr.bf16.mxu0 0
    %2038 = vmatpush1.bf16.msra.mxu0 0
    %2039 = vmatprep.subr.bf16.mxu0 0
    %2040 = vmatpush1.bf16.msra.mxu0 0
    %2041 = vmatprep.subr.bf16.mxu0 0
    %2042 = vmatpush1.bf16.msra.mxu0 0
    %2043 = vmatprep.subr.bf16.mxu0 0
    %2044 = vmatpush1.bf16.msra.mxu0 0
    %2045 = vmatprep.subr.bf16.mxu0 0
    %2046 = vmatpush1.bf16.msra.mxu0 0
    %2047 = vmatprep.subr.bf16.mxu0 0
    %2048 = vmatpush1.bf16.msra.mxu0 0
    %2049 = vmatprep.subr.bf16.mxu0 0
    %2050 = vmatpush1.bf16.msra.mxu0 0
    %2051 = vmatprep.subr.bf16.mxu0 0
    %2052 = vmatpush1.bf16.msra.mxu0 0
    %2053 = vmatprep.subr.bf16.mxu0 0
    %2054 = vmatpush1.bf16.msra.mxu0 0
    %2055 = vmatprep.subr.bf16.mxu0 0
    %2056 = vmatpush1.bf16.msra.mxu0 0
    %2057 = vmatprep.subr.bf16.mxu0 0
    %2058 = vmatpush1.bf16.msra.mxu0 0
    %2059 = vmatprep.subr.bf16.mxu0 0
    %2060 = vmatpush1.bf16.msra.mxu0 0
    %2061 = vmatprep.mubr.bf16.mxu0 0
    %2062 = vmatmul.mubr.bf16.gmra.mrb[0].mxu0 %v2003
    %v2063 = vpop.f32.mrb[0].mxu0
    %v2064 = vadd.f32 0.0, %v2063
    %v2065 = vpop.f32.mrb[0].mxu0
    %v2066 = vpop.f32.mrb[0].mxu0
    %v2067 = vadd.f32 0.0, %v2066
    %v2068 = vpop.f32.mrb[0].mxu0
    %2069 = vmatprep.mubr.bf16.mxu0 0
    %2070 = vmatmul.mubr.bf16.gmra.mrb[0].mxu0 %v2006
    %v2071 = vpop.f32.mrb[0].mxu0
    %v2072 = vadd.f32 0.0, %v2071
    %v2073 = vpop.f32.mrb[0].mxu0
    %v2074 = vpop.f32.mrb[0].mxu0
    %v2075 = vadd.f32 0.0, %v2074
    %v2076 = vpop.f32.mrb[0].mxu0
    %2077 = vmatprep.mubr.bf16.mxu0 0
    %2078 = vmatmul.mubr.bf16.gmra.mrb[0].mxu0 %v2009
    %v2079 = vpop.f32.mrb[0].mxu0
    %v2080 = vadd.f32 0.0, %v2079
    %v2081 = vpop.f32.mrb[0].mxu0
    %v2082 = vpop.f32.mrb[0].mxu0
    %v2083 = vadd.f32 0.0, %v2082
    %v2084 = vpop.f32.mrb[0].mxu0
    %2085 = vmatprep.mubr.bf16.mxu0 0
    %2086 = vmatmul.mubr.bf16.gmra.mrb[0].mxu0 %v2012
    %v2087 = vpop.f32.mrb[0].mxu0
    %v2088 = vadd.f32 0.0, %v2087
    %v2089 = vpop.f32.mrb[0].mxu0
    %v2090 = vpop.f32.mrb[0].mxu0
    %v2091 = vadd.f32 0.0, %v2090
    %v2092 = vpop.f32.mrb[0].mxu0
    %2093 = vmatprep.mubr.bf16.mxu0 0
    %2094 = vmatmul.mubr.bf16.gmra.mrb[0].mxu0 %v2015
    %v2095 = vpop.f32.mrb[0].mxu0
    %v2096 = vadd.f32 0.0, %v2095
    %v2097 = vpop.f32.mrb[0].mxu0
    %v2098 = vpop.f32.mrb[0].mxu0
    %v2099 = vadd.f32 0.0, %v2098
    %v2100 = vpop.f32.mrb[0].mxu0
    %2101 = vmatprep.mubr.bf16.mxu0 0
    %2102 = vmatmul.mubr.bf16.gmra.mrb[0].mxu0 %v2018
    %v2103 = vpop.f32.mrb[0].mxu0
    %v2104 = vadd.f32 0.0, %v2103
    %v2105 = vpop.f32.mrb[0].mxu0
    %v2106 = vpop.f32.mrb[0].mxu0
    %v2107 = vadd.f32 0.0, %v2106
    %v2108 = vpop.f32.mrb[0].mxu0
    %2109 = vmatprep.mubr.bf16.mxu0 0
    %2110 = vmatmul.mubr.bf16.gmra.mrb[0].mxu0 %v2021
    %v2111 = vpop.f32.mrb[0].mxu0
    %v2112 = vadd.f32 0.0, %v2111
    %v2113 = vpop.f32.mrb[0].mxu0
    %v2114 = vpop.f32.mrb[0].mxu0
    %v2115 = vadd.f32 0.0, %v2114
    %v2116 = vpop.f32.mrb[0].mxu0
    %2117 = vmatprep.mubr.bf16.mxu0 0
    %2118 = vmatmul.mubr.bf16.gmra.mrb[0].mxu0 %v2024
    %v2119 = vpop.f32.mrb[0].mxu0
    %v2120 = vadd.f32 0.0, %v2119
    %v2121 = vpop.f32.mrb[0].mxu0
    %v2122 = vpop.f32.mrb[0].mxu0
    %v2123 = vadd.f32 0.0, %v2122
    %v2124 = vpop.f32.mrb[0].mxu0
    %2125 = vdwg.mxu0
    %v2126 = vadd.f32 %v1960, %v2064
    %v2127 = vadd.f32 %v1961, %v2067
    %v2128 = vadd.f32 %v1962, %v2072
    %v2129 = vadd.f32 %v1963, %v2075
    %v2130 = vadd.f32 %v1964, %v2080
    %v2131 = vadd.f32 %v1965, %v2083
    %v2132 = vadd.f32 %v1966, %v2088
    %v2133 = vadd.f32 %v1967, %v2091
    %v2134 = vadd.f32 %v1968, %v2096
    %v2135 = vadd.f32 %v1969, %v2099
    %v2136 = vadd.f32 %v1970, %v2104
    %v2137 = vadd.f32 %v1971, %v2107
    %v2138 = vadd.f32 %v1972, %v2112
    %v2139 = vadd.f32 %v1973, %v2115
    %v2140 = vadd.f32 %v1974, %v2120
    %v2141 = vadd.f32 %v1975, %v2123
    %v2142 = vld [vmem:[%s1809 + $0x2] sm:$0xff]
    %v2143 = vld [vmem:[%s1809 + $0x12] sm:$0xff]
    %v2144 = vld [vmem:[%s1809 + $0x22] sm:$0xff]
    %v2145 = vld [vmem:[%s1809 + $0x32] sm:$0xff]
    %v2146 = vld [vmem:[%s1809 + $0x42] sm:$0xff]
    %v2147 = vld [vmem:[%s1809 + $0x52] sm:$0xff]
    %v2148 = vld [vmem:[%s1809 + $0x62] sm:$0xff]
    %v2149 = vld [vmem:[%s1809 + $0x72] sm:$0xff]
    %v2150 = vld [vmem:[%s1809 + $0xc2] sm:$0xff]
    %v2151 = vld [vmem:[%s1809 + $0xd2] sm:$0xff]
    %v2152 = vld [vmem:[%s1809 + $0xe2] sm:$0xff]
    %v2153 = vld [vmem:[%s1809 + $0xf2] sm:$0xff]
    %v2154 = vld [vmem:[%s1809 + $0x102] sm:$0xff]
    %v2155 = vld [vmem:[%s1809 + $0x112] sm:$0xff]
    %v2156 = vld [vmem:[%s1809 + $0x122] sm:$0xff]
    %v2157 = vld [vmem:[%s1809 + $0x132] sm:$0xff]
    %v2158 = vpack.c.bf16 %v2143, %v2142
    %v2159 = vpack.c.bf16 %v2145, %v2144
    %v2160 = vpack.c.bf16 %v2147, %v2146
    %v2161 = vpack.c.bf16 %v2149, %v2148
    %v2162 = vpack.c.bf16 %v2151, %v2150
    %v2163 = vpack.c.bf16 %v2153, %v2152
    %v2164 = vpack.c.bf16 %v2155, %v2154
    %v2165 = vpack.c.bf16 %v2157, %v2156
    %s2166 = scalar_lea.vmem %s1, 24
    %v2167 = vld [vmem:[%s2166] sm:$0x3]
    %v2169 = vsel %vm46, %v2158, 0
    %v2172 = vsel %vm46, %v2159, 0
    %v2175 = vsel %vm46, %v2160, 0
    %v2178 = vsel %vm46, %v2161, 0
    %v2181 = vsel %vm46, %v2162, 0
    %v2184 = vsel %vm46, %v2163, 0
    %v2187 = vsel %vm46, %v2164, 0
    %v2190 = vsel %vm46, %v2165, 0
    %v2193 = vand.u32 %v2167, %v256
    %2195 = vmatprep.subr.bf16.mxu0 0
    %2196 = vmatpush1.bf16.msra.mxu0 %v2193
    %2197 = vmatprep.subr.bf16.mxu0 0
    %2198 = vmatpush1.bf16.msra.mxu0 0
    %2199 = vmatprep.subr.bf16.mxu0 0
    %2200 = vmatpush1.bf16.msra.mxu0 0
    %2201 = vmatprep.subr.bf16.mxu0 0
    %2202 = vmatpush1.bf16.msra.mxu0 0
    %2203 = vmatprep.subr.bf16.mxu0 0
    %2204 = vmatpush1.bf16.msra.mxu0 0
    %2205 = vmatprep.subr.bf16.mxu0 0
    %2206 = vmatpush1.bf16.msra.mxu0 0
    %2207 = vmatprep.subr.bf16.mxu0 0
    %2208 = vmatpush1.bf16.msra.mxu0 0
    %2209 = vmatprep.subr.bf16.mxu0 0
    %2210 = vmatpush1.bf16.msra.mxu0 0
    %2211 = vmatprep.subr.bf16.mxu0 0
    %2212 = vmatpush1.bf16.msra.mxu0 0
    %2213 = vmatprep.subr.bf16.mxu0 0
    %2214 = vmatpush1.bf16.msra.mxu0 0
    %2215 = vmatprep.subr.bf16.mxu0 0
    %2216 = vmatpush1.bf16.msra.mxu0 0
    %2217 = vmatprep.subr.bf16.mxu0 0
    %2218 = vmatpush1.bf16.msra.mxu0 0
    %2219 = vmatprep.subr.bf16.mxu0 0
    %2220 = vmatpush1.bf16.msra.mxu0 0
    %2221 = vmatprep.subr.bf16.mxu0 0
    %2222 = vmatpush1.bf16.msra.mxu0 0
    %2223 = vmatprep.subr.bf16.mxu0 0
    %2224 = vmatpush1.bf16.msra.mxu0 0
    %2225 = vmatprep.subr.bf16.mxu0 0
    %2226 = vmatpush1.bf16.msra.mxu0 0
    %2227 = vmatprep.mubr.bf16.mxu0 0
    %2228 = vmatmul.mubr.bf16.gmra.mrb[0].mxu0 %v2169
    %v2229 = vpop.f32.mrb[0].mxu0
    %v2230 = vadd.f32 0.0, %v2229
    %v2231 = vpop.f32.mrb[0].mxu0
    %v2232 = vpop.f32.mrb[0].mxu0
    %v2233 = vadd.f32 0.0, %v2232
    %v2234 = vpop.f32.mrb[0].mxu0
    %2235 = vmatprep.mubr.bf16.mxu0 0
    %2236 = vmatmul.mubr.bf16.gmra.mrb[0].mxu0 %v2172
    %v2237 = vpop.f32.mrb[0].mxu0
    %v2238 = vadd.f32 0.0, %v2237
    %v2239 = vpop.f32.mrb[0].mxu0
    %v2240 = vpop.f32.mrb[0].mxu0
    %v2241 = vadd.f32 0.0, %v2240
    %v2242 = vpop.f32.mrb[0].mxu0
    %2243 = vmatprep.mubr.bf16.mxu0 0
    %2244 = vmatmul.mubr.bf16.gmra.mrb[0].mxu0 %v2175
    %v2245 = vpop.f32.mrb[0].mxu0
    %v2246 = vadd.f32 0.0, %v2245
    %v2247 = vpop.f32.mrb[0].mxu0
    %v2248 = vpop.f32.mrb[0].mxu0
    %v2249 = vadd.f32 0.0, %v2248
    %v2250 = vpop.f32.mrb[0].mxu0
    %2251 = vmatprep.mubr.bf16.mxu0 0
    %2252 = vmatmul.mubr.bf16.gmra.mrb[0].mxu0 %v2178
    %v2253 = vpop.f32.mrb[0].mxu0
    %v2254 = vadd.f32 0.0, %v2253
    %v2255 = vpop.f32.mrb[0].mxu0
    %v2256 = vpop.f32.mrb[0].mxu0
    %v2257 = vadd.f32 0.0, %v2256
    %v2258 = vpop.f32.mrb[0].mxu0
    %2259 = vmatprep.mubr.bf16.mxu0 0
    %2260 = vmatmul.mubr.bf16.gmra.mrb[0].mxu0 %v2181
    %v2261 = vpop.f32.mrb[0].mxu0
    %v2262 = vadd.f32 0.0, %v2261
    %v2263 = vpop.f32.mrb[0].mxu0
    %v2264 = vpop.f32.mrb[0].mxu0
    %v2265 = vadd.f32 0.0, %v2264
    %v2266 = vpop.f32.mrb[0].mxu0
    %2267 = vmatprep.mubr.bf16.mxu0 0
    %2268 = vmatmul.mubr.bf16.gmra.mrb[0].mxu0 %v2184
    %v2269 = vpop.f32.mrb[0].mxu0
    %v2270 = vadd.f32 0.0, %v2269
    %v2271 = vpop.f32.mrb[0].mxu0
    %v2272 = vpop.f32.mrb[0].mxu0
    %v2273 = vadd.f32 0.0, %v2272
    %v2274 = vpop.f32.mrb[0].mxu0
    %2275 = vmatprep.mubr.bf16.mxu0 0
    %2276 = vmatmul.mubr.bf16.gmra.mrb[0].mxu0 %v2187
    %v2277 = vpop.f32.mrb[0].mxu0
    %v2278 = vadd.f32 0.0, %v2277
    %v2279 = vpop.f32.mrb[0].mxu0
    %v2280 = vpop.f32.mrb[0].mxu0
    %v2281 = vadd.f32 0.0, %v2280
    %v2282 = vpop.f32.mrb[0].mxu0
    %2283 = vmatprep.mubr.bf16.mxu0 0
    %2284 = vmatmul.mubr.bf16.gmra.mrb[0].mxu0 %v2190
    %v2285 = vpop.f32.mrb[0].mxu0
    %v2286 = vadd.f32 0.0, %v2285
    %v2287 = vpop.f32.mrb[0].mxu0
    %v2288 = vpop.f32.mrb[0].mxu0
    %v2289 = vadd.f32 0.0, %v2288
    %v2290 = vpop.f32.mrb[0].mxu0
    %2291 = vdwg.mxu0
    %v2292 = vadd.f32 %v2126, %v2230
    %v2293 = vadd.f32 %v2127, %v2233
    %v2294 = vadd.f32 %v2128, %v2238
    %v2295 = vadd.f32 %v2129, %v2241
    %v2296 = vadd.f32 %v2130, %v2246
    %v2297 = vadd.f32 %v2131, %v2249
    %v2298 = vadd.f32 %v2132, %v2254
    %v2299 = vadd.f32 %v2133, %v2257
    %v2300 = vadd.f32 %v2134, %v2262
    %v2301 = vadd.f32 %v2135, %v2265
    %v2302 = vadd.f32 %v2136, %v2270
    %v2303 = vadd.f32 %v2137, %v2273
    %v2304 = vadd.f32 %v2138, %v2278
    %v2305 = vadd.f32 %v2139, %v2281
    %v2306 = vadd.f32 %v2140, %v2286
    %v2307 = vadd.f32 %v2141, %v2289
    %v2308 = vld [vmem:[%s1809 + $0x3] sm:$0xff]
    %v2309 = vld [vmem:[%s1809 + $0x13] sm:$0xff]
    %v2310 = vld [vmem:[%s1809 + $0x23] sm:$0xff]
    %v2311 = vld [vmem:[%s1809 + $0x33] sm:$0xff]
    %v2312 = vld [vmem:[%s1809 + $0x43] sm:$0xff]
    %v2313 = vld [vmem:[%s1809 + $0x53] sm:$0xff]
    %v2314 = vld [vmem:[%s1809 + $0x63] sm:$0xff]
    %v2315 = vld [vmem:[%s1809 + $0x73] sm:$0xff]
    %v2316 = vld [vmem:[%s1809 + $0xc3] sm:$0xff]
    %v2317 = vld [vmem:[%s1809 + $0xd3] sm:$0xff]
    %v2318 = vld [vmem:[%s1809 + $0xe3] sm:$0xff]
    %v2319 = vld [vmem:[%s1809 + $0xf3] sm:$0xff]
    %v2320 = vld [vmem:[%s1809 + $0x103] sm:$0xff]
    %v2321 = vld [vmem:[%s1809 + $0x113] sm:$0xff]
    %v2322 = vld [vmem:[%s1809 + $0x123] sm:$0xff]
    %v2323 = vld [vmem:[%s1809 + $0x133] sm:$0xff]
    %v2324 = vpack.c.bf16 %v2309, %v2308
    %v2325 = vpack.c.bf16 %v2311, %v2310
    %v2326 = vpack.c.bf16 %v2313, %v2312
    %v2327 = vpack.c.bf16 %v2315, %v2314
    %v2328 = vpack.c.bf16 %v2317, %v2316
    %v2329 = vpack.c.bf16 %v2319, %v2318
    %v2330 = vpack.c.bf16 %v2321, %v2320
    %v2331 = vpack.c.bf16 %v2323, %v2322
    %s2332 = scalar_lea.vmem %s1, 26
    %v2333 = vld [vmem:[%s2332] sm:$0x3]
    %v2335 = vsel %vm46, %v2324, 0
    %v2338 = vsel %vm46, %v2325, 0
    %v2341 = vsel %vm46, %v2326, 0
    %v2344 = vsel %vm46, %v2327, 0
    %v2347 = vsel %vm46, %v2328, 0
    %v2350 = vsel %vm46, %v2329, 0
    %v2353 = vsel %vm46, %v2330, 0
    %v2356 = vsel %vm46, %v2331, 0
    %v2359 = vand.u32 %v2333, %v256
    %2361 = vmatprep.subr.bf16.mxu0 0
    %2362 = vmatpush1.bf16.msra.mxu0 %v2359
    %2363 = vmatprep.subr.bf16.mxu0 0
    %2364 = vmatpush1.bf16.msra.mxu0 0
    %2365 = vmatprep.subr.bf16.mxu0 0
    %2366 = vmatpush1.bf16.msra.mxu0 0
    %2367 = vmatprep.subr.bf16.mxu0 0
    %2368 = vmatpush1.bf16.msra.mxu0 0
    %2369 = vmatprep.subr.bf16.mxu0 0
    %2370 = vmatpush1.bf16.msra.mxu0 0
    %2371 = vmatprep.subr.bf16.mxu0 0
    %2372 = vmatpush1.bf16.msra.mxu0 0
    %2373 = vmatprep.subr.bf16.mxu0 0
    %2374 = vmatpush1.bf16.msra.mxu0 0
    %2375 = vmatprep.subr.bf16.mxu0 0
    %2376 = vmatpush1.bf16.msra.mxu0 0
    %2377 = vmatprep.subr.bf16.mxu0 0
    %2378 = vmatpush1.bf16.msra.mxu0 0
    %2379 = vmatprep.subr.bf16.mxu0 0
    %2380 = vmatpush1.bf16.msra.mxu0 0
    %2381 = vmatprep.subr.bf16.mxu0 0
    %2382 = vmatpush1.bf16.msra.mxu0 0
    %2383 = vmatprep.subr.bf16.mxu0 0
    %2384 = vmatpush1.bf16.msra.mxu0 0
    %2385 = vmatprep.subr.bf16.mxu0 0
    %2386 = vmatpush1.bf16.msra.mxu0 0
    %2387 = vmatprep.subr.bf16.mxu0 0
    %2388 = vmatpush1.bf16.msra.mxu0 0
    %2389 = vmatprep.subr.bf16.mxu0 0
    %2390 = vmatpush1.bf16.msra.mxu0 0
    %2391 = vmatprep.subr.bf16.mxu0 0
    %2392 = vmatpush1.bf16.msra.mxu0 0
    %2393 = vmatprep.mubr.bf16.mxu0 0
    %2394 = vmatmul.mubr.bf16.gmra.mrb[0].mxu0 %v2335
    %v2395 = vpop.f32.mrb[0].mxu0
    %v2396 = vadd.f32 0.0, %v2395
    %v2397 = vpop.f32.mrb[0].mxu0
    %v2398 = vpop.f32.mrb[0].mxu0
    %v2399 = vadd.f32 0.0, %v2398
    %v2400 = vpop.f32.mrb[0].mxu0
    %2401 = vmatprep.mubr.bf16.mxu0 0
    %2402 = vmatmul.mubr.bf16.gmra.mrb[0].mxu0 %v2338
    %v2403 = vpop.f32.mrb[0].mxu0
    %v2404 = vadd.f32 0.0, %v2403
    %v2405 = vpop.f32.mrb[0].mxu0
    %v2406 = vpop.f32.mrb[0].mxu0
    %v2407 = vadd.f32 0.0, %v2406
    %v2408 = vpop.f32.mrb[0].mxu0
    %2409 = vmatprep.mubr.bf16.mxu0 0
    %2410 = vmatmul.mubr.bf16.gmra.mrb[0].mxu0 %v2341
    %v2411 = vpop.f32.mrb[0].mxu0
    %v2412 = vadd.f32 0.0, %v2411
    %v2413 = vpop.f32.mrb[0].mxu0
    %v2414 = vpop.f32.mrb[0].mxu0
    %v2415 = vadd.f32 0.0, %v2414
    %v2416 = vpop.f32.mrb[0].mxu0
    %2417 = vmatprep.mubr.bf16.mxu0 0
    %2418 = vmatmul.mubr.bf16.gmra.mrb[0].mxu0 %v2344
    %v2419 = vpop.f32.mrb[0].mxu0
    %v2420 = vadd.f32 0.0, %v2419
    %v2421 = vpop.f32.mrb[0].mxu0
    %v2422 = vpop.f32.mrb[0].mxu0
    %v2423 = vadd.f32 0.0, %v2422
    %v2424 = vpop.f32.mrb[0].mxu0
    %2425 = vmatprep.mubr.bf16.mxu0 0
    %2426 = vmatmul.mubr.bf16.gmra.mrb[0].mxu0 %v2347
    %v2427 = vpop.f32.mrb[0].mxu0
    %v2428 = vadd.f32 0.0, %v2427
    %v2429 = vpop.f32.mrb[0].mxu0
    %v2430 = vpop.f32.mrb[0].mxu0
    %v2431 = vadd.f32 0.0, %v2430
    %v2432 = vpop.f32.mrb[0].mxu0
    %2433 = vmatprep.mubr.bf16.mxu0 0
    %2434 = vmatmul.mubr.bf16.gmra.mrb[0].mxu0 %v2350
    %v2435 = vpop.f32.mrb[0].mxu0
    %v2436 = vadd.f32 0.0, %v2435
    %v2437 = vpop.f32.mrb[0].mxu0
    %v2438 = vpop.f32.mrb[0].mxu0
    %v2439 = vadd.f32 0.0, %v2438
    %v2440 = vpop.f32.mrb[0].mxu0
    %2441 = vmatprep.mubr.bf16.mxu0 0
    %2442 = vmatmul.mubr.bf16.gmra.mrb[0].mxu0 %v2353
    %v2443 = vpop.f32.mrb[0].mxu0
    %v2444 = vadd.f32 0.0, %v2443
    %v2445 = vpop.f32.mrb[0].mxu0
    %v2446 = vpop.f32.mrb[0].mxu0
    %v2447 = vadd.f32 0.0, %v2446
    %v2448 = vpop.f32.mrb[0].mxu0
    %2449 = vmatprep.mubr.bf16.mxu0 0
    %2450 = vmatmul.mubr.bf16.gmra.mrb[0].mxu0 %v2356
    %v2451 = vpop.f32.mrb[0].mxu0
    %v2452 = vadd.f32 0.0, %v2451
    %v2453 = vpop.f32.mrb[0].mxu0
    %v2454 = vpop.f32.mrb[0].mxu0
    %v2455 = vadd.f32 0.0, %v2454
    %v2456 = vpop.f32.mrb[0].mxu0
    %2457 = vdwg.mxu0
    %v2458 = vadd.f32 %v2292, %v2396
    %v2459 = vadd.f32 %v2293, %v2399
    %v2460 = vadd.f32 %v2294, %v2404
    %v2461 = vadd.f32 %v2295, %v2407
    %v2462 = vadd.f32 %v2296, %v2412
    %v2463 = vadd.f32 %v2297, %v2415
    %v2464 = vadd.f32 %v2298, %v2420
    %v2465 = vadd.f32 %v2299, %v2423
    %v2466 = vadd.f32 %v2300, %v2428
    %v2467 = vadd.f32 %v2301, %v2431
    %v2468 = vadd.f32 %v2302, %v2436
    %v2469 = vadd.f32 %v2303, %v2439
    %v2470 = vadd.f32 %v2304, %v2444
    %v2471 = vadd.f32 %v2305, %v2447
    %v2472 = vadd.f32 %v2306, %v2452
    %v2473 = vadd.f32 %v2307, %v2455
    %v2474 = vld [vmem:[%s1809 + $0x4] sm:$0xff]
    %v2475 = vld [vmem:[%s1809 + $0x14] sm:$0xff]
    %v2476 = vld [vmem:[%s1809 + $0x24] sm:$0xff]
    %v2477 = vld [vmem:[%s1809 + $0x34] sm:$0xff]
    %v2478 = vld [vmem:[%s1809 + $0x44] sm:$0xff]
    %v2479 = vld [vmem:[%s1809 + $0x54] sm:$0xff]
    %v2480 = vld [vmem:[%s1809 + $0x64] sm:$0xff]
    %v2481 = vld [vmem:[%s1809 + $0x74] sm:$0xff]
    %v2482 = vld [vmem:[%s1809 + $0xc4] sm:$0xff]
    %v2483 = vld [vmem:[%s1809 + $0xd4] sm:$0xff]
    %v2484 = vld [vmem:[%s1809 + $0xe4] sm:$0xff]
    %v2485 = vld [vmem:[%s1809 + $0xf4] sm:$0xff]
    %v2486 = vld [vmem:[%s1809 + $0x104] sm:$0xff]
    %v2487 = vld [vmem:[%s1809 + $0x114] sm:$0xff]
    %v2488 = vld [vmem:[%s1809 + $0x124] sm:$0xff]
    %v2489 = vld [vmem:[%s1809 + $0x134] sm:$0xff]
    %v2490 = vpack.c.bf16 %v2475, %v2474
    %v2491 = vpack.c.bf16 %v2477, %v2476
    %v2492 = vpack.c.bf16 %v2479, %v2478
    %v2493 = vpack.c.bf16 %v2481, %v2480
    %v2494 = vpack.c.bf16 %v2483, %v2482
    %v2495 = vpack.c.bf16 %v2485, %v2484
    %v2496 = vpack.c.bf16 %v2487, %v2486
    %v2497 = vpack.c.bf16 %v2489, %v2488
    %s2498 = scalar_lea.vmem %s1, 28
    %v2499 = vld [vmem:[%s2498] sm:$0x3]
    %v2501 = vsel %vm46, %v2490, 0
    %v2504 = vsel %vm46, %v2491, 0
    %v2507 = vsel %vm46, %v2492, 0
    %v2510 = vsel %vm46, %v2493, 0
    %v2513 = vsel %vm46, %v2494, 0
    %v2516 = vsel %vm46, %v2495, 0
    %v2519 = vsel %vm46, %v2496, 0
    %v2522 = vsel %vm46, %v2497, 0
    %v2525 = vand.u32 %v2499, %v256
    %2527 = vmatprep.subr.bf16.mxu0 0
    %2528 = vmatpush1.bf16.msra.mxu0 %v2525
    %2529 = vmatprep.subr.bf16.mxu0 0
    %2530 = vmatpush1.bf16.msra.mxu0 0
    %2531 = vmatprep.subr.bf16.mxu0 0
    %2532 = vmatpush1.bf16.msra.mxu0 0
    %2533 = vmatprep.subr.bf16.mxu0 0
    %2534 = vmatpush1.bf16.msra.mxu0 0
    %2535 = vmatprep.subr.bf16.mxu0 0
    %2536 = vmatpush1.bf16.msra.mxu0 0
    %2537 = vmatprep.subr.bf16.mxu0 0
    %2538 = vmatpush1.bf16.msra.mxu0 0
    %2539 = vmatprep.subr.bf16.mxu0 0
    %2540 = vmatpush1.bf16.msra.mxu0 0
    %2541 = vmatprep.subr.bf16.mxu0 0
    %2542 = vmatpush1.bf16.msra.mxu0 0
    %2543 = vmatprep.subr.bf16.mxu0 0
    %2544 = vmatpush1.bf16.msra.mxu0 0
    %2545 = vmatprep.subr.bf16.mxu0 0
    %2546 = vmatpush1.bf16.msra.mxu0 0
    %2547 = vmatprep.subr.bf16.mxu0 0
    %2548 = vmatpush1.bf16.msra.mxu0 0
    %2549 = vmatprep.subr.bf16.mxu0 0
    %2550 = vmatpush1.bf16.msra.mxu0 0
    %2551 = vmatprep.subr.bf16.mxu0 0
    %2552 = vmatpush1.bf16.msra.mxu0 0
    %2553 = vmatprep.subr.bf16.mxu0 0
    %2554 = vmatpush1.bf16.msra.mxu0 0
    %2555 = vmatprep.subr.bf16.mxu0 0
    %2556 = vmatpush1.bf16.msra.mxu0 0
    %2557 = vmatprep.subr.bf16.mxu0 0
    %2558 = vmatpush1.bf16.msra.mxu0 0
    %2559 = vmatprep.mubr.bf16.mxu0 0
    %2560 = vmatmul.mubr.bf16.gmra.mrb[0].mxu0 %v2501
    %v2561 = vpop.f32.mrb[0].mxu0
    %v2562 = vadd.f32 0.0, %v2561
    %v2563 = vpop.f32.mrb[0].mxu0
    %v2564 = vpop.f32.mrb[0].mxu0
    %v2565 = vadd.f32 0.0, %v2564
    %v2566 = vpop.f32.mrb[0].mxu0
    %2567 = vmatprep.mubr.bf16.mxu0 0
    %2568 = vmatmul.mubr.bf16.gmra.mrb[0].mxu0 %v2504
    %v2569 = vpop.f32.mrb[0].mxu0
    %v2570 = vadd.f32 0.0, %v2569
    %v2571 = vpop.f32.mrb[0].mxu0
    %v2572 = vpop.f32.mrb[0].mxu0
    %v2573 = vadd.f32 0.0, %v2572
    %v2574 = vpop.f32.mrb[0].mxu0
    %2575 = vmatprep.mubr.bf16.mxu0 0
    %2576 = vmatmul.mubr.bf16.gmra.mrb[0].mxu0 %v2507
    %v2577 = vpop.f32.mrb[0].mxu0
    %v2578 = vadd.f32 0.0, %v2577
    %v2579 = vpop.f32.mrb[0].mxu0
    %v2580 = vpop.f32.mrb[0].mxu0
    %v2581 = vadd.f32 0.0, %v2580
    %v2582 = vpop.f32.mrb[0].mxu0
    %2583 = vmatprep.mubr.bf16.mxu0 0
    %2584 = vmatmul.mubr.bf16.gmra.mrb[0].mxu0 %v2510
    %v2585 = vpop.f32.mrb[0].mxu0
    %v2586 = vadd.f32 0.0, %v2585
    %v2587 = vpop.f32.mrb[0].mxu0
    %v2588 = vpop.f32.mrb[0].mxu0
    %v2589 = vadd.f32 0.0, %v2588
    %v2590 = vpop.f32.mrb[0].mxu0
    %2591 = vmatprep.mubr.bf16.mxu0 0
    %2592 = vmatmul.mubr.bf16.gmra.mrb[0].mxu0 %v2513
    %v2593 = vpop.f32.mrb[0].mxu0
    %v2594 = vadd.f32 0.0, %v2593
    %v2595 = vpop.f32.mrb[0].mxu0
    %v2596 = vpop.f32.mrb[0].mxu0
    %v2597 = vadd.f32 0.0, %v2596
    %v2598 = vpop.f32.mrb[0].mxu0
    %2599 = vmatprep.mubr.bf16.mxu0 0
    %2600 = vmatmul.mubr.bf16.gmra.mrb[0].mxu0 %v2516
    %v2601 = vpop.f32.mrb[0].mxu0
    %v2602 = vadd.f32 0.0, %v2601
    %v2603 = vpop.f32.mrb[0].mxu0
    %v2604 = vpop.f32.mrb[0].mxu0
    %v2605 = vadd.f32 0.0, %v2604
    %v2606 = vpop.f32.mrb[0].mxu0
    %2607 = vmatprep.mubr.bf16.mxu0 0
    %2608 = vmatmul.mubr.bf16.gmra.mrb[0].mxu0 %v2519
    %v2609 = vpop.f32.mrb[0].mxu0
    %v2610 = vadd.f32 0.0, %v2609
    %v2611 = vpop.f32.mrb[0].mxu0
    %v2612 = vpop.f32.mrb[0].mxu0
    %v2613 = vadd.f32 0.0, %v2612
    %v2614 = vpop.f32.mrb[0].mxu0
    %2615 = vmatprep.mubr.bf16.mxu0 0
    %2616 = vmatmul.mubr.bf16.gmra.mrb[0].mxu0 %v2522
    %v2617 = vpop.f32.mrb[0].mxu0
    %v2618 = vadd.f32 0.0, %v2617
    %v2619 = vpop.f32.mrb[0].mxu0
    %v2620 = vpop.f32.mrb[0].mxu0
    %v2621 = vadd.f32 0.0, %v2620
    %v2622 = vpop.f32.mrb[0].mxu0
    %2623 = vdwg.mxu0
    %v2624 = vadd.f32 %v2458, %v2562
    %v2625 = vadd.f32 %v2459, %v2565
    %v2626 = vadd.f32 %v2460, %v2570
    %v2627 = vadd.f32 %v2461, %v2573
    %v2628 = vadd.f32 %v2462, %v2578
    %v2629 = vadd.f32 %v2463, %v2581
    %v2630 = vadd.f32 %v2464, %v2586
    %v2631 = vadd.f32 %v2465, %v2589
    %v2632 = vadd.f32 %v2466, %v2594
    %v2633 = vadd.f32 %v2467, %v2597
    %v2634 = vadd.f32 %v2468, %v2602
    %v2635 = vadd.f32 %v2469, %v2605
    %v2636 = vadd.f32 %v2470, %v2610
    %v2637 = vadd.f32 %v2471, %v2613
    %v2638 = vadd.f32 %v2472, %v2618
    %v2639 = vadd.f32 %v2473, %v2621
    %s2640 = scalar_lea.vmem [#allocation2], 48
    %v2641 = vld [vmem:[%s2640] sm:$0xff]
    %v2642 = vld [vmem:[%s2640 + $0x10] sm:$0xff]
    %v2643 = vld [vmem:[%s2640 + $0x20] sm:$0xff]
    %v2644 = vld [vmem:[%s2640 + $0x30] sm:$0xff]
    %v2645 = vld [vmem:[%s2640 + $0x40] sm:$0xff]
    %v2646 = vld [vmem:[%s2640 + $0x50] sm:$0xff]
    %v2647 = vld [vmem:[%s2640 + $0x60] sm:$0xff]
    %v2648 = vld [vmem:[%s2640 + $0x70] sm:$0xff]
    %v2649 = vld [vmem:[%s2640 + $0xc0] sm:$0xff]
    %v2650 = vld [vmem:[%s2640 + $0xd0] sm:$0xff]
    %v2651 = vld [vmem:[%s2640 + $0xe0] sm:$0xff]
    %v2652 = vld [vmem:[%s2640 + $0xf0] sm:$0xff]
    %v2653 = vld [vmem:[%s2640 + $0x100] sm:$0xff]
    %v2654 = vld [vmem:[%s2640 + $0x110] sm:$0xff]
    %v2655 = vld [vmem:[%s2640 + $0x120] sm:$0xff]
    %v2656 = vld [vmem:[%s2640 + $0x130] sm:$0xff]
    %v2657 = vpack.c.bf16 %v2642, %v2641
    %v2658 = vpack.c.bf16 %v2644, %v2643
    %v2659 = vpack.c.bf16 %v2646, %v2645
    %v2660 = vpack.c.bf16 %v2648, %v2647
    %v2661 = vpack.c.bf16 %v2650, %v2649
    %v2662 = vpack.c.bf16 %v2652, %v2651
    %v2663 = vpack.c.bf16 %v2654, %v2653
    %v2664 = vpack.c.bf16 %v2656, %v2655
    %s2665 = scalar_lea.vmem %s1, 30
    %v2666 = vld [vmem:[%s2665] sm:$0x3]
    %v2668 = vsel %vm46, %v2657, 0
    %v2671 = vsel %vm46, %v2658, 0
    %v2674 = vsel %vm46, %v2659, 0
    %v2677 = vsel %vm46, %v2660, 0
    %v2680 = vsel %vm46, %v2661, 0
    %v2683 = vsel %vm46, %v2662, 0
    %v2686 = vsel %vm46, %v2663, 0
    %v2689 = vsel %vm46, %v2664, 0
    %v2692 = vand.u32 %v2666, %v256
    %2694 = vmatprep.subr.bf16.mxu0 0
    %2695 = vmatpush1.bf16.msra.mxu0 %v2692
    %2696 = vmatprep.subr.bf16.mxu0 0
    %2697 = vmatpush1.bf16.msra.mxu0 0
    %2698 = vmatprep.subr.bf16.mxu0 0
    %2699 = vmatpush1.bf16.msra.mxu0 0
    %2700 = vmatprep.subr.bf16.mxu0 0
    %2701 = vmatpush1.bf16.msra.mxu0 0
    %2702 = vmatprep.subr.bf16.mxu0 0
    %2703 = vmatpush1.bf16.msra.mxu0 0
    %2704 = vmatprep.subr.bf16.mxu0 0
    %2705 = vmatpush1.bf16.msra.mxu0 0
    %2706 = vmatprep.subr.bf16.mxu0 0
    %2707 = vmatpush1.bf16.msra.mxu0 0
    %2708 = vmatprep.subr.bf16.mxu0 0
    %2709 = vmatpush1.bf16.msra.mxu0 0
    %2710 = vmatprep.subr.bf16.mxu0 0
    %2711 = vmatpush1.bf16.msra.mxu0 0
    %2712 = vmatprep.subr.bf16.mxu0 0
    %2713 = vmatpush1.bf16.msra.mxu0 0
    %2714 = vmatprep.subr.bf16.mxu0 0
    %2715 = vmatpush1.bf16.msra.mxu0 0
    %2716 = vmatprep.subr.bf16.mxu0 0
    %2717 = vmatpush1.bf16.msra.mxu0 0
    %2718 = vmatprep.subr.bf16.mxu0 0
    %2719 = vmatpush1.bf16.msra.mxu0 0
    %2720 = vmatprep.subr.bf16.mxu0 0
    %2721 = vmatpush1.bf16.msra.mxu0 0
    %2722 = vmatprep.subr.bf16.mxu0 0
    %2723 = vmatpush1.bf16.msra.mxu0 0
    %2724 = vmatprep.subr.bf16.mxu0 0
    %2725 = vmatpush1.bf16.msra.mxu0 0
    %2726 = vmatprep.mubr.bf16.mxu0 0
    %2727 = vmatmul.mubr.bf16.gmra.mrb[0].mxu0 %v2668
    %v2728 = vpop.f32.mrb[0].mxu0
    %v2729 = vadd.f32 0.0, %v2728
    %v2730 = vpop.f32.mrb[0].mxu0
    %v2731 = vpop.f32.mrb[0].mxu0
    %v2732 = vadd.f32 0.0, %v2731
    %v2733 = vpop.f32.mrb[0].mxu0
    %2734 = vmatprep.mubr.bf16.mxu0 0
    %2735 = vmatmul.mubr.bf16.gmra.mrb[0].mxu0 %v2671
    %v2736 = vpop.f32.mrb[0].mxu0
    %v2737 = vadd.f32 0.0, %v2736
    %v2738 = vpop.f32.mrb[0].mxu0
    %v2739 = vpop.f32.mrb[0].mxu0
    %v2740 = vadd.f32 0.0, %v2739
    %v2741 = vpop.f32.mrb[0].mxu0
    %2742 = vmatprep.mubr.bf16.mxu0 0
    %2743 = vmatmul.mubr.bf16.gmra.mrb[0].mxu0 %v2674
    %v2744 = vpop.f32.mrb[0].mxu0
    %v2745 = vadd.f32 0.0, %v2744
    %v2746 = vpop.f32.mrb[0].mxu0
    %v2747 = vpop.f32.mrb[0].mxu0
    %v2748 = vadd.f32 0.0, %v2747
    %v2749 = vpop.f32.mrb[0].mxu0
    %2750 = vmatprep.mubr.bf16.mxu0 0
    %2751 = vmatmul.mubr.bf16.gmra.mrb[0].mxu0 %v2677
    %v2752 = vpop.f32.mrb[0].mxu0
    %v2753 = vadd.f32 0.0, %v2752
    %v2754 = vpop.f32.mrb[0].mxu0
    %v2755 = vpop.f32.mrb[0].mxu0
    %v2756 = vadd.f32 0.0, %v2755
    %v2757 = vpop.f32.mrb[0].mxu0
    %2758 = vmatprep.mubr.bf16.mxu0 0
    %2759 = vmatmul.mubr.bf16.gmra.mrb[0].mxu0 %v2680
    %v2760 = vpop.f32.mrb[0].mxu0
    %v2761 = vadd.f32 0.0, %v2760
    %v2762 = vpop.f32.mrb[0].mxu0
    %v2763 = vpop.f32.mrb[0].mxu0
    %v2764 = vadd.f32 0.0, %v2763
    %v2765 = vpop.f32.mrb[0].mxu0
    %2766 = vmatprep.mubr.bf16.mxu0 0
    %2767 = vmatmul.mubr.bf16.gmra.mrb[0].mxu0 %v2683
    %v2768 = vpop.f32.mrb[0].mxu0
    %v2769 = vadd.f32 0.0, %v2768
    %v2770 = vpop.f32.mrb[0].mxu0
    %v2771 = vpop.f32.mrb[0].mxu0
    %v2772 = vadd.f32 0.0, %v2771
    %v2773 = vpop.f32.mrb[0].mxu0
    %2774 = vmatprep.mubr.bf16.mxu0 0
    %2775 = vmatmul.mubr.bf16.gmra.mrb[0].mxu0 %v2686
    %v2776 = vpop.f32.mrb[0].mxu0
    %v2777 = vadd.f32 0.0, %v2776
    %v2778 = vpop.f32.mrb[0].mxu0
    %v2779 = vpop.f32.mrb[0].mxu0
    %v2780 = vadd.f32 0.0, %v2779
    %v2781 = vpop.f32.mrb[0].mxu0
    %2782 = vmatprep.mubr.bf16.mxu0 0
    %2783 = vmatmul.mubr.bf16.gmra.mrb[0].mxu0 %v2689
    %v2784 = vpop.f32.mrb[0].mxu0
    %v2785 = vadd.f32 0.0, %v2784
    %v2786 = vpop.f32.mrb[0].mxu0
    %v2787 = vpop.f32.mrb[0].mxu0
    %v2788 = vadd.f32 0.0, %v2787
    %v2789 = vpop.f32.mrb[0].mxu0
    %2790 = vdwg.mxu0
    %v2791 = vadd.f32 %v2624, %v2729
    %v2792 = vadd.f32 %v2625, %v2732
    %v2793 = vadd.f32 %v2626, %v2737
    %v2794 = vadd.f32 %v2627, %v2740
    %v2795 = vadd.f32 %v2628, %v2745
    %v2796 = vadd.f32 %v2629, %v2748
    %v2797 = vadd.f32 %v2630, %v2753
    %v2798 = vadd.f32 %v2631, %v2756
    %v2799 = vadd.f32 %v2632, %v2761
    %v2800 = vadd.f32 %v2633, %v2764
    %v2801 = vadd.f32 %v2634, %v2769
    %v2802 = vadd.f32 %v2635, %v2772
    %v2803 = vadd.f32 %v2636, %v2777
    %v2804 = vadd.f32 %v2637, %v2780
    %v2805 = vadd.f32 %v2638, %v2785
    %v2806 = vadd.f32 %v2639, %v2788
    %v2807 = vld [vmem:[%s2640 + $0x1] sm:$0xff]
    %v2808 = vld [vmem:[%s2640 + $0x11] sm:$0xff]
    %v2809 = vld [vmem:[%s2640 + $0x21] sm:$0xff]
    %v2810 = vld [vmem:[%s2640 + $0x31] sm:$0xff]
    %v2811 = vld [vmem:[%s2640 + $0x41] sm:$0xff]
    %v2812 = vld [vmem:[%s2640 + $0x51] sm:$0xff]
    %v2813 = vld [vmem:[%s2640 + $0x61] sm:$0xff]
    %v2814 = vld [vmem:[%s2640 + $0x71] sm:$0xff]
    %v2815 = vld [vmem:[%s2640 + $0xc1] sm:$0xff]
    %v2816 = vld [vmem:[%s2640 + $0xd1] sm:$0xff]
    %v2817 = vld [vmem:[%s2640 + $0xe1] sm:$0xff]
    %v2818 = vld [vmem:[%s2640 + $0xf1] sm:$0xff]
    %v2819 = vld [vmem:[%s2640 + $0x101] sm:$0xff]
    %v2820 = vld [vmem:[%s2640 + $0x111] sm:$0xff]
    %v2821 = vld [vmem:[%s2640 + $0x121] sm:$0xff]
    %v2822 = vld [vmem:[%s2640 + $0x131] sm:$0xff]
    %v2823 = vpack.c.bf16 %v2808, %v2807
    %v2824 = vpack.c.bf16 %v2810, %v2809
    %v2825 = vpack.c.bf16 %v2812, %v2811
    %v2826 = vpack.c.bf16 %v2814, %v2813
    %v2827 = vpack.c.bf16 %v2816, %v2815
    %v2828 = vpack.c.bf16 %v2818, %v2817
    %v2829 = vpack.c.bf16 %v2820, %v2819
    %v2830 = vpack.c.bf16 %v2822, %v2821
    %s2831 = scalar_lea.vmem %s1, 32
    %v2832 = vld [vmem:[%s2831] sm:$0x3]
    %v2834 = vsel %vm46, %v2823, 0
    %v2837 = vsel %vm46, %v2824, 0
    %v2840 = vsel %vm46, %v2825, 0
    %v2843 = vsel %vm46, %v2826, 0
    %v2846 = vsel %vm46, %v2827, 0
    %v2849 = vsel %vm46, %v2828, 0
    %v2852 = vsel %vm46, %v2829, 0
    %v2855 = vsel %vm46, %v2830, 0
    %v2858 = vand.u32 %v2832, %v256
    %2860 = vmatprep.subr.bf16.mxu0 0
    %2861 = vmatpush1.bf16.msra.mxu0 %v2858
    %2862 = vmatprep.subr.bf16.mxu0 0
    %2863 = vmatpush1.bf16.msra.mxu0 0
    %2864 = vmatprep.subr.bf16.mxu0 0
    %2865 = vmatpush1.bf16.msra.mxu0 0
    %2866 = vmatprep.subr.bf16.mxu0 0
    %2867 = vmatpush1.bf16.msra.mxu0 0
    %2868 = vmatprep.subr.bf16.mxu0 0
    %2869 = vmatpush1.bf16.msra.mxu0 0
    %2870 = vmatprep.subr.bf16.mxu0 0
    %2871 = vmatpush1.bf16.msra.mxu0 0
    %2872 = vmatprep.subr.bf16.mxu0 0
    %2873 = vmatpush1.bf16.msra.mxu0 0
    %2874 = vmatprep.subr.bf16.mxu0 0
    %2875 = vmatpush1.bf16.msra.mxu0 0
    %2876 = vmatprep.subr.bf16.mxu0 0
    %2877 = vmatpush1.bf16.msra.mxu0 0
    %2878 = vmatprep.subr.bf16.mxu0 0
    %2879 = vmatpush1.bf16.msra.mxu0 0
    %2880 = vmatprep.subr.bf16.mxu0 0
    %2881 = vmatpush1.bf16.msra.mxu0 0
    %2882 = vmatprep.subr.bf16.mxu0 0
    %2883 = vmatpush1.bf16.msra.mxu0 0
    %2884 = vmatprep.subr.bf16.mxu0 0
    %2885 = vmatpush1.bf16.msra.mxu0 0
    %2886 = vmatprep.subr.bf16.mxu0 0
    %2887 = vmatpush1.bf16.msra.mxu0 0
    %2888 = vmatprep.subr.bf16.mxu0 0
    %2889 = vmatpush1.bf16.msra.mxu0 0
    %2890 = vmatprep.subr.bf16.mxu0 0
    %2891 = vmatpush1.bf16.msra.mxu0 0
    %2892 = vmatprep.mubr.bf16.mxu0 0
    %2893 = vmatmul.mubr.bf16.gmra.mrb[0].mxu0 %v2834
    %v2894 = vpop.f32.mrb[0].mxu0
    %v2895 = vadd.f32 0.0, %v2894
    %v2896 = vpop.f32.mrb[0].mxu0
    %v2897 = vpop.f32.mrb[0].mxu0
    %v2898 = vadd.f32 0.0, %v2897
    %v2899 = vpop.f32.mrb[0].mxu0
    %2900 = vmatprep.mubr.bf16.mxu0 0
    %2901 = vmatmul.mubr.bf16.gmra.mrb[0].mxu0 %v2837
    %v2902 = vpop.f32.mrb[0].mxu0
    %v2903 = vadd.f32 0.0, %v2902
    %v2904 = vpop.f32.mrb[0].mxu0
    %v2905 = vpop.f32.mrb[0].mxu0
    %v2906 = vadd.f32 0.0, %v2905
    %v2907 = vpop.f32.mrb[0].mxu0
    %2908 = vmatprep.mubr.bf16.mxu0 0
    %2909 = vmatmul.mubr.bf16.gmra.mrb[0].mxu0 %v2840
    %v2910 = vpop.f32.mrb[0].mxu0
    %v2911 = vadd.f32 0.0, %v2910
    %v2912 = vpop.f32.mrb[0].mxu0
    %v2913 = vpop.f32.mrb[0].mxu0
    %v2914 = vadd.f32 0.0, %v2913
    %v2915 = vpop.f32.mrb[0].mxu0
    %2916 = vmatprep.mubr.bf16.mxu0 0
    %2917 = vmatmul.mubr.bf16.gmra.mrb[0].mxu0 %v2843
    %v2918 = vpop.f32.mrb[0].mxu0
    %v2919 = vadd.f32 0.0, %v2918
    %v2920 = vpop.f32.mrb[0].mxu0
    %v2921 = vpop.f32.mrb[0].mxu0
    %v2922 = vadd.f32 0.0, %v2921
    %v2923 = vpop.f32.mrb[0].mxu0
    %2924 = vmatprep.mubr.bf16.mxu0 0
    %2925 = vmatmul.mubr.bf16.gmra.mrb[0].mxu0 %v2846
    %v2926 = vpop.f32.mrb[0].mxu0
    %v2927 = vadd.f32 0.0, %v2926
    %v2928 = vpop.f32.mrb[0].mxu0
    %v2929 = vpop.f32.mrb[0].mxu0
    %v2930 = vadd.f32 0.0, %v2929
    %v2931 = vpop.f32.mrb[0].mxu0
    %2932 = vmatprep.mubr.bf16.mxu0 0
    %2933 = vmatmul.mubr.bf16.gmra.mrb[0].mxu0 %v2849
    %v2934 = vpop.f32.mrb[0].mxu0
    %v2935 = vadd.f32 0.0, %v2934
    %v2936 = vpop.f32.mrb[0].mxu0
    %v2937 = vpop.f32.mrb[0].mxu0
    %v2938 = vadd.f32 0.0, %v2937
    %v2939 = vpop.f32.mrb[0].mxu0
    %2940 = vmatprep.mubr.bf16.mxu0 0
    %2941 = vmatmul.mubr.bf16.gmra.mrb[0].mxu0 %v2852
    %v2942 = vpop.f32.mrb[0].mxu0
    %v2943 = vadd.f32 0.0, %v2942
    %v2944 = vpop.f32.mrb[0].mxu0
    %v2945 = vpop.f32.mrb[0].mxu0
    %v2946 = vadd.f32 0.0, %v2945
    %v2947 = vpop.f32.mrb[0].mxu0
    %2948 = vmatprep.mubr.bf16.mxu0 0
    %2949 = vmatmul.mubr.bf16.gmra.mrb[0].mxu0 %v2855
    %v2950 = vpop.f32.mrb[0].mxu0
    %v2951 = vadd.f32 0.0, %v2950
    %v2952 = vpop.f32.mrb[0].mxu0
    %v2953 = vpop.f32.mrb[0].mxu0
    %v2954 = vadd.f32 0.0, %v2953
    %v2955 = vpop.f32.mrb[0].mxu0
    %2956 = vdwg.mxu0
    %v2957 = vadd.f32 %v2791, %v2895
    %v2958 = vadd.f32 %v2792, %v2898
    %v2959 = vadd.f32 %v2793, %v2903
    %v2960 = vadd.f32 %v2794, %v2906
    %v2961 = vadd.f32 %v2795, %v2911
    %v2962 = vadd.f32 %v2796, %v2914
    %v2963 = vadd.f32 %v2797, %v2919
    %v2964 = vadd.f32 %v2798, %v2922
    %v2965 = vadd.f32 %v2799, %v2927
    %v2966 = vadd.f32 %v2800, %v2930
    %v2967 = vadd.f32 %v2801, %v2935
    %v2968 = vadd.f32 %v2802, %v2938
    %v2969 = vadd.f32 %v2803, %v2943
    %v2970 = vadd.f32 %v2804, %v2946
    %v2971 = vadd.f32 %v2805, %v2951
    %v2972 = vadd.f32 %v2806, %v2954
    %v2973 = vld [vmem:[%s2640 + $0x2] sm:$0xff]
    %v2974 = vld [vmem:[%s2640 + $0x12] sm:$0xff]
    %v2975 = vld [vmem:[%s2640 + $0x22] sm:$0xff]
    %v2976 = vld [vmem:[%s2640 + $0x32] sm:$0xff]
    %v2977 = vld [vmem:[%s2640 + $0x42] sm:$0xff]
    %v2978 = vld [vmem:[%s2640 + $0x52] sm:$0xff]
    %v2979 = vld [vmem:[%s2640 + $0x62] sm:$0xff]
    %v2980 = vld [vmem:[%s2640 + $0x72] sm:$0xff]
    %v2981 = vld [vmem:[%s2640 + $0xc2] sm:$0xff]
    %v2982 = vld [vmem:[%s2640 + $0xd2] sm:$0xff]
    %v2983 = vld [vmem:[%s2640 + $0xe2] sm:$0xff]
    %v2984 = vld [vmem:[%s2640 + $0xf2] sm:$0xff]
    %v2985 = vld [vmem:[%s2640 + $0x102] sm:$0xff]
    %v2986 = vld [vmem:[%s2640 + $0x112] sm:$0xff]
    %v2987 = vld [vmem:[%s2640 + $0x122] sm:$0xff]
    %v2988 = vld [vmem:[%s2640 + $0x132] sm:$0xff]
    %v2989 = vpack.c.bf16 %v2974, %v2973
    %v2990 = vpack.c.bf16 %v2976, %v2975
    %v2991 = vpack.c.bf16 %v2978, %v2977
    %v2992 = vpack.c.bf16 %v2980, %v2979
    %v2993 = vpack.c.bf16 %v2982, %v2981
    %v2994 = vpack.c.bf16 %v2984, %v2983
    %v2995 = vpack.c.bf16 %v2986, %v2985
    %v2996 = vpack.c.bf16 %v2988, %v2987
    %s2997 = scalar_lea.vmem %s1, 34
    %v2998 = vld [vmem:[%s2997] sm:$0x3]
    %v3000 = vsel %vm46, %v2989, 0
    %v3003 = vsel %vm46, %v2990, 0
    %v3006 = vsel %vm46, %v2991, 0
    %v3009 = vsel %vm46, %v2992, 0
    %v3012 = vsel %vm46, %v2993, 0
    %v3015 = vsel %vm46, %v2994, 0
    %v3018 = vsel %vm46, %v2995, 0
    %v3021 = vsel %vm46, %v2996, 0
    %v3024 = vand.u32 %v2998, %v256
    %3026 = vmatprep.subr.bf16.mxu0 0
    %3027 = vmatpush1.bf16.msra.mxu0 %v3024
    %3028 = vmatprep.subr.bf16.mxu0 0
    %3029 = vmatpush1.bf16.msra.mxu0 0
    %3030 = vmatprep.subr.bf16.mxu0 0
    %3031 = vmatpush1.bf16.msra.mxu0 0
    %3032 = vmatprep.subr.bf16.mxu0 0
    %3033 = vmatpush1.bf16.msra.mxu0 0
    %3034 = vmatprep.subr.bf16.mxu0 0
    %3035 = vmatpush1.bf16.msra.mxu0 0
    %3036 = vmatprep.subr.bf16.mxu0 0
    %3037 = vmatpush1.bf16.msra.mxu0 0
    %3038 = vmatprep.subr.bf16.mxu0 0
    %3039 = vmatpush1.bf16.msra.mxu0 0
    %3040 = vmatprep.subr.bf16.mxu0 0
    %3041 = vmatpush1.bf16.msra.mxu0 0
    %3042 = vmatprep.subr.bf16.mxu0 0
    %3043 = vmatpush1.bf16.msra.mxu0 0
    %3044 = vmatprep.subr.bf16.mxu0 0
    %3045 = vmatpush1.bf16.msra.mxu0 0
    %3046 = vmatprep.subr.bf16.mxu0 0
    %3047 = vmatpush1.bf16.msra.mxu0 0
    %3048 = vmatprep.subr.bf16.mxu0 0
    %3049 = vmatpush1.bf16.msra.mxu0 0
    %3050 = vmatprep.subr.bf16.mxu0 0
    %3051 = vmatpush1.bf16.msra.mxu0 0
    %3052 = vmatprep.subr.bf16.mxu0 0
    %3053 = vmatpush1.bf16.msra.mxu0 0
    %3054 = vmatprep.subr.bf16.mxu0 0
    %3055 = vmatpush1.bf16.msra.mxu0 0
    %3056 = vmatprep.subr.bf16.mxu0 0
    %3057 = vmatpush1.bf16.msra.mxu0 0
    %3058 = vmatprep.mubr.bf16.mxu0 0
    %3059 = vmatmul.mubr.bf16.gmra.mrb[0].mxu0 %v3000
    %v3060 = vpop.f32.mrb[0].mxu0
    %v3061 = vadd.f32 0.0, %v3060
    %v3062 = vpop.f32.mrb[0].mxu0
    %v3063 = vpop.f32.mrb[0].mxu0
    %v3064 = vadd.f32 0.0, %v3063
    %v3065 = vpop.f32.mrb[0].mxu0
    %3066 = vmatprep.mubr.bf16.mxu0 0
    %3067 = vmatmul.mubr.bf16.gmra.mrb[0].mxu0 %v3003
    %v3068 = vpop.f32.mrb[0].mxu0
    %v3069 = vadd.f32 0.0, %v3068
    %v3070 = vpop.f32.mrb[0].mxu0
    %v3071 = vpop.f32.mrb[0].mxu0
    %v3072 = vadd.f32 0.0, %v3071
    %v3073 = vpop.f32.mrb[0].mxu0
    %3074 = vmatprep.mubr.bf16.mxu0 0
    %3075 = vmatmul.mubr.bf16.gmra.mrb[0].mxu0 %v3006
    %v3076 = vpop.f32.mrb[0].mxu0
    %v3077 = vadd.f32 0.0, %v3076
    %v3078 = vpop.f32.mrb[0].mxu0
    %v3079 = vpop.f32.mrb[0].mxu0
    %v3080 = vadd.f32 0.0, %v3079
    %v3081 = vpop.f32.mrb[0].mxu0
    %3082 = vmatprep.mubr.bf16.mxu0 0
    %3083 = vmatmul.mubr.bf16.gmra.mrb[0].mxu0 %v3009
    %v3084 = vpop.f32.mrb[0].mxu0
    %v3085 = vadd.f32 0.0, %v3084
    %v3086 = vpop.f32.mrb[0].mxu0
    %v3087 = vpop.f32.mrb[0].mxu0
    %v3088 = vadd.f32 0.0, %v3087
    %v3089 = vpop.f32.mrb[0].mxu0
    %3090 = vmatprep.mubr.bf16.mxu0 0
    %3091 = vmatmul.mubr.bf16.gmra.mrb[0].mxu0 %v3012
    %v3092 = vpop.f32.mrb[0].mxu0
    %v3093 = vadd.f32 0.0, %v3092
    %v3094 = vpop.f32.mrb[0].mxu0
    %v3095 = vpop.f32.mrb[0].mxu0
    %v3096 = vadd.f32 0.0, %v3095
    %v3097 = vpop.f32.mrb[0].mxu0
    %3098 = vmatprep.mubr.bf16.mxu0 0
    %3099 = vmatmul.mubr.bf16.gmra.mrb[0].mxu0 %v3015
    %v3100 = vpop.f32.mrb[0].mxu0
    %v3101 = vadd.f32 0.0, %v3100
    %v3102 = vpop.f32.mrb[0].mxu0
    %v3103 = vpop.f32.mrb[0].mxu0
    %v3104 = vadd.f32 0.0, %v3103
    %v3105 = vpop.f32.mrb[0].mxu0
    %3106 = vmatprep.mubr.bf16.mxu0 0
    %3107 = vmatmul.mubr.bf16.gmra.mrb[0].mxu0 %v3018
    %v3108 = vpop.f32.mrb[0].mxu0
    %v3109 = vadd.f32 0.0, %v3108
    %v3110 = vpop.f32.mrb[0].mxu0
    %v3111 = vpop.f32.mrb[0].mxu0
    %v3112 = vadd.f32 0.0, %v3111
    %v3113 = vpop.f32.mrb[0].mxu0
    %3114 = vmatprep.mubr.bf16.mxu0 0
    %3115 = vmatmul.mubr.bf16.gmra.mrb[0].mxu0 %v3021
    %v3116 = vpop.f32.mrb[0].mxu0
    %v3117 = vadd.f32 0.0, %v3116
    %v3118 = vpop.f32.mrb[0].mxu0
    %v3119 = vpop.f32.mrb[0].mxu0
    %v3120 = vadd.f32 0.0, %v3119
    %v3121 = vpop.f32.mrb[0].mxu0
    %3122 = vdwg.mxu0
    %v3123 = vadd.f32 %v2957, %v3061
    %v3124 = vadd.f32 %v2958, %v3064
    %v3125 = vadd.f32 %v2959, %v3069
    %v3126 = vadd.f32 %v2960, %v3072
    %v3127 = vadd.f32 %v2961, %v3077
    %v3128 = vadd.f32 %v2962, %v3080
    %v3129 = vadd.f32 %v2963, %v3085
    %v3130 = vadd.f32 %v2964, %v3088
    %v3131 = vadd.f32 %v2965, %v3093
    %v3132 = vadd.f32 %v2966, %v3096
    %v3133 = vadd.f32 %v2967, %v3101
    %v3134 = vadd.f32 %v2968, %v3104
    %v3135 = vadd.f32 %v2969, %v3109
    %v3136 = vadd.f32 %v2970, %v3112
    %v3137 = vadd.f32 %v2971, %v3117
    %v3138 = vadd.f32 %v2972, %v3120
    %v3139 = vld [vmem:[%s2640 + $0x3] sm:$0xff]
    %v3140 = vld [vmem:[%s2640 + $0x13] sm:$0xff]
    %v3141 = vld [vmem:[%s2640 + $0x23] sm:$0xff]
    %v3142 = vld [vmem:[%s2640 + $0x33] sm:$0xff]
    %v3143 = vld [vmem:[%s2640 + $0x43] sm:$0xff]
    %v3144 = vld [vmem:[%s2640 + $0x53] sm:$0xff]
    %v3145 = vld [vmem:[%s2640 + $0x63] sm:$0xff]
    %v3146 = vld [vmem:[%s2640 + $0x73] sm:$0xff]
    %v3147 = vld [vmem:[%s2640 + $0xc3] sm:$0xff]
    %v3148 = vld [vmem:[%s2640 + $0xd3] sm:$0xff]
    %v3149 = vld [vmem:[%s2640 + $0xe3] sm:$0xff]
    %v3150 = vld [vmem:[%s2640 + $0xf3] sm:$0xff]
    %v3151 = vld [vmem:[%s2640 + $0x103] sm:$0xff]
    %v3152 = vld [vmem:[%s2640 + $0x113] sm:$0xff]
    %v3153 = vld [vmem:[%s2640 + $0x123] sm:$0xff]
    %v3154 = vld [vmem:[%s2640 + $0x133] sm:$0xff]
    %v3155 = vpack.c.bf16 %v3140, %v3139
    %v3156 = vpack.c.bf16 %v3142, %v3141
    %v3157 = vpack.c.bf16 %v3144, %v3143
    %v3158 = vpack.c.bf16 %v3146, %v3145
    %v3159 = vpack.c.bf16 %v3148, %v3147
    %v3160 = vpack.c.bf16 %v3150, %v3149
    %v3161 = vpack.c.bf16 %v3152, %v3151
    %v3162 = vpack.c.bf16 %v3154, %v3153
    %s3163 = scalar_lea.vmem %s1, 36
    %v3164 = vld [vmem:[%s3163] sm:$0x3]
    %v3166 = vsel %vm46, %v3155, 0
    %v3169 = vsel %vm46, %v3156, 0
    %v3172 = vsel %vm46, %v3157, 0
    %v3175 = vsel %vm46, %v3158, 0
    %v3178 = vsel %vm46, %v3159, 0
    %v3181 = vsel %vm46, %v3160, 0
    %v3184 = vsel %vm46, %v3161, 0
    %v3187 = vsel %vm46, %v3162, 0
    %v3190 = vand.u32 %v3164, %v256
    %3192 = vmatprep.subr.bf16.mxu0 0
    %3193 = vmatpush1.bf16.msra.mxu0 %v3190
    %3194 = vmatprep.subr.bf16.mxu0 0
    %3195 = vmatpush1.bf16.msra.mxu0 0
    %3196 = vmatprep.subr.bf16.mxu0 0
    %3197 = vmatpush1.bf16.msra.mxu0 0
    %3198 = vmatprep.subr.bf16.mxu0 0
    %3199 = vmatpush1.bf16.msra.mxu0 0
    %3200 = vmatprep.subr.bf16.mxu0 0
    %3201 = vmatpush1.bf16.msra.mxu0 0
    %3202 = vmatprep.subr.bf16.mxu0 0
    %3203 = vmatpush1.bf16.msra.mxu0 0
    %3204 = vmatprep.subr.bf16.mxu0 0
    %3205 = vmatpush1.bf16.msra.mxu0 0
    %3206 = vmatprep.subr.bf16.mxu0 0
    %3207 = vmatpush1.bf16.msra.mxu0 0
    %3208 = vmatprep.subr.bf16.mxu0 0
    %3209 = vmatpush1.bf16.msra.mxu0 0
    %3210 = vmatprep.subr.bf16.mxu0 0
    %3211 = vmatpush1.bf16.msra.mxu0 0
    %3212 = vmatprep.subr.bf16.mxu0 0
    %3213 = vmatpush1.bf16.msra.mxu0 0
    %3214 = vmatprep.subr.bf16.mxu0 0
    %3215 = vmatpush1.bf16.msra.mxu0 0
    %3216 = vmatprep.subr.bf16.mxu0 0
    %3217 = vmatpush1.bf16.msra.mxu0 0
    %3218 = vmatprep.subr.bf16.mxu0 0
    %3219 = vmatpush1.bf16.msra.mxu0 0
    %3220 = vmatprep.subr.bf16.mxu0 0
    %3221 = vmatpush1.bf16.msra.mxu0 0
    %3222 = vmatprep.subr.bf16.mxu0 0
    %3223 = vmatpush1.bf16.msra.mxu0 0
    %3224 = vmatprep.mubr.bf16.mxu0 0
    %3225 = vmatmul.mubr.bf16.gmra.mrb[0].mxu0 %v3166
    %v3226 = vpop.f32.mrb[0].mxu0
    %v3227 = vadd.f32 0.0, %v3226
    %v3228 = vpop.f32.mrb[0].mxu0
    %v3229 = vpop.f32.mrb[0].mxu0
    %v3230 = vadd.f32 0.0, %v3229
    %v3231 = vpop.f32.mrb[0].mxu0
    %3232 = vmatprep.mubr.bf16.mxu0 0
    %3233 = vmatmul.mubr.bf16.gmra.mrb[0].mxu0 %v3169
    %v3234 = vpop.f32.mrb[0].mxu0
    %v3235 = vadd.f32 0.0, %v3234
    %v3236 = vpop.f32.mrb[0].mxu0
    %v3237 = vpop.f32.mrb[0].mxu0
    %v3238 = vadd.f32 0.0, %v3237
    %v3239 = vpop.f32.mrb[0].mxu0
    %3240 = vmatprep.mubr.bf16.mxu0 0
    %3241 = vmatmul.mubr.bf16.gmra.mrb[0].mxu0 %v3172
    %v3242 = vpop.f32.mrb[0].mxu0
    %v3243 = vadd.f32 0.0, %v3242
    %v3244 = vpop.f32.mrb[0].mxu0
    %v3245 = vpop.f32.mrb[0].mxu0
    %v3246 = vadd.f32 0.0, %v3245
    %v3247 = vpop.f32.mrb[0].mxu0
    %3248 = vmatprep.mubr.bf16.mxu0 0
    %3249 = vmatmul.mubr.bf16.gmra.mrb[0].mxu0 %v3175
    %v3250 = vpop.f32.mrb[0].mxu0
    %v3251 = vadd.f32 0.0, %v3250
    %v3252 = vpop.f32.mrb[0].mxu0
    %v3253 = vpop.f32.mrb[0].mxu0
    %v3254 = vadd.f32 0.0, %v3253
    %v3255 = vpop.f32.mrb[0].mxu0
    %3256 = vmatprep.mubr.bf16.mxu0 0
    %3257 = vmatmul.mubr.bf16.gmra.mrb[0].mxu0 %v3178
    %v3258 = vpop.f32.mrb[0].mxu0
    %v3259 = vadd.f32 0.0, %v3258
    %v3260 = vpop.f32.mrb[0].mxu0
    %v3261 = vpop.f32.mrb[0].mxu0
    %v3262 = vadd.f32 0.0, %v3261
    %v3263 = vpop.f32.mrb[0].mxu0
    %3264 = vmatprep.mubr.bf16.mxu0 0
    %3265 = vmatmul.mubr.bf16.gmra.mrb[0].mxu0 %v3181
    %v3266 = vpop.f32.mrb[0].mxu0
    %v3267 = vadd.f32 0.0, %v3266
    %v3268 = vpop.f32.mrb[0].mxu0
    %v3269 = vpop.f32.mrb[0].mxu0
    %v3270 = vadd.f32 0.0, %v3269
    %v3271 = vpop.f32.mrb[0].mxu0
    %3272 = vmatprep.mubr.bf16.mxu0 0
    %3273 = vmatmul.mubr.bf16.gmra.mrb[0].mxu0 %v3184
    %v3274 = vpop.f32.mrb[0].mxu0
    %v3275 = vadd.f32 0.0, %v3274
    %v3276 = vpop.f32.mrb[0].mxu0
    %v3277 = vpop.f32.mrb[0].mxu0
    %v3278 = vadd.f32 0.0, %v3277
    %v3279 = vpop.f32.mrb[0].mxu0
    %3280 = vmatprep.mubr.bf16.mxu0 0
    %3281 = vmatmul.mubr.bf16.gmra.mrb[0].mxu0 %v3187
    %v3282 = vpop.f32.mrb[0].mxu0
    %v3283 = vadd.f32 0.0, %v3282
    %v3284 = vpop.f32.mrb[0].mxu0
    %v3285 = vpop.f32.mrb[0].mxu0
    %v3286 = vadd.f32 0.0, %v3285
    %v3287 = vpop.f32.mrb[0].mxu0
    %3288 = vdwg.mxu0
    %v3289 = vadd.f32 %v3123, %v3227
    %v3290 = vadd.f32 %v3124, %v3230
    %v3291 = vadd.f32 %v3125, %v3235
    %v3292 = vadd.f32 %v3126, %v3238
    %v3293 = vadd.f32 %v3127, %v3243
    %v3294 = vadd.f32 %v3128, %v3246
    %v3295 = vadd.f32 %v3129, %v3251
    %v3296 = vadd.f32 %v3130, %v3254
    %v3297 = vadd.f32 %v3131, %v3259
    %v3298 = vadd.f32 %v3132, %v3262
    %v3299 = vadd.f32 %v3133, %v3267
    %v3300 = vadd.f32 %v3134, %v3270
    %v3301 = vadd.f32 %v3135, %v3275
    %v3302 = vadd.f32 %v3136, %v3278
    %v3303 = vadd.f32 %v3137, %v3283
    %v3304 = vadd.f32 %v3138, %v3286
    %v3305 = vld [vmem:[%s2640 + $0x4] sm:$0xff]
    %v3306 = vld [vmem:[%s2640 + $0x14] sm:$0xff]
    %v3307 = vld [vmem:[%s2640 + $0x24] sm:$0xff]
    %v3308 = vld [vmem:[%s2640 + $0x34] sm:$0xff]
    %v3309 = vld [vmem:[%s2640 + $0x44] sm:$0xff]
    %v3310 = vld [vmem:[%s2640 + $0x54] sm:$0xff]
    %v3311 = vld [vmem:[%s2640 + $0x64] sm:$0xff]
    %v3312 = vld [vmem:[%s2640 + $0x74] sm:$0xff]
    %v3313 = vld [vmem:[%s2640 + $0xc4] sm:$0xff]
    %v3314 = vld [vmem:[%s2640 + $0xd4] sm:$0xff]
    %v3315 = vld [vmem:[%s2640 + $0xe4] sm:$0xff]
    %v3316 = vld [vmem:[%s2640 + $0xf4] sm:$0xff]
    %v3317 = vld [vmem:[%s2640 + $0x104] sm:$0xff]
    %v3318 = vld [vmem:[%s2640 + $0x114] sm:$0xff]
    %v3319 = vld [vmem:[%s2640 + $0x124] sm:$0xff]
    %v3320 = vld [vmem:[%s2640 + $0x134] sm:$0xff]
    %v3321 = vpack.c.bf16 %v3306, %v3305
    %v3322 = vpack.c.bf16 %v3308, %v3307
    %v3323 = vpack.c.bf16 %v3310, %v3309
    %v3324 = vpack.c.bf16 %v3312, %v3311
    %v3325 = vpack.c.bf16 %v3314, %v3313
    %v3326 = vpack.c.bf16 %v3316, %v3315
    %v3327 = vpack.c.bf16 %v3318, %v3317
    %v3328 = vpack.c.bf16 %v3320, %v3319
    %s3329 = scalar_lea.vmem %s1, 38
    %v3330 = vld [vmem:[%s3329] sm:$0x3]
    %v3332 = vsel %vm46, %v3321, 0
    %v3335 = vsel %vm46, %v3322, 0
    %v3338 = vsel %vm46, %v3323, 0
    %v3341 = vsel %vm46, %v3324, 0
    %v3344 = vsel %vm46, %v3325, 0
    %v3347 = vsel %vm46, %v3326, 0
    %v3350 = vsel %vm46, %v3327, 0
    %v3353 = vsel %vm46, %v3328, 0
    %v3356 = vand.u32 %v3330, %v256
    %3358 = vmatprep.subr.bf16.mxu0 0
    %3359 = vmatpush1.bf16.msra.mxu0 %v3356
    %3360 = vmatprep.subr.bf16.mxu0 0
    %3361 = vmatpush1.bf16.msra.mxu0 0
    %3362 = vmatprep.subr.bf16.mxu0 0
    %3363 = vmatpush1.bf16.msra.mxu0 0
    %3364 = vmatprep.subr.bf16.mxu0 0
    %3365 = vmatpush1.bf16.msra.mxu0 0
    %3366 = vmatprep.subr.bf16.mxu0 0
    %3367 = vmatpush1.bf16.msra.mxu0 0
    %3368 = vmatprep.subr.bf16.mxu0 0
    %3369 = vmatpush1.bf16.msra.mxu0 0
    %3370 = vmatprep.subr.bf16.mxu0 0
    %3371 = vmatpush1.bf16.msra.mxu0 0
    %3372 = vmatprep.subr.bf16.mxu0 0
    %3373 = vmatpush1.bf16.msra.mxu0 0
    %3374 = vmatprep.subr.bf16.mxu0 0
    %3375 = vmatpush1.bf16.msra.mxu0 0
    %3376 = vmatprep.subr.bf16.mxu0 0
    %3377 = vmatpush1.bf16.msra.mxu0 0
    %3378 = vmatprep.subr.bf16.mxu0 0
    %3379 = vmatpush1.bf16.msra.mxu0 0
    %3380 = vmatprep.subr.bf16.mxu0 0
    %3381 = vmatpush1.bf16.msra.mxu0 0
    %3382 = vmatprep.subr.bf16.mxu0 0
    %3383 = vmatpush1.bf16.msra.mxu0 0
    %3384 = vmatprep.subr.bf16.mxu0 0
    %3385 = vmatpush1.bf16.msra.mxu0 0
    %3386 = vmatprep.subr.bf16.mxu0 0
    %3387 = vmatpush1.bf16.msra.mxu0 0
    %3388 = vmatprep.subr.bf16.mxu0 0
    %3389 = vmatpush1.bf16.msra.mxu0 0
    %3390 = vmatprep.mubr.bf16.mxu0 0
    %3391 = vmatmul.mubr.bf16.gmra.mrb[0].mxu0 %v3332
    %v3392 = vpop.f32.mrb[0].mxu0
    %v3393 = vadd.f32 0.0, %v3392
    %v3394 = vpop.f32.mrb[0].mxu0
    %v3395 = vpop.f32.mrb[0].mxu0
    %v3396 = vadd.f32 0.0, %v3395
    %v3397 = vpop.f32.mrb[0].mxu0
    %3398 = vmatprep.mubr.bf16.mxu0 0
    %3399 = vmatmul.mubr.bf16.gmra.mrb[0].mxu0 %v3335
    %v3400 = vpop.f32.mrb[0].mxu0
    %v3401 = vadd.f32 0.0, %v3400
    %v3402 = vpop.f32.mrb[0].mxu0
    %v3403 = vpop.f32.mrb[0].mxu0
    %v3404 = vadd.f32 0.0, %v3403
    %v3405 = vpop.f32.mrb[0].mxu0
    %3406 = vmatprep.mubr.bf16.mxu0 0
    %3407 = vmatmul.mubr.bf16.gmra.mrb[0].mxu0 %v3338
    %v3408 = vpop.f32.mrb[0].mxu0
    %v3409 = vadd.f32 0.0, %v3408
    %v3410 = vpop.f32.mrb[0].mxu0
    %v3411 = vpop.f32.mrb[0].mxu0
    %v3412 = vadd.f32 0.0, %v3411
    %v3413 = vpop.f32.mrb[0].mxu0
    %3414 = vmatprep.mubr.bf16.mxu0 0
    %3415 = vmatmul.mubr.bf16.gmra.mrb[0].mxu0 %v3341
    %v3416 = vpop.f32.mrb[0].mxu0
    %v3417 = vadd.f32 0.0, %v3416
    %v3418 = vpop.f32.mrb[0].mxu0
    %v3419 = vpop.f32.mrb[0].mxu0
    %v3420 = vadd.f32 0.0, %v3419
    %v3421 = vpop.f32.mrb[0].mxu0
    %3422 = vmatprep.mubr.bf16.mxu0 0
    %3423 = vmatmul.mubr.bf16.gmra.mrb[0].mxu0 %v3344
    %v3424 = vpop.f32.mrb[0].mxu0
    %v3425 = vadd.f32 0.0, %v3424
    %v3426 = vpop.f32.mrb[0].mxu0
    %v3427 = vpop.f32.mrb[0].mxu0
    %v3428 = vadd.f32 0.0, %v3427
    %v3429 = vpop.f32.mrb[0].mxu0
    %3430 = vmatprep.mubr.bf16.mxu0 0
    %3431 = vmatmul.mubr.bf16.gmra.mrb[0].mxu0 %v3347
    %v3432 = vpop.f32.mrb[0].mxu0
    %v3433 = vadd.f32 0.0, %v3432
    %v3434 = vpop.f32.mrb[0].mxu0
    %v3435 = vpop.f32.mrb[0].mxu0
    %v3436 = vadd.f32 0.0, %v3435
    %v3437 = vpop.f32.mrb[0].mxu0
    %3438 = vmatprep.mubr.bf16.mxu0 0
    %3439 = vmatmul.mubr.bf16.gmra.mrb[0].mxu0 %v3350
    %v3440 = vpop.f32.mrb[0].mxu0
    %v3441 = vadd.f32 0.0, %v3440
    %v3442 = vpop.f32.mrb[0].mxu0
    %v3443 = vpop.f32.mrb[0].mxu0
    %v3444 = vadd.f32 0.0, %v3443
    %v3445 = vpop.f32.mrb[0].mxu0
    %3446 = vmatprep.mubr.bf16.mxu0 0
    %3447 = vmatmul.mubr.bf16.gmra.mrb[0].mxu0 %v3353
    %v3448 = vpop.f32.mrb[0].mxu0
    %v3449 = vadd.f32 0.0, %v3448
    %v3450 = vpop.f32.mrb[0].mxu0
    %v3451 = vpop.f32.mrb[0].mxu0
    %v3452 = vadd.f32 0.0, %v3451
    %v3453 = vpop.f32.mrb[0].mxu0
    %3454 = vdwg.mxu0
    %v3455 = vadd.f32 %v3289, %v3393
    %v3456 = vadd.f32 %v3290, %v3396
    %v3457 = vadd.f32 %v3291, %v3401
    %v3458 = vadd.f32 %v3292, %v3404
    %v3459 = vadd.f32 %v3293, %v3409
    %v3460 = vadd.f32 %v3294, %v3412
    %v3461 = vadd.f32 %v3295, %v3417
    %v3462 = vadd.f32 %v3296, %v3420
    %v3463 = vadd.f32 %v3297, %v3425
    %v3464 = vadd.f32 %v3298, %v3428
    %v3465 = vadd.f32 %v3299, %v3433
    %v3466 = vadd.f32 %v3300, %v3436
    %v3467 = vadd.f32 %v3301, %v3441
    %v3468 = vadd.f32 %v3302, %v3444
    %v3469 = vadd.f32 %v3303, %v3449
    %v3470 = vadd.f32 %v3304, %v3452
    %s3471 = scalar_lea.vmem [#allocation2], 64
    %v3472 = vld [vmem:[%s3471] sm:$0xff]
    %v3473 = vld [vmem:[%s3471 + $0x10] sm:$0xff]
    %v3474 = vld [vmem:[%s3471 + $0x20] sm:$0xff]
    %v3475 = vld [vmem:[%s3471 + $0x30] sm:$0xff]
    %v3476 = vld [vmem:[%s3471 + $0x40] sm:$0xff]
    %v3477 = vld [vmem:[%s3471 + $0x50] sm:$0xff]
    %v3478 = vld [vmem:[%s3471 + $0x60] sm:$0xff]
    %v3479 = vld [vmem:[%s3471 + $0x70] sm:$0xff]
    %v3480 = vld [vmem:[%s3471 + $0xc0] sm:$0xff]
    %v3481 = vld [vmem:[%s3471 + $0xd0] sm:$0xff]
    %v3482 = vld [vmem:[%s3471 + $0xe0] sm:$0xff]
    %v3483 = vld [vmem:[%s3471 + $0xf0] sm:$0xff]
    %v3484 = vld [vmem:[%s3471 + $0x100] sm:$0xff]
    %v3485 = vld [vmem:[%s3471 + $0x110] sm:$0xff]
    %v3486 = vld [vmem:[%s3471 + $0x120] sm:$0xff]
    %v3487 = vld [vmem:[%s3471 + $0x130] sm:$0xff]
    %v3488 = vpack.c.bf16 %v3473, %v3472
    %v3489 = vpack.c.bf16 %v3475, %v3474
    %v3490 = vpack.c.bf16 %v3477, %v3476
    %v3491 = vpack.c.bf16 %v3479, %v3478
    %v3492 = vpack.c.bf16 %v3481, %v3480
    %v3493 = vpack.c.bf16 %v3483, %v3482
    %v3494 = vpack.c.bf16 %v3485, %v3484
    %v3495 = vpack.c.bf16 %v3487, %v3486
    %s3496 = scalar_lea.vmem %s1, 40
    %v3497 = vld [vmem:[%s3496] sm:$0x3]
    %v3499 = vsel %vm46, %v3488, 0
    %v3502 = vsel %vm46, %v3489, 0
    %v3505 = vsel %vm46, %v3490, 0
    %v3508 = vsel %vm46, %v3491, 0
    %v3511 = vsel %vm46, %v3492, 0
    %v3514 = vsel %vm46, %v3493, 0
    %v3517 = vsel %vm46, %v3494, 0
    %v3520 = vsel %vm46, %v3495, 0
    %v3523 = vand.u32 %v3497, %v256
    %3525 = vmatprep.subr.bf16.mxu0 0
    %3526 = vmatpush1.bf16.msra.mxu0 %v3523
    %3527 = vmatprep.subr.bf16.mxu0 0
    %3528 = vmatpush1.bf16.msra.mxu0 0
    %3529 = vmatprep.subr.bf16.mxu0 0
    %3530 = vmatpush1.bf16.msra.mxu0 0
    %3531 = vmatprep.subr.bf16.mxu0 0
    %3532 = vmatpush1.bf16.msra.mxu0 0
    %3533 = vmatprep.subr.bf16.mxu0 0
    %3534 = vmatpush1.bf16.msra.mxu0 0
    %3535 = vmatprep.subr.bf16.mxu0 0
    %3536 = vmatpush1.bf16.msra.mxu0 0
    %3537 = vmatprep.subr.bf16.mxu0 0
    %3538 = vmatpush1.bf16.msra.mxu0 0
    %3539 = vmatprep.subr.bf16.mxu0 0
    %3540 = vmatpush1.bf16.msra.mxu0 0
    %3541 = vmatprep.subr.bf16.mxu0 0
    %3542 = vmatpush1.bf16.msra.mxu0 0
    %3543 = vmatprep.subr.bf16.mxu0 0
    %3544 = vmatpush1.bf16.msra.mxu0 0
    %3545 = vmatprep.subr.bf16.mxu0 0
    %3546 = vmatpush1.bf16.msra.mxu0 0
    %3547 = vmatprep.subr.bf16.mxu0 0
    %3548 = vmatpush1.bf16.msra.mxu0 0
    %3549 = vmatprep.subr.bf16.mxu0 0
    %3550 = vmatpush1.bf16.msra.mxu0 0
    %3551 = vmatprep.subr.bf16.mxu0 0
    %3552 = vmatpush1.bf16.msra.mxu0 0
    %3553 = vmatprep.subr.bf16.mxu0 0
    %3554 = vmatpush1.bf16.msra.mxu0 0
    %3555 = vmatprep.subr.bf16.mxu0 0
    %3556 = vmatpush1.bf16.msra.mxu0 0
    %3557 = vmatprep.mubr.bf16.mxu0 0
    %3558 = vmatmul.mubr.bf16.gmra.mrb[0].mxu0 %v3499
    %v3559 = vpop.f32.mrb[0].mxu0
    %v3560 = vadd.f32 0.0, %v3559
    %v3561 = vpop.f32.mrb[0].mxu0
    %v3562 = vpop.f32.mrb[0].mxu0
    %v3563 = vadd.f32 0.0, %v3562
    %v3564 = vpop.f32.mrb[0].mxu0
    %3565 = vmatprep.mubr.bf16.mxu0 0
    %3566 = vmatmul.mubr.bf16.gmra.mrb[0].mxu0 %v3502
    %v3567 = vpop.f32.mrb[0].mxu0
    %v3568 = vadd.f32 0.0, %v3567
    %v3569 = vpop.f32.mrb[0].mxu0
    %v3570 = vpop.f32.mrb[0].mxu0
    %v3571 = vadd.f32 0.0, %v3570
    %v3572 = vpop.f32.mrb[0].mxu0
    %3573 = vmatprep.mubr.bf16.mxu0 0
    %3574 = vmatmul.mubr.bf16.gmra.mrb[0].mxu0 %v3505
    %v3575 = vpop.f32.mrb[0].mxu0
    %v3576 = vadd.f32 0.0, %v3575
    %v3577 = vpop.f32.mrb[0].mxu0
    %v3578 = vpop.f32.mrb[0].mxu0
    %v3579 = vadd.f32 0.0, %v3578
    %v3580 = vpop.f32.mrb[0].mxu0
    %3581 = vmatprep.mubr.bf16.mxu0 0
    %3582 = vmatmul.mubr.bf16.gmra.mrb[0].mxu0 %v3508
    %v3583 = vpop.f32.mrb[0].mxu0
    %v3584 = vadd.f32 0.0, %v3583
    %v3585 = vpop.f32.mrb[0].mxu0
    %v3586 = vpop.f32.mrb[0].mxu0
    %v3587 = vadd.f32 0.0, %v3586
    %v3588 = vpop.f32.mrb[0].mxu0
    %3589 = vmatprep.mubr.bf16.mxu0 0
    %3590 = vmatmul.mubr.bf16.gmra.mrb[0].mxu0 %v3511
    %v3591 = vpop.f32.mrb[0].mxu0
    %v3592 = vadd.f32 0.0, %v3591
    %v3593 = vpop.f32.mrb[0].mxu0
    %v3594 = vpop.f32.mrb[0].mxu0
    %v3595 = vadd.f32 0.0, %v3594
    %v3596 = vpop.f32.mrb[0].mxu0
    %3597 = vmatprep.mubr.bf16.mxu0 0
    %3598 = vmatmul.mubr.bf16.gmra.mrb[0].mxu0 %v3514
    %v3599 = vpop.f32.mrb[0].mxu0
    %v3600 = vadd.f32 0.0, %v3599
    %v3601 = vpop.f32.mrb[0].mxu0
    %v3602 = vpop.f32.mrb[0].mxu0
    %v3603 = vadd.f32 0.0, %v3602
    %v3604 = vpop.f32.mrb[0].mxu0
    %3605 = vmatprep.mubr.bf16.mxu0 0
    %3606 = vmatmul.mubr.bf16.gmra.mrb[0].mxu0 %v3517
    %v3607 = vpop.f32.mrb[0].mxu0
    %v3608 = vadd.f32 0.0, %v3607
    %v3609 = vpop.f32.mrb[0].mxu0
    %v3610 = vpop.f32.mrb[0].mxu0
    %v3611 = vadd.f32 0.0, %v3610
    %v3612 = vpop.f32.mrb[0].mxu0
    %3613 = vmatprep.mubr.bf16.mxu0 0
    %3614 = vmatmul.mubr.bf16.gmra.mrb[0].mxu0 %v3520
    %v3615 = vpop.f32.mrb[0].mxu0
    %v3616 = vadd.f32 0.0, %v3615
    %v3617 = vpop.f32.mrb[0].mxu0
    %v3618 = vpop.f32.mrb[0].mxu0
    %v3619 = vadd.f32 0.0, %v3618
    %v3620 = vpop.f32.mrb[0].mxu0
    %3621 = vdwg.mxu0
    %v3622 = vadd.f32 %v3455, %v3560
    %v3623 = vadd.f32 %v3456, %v3563
    %v3624 = vadd.f32 %v3457, %v3568
    %v3625 = vadd.f32 %v3458, %v3571
    %v3626 = vadd.f32 %v3459, %v3576
    %v3627 = vadd.f32 %v3460, %v3579
    %v3628 = vadd.f32 %v3461, %v3584
    %v3629 = vadd.f32 %v3462, %v3587
    %v3630 = vadd.f32 %v3463, %v3592
    %v3631 = vadd.f32 %v3464, %v3595
    %v3632 = vadd.f32 %v3465, %v3600
    %v3633 = vadd.f32 %v3466, %v3603
    %v3634 = vadd.f32 %v3467, %v3608
    %v3635 = vadd.f32 %v3468, %v3611
    %v3636 = vadd.f32 %v3469, %v3616
    %v3637 = vadd.f32 %v3470, %v3619
    %v3638 = vld [vmem:[%s3471 + $0x1] sm:$0xff]
    %v3639 = vld [vmem:[%s3471 + $0x11] sm:$0xff]
    %v3640 = vld [vmem:[%s3471 + $0x21] sm:$0xff]
    %v3641 = vld [vmem:[%s3471 + $0x31] sm:$0xff]
    %v3642 = vld [vmem:[%s3471 + $0x41] sm:$0xff]
    %v3643 = vld [vmem:[%s3471 + $0x51] sm:$0xff]
    %v3644 = vld [vmem:[%s3471 + $0x61] sm:$0xff]
    %v3645 = vld [vmem:[%s3471 + $0x71] sm:$0xff]
    %v3646 = vld [vmem:[%s3471 + $0xc1] sm:$0xff]
    %v3647 = vld [vmem:[%s3471 + $0xd1] sm:$0xff]
    %v3648 = vld [vmem:[%s3471 + $0xe1] sm:$0xff]
    %v3649 = vld [vmem:[%s3471 + $0xf1] sm:$0xff]
    %v3650 = vld [vmem:[%s3471 + $0x101] sm:$0xff]
    %v3651 = vld [vmem:[%s3471 + $0x111] sm:$0xff]
    %v3652 = vld [vmem:[%s3471 + $0x121] sm:$0xff]
    %v3653 = vld [vmem:[%s3471 + $0x131] sm:$0xff]
    %v3654 = vpack.c.bf16 %v3639, %v3638
    %v3655 = vpack.c.bf16 %v3641, %v3640
    %v3656 = vpack.c.bf16 %v3643, %v3642
    %v3657 = vpack.c.bf16 %v3645, %v3644
    %v3658 = vpack.c.bf16 %v3647, %v3646
    %v3659 = vpack.c.bf16 %v3649, %v3648
    %v3660 = vpack.c.bf16 %v3651, %v3650
    %v3661 = vpack.c.bf16 %v3653, %v3652
    %s3662 = scalar_lea.vmem %s1, 42
    %v3663 = vld [vmem:[%s3662] sm:$0x3]
    %v3665 = vsel %vm46, %v3654, 0
    %v3668 = vsel %vm46, %v3655, 0
    %v3671 = vsel %vm46, %v3656, 0
    %v3674 = vsel %vm46, %v3657, 0
    %v3677 = vsel %vm46, %v3658, 0
    %v3680 = vsel %vm46, %v3659, 0
    %v3683 = vsel %vm46, %v3660, 0
    %v3686 = vsel %vm46, %v3661, 0
    %v3689 = vand.u32 %v3663, %v256
    %3691 = vmatprep.subr.bf16.mxu0 0
    %3692 = vmatpush1.bf16.msra.mxu0 %v3689
    %3693 = vmatprep.subr.bf16.mxu0 0
    %3694 = vmatpush1.bf16.msra.mxu0 0
    %3695 = vmatprep.subr.bf16.mxu0 0
    %3696 = vmatpush1.bf16.msra.mxu0 0
    %3697 = vmatprep.subr.bf16.mxu0 0
    %3698 = vmatpush1.bf16.msra.mxu0 0
    %3699 = vmatprep.subr.bf16.mxu0 0
    %3700 = vmatpush1.bf16.msra.mxu0 0
    %3701 = vmatprep.subr.bf16.mxu0 0
    %3702 = vmatpush1.bf16.msra.mxu0 0
    %3703 = vmatprep.subr.bf16.mxu0 0
    %3704 = vmatpush1.bf16.msra.mxu0 0
    %3705 = vmatprep.subr.bf16.mxu0 0
    %3706 = vmatpush1.bf16.msra.mxu0 0
    %3707 = vmatprep.subr.bf16.mxu0 0
    %3708 = vmatpush1.bf16.msra.mxu0 0
    %3709 = vmatprep.subr.bf16.mxu0 0
    %3710 = vmatpush1.bf16.msra.mxu0 0
    %3711 = vmatprep.subr.bf16.mxu0 0
    %3712 = vmatpush1.bf16.msra.mxu0 0
    %3713 = vmatprep.subr.bf16.mxu0 0
    %3714 = vmatpush1.bf16.msra.mxu0 0
    %3715 = vmatprep.subr.bf16.mxu0 0
    %3716 = vmatpush1.bf16.msra.mxu0 0
    %3717 = vmatprep.subr.bf16.mxu0 0
    %3718 = vmatpush1.bf16.msra.mxu0 0
    %3719 = vmatprep.subr.bf16.mxu0 0
    %3720 = vmatpush1.bf16.msra.mxu0 0
    %3721 = vmatprep.subr.bf16.mxu0 0
    %3722 = vmatpush1.bf16.msra.mxu0 0
    %3723 = vmatprep.mubr.bf16.mxu0 0
    %3724 = vmatmul.mubr.bf16.gmra.mrb[0].mxu0 %v3665
    %v3725 = vpop.f32.mrb[0].mxu0
    %v3726 = vadd.f32 0.0, %v3725
    %v3727 = vpop.f32.mrb[0].mxu0
    %v3728 = vpop.f32.mrb[0].mxu0
    %v3729 = vadd.f32 0.0, %v3728
    %v3730 = vpop.f32.mrb[0].mxu0
    %3731 = vmatprep.mubr.bf16.mxu0 0
    %3732 = vmatmul.mubr.bf16.gmra.mrb[0].mxu0 %v3668
    %v3733 = vpop.f32.mrb[0].mxu0
    %v3734 = vadd.f32 0.0, %v3733
    %v3735 = vpop.f32.mrb[0].mxu0
    %v3736 = vpop.f32.mrb[0].mxu0
    %v3737 = vadd.f32 0.0, %v3736
    %v3738 = vpop.f32.mrb[0].mxu0
    %3739 = vmatprep.mubr.bf16.mxu0 0
    %3740 = vmatmul.mubr.bf16.gmra.mrb[0].mxu0 %v3671
    %v3741 = vpop.f32.mrb[0].mxu0
    %v3742 = vadd.f32 0.0, %v3741
    %v3743 = vpop.f32.mrb[0].mxu0
    %v3744 = vpop.f32.mrb[0].mxu0
    %v3745 = vadd.f32 0.0, %v3744
    %v3746 = vpop.f32.mrb[0].mxu0
    %3747 = vmatprep.mubr.bf16.mxu0 0
    %3748 = vmatmul.mubr.bf16.gmra.mrb[0].mxu0 %v3674
    %v3749 = vpop.f32.mrb[0].mxu0
    %v3750 = vadd.f32 0.0, %v3749
    %v3751 = vpop.f32.mrb[0].mxu0
    %v3752 = vpop.f32.mrb[0].mxu0
    %v3753 = vadd.f32 0.0, %v3752
    %v3754 = vpop.f32.mrb[0].mxu0
    %3755 = vmatprep.mubr.bf16.mxu0 0
    %3756 = vmatmul.mubr.bf16.gmra.mrb[0].mxu0 %v3677
    %v3757 = vpop.f32.mrb[0].mxu0
    %v3758 = vadd.f32 0.0, %v3757
    %v3759 = vpop.f32.mrb[0].mxu0
    %v3760 = vpop.f32.mrb[0].mxu0
    %v3761 = vadd.f32 0.0, %v3760
    %v3762 = vpop.f32.mrb[0].mxu0
    %3763 = vmatprep.mubr.bf16.mxu0 0
    %3764 = vmatmul.mubr.bf16.gmra.mrb[0].mxu0 %v3680
    %v3765 = vpop.f32.mrb[0].mxu0
    %v3766 = vadd.f32 0.0, %v3765
    %v3767 = vpop.f32.mrb[0].mxu0
    %v3768 = vpop.f32.mrb[0].mxu0
    %v3769 = vadd.f32 0.0, %v3768
    %v3770 = vpop.f32.mrb[0].mxu0
    %3771 = vmatprep.mubr.bf16.mxu0 0
    %3772 = vmatmul.mubr.bf16.gmra.mrb[0].mxu0 %v3683
    %v3773 = vpop.f32.mrb[0].mxu0
    %v3774 = vadd.f32 0.0, %v3773
    %v3775 = vpop.f32.mrb[0].mxu0
    %v3776 = vpop.f32.mrb[0].mxu0
    %v3777 = vadd.f32 0.0, %v3776
    %v3778 = vpop.f32.mrb[0].mxu0
    %3779 = vmatprep.mubr.bf16.mxu0 0
    %3780 = vmatmul.mubr.bf16.gmra.mrb[0].mxu0 %v3686
    %v3781 = vpop.f32.mrb[0].mxu0
    %v3782 = vadd.f32 0.0, %v3781
    %v3783 = vpop.f32.mrb[0].mxu0
    %v3784 = vpop.f32.mrb[0].mxu0
    %v3785 = vadd.f32 0.0, %v3784
    %v3786 = vpop.f32.mrb[0].mxu0
    %3787 = vdwg.mxu0
    %v3788 = vadd.f32 %v3622, %v3726
    %v3789 = vadd.f32 %v3623, %v3729
    %v3790 = vadd.f32 %v3624, %v3734
    %v3791 = vadd.f32 %v3625, %v3737
    %v3792 = vadd.f32 %v3626, %v3742
    %v3793 = vadd.f32 %v3627, %v3745
    %v3794 = vadd.f32 %v3628, %v3750
    %v3795 = vadd.f32 %v3629, %v3753
    %v3796 = vadd.f32 %v3630, %v3758
    %v3797 = vadd.f32 %v3631, %v3761
    %v3798 = vadd.f32 %v3632, %v3766
    %v3799 = vadd.f32 %v3633, %v3769
    %v3800 = vadd.f32 %v3634, %v3774
    %v3801 = vadd.f32 %v3635, %v3777
    %v3802 = vadd.f32 %v3636, %v3782
    %v3803 = vadd.f32 %v3637, %v3785
    %v3804 = vld [vmem:[%s3471 + $0x2] sm:$0xff]
    %v3805 = vld [vmem:[%s3471 + $0x12] sm:$0xff]
    %v3806 = vld [vmem:[%s3471 + $0x22] sm:$0xff]
    %v3807 = vld [vmem:[%s3471 + $0x32] sm:$0xff]
    %v3808 = vld [vmem:[%s3471 + $0x42] sm:$0xff]
    %v3809 = vld [vmem:[%s3471 + $0x52] sm:$0xff]
    %v3810 = vld [vmem:[%s3471 + $0x62] sm:$0xff]
    %v3811 = vld [vmem:[%s3471 + $0x72] sm:$0xff]
    %v3812 = vld [vmem:[%s3471 + $0xc2] sm:$0xff]
    %v3813 = vld [vmem:[%s3471 + $0xd2] sm:$0xff]
    %v3814 = vld [vmem:[%s3471 + $0xe2] sm:$0xff]
    %v3815 = vld [vmem:[%s3471 + $0xf2] sm:$0xff]
    %v3816 = vld [vmem:[%s3471 + $0x102] sm:$0xff]
    %v3817 = vld [vmem:[%s3471 + $0x112] sm:$0xff]
    %v3818 = vld [vmem:[%s3471 + $0x122] sm:$0xff]
    %v3819 = vld [vmem:[%s3471 + $0x132] sm:$0xff]
    %v3820 = vpack.c.bf16 %v3805, %v3804
    %v3821 = vpack.c.bf16 %v3807, %v3806
    %v3822 = vpack.c.bf16 %v3809, %v3808
    %v3823 = vpack.c.bf16 %v3811, %v3810
    %v3824 = vpack.c.bf16 %v3813, %v3812
    %v3825 = vpack.c.bf16 %v3815, %v3814
    %v3826 = vpack.c.bf16 %v3817, %v3816
    %v3827 = vpack.c.bf16 %v3819, %v3818
    %s3828 = scalar_lea.vmem %s1, 44
    %v3829 = vld [vmem:[%s3828] sm:$0x3]
    %v3831 = vsel %vm46, %v3820, 0
    %v3834 = vsel %vm46, %v3821, 0
    %v3837 = vsel %vm46, %v3822, 0
    %v3840 = vsel %vm46, %v3823, 0
    %v3843 = vsel %vm46, %v3824, 0
    %v3846 = vsel %vm46, %v3825, 0
    %v3849 = vsel %vm46, %v3826, 0
    %v3852 = vsel %vm46, %v3827, 0
    %v3855 = vand.u32 %v3829, %v256
    %3857 = vmatprep.subr.bf16.mxu0 0
    %3858 = vmatpush1.bf16.msra.mxu0 %v3855
    %3859 = vmatprep.subr.bf16.mxu0 0
    %3860 = vmatpush1.bf16.msra.mxu0 0
    %3861 = vmatprep.subr.bf16.mxu0 0
    %3862 = vmatpush1.bf16.msra.mxu0 0
    %3863 = vmatprep.subr.bf16.mxu0 0
    %3864 = vmatpush1.bf16.msra.mxu0 0
    %3865 = vmatprep.subr.bf16.mxu0 0
    %3866 = vmatpush1.bf16.msra.mxu0 0
    %3867 = vmatprep.subr.bf16.mxu0 0
    %3868 = vmatpush1.bf16.msra.mxu0 0
    %3869 = vmatprep.subr.bf16.mxu0 0
    %3870 = vmatpush1.bf16.msra.mxu0 0
    %3871 = vmatprep.subr.bf16.mxu0 0
    %3872 = vmatpush1.bf16.msra.mxu0 0
    %3873 = vmatprep.subr.bf16.mxu0 0
    %3874 = vmatpush1.bf16.msra.mxu0 0
    %3875 = vmatprep.subr.bf16.mxu0 0
    %3876 = vmatpush1.bf16.msra.mxu0 0
    %3877 = vmatprep.subr.bf16.mxu0 0
    %3878 = vmatpush1.bf16.msra.mxu0 0
    %3879 = vmatprep.subr.bf16.mxu0 0
    %3880 = vmatpush1.bf16.msra.mxu0 0
    %3881 = vmatprep.subr.bf16.mxu0 0
    %3882 = vmatpush1.bf16.msra.mxu0 0
    %3883 = vmatprep.subr.bf16.mxu0 0
    %3884 = vmatpush1.bf16.msra.mxu0 0
    %3885 = vmatprep.subr.bf16.mxu0 0
    %3886 = vmatpush1.bf16.msra.mxu0 0
    %3887 = vmatprep.subr.bf16.mxu0 0
    %3888 = vmatpush1.bf16.msra.mxu0 0
    %3889 = vmatprep.mubr.bf16.mxu0 0
    %3890 = vmatmul.mubr.bf16.gmra.mrb[0].mxu0 %v3831
    %v3891 = vpop.f32.mrb[0].mxu0
    %v3892 = vadd.f32 0.0, %v3891
    %v3893 = vpop.f32.mrb[0].mxu0
    %v3894 = vpop.f32.mrb[0].mxu0
    %v3895 = vadd.f32 0.0, %v3894
    %v3896 = vpop.f32.mrb[0].mxu0
    %3897 = vmatprep.mubr.bf16.mxu0 0
    %3898 = vmatmul.mubr.bf16.gmra.mrb[0].mxu0 %v3834
    %v3899 = vpop.f32.mrb[0].mxu0
    %v3900 = vadd.f32 0.0, %v3899
    %v3901 = vpop.f32.mrb[0].mxu0
    %v3902 = vpop.f32.mrb[0].mxu0
    %v3903 = vadd.f32 0.0, %v3902
    %v3904 = vpop.f32.mrb[0].mxu0
    %3905 = vmatprep.mubr.bf16.mxu0 0
    %3906 = vmatmul.mubr.bf16.gmra.mrb[0].mxu0 %v3837
    %v3907 = vpop.f32.mrb[0].mxu0
    %v3908 = vadd.f32 0.0, %v3907
    %v3909 = vpop.f32.mrb[0].mxu0
    %v3910 = vpop.f32.mrb[0].mxu0
    %v3911 = vadd.f32 0.0, %v3910
    %v3912 = vpop.f32.mrb[0].mxu0
    %3913 = vmatprep.mubr.bf16.mxu0 0
    %3914 = vmatmul.mubr.bf16.gmra.mrb[0].mxu0 %v3840
    %v3915 = vpop.f32.mrb[0].mxu0
    %v3916 = vadd.f32 0.0, %v3915
    %v3917 = vpop.f32.mrb[0].mxu0
    %v3918 = vpop.f32.mrb[0].mxu0
    %v3919 = vadd.f32 0.0, %v3918
    %v3920 = vpop.f32.mrb[0].mxu0
    %3921 = vmatprep.mubr.bf16.mxu0 0
    %3922 = vmatmul.mubr.bf16.gmra.mrb[0].mxu0 %v3843
    %v3923 = vpop.f32.mrb[0].mxu0
    %v3924 = vadd.f32 0.0, %v3923
    %v3925 = vpop.f32.mrb[0].mxu0
    %v3926 = vpop.f32.mrb[0].mxu0
    %v3927 = vadd.f32 0.0, %v3926
    %v3928 = vpop.f32.mrb[0].mxu0
    %3929 = vmatprep.mubr.bf16.mxu0 0
    %3930 = vmatmul.mubr.bf16.gmra.mrb[0].mxu0 %v3846
    %v3931 = vpop.f32.mrb[0].mxu0
    %v3932 = vadd.f32 0.0, %v3931
    %v3933 = vpop.f32.mrb[0].mxu0
    %v3934 = vpop.f32.mrb[0].mxu0
    %v3935 = vadd.f32 0.0, %v3934
    %v3936 = vpop.f32.mrb[0].mxu0
    %3937 = vmatprep.mubr.bf16.mxu0 0
    %3938 = vmatmul.mubr.bf16.gmra.mrb[0].mxu0 %v3849
    %v3939 = vpop.f32.mrb[0].mxu0
    %v3940 = vadd.f32 0.0, %v3939
    %v3941 = vpop.f32.mrb[0].mxu0
    %v3942 = vpop.f32.mrb[0].mxu0
    %v3943 = vadd.f32 0.0, %v3942
    %v3944 = vpop.f32.mrb[0].mxu0
    %3945 = vmatprep.mubr.bf16.mxu0 0
    %3946 = vmatmul.mubr.bf16.gmra.mrb[0].mxu0 %v3852
    %v3947 = vpop.f32.mrb[0].mxu0
    %v3948 = vadd.f32 0.0, %v3947
    %v3949 = vpop.f32.mrb[0].mxu0
    %v3950 = vpop.f32.mrb[0].mxu0
    %v3951 = vadd.f32 0.0, %v3950
    %v3952 = vpop.f32.mrb[0].mxu0
    %3953 = vdwg.mxu0
    %v3954 = vadd.f32 %v3788, %v3892
    %v3955 = vadd.f32 %v3789, %v3895
    %v3956 = vadd.f32 %v3790, %v3900
    %v3957 = vadd.f32 %v3791, %v3903
    %v3958 = vadd.f32 %v3792, %v3908
    %v3959 = vadd.f32 %v3793, %v3911
    %v3960 = vadd.f32 %v3794, %v3916
    %v3961 = vadd.f32 %v3795, %v3919
    %v3962 = vadd.f32 %v3796, %v3924
    %v3963 = vadd.f32 %v3797, %v3927
    %v3964 = vadd.f32 %v3798, %v3932
    %v3965 = vadd.f32 %v3799, %v3935
    %v3966 = vadd.f32 %v3800, %v3940
    %v3967 = vadd.f32 %v3801, %v3943
    %v3968 = vadd.f32 %v3802, %v3948
    %v3969 = vadd.f32 %v3803, %v3951
    %v3970 = vld [vmem:[%s3471 + $0x3] sm:$0xff]
    %v3971 = vld [vmem:[%s3471 + $0x13] sm:$0xff]
    %v3972 = vld [vmem:[%s3471 + $0x23] sm:$0xff]
    %v3973 = vld [vmem:[%s3471 + $0x33] sm:$0xff]
    %v3974 = vld [vmem:[%s3471 + $0x43] sm:$0xff]
    %v3975 = vld [vmem:[%s3471 + $0x53] sm:$0xff]
    %v3976 = vld [vmem:[%s3471 + $0x63] sm:$0xff]
    %v3977 = vld [vmem:[%s3471 + $0x73] sm:$0xff]
    %v3978 = vld [vmem:[%s3471 + $0xc3] sm:$0xff]
    %v3979 = vld [vmem:[%s3471 + $0xd3] sm:$0xff]
    %v3980 = vld [vmem:[%s3471 + $0xe3] sm:$0xff]
    %v3981 = vld [vmem:[%s3471 + $0xf3] sm:$0xff]
    %v3982 = vld [vmem:[%s3471 + $0x103] sm:$0xff]
    %v3983 = vld [vmem:[%s3471 + $0x113] sm:$0xff]
    %v3984 = vld [vmem:[%s3471 + $0x123] sm:$0xff]
    %v3985 = vld [vmem:[%s3471 + $0x133] sm:$0xff]
    %v3986 = vpack.c.bf16 %v3971, %v3970
    %v3987 = vpack.c.bf16 %v3973, %v3972
    %v3988 = vpack.c.bf16 %v3975, %v3974
    %v3989 = vpack.c.bf16 %v3977, %v3976
    %v3990 = vpack.c.bf16 %v3979, %v3978
    %v3991 = vpack.c.bf16 %v3981, %v3980
    %v3992 = vpack.c.bf16 %v3983, %v3982
    %v3993 = vpack.c.bf16 %v3985, %v3984
    %s3994 = scalar_lea.vmem %s1, 46
    %v3995 = vld [vmem:[%s3994] sm:$0x3]
    %v3997 = vsel %vm46, %v3986, 0
    %v4000 = vsel %vm46, %v3987, 0
    %v4003 = vsel %vm46, %v3988, 0
    %v4006 = vsel %vm46, %v3989, 0
    %v4009 = vsel %vm46, %v3990, 0
    %v4012 = vsel %vm46, %v3991, 0
    %v4015 = vsel %vm46, %v3992, 0
    %v4018 = vsel %vm46, %v3993, 0
    %v4021 = vand.u32 %v3995, %v256
    %4023 = vmatprep.subr.bf16.mxu0 0
    %4024 = vmatpush1.bf16.msra.mxu0 %v4021
    %4025 = vmatprep.subr.bf16.mxu0 0
    %4026 = vmatpush1.bf16.msra.mxu0 0
    %4027 = vmatprep.subr.bf16.mxu0 0
    %4028 = vmatpush1.bf16.msra.mxu0 0
    %4029 = vmatprep.subr.bf16.mxu0 0
    %4030 = vmatpush1.bf16.msra.mxu0 0
    %4031 = vmatprep.subr.bf16.mxu0 0
    %4032 = vmatpush1.bf16.msra.mxu0 0
    %4033 = vmatprep.subr.bf16.mxu0 0
    %4034 = vmatpush1.bf16.msra.mxu0 0
    %4035 = vmatprep.subr.bf16.mxu0 0
    %4036 = vmatpush1.bf16.msra.mxu0 0
    %4037 = vmatprep.subr.bf16.mxu0 0
    %4038 = vmatpush1.bf16.msra.mxu0 0
    %4039 = vmatprep.subr.bf16.mxu0 0
    %4040 = vmatpush1.bf16.msra.mxu0 0
    %4041 = vmatprep.subr.bf16.mxu0 0
    %4042 = vmatpush1.bf16.msra.mxu0 0
    %4043 = vmatprep.subr.bf16.mxu0 0
    %4044 = vmatpush1.bf16.msra.mxu0 0
    %4045 = vmatprep.subr.bf16.mxu0 0
    %4046 = vmatpush1.bf16.msra.mxu0 0
    %4047 = vmatprep.subr.bf16.mxu0 0
    %4048 = vmatpush1.bf16.msra.mxu0 0
    %4049 = vmatprep.subr.bf16.mxu0 0
    %4050 = vmatpush1.bf16.msra.mxu0 0
    %4051 = vmatprep.subr.bf16.mxu0 0
    %4052 = vmatpush1.bf16.msra.mxu0 0
    %4053 = vmatprep.subr.bf16.mxu0 0
    %4054 = vmatpush1.bf16.msra.mxu0 0
    %4055 = vmatprep.mubr.bf16.mxu0 0
    %4056 = vmatmul.mubr.bf16.gmra.mrb[0].mxu0 %v3997
    %v4057 = vpop.f32.mrb[0].mxu0
    %v4058 = vadd.f32 0.0, %v4057
    %v4059 = vpop.f32.mrb[0].mxu0
    %v4060 = vpop.f32.mrb[0].mxu0
    %v4061 = vadd.f32 0.0, %v4060
    %v4062 = vpop.f32.mrb[0].mxu0
    %4063 = vmatprep.mubr.bf16.mxu0 0
    %4064 = vmatmul.mubr.bf16.gmra.mrb[0].mxu0 %v4000
    %v4065 = vpop.f32.mrb[0].mxu0
    %v4066 = vadd.f32 0.0, %v4065
    %v4067 = vpop.f32.mrb[0].mxu0
    %v4068 = vpop.f32.mrb[0].mxu0
    %v4069 = vadd.f32 0.0, %v4068
    %v4070 = vpop.f32.mrb[0].mxu0
    %4071 = vmatprep.mubr.bf16.mxu0 0
    %4072 = vmatmul.mubr.bf16.gmra.mrb[0].mxu0 %v4003
    %v4073 = vpop.f32.mrb[0].mxu0
    %v4074 = vadd.f32 0.0, %v4073
    %v4075 = vpop.f32.mrb[0].mxu0
    %v4076 = vpop.f32.mrb[0].mxu0
    %v4077 = vadd.f32 0.0, %v4076
    %v4078 = vpop.f32.mrb[0].mxu0
    %4079 = vmatprep.mubr.bf16.mxu0 0
    %4080 = vmatmul.mubr.bf16.gmra.mrb[0].mxu0 %v4006
    %v4081 = vpop.f32.mrb[0].mxu0
    %v4082 = vadd.f32 0.0, %v4081
    %v4083 = vpop.f32.mrb[0].mxu0
    %v4084 = vpop.f32.mrb[0].mxu0
    %v4085 = vadd.f32 0.0, %v4084
    %v4086 = vpop.f32.mrb[0].mxu0
    %4087 = vmatprep.mubr.bf16.mxu0 0
    %4088 = vmatmul.mubr.bf16.gmra.mrb[0].mxu0 %v4009
    %v4089 = vpop.f32.mrb[0].mxu0
    %v4090 = vadd.f32 0.0, %v4089
    %v4091 = vpop.f32.mrb[0].mxu0
    %v4092 = vpop.f32.mrb[0].mxu0
    %v4093 = vadd.f32 0.0, %v4092
    %v4094 = vpop.f32.mrb[0].mxu0
    %4095 = vmatprep.mubr.bf16.mxu0 0
    %4096 = vmatmul.mubr.bf16.gmra.mrb[0].mxu0 %v4012
    %v4097 = vpop.f32.mrb[0].mxu0
    %v4098 = vadd.f32 0.0, %v4097
    %v4099 = vpop.f32.mrb[0].mxu0
    %v4100 = vpop.f32.mrb[0].mxu0
    %v4101 = vadd.f32 0.0, %v4100
    %v4102 = vpop.f32.mrb[0].mxu0
    %4103 = vmatprep.mubr.bf16.mxu0 0
    %4104 = vmatmul.mubr.bf16.gmra.mrb[0].mxu0 %v4015
    %v4105 = vpop.f32.mrb[0].mxu0
    %v4106 = vadd.f32 0.0, %v4105
    %v4107 = vpop.f32.mrb[0].mxu0
    %v4108 = vpop.f32.mrb[0].mxu0
    %v4109 = vadd.f32 0.0, %v4108
    %v4110 = vpop.f32.mrb[0].mxu0
    %4111 = vmatprep.mubr.bf16.mxu0 0
    %4112 = vmatmul.mubr.bf16.gmra.mrb[0].mxu0 %v4018
    %v4113 = vpop.f32.mrb[0].mxu0
    %v4114 = vadd.f32 0.0, %v4113
    %v4115 = vpop.f32.mrb[0].mxu0
    %v4116 = vpop.f32.mrb[0].mxu0
    %v4117 = vadd.f32 0.0, %v4116
    %v4118 = vpop.f32.mrb[0].mxu0
    %4119 = vdwg.mxu0
    %v4120 = vadd.f32 %v3954, %v4058
    %v4121 = vadd.f32 %v3955, %v4061
    %v4122 = vadd.f32 %v3956, %v4066
    %v4123 = vadd.f32 %v3957, %v4069
    %v4124 = vadd.f32 %v3958, %v4074
    %v4125 = vadd.f32 %v3959, %v4077
    %v4126 = vadd.f32 %v3960, %v4082
    %v4127 = vadd.f32 %v3961, %v4085
    %v4128 = vadd.f32 %v3962, %v4090
    %v4129 = vadd.f32 %v3963, %v4093
    %v4130 = vadd.f32 %v3964, %v4098
    %v4131 = vadd.f32 %v3965, %v4101
    %v4132 = vadd.f32 %v3966, %v4106
    %v4133 = vadd.f32 %v3967, %v4109
    %v4134 = vadd.f32 %v3968, %v4114
    %v4135 = vadd.f32 %v3969, %v4117
    %v4136 = vld [vmem:[%s3471 + $0x4] sm:$0xff]
    %v4137 = vld [vmem:[%s3471 + $0x14] sm:$0xff]
    %v4138 = vld [vmem:[%s3471 + $0x24] sm:$0xff]
    %v4139 = vld [vmem:[%s3471 + $0x34] sm:$0xff]
    %v4140 = vld [vmem:[%s3471 + $0x44] sm:$0xff]
    %v4141 = vld [vmem:[%s3471 + $0x54] sm:$0xff]
    %v4142 = vld [vmem:[%s3471 + $0x64] sm:$0xff]
    %v4143 = vld [vmem:[%s3471 + $0x74] sm:$0xff]
    %v4144 = vld [vmem:[%s3471 + $0xc4] sm:$0xff]
    %v4145 = vld [vmem:[%s3471 + $0xd4] sm:$0xff]
    %v4146 = vld [vmem:[%s3471 + $0xe4] sm:$0xff]
    %v4147 = vld [vmem:[%s3471 + $0xf4] sm:$0xff]
    %v4148 = vld [vmem:[%s3471 + $0x104] sm:$0xff]
    %v4149 = vld [vmem:[%s3471 + $0x114] sm:$0xff]
    %v4150 = vld [vmem:[%s3471 + $0x124] sm:$0xff]
    %v4151 = vld [vmem:[%s3471 + $0x134] sm:$0xff]
    %v4152 = vpack.c.bf16 %v4137, %v4136
    %v4153 = vpack.c.bf16 %v4139, %v4138
    %v4154 = vpack.c.bf16 %v4141, %v4140
    %v4155 = vpack.c.bf16 %v4143, %v4142
    %v4156 = vpack.c.bf16 %v4145, %v4144
    %v4157 = vpack.c.bf16 %v4147, %v4146
    %v4158 = vpack.c.bf16 %v4149, %v4148
    %v4159 = vpack.c.bf16 %v4151, %v4150
    %s4160 = scalar_lea.vmem %s1, 48
    %v4161 = vld [vmem:[%s4160] sm:$0x3]
    %v4163 = vsel %vm46, %v4152, 0
    %v4166 = vsel %vm46, %v4153, 0
    %v4169 = vsel %vm46, %v4154, 0
    %v4172 = vsel %vm46, %v4155, 0
    %v4175 = vsel %vm46, %v4156, 0
    %v4178 = vsel %vm46, %v4157, 0
    %v4181 = vsel %vm46, %v4158, 0
    %v4184 = vsel %vm46, %v4159, 0
    %v4187 = vand.u32 %v4161, %v256
    %4189 = vmatprep.subr.bf16.mxu0 0
    %4190 = vmatpush1.bf16.msra.mxu0 %v4187
    %4191 = vmatprep.subr.bf16.mxu0 0
    %4192 = vmatpush1.bf16.msra.mxu0 0
    %4193 = vmatprep.subr.bf16.mxu0 0
    %4194 = vmatpush1.bf16.msra.mxu0 0
    %4195 = vmatprep.subr.bf16.mxu0 0
    %4196 = vmatpush1.bf16.msra.mxu0 0
    %4197 = vmatprep.subr.bf16.mxu0 0
    %4198 = vmatpush1.bf16.msra.mxu0 0
    %4199 = vmatprep.subr.bf16.mxu0 0
    %4200 = vmatpush1.bf16.msra.mxu0 0
    %4201 = vmatprep.subr.bf16.mxu0 0
    %4202 = vmatpush1.bf16.msra.mxu0 0
    %4203 = vmatprep.subr.bf16.mxu0 0
    %4204 = vmatpush1.bf16.msra.mxu0 0
    %4205 = vmatprep.subr.bf16.mxu0 0
    %4206 = vmatpush1.bf16.msra.mxu0 0
    %4207 = vmatprep.subr.bf16.mxu0 0
    %4208 = vmatpush1.bf16.msra.mxu0 0
    %4209 = vmatprep.subr.bf16.mxu0 0
    %4210 = vmatpush1.bf16.msra.mxu0 0
    %4211 = vmatprep.subr.bf16.mxu0 0
    %4212 = vmatpush1.bf16.msra.mxu0 0
    %4213 = vmatprep.subr.bf16.mxu0 0
    %4214 = vmatpush1.bf16.msra.mxu0 0
    %4215 = vmatprep.subr.bf16.mxu0 0
    %4216 = vmatpush1.bf16.msra.mxu0 0
    %4217 = vmatprep.subr.bf16.mxu0 0
    %4218 = vmatpush1.bf16.msra.mxu0 0
    %4219 = vmatprep.subr.bf16.mxu0 0
    %4220 = vmatpush1.bf16.msra.mxu0 0
    %4221 = vmatprep.mubr.bf16.mxu0 0
    %4222 = vmatmul.mubr.bf16.gmra.mrb[0].mxu0 %v4163
    %v4223 = vpop.f32.mrb[0].mxu0
    %v4224 = vadd.f32 0.0, %v4223
    %v4225 = vpop.f32.mrb[0].mxu0
    %v4226 = vpop.f32.mrb[0].mxu0
    %v4227 = vadd.f32 0.0, %v4226
    %v4228 = vpop.f32.mrb[0].mxu0
    %4229 = vmatprep.mubr.bf16.mxu0 0
    %4230 = vmatmul.mubr.bf16.gmra.mrb[0].mxu0 %v4166
    %v4231 = vpop.f32.mrb[0].mxu0
    %v4232 = vadd.f32 0.0, %v4231
    %v4233 = vpop.f32.mrb[0].mxu0
    %v4234 = vpop.f32.mrb[0].mxu0
    %v4235 = vadd.f32 0.0, %v4234
    %v4236 = vpop.f32.mrb[0].mxu0
    %4237 = vmatprep.mubr.bf16.mxu0 0
    %4238 = vmatmul.mubr.bf16.gmra.mrb[0].mxu0 %v4169
    %v4239 = vpop.f32.mrb[0].mxu0
    %v4240 = vadd.f32 0.0, %v4239
    %v4241 = vpop.f32.mrb[0].mxu0
    %v4242 = vpop.f32.mrb[0].mxu0
    %v4243 = vadd.f32 0.0, %v4242
    %v4244 = vpop.f32.mrb[0].mxu0
    %4245 = vmatprep.mubr.bf16.mxu0 0
    %4246 = vmatmul.mubr.bf16.gmra.mrb[0].mxu0 %v4172
    %v4247 = vpop.f32.mrb[0].mxu0
    %v4248 = vadd.f32 0.0, %v4247
    %v4249 = vpop.f32.mrb[0].mxu0
    %v4250 = vpop.f32.mrb[0].mxu0
    %v4251 = vadd.f32 0.0, %v4250
    %v4252 = vpop.f32.mrb[0].mxu0
    %4253 = vmatprep.mubr.bf16.mxu0 0
    %4254 = vmatmul.mubr.bf16.gmra.mrb[0].mxu0 %v4175
    %v4255 = vpop.f32.mrb[0].mxu0
    %v4256 = vadd.f32 0.0, %v4255
    %v4257 = vpop.f32.mrb[0].mxu0
    %v4258 = vpop.f32.mrb[0].mxu0
    %v4259 = vadd.f32 0.0, %v4258
    %v4260 = vpop.f32.mrb[0].mxu0
    %4261 = vmatprep.mubr.bf16.mxu0 0
    %4262 = vmatmul.mubr.bf16.gmra.mrb[0].mxu0 %v4178
    %v4263 = vpop.f32.mrb[0].mxu0
    %v4264 = vadd.f32 0.0, %v4263
    %v4265 = vpop.f32.mrb[0].mxu0
    %v4266 = vpop.f32.mrb[0].mxu0
    %v4267 = vadd.f32 0.0, %v4266
    %v4268 = vpop.f32.mrb[0].mxu0
    %4269 = vmatprep.mubr.bf16.mxu0 0
    %4270 = vmatmul.mubr.bf16.gmra.mrb[0].mxu0 %v4181
    %v4271 = vpop.f32.mrb[0].mxu0
    %v4272 = vadd.f32 0.0, %v4271
    %v4273 = vpop.f32.mrb[0].mxu0
    %v4274 = vpop.f32.mrb[0].mxu0
    %v4275 = vadd.f32 0.0, %v4274
    %v4276 = vpop.f32.mrb[0].mxu0
    %4277 = vmatprep.mubr.bf16.mxu0 0
    %4278 = vmatmul.mubr.bf16.gmra.mrb[0].mxu0 %v4184
    %v4279 = vpop.f32.mrb[0].mxu0
    %v4280 = vadd.f32 0.0, %v4279
    %v4281 = vpop.f32.mrb[0].mxu0
    %v4282 = vpop.f32.mrb[0].mxu0
    %v4283 = vadd.f32 0.0, %v4282
    %v4284 = vpop.f32.mrb[0].mxu0
    %4285 = vdwg.mxu0
    %v4286 = vadd.f32 %v4120, %v4224
    %v4287 = vadd.f32 %v4121, %v4227
    %v4288 = vadd.f32 %v4122, %v4232
    %v4289 = vadd.f32 %v4123, %v4235
    %v4290 = vadd.f32 %v4124, %v4240
    %v4291 = vadd.f32 %v4125, %v4243
    %v4292 = vadd.f32 %v4126, %v4248
    %v4293 = vadd.f32 %v4127, %v4251
    %v4294 = vadd.f32 %v4128, %v4256
    %v4295 = vadd.f32 %v4129, %v4259
    %v4296 = vadd.f32 %v4130, %v4264
    %v4297 = vadd.f32 %v4131, %v4267
    %v4298 = vadd.f32 %v4132, %v4272
    %v4299 = vadd.f32 %v4133, %v4275
    %v4300 = vadd.f32 %v4134, %v4280
    %v4301 = vadd.f32 %v4135, %v4283
    %v4302 = vld [vmem:[%s2] sm:$0x1]
    %v4304 = vlaneseq
    %v4305 = vshrl.u32 %v4304, 7
    %v4306 = vsub.s32 0, %v4305
    %v4307 = vrot.slane %v4302, %v4306
    %v4309 = vadd.f32 %v4286, %v4307
    %v4310 = vadd.f32 %v4287, %v4307
    %v4311 = vadd.f32 %v4288, %v4307
    %v4312 = vadd.f32 %v4289, %v4307
    %v4313 = vadd.f32 %v4290, %v4307
    %v4314 = vadd.f32 %v4291, %v4307
    %v4315 = vadd.f32 %v4292, %v4307
    %v4316 = vadd.f32 %v4293, %v4307
    %v4317 = vadd.f32 %v4294, %v4307
    %v4318 = vadd.f32 %v4295, %v4307
    %v4319 = vadd.f32 %v4296, %v4307
    %v4320 = vadd.f32 %v4297, %v4307
    %v4321 = vadd.f32 %v4298, %v4307
    %v4322 = vadd.f32 %v4299, %v4307
    %v4323 = vadd.f32 %v4300, %v4307
    %v4324 = vadd.f32 %v4301, %v4307
    %v4325 = vmax.f32 %v4309, 0.0
    %v4326 = vmax.f32 %v4310, 0.0
    %v4327 = vmax.f32 %v4311, 0.0
    %v4328 = vmax.f32 %v4312, 0.0
    %v4329 = vmax.f32 %v4313, 0.0
    %v4330 = vmax.f32 %v4314, 0.0
    %v4331 = vmax.f32 %v4315, 0.0
    %v4332 = vmax.f32 %v4316, 0.0
    %v4333 = vmax.f32 %v4317, 0.0
    %v4334 = vmax.f32 %v4318, 0.0
    %v4335 = vmax.f32 %v4319, 0.0
    %v4336 = vmax.f32 %v4320, 0.0
    %v4337 = vmax.f32 %v4321, 0.0
    %v4338 = vmax.f32 %v4322, 0.0
    %v4339 = vmax.f32 %v4323, 0.0
    %v4340 = vmax.f32 %v4324, 0.0
    %vm4341 = vcmask 97280
    %4342 = vst.msk [vmem:[#allocation3] sm:$0xff] %vm4341, 0.0
    %vm4343 = vcmask 91136
    %4344 = vst.msk [vmem:[#allocation3 + $0x8] sm:$0x3] %vm4343, 0.0
    %4345 = vst.msk [vmem:[#allocation3 + $0x10] sm:$0xff] %vm4341, 0.0
    %4346 = vst.msk [vmem:[#allocation3 + $0x18] sm:$0x3] %vm4343, 0.0
    %4347 = vst.msk [vmem:[#allocation3 + $0x20] sm:$0xff] %vm4341, 0.0
    %4348 = vst.msk [vmem:[#allocation3 + $0x28] sm:$0x3] %vm4343, 0.0
    %4349 = vst.msk [vmem:[#allocation3 + $0x30] sm:$0xff] %vm4341, 0.0
    %4350 = vst.msk [vmem:[#allocation3 + $0x38] sm:$0x3] %vm4343, 0.0
    %4351 = vst.msk [vmem:[#allocation3 + $0x40] sm:$0xff] %vm4341, 0.0
    %4352 = vst.msk [vmem:[#allocation3 + $0x48] sm:$0x3] %vm4343, 0.0
    %4353 = vst.msk [vmem:[#allocation3 + $0x50] sm:$0xff] %vm4341, 0.0
    %4354 = vst.msk [vmem:[#allocation3 + $0x58] sm:$0x3] %vm4343, 0.0
    %4355 = vst.msk [vmem:[#allocation3 + $0x60] sm:$0xff] %vm4341, 0.0
    %4356 = vst.msk [vmem:[#allocation3 + $0x68] sm:$0x3] %vm4343, 0.0
    %4357 = vst.msk [vmem:[#allocation3 + $0x70] sm:$0xff] %vm4341, 0.0
    %4358 = vst.msk [vmem:[#allocation3 + $0x78] sm:$0x3] %vm4343, 0.0
    %4359 = vst.msk [vmem:[#allocation3 + $0x80] sm:$0xff] %vm4341, 0.0
    %4360 = vst.msk [vmem:[#allocation3 + $0x88] sm:$0x3] %vm4343, 0.0
    %4361 = vst.msk [vmem:[#allocation3 + $0x90] sm:$0xff] %vm4341, 0.0
    %4362 = vst.msk [vmem:[#allocation3 + $0x98] sm:$0x3] %vm4343, 0.0
    %4363 = vst.msk [vmem:[#allocation3 + $0xa0] sm:$0xff] %vm4341, 0.0
    %4364 = vst.msk [vmem:[#allocation3 + $0xa8] sm:$0x3] %vm4343, 0.0
    %4365 = vst.msk [vmem:[#allocation3 + $0xb0] sm:$0xff] %vm4341, 0.0
    %4366 = vst.msk [vmem:[#allocation3 + $0xb8] sm:$0x3] %vm4343, 0.0
    %4367 = vst.msk [vmem:[#allocation3 + $0xc0] sm:$0xff] %vm4341, 0.0
    %4368 = vst.msk [vmem:[#allocation3 + $0xc8] sm:$0x3] %vm4343, 0.0
    %4369 = vst.msk [vmem:[#allocation3 + $0xd0] sm:$0xff] %vm4341, 0.0
    %4370 = vst.msk [vmem:[#allocation3 + $0xd8] sm:$0x3] %vm4343, 0.0
    %4371 = vst.msk [vmem:[#allocation3 + $0xe0] sm:$0xff] %vm4341, 0.0
    %4372 = vst.msk [vmem:[#allocation3 + $0xe8] sm:$0x3] %vm4343, 0.0
    %4373 = vst.msk [vmem:[#allocation3 + $0xf0] sm:$0xff] %vm4341, 0.0
    %4374 = vst.msk [vmem:[#allocation3 + $0xf8] sm:$0x3] %vm4343, 0.0
    %4375 = vst.msk [vmem:[#allocation3 + $0x100] sm:$0xff] %vm4341, 0.0
    %4376 = vst.msk [vmem:[#allocation3 + $0x108] sm:$0x3] %vm4343, 0.0
    %4377 = vst.msk [vmem:[#allocation3 + $0x110] sm:$0xff] %vm4341, 0.0
    %4378 = vst.msk [vmem:[#allocation3 + $0x118] sm:$0x3] %vm4343, 0.0
    %4379 = vst.msk [vmem:[#allocation3 + $0x120] sm:$0xff] %vm4341, 0.0
    %4380 = vst.msk [vmem:[#allocation3 + $0x128] sm:$0x3] %vm4343, 0.0
    %4381 = vst.msk [vmem:[#allocation3 + $0x130] sm:$0xff] %vm4341, 0.0
    %4382 = vst.msk [vmem:[#allocation3 + $0x138] sm:$0x3] %vm4343, 0.0
    %s4383 = scalar_lea.vmem [#allocation3], 16
    %4384 = vst.msk [vmem:[%s4383 + $0x1] sm:$0xff] %vm4341, %v4325
    %4385 = vst.msk [vmem:[%s4383 + $0x11] sm:$0xff] %vm4341, %v4326
    %4386 = vst.msk [vmem:[%s4383 + $0x21] sm:$0xff] %vm4341, %v4327
    %4387 = vst.msk [vmem:[%s4383 + $0x31] sm:$0xff] %vm4341, %v4328
    %4388 = vst.msk [vmem:[%s4383 + $0x41] sm:$0xff] %vm4341, %v4329
    %4389 = vst.msk [vmem:[%s4383 + $0x51] sm:$0xff] %vm4341, %v4330
    %4390 = vst.msk [vmem:[%s4383 + $0x61] sm:$0xff] %vm4341, %v4331
    %4391 = vst.msk [vmem:[%s4383 + $0x71] sm:$0xff] %vm4341, %v4332
    %4392 = vst.msk [vmem:[%s4383 + $0xa1] sm:$0xff] %vm4341, %v4333
    %4393 = vst.msk [vmem:[%s4383 + $0xb1] sm:$0xff] %vm4341, %v4334
    %4394 = vst.msk [vmem:[%s4383 + $0xc1] sm:$0xff] %vm4341, %v4335
    %4395 = vst.msk [vmem:[%s4383 + $0xd1] sm:$0xff] %vm4341, %v4336
    %4396 = vst.msk [vmem:[%s4383 + $0xe1] sm:$0xff] %vm4341, %v4337
    %4397 = vst.msk [vmem:[%s4383 + $0xf1] sm:$0xff] %vm4341, %v4338
    %4398 = vst.msk [vmem:[%s4383 + $0x101] sm:$0xff] %vm4341, %v4339
    %4399 = vst.msk [vmem:[%s4383 + $0x111] sm:$0xff] %vm4341, %v4340
    %v4400 = vld [vmem:[#allocation3] sm:$0xff]
    %v4401 = vld [vmem:[#allocation3 + $0x10] sm:$0xff]
    %v4402 = vld [vmem:[#allocation3 + $0x20] sm:$0xff]
    %v4403 = vld [vmem:[#allocation3 + $0x30] sm:$0xff]
    %v4404 = vld [vmem:[#allocation3 + $0x40] sm:$0xff]
    %v4405 = vld [vmem:[#allocation3 + $0x50] sm:$0xff]
    %v4406 = vld [vmem:[#allocation3 + $0x60] sm:$0xff]
    %v4407 = vld [vmem:[#allocation3 + $0x70] sm:$0xff]
    %v4408 = vld [vmem:[#allocation3 + $0xa0] sm:$0xff]
    %v4409 = vld [vmem:[#allocation3 + $0xb0] sm:$0xff]
    %v4410 = vld [vmem:[#allocation3 + $0xc0] sm:$0xff]
    %v4411 = vld [vmem:[#allocation3 + $0xd0] sm:$0xff]
    %v4412 = vld [vmem:[#allocation3 + $0xe0] sm:$0xff]
    %v4413 = vld [vmem:[#allocation3 + $0xf0] sm:$0xff]
    %v4414 = vld [vmem:[#allocation3 + $0x100] sm:$0xff]
    %v4415 = vld [vmem:[#allocation3 + $0x110] sm:$0xff]
    %v4416 = vpack.c.bf16 %v4401, %v4400
    %v4417 = vpack.c.bf16 %v4403, %v4402
    %v4418 = vpack.c.bf16 %v4405, %v4404
    %v4419 = vpack.c.bf16 %v4407, %v4406
    %v4420 = vpack.c.bf16 %v4409, %v4408
    %v4421 = vpack.c.bf16 %v4411, %v4410
    %v4422 = vpack.c.bf16 %v4413, %v4412
    %v4423 = vpack.c.bf16 %v4415, %v4414
    %v4424 = vld [vmem:[%s3] sm:$0xf]
    %v4425 = vld [vmem:[%s3 + $0x4] sm:$0x3]
    %v4426 = vld [vmem:[#allocation3 + $0x1] sm:$0xff]
    %v4427 = vld [vmem:[#allocation3 + $0x11] sm:$0xff]
    %v4428 = vld [vmem:[#allocation3 + $0x21] sm:$0xff]
    %v4429 = vld [vmem:[#allocation3 + $0x31] sm:$0xff]
    %v4430 = vld [vmem:[#allocation3 + $0x41] sm:$0xff]
    %v4431 = vld [vmem:[#allocation3 + $0x51] sm:$0xff]
    %v4432 = vld [vmem:[#allocation3 + $0x61] sm:$0xff]
    %v4433 = vld [vmem:[#allocation3 + $0x71] sm:$0xff]
    %v4434 = vld [vmem:[#allocation3 + $0xa1] sm:$0xff]
    %v4435 = vld [vmem:[#allocation3 + $0xb1] sm:$0xff]
    %v4436 = vld [vmem:[#allocation3 + $0xc1] sm:$0xff]
    %v4437 = vld [vmem:[#allocation3 + $0xd1] sm:$0xff]
    %v4438 = vld [vmem:[#allocation3 + $0xe1] sm:$0xff]
    %v4439 = vld [vmem:[#allocation3 + $0xf1] sm:$0xff]
    %v4440 = vld [vmem:[#allocation3 + $0x101] sm:$0xff]
    %v4441 = vld [vmem:[#allocation3 + $0x111] sm:$0xff]
    %v4442 = vpack.c.bf16 %v4427, %v4426
    %v4443 = vpack.c.bf16 %v4429, %v4428
    %v4444 = vpack.c.bf16 %v4431, %v4430
    %v4445 = vpack.c.bf16 %v4433, %v4432
    %v4446 = vpack.c.bf16 %v4435, %v4434
    %v4447 = vpack.c.bf16 %v4437, %v4436
    %v4448 = vpack.c.bf16 %v4439, %v4438
    %v4449 = vpack.c.bf16 %v4441, %v4440
    %s4450 = scalar_lea.vmem %s3, 8
    %v4451 = vld [vmem:[%s4450] sm:$0xf]
    %v4452 = vld [vmem:[%s4450 + $0x4] sm:$0x3]
    %v4455 = vunpack.c.l.b16 %v4451
    %v4456 = vunpack.c.l.b16 %v4452
    %v4457 = vpack.c.b16 %v4456, %v4455
    %v4459 = vsel %vm4341, %v4442, 0
    %v4462 = vsel %vm4341, %v4443, 0
    %v4465 = vsel %vm4341, %v4444, 0
    %v4468 = vsel %vm4341, %v4445, 0
    %v4471 = vsel %vm4341, %v4446, 0
    %v4474 = vsel %vm4341, %v4447, 0
    %v4477 = vsel %vm4341, %v4448, 0
    %v4480 = vsel %vm4341, %v4449, 0
    %vm4482 = vcmask 1045504
    %v4484 = vsel %vm4482, %v4457, 0
    %4486 = vmatprep.subr.bf16.mxu0 0
    %4487 = vmatpush1.bf16.msra.mxu0 %v4484
    %4488 = vmatprep.subr.bf16.mxu0 0
    %4489 = vmatpush1.bf16.msra.mxu0 0
    %4490 = vmatprep.subr.bf16.mxu0 0
    %4491 = vmatpush1.bf16.msra.mxu0 0
    %4492 = vmatprep.subr.bf16.mxu0 0
    %4493 = vmatpush1.bf16.msra.mxu0 0
    %4494 = vmatprep.subr.bf16.mxu0 0
    %4495 = vmatpush1.bf16.msra.mxu0 0
    %4496 = vmatprep.subr.bf16.mxu0 0
    %4497 = vmatpush1.bf16.msra.mxu0 0
    %4498 = vmatprep.subr.bf16.mxu0 0
    %4499 = vmatpush1.bf16.msra.mxu0 0
    %4500 = vmatprep.subr.bf16.mxu0 0
    %4501 = vmatpush1.bf16.msra.mxu0 0
    %4502 = vmatprep.subr.bf16.mxu0 0
    %4503 = vmatpush1.bf16.msra.mxu0 0
    %4504 = vmatprep.subr.bf16.mxu0 0
    %4505 = vmatpush1.bf16.msra.mxu0 0
    %4506 = vmatprep.subr.bf16.mxu0 0
    %4507 = vmatpush1.bf16.msra.mxu0 0
    %4508 = vmatprep.subr.bf16.mxu0 0
    %4509 = vmatpush1.bf16.msra.mxu0 0
    %4510 = vmatprep.subr.bf16.mxu0 0
    %4511 = vmatpush1.bf16.msra.mxu0 0
    %4512 = vmatprep.subr.bf16.mxu0 0
    %4513 = vmatpush1.bf16.msra.mxu0 0
    %4514 = vmatprep.subr.bf16.mxu0 0
    %4515 = vmatpush1.bf16.msra.mxu0 0
    %4516 = vmatprep.subr.bf16.mxu0 0
    %4517 = vmatpush1.bf16.msra.mxu0 0
    %4518 = vmatprep.mubr.bf16.mxu0 0
    %4519 = vmatmul.mubr.bf16.gmra.mrb[0].mxu0 %v4459
    %v4520 = vpop.f32.mrb[0].mxu0
    %v4521 = vadd.f32 0.0, %v4520
    %v4522 = vpop.f32.mrb[0].mxu0
    %v4523 = vpop.f32.mrb[0].mxu0
    %v4524 = vadd.f32 0.0, %v4523
    %v4525 = vpop.f32.mrb[0].mxu0
    %4526 = vmatprep.mubr.bf16.mxu0 0
    %4527 = vmatmul.mubr.bf16.gmra.mrb[0].mxu0 %v4462
    %v4528 = vpop.f32.mrb[0].mxu0
    %v4529 = vadd.f32 0.0, %v4528
    %v4530 = vpop.f32.mrb[0].mxu0
    %v4531 = vpop.f32.mrb[0].mxu0
    %v4532 = vadd.f32 0.0, %v4531
    %v4533 = vpop.f32.mrb[0].mxu0
    %4534 = vmatprep.mubr.bf16.mxu0 0
    %4535 = vmatmul.mubr.bf16.gmra.mrb[0].mxu0 %v4465
    %v4536 = vpop.f32.mrb[0].mxu0
    %v4537 = vadd.f32 0.0, %v4536
    %v4538 = vpop.f32.mrb[0].mxu0
    %v4539 = vpop.f32.mrb[0].mxu0
    %v4540 = vadd.f32 0.0, %v4539
    %v4541 = vpop.f32.mrb[0].mxu0
    %4542 = vmatprep.mubr.bf16.mxu0 0
    %4543 = vmatmul.mubr.bf16.gmra.mrb[0].mxu0 %v4468
    %v4544 = vpop.f32.mrb[0].mxu0
    %v4545 = vadd.f32 0.0, %v4544
    %v4546 = vpop.f32.mrb[0].mxu0
    %v4547 = vpop.f32.mrb[0].mxu0
    %v4548 = vadd.f32 0.0, %v4547
    %v4549 = vpop.f32.mrb[0].mxu0
    %4550 = vmatprep.mubr.bf16.mxu0 0
    %4551 = vmatmul.mubr.bf16.gmra.mrb[0].mxu0 %v4471
    %v4552 = vpop.f32.mrb[0].mxu0
    %v4553 = vadd.f32 0.0, %v4552
    %v4554 = vpop.f32.mrb[0].mxu0
    %v4555 = vpop.f32.mrb[0].mxu0
    %v4556 = vadd.f32 0.0, %v4555
    %v4557 = vpop.f32.mrb[0].mxu0
    %4558 = vmatprep.mubr.bf16.mxu0 0
    %4559 = vmatmul.mubr.bf16.gmra.mrb[0].mxu0 %v4474
    %v4560 = vpop.f32.mrb[0].mxu0
    %v4561 = vadd.f32 0.0, %v4560
    %v4562 = vpop.f32.mrb[0].mxu0
    %v4563 = vpop.f32.mrb[0].mxu0
    %v4564 = vadd.f32 0.0, %v4563
    %v4565 = vpop.f32.mrb[0].mxu0
    %4566 = vmatprep.mubr.bf16.mxu0 0
    %4567 = vmatmul.mubr.bf16.gmra.mrb[0].mxu0 %v4477
    %v4568 = vpop.f32.mrb[0].mxu0
    %v4569 = vadd.f32 0.0, %v4568
    %v4570 = vpop.f32.mrb[0].mxu0
    %v4571 = vpop.f32.mrb[0].mxu0
    %v4572 = vadd.f32 0.0, %v4571
    %v4573 = vpop.f32.mrb[0].mxu0
    %4574 = vmatprep.mubr.bf16.mxu0 0
    %4575 = vmatmul.mubr.bf16.gmra.mrb[0].mxu0 %v4480
    %v4576 = vpop.f32.mrb[0].mxu0
    %v4577 = vadd.f32 0.0, %v4576
    %v4578 = vpop.f32.mrb[0].mxu0
    %v4579 = vpop.f32.mrb[0].mxu0
    %v4580 = vadd.f32 0.0, %v4579
    %v4581 = vpop.f32.mrb[0].mxu0
    %4582 = vdwg.mxu0
    %v4585 = vunpack.c.l.b16 %v4424
    %v4586 = vunpack.c.l.b16 %v4425
    %v4587 = vpack.c.b16 %v4586, %v4585
    %v4589 = vsel %vm4341, %v4416, 0
    %v4592 = vsel %vm4341, %v4417, 0
    %v4595 = vsel %vm4341, %v4418, 0
    %v4598 = vsel %vm4341, %v4419, 0
    %v4601 = vsel %vm4341, %v4420, 0
    %v4604 = vsel %vm4341, %v4421, 0
    %v4607 = vsel %vm4341, %v4422, 0
    %v4610 = vsel %vm4341, %v4423, 0
    %v4613 = vsel %vm4482, %v4587, 0
    %4615 = vmatprep.subr.bf16.mxu0 0
    %4616 = vmatpush1.bf16.msra.mxu0 %v4613
    %4617 = vmatprep.subr.bf16.mxu0 0
    %4618 = vmatpush1.bf16.msra.mxu0 0
    %4619 = vmatprep.subr.bf16.mxu0 0
    %4620 = vmatpush1.bf16.msra.mxu0 0
    %4621 = vmatprep.subr.bf16.mxu0 0
    %4622 = vmatpush1.bf16.msra.mxu0 0
    %4623 = vmatprep.subr.bf16.mxu0 0
    %4624 = vmatpush1.bf16.msra.mxu0 0
    %4625 = vmatprep.subr.bf16.mxu0 0
    %4626 = vmatpush1.bf16.msra.mxu0 0
    %4627 = vmatprep.subr.bf16.mxu0 0
    %4628 = vmatpush1.bf16.msra.mxu0 0
    %4629 = vmatprep.subr.bf16.mxu0 0
    %4630 = vmatpush1.bf16.msra.mxu0 0
    %4631 = vmatprep.subr.bf16.mxu0 0
    %4632 = vmatpush1.bf16.msra.mxu0 0
    %4633 = vmatprep.subr.bf16.mxu0 0
    %4634 = vmatpush1.bf16.msra.mxu0 0
    %4635 = vmatprep.subr.bf16.mxu0 0
    %4636 = vmatpush1.bf16.msra.mxu0 0
    %4637 = vmatprep.subr.bf16.mxu0 0
    %4638 = vmatpush1.bf16.msra.mxu0 0
    %4639 = vmatprep.subr.bf16.mxu0 0
    %4640 = vmatpush1.bf16.msra.mxu0 0
    %4641 = vmatprep.subr.bf16.mxu0 0
    %4642 = vmatpush1.bf16.msra.mxu0 0
    %4643 = vmatprep.subr.bf16.mxu0 0
    %4644 = vmatpush1.bf16.msra.mxu0 0
    %4645 = vmatprep.subr.bf16.mxu0 0
    %4646 = vmatpush1.bf16.msra.mxu0 0
    %4647 = vmatprep.mubr.bf16.mxu0 0
    %4648 = vmatmul.mubr.bf16.gmra.mrb[0].mxu0 %v4589
    %v4649 = vpop.f32.mrb[0].mxu0
    %v4650 = vadd.f32 %v4521, %v4649
    %v4651 = vpop.f32.mrb[0].mxu0
    %v4652 = vpop.f32.mrb[0].mxu0
    %v4653 = vadd.f32 %v4524, %v4652
    %v4654 = vpop.f32.mrb[0].mxu0
    %4655 = vmatprep.mubr.bf16.mxu0 0
    %4656 = vmatmul.mubr.bf16.gmra.mrb[0].mxu0 %v4592
    %v4657 = vpop.f32.mrb[0].mxu0
    %v4658 = vadd.f32 %v4529, %v4657
    %v4659 = vpop.f32.mrb[0].mxu0
    %v4660 = vpop.f32.mrb[0].mxu0
    %v4661 = vadd.f32 %v4532, %v4660
    %v4662 = vpop.f32.mrb[0].mxu0
    %4663 = vmatprep.mubr.bf16.mxu0 0
    %4664 = vmatmul.mubr.bf16.gmra.mrb[0].mxu0 %v4595
    %v4665 = vpop.f32.mrb[0].mxu0
    %v4666 = vadd.f32 %v4537, %v4665
    %v4667 = vpop.f32.mrb[0].mxu0
    %v4668 = vpop.f32.mrb[0].mxu0
    %v4669 = vadd.f32 %v4540, %v4668
    %v4670 = vpop.f32.mrb[0].mxu0
    %4671 = vmatprep.mubr.bf16.mxu0 0
    %4672 = vmatmul.mubr.bf16.gmra.mrb[0].mxu0 %v4598
    %v4673 = vpop.f32.mrb[0].mxu0
    %v4674 = vadd.f32 %v4545, %v4673
    %v4675 = vpop.f32.mrb[0].mxu0
    %v4676 = vpop.f32.mrb[0].mxu0
    %v4677 = vadd.f32 %v4548, %v4676
    %v4678 = vpop.f32.mrb[0].mxu0
    %4679 = vmatprep.mubr.bf16.mxu0 0
    %4680 = vmatmul.mubr.bf16.gmra.mrb[0].mxu0 %v4601
    %v4681 = vpop.f32.mrb[0].mxu0
    %v4682 = vadd.f32 %v4553, %v4681
    %v4683 = vpop.f32.mrb[0].mxu0
    %v4684 = vpop.f32.mrb[0].mxu0
    %v4685 = vadd.f32 %v4556, %v4684
    %v4686 = vpop.f32.mrb[0].mxu0
    %4687 = vmatprep.mubr.bf16.mxu0 0
    %4688 = vmatmul.mubr.bf16.gmra.mrb[0].mxu0 %v4604
    %v4689 = vpop.f32.mrb[0].mxu0
    %v4690 = vadd.f32 %v4561, %v4689
    %v4691 = vpop.f32.mrb[0].mxu0
    %v4692 = vpop.f32.mrb[0].mxu0
    %v4693 = vadd.f32 %v4564, %v4692
    %v4694 = vpop.f32.mrb[0].mxu0
    %4695 = vmatprep.mubr.bf16.mxu0 0
    %4696 = vmatmul.mubr.bf16.gmra.mrb[0].mxu0 %v4607
    %v4697 = vpop.f32.mrb[0].mxu0
    %v4698 = vadd.f32 %v4569, %v4697
    %v4699 = vpop.f32.mrb[0].mxu0
    %v4700 = vpop.f32.mrb[0].mxu0
    %v4701 = vadd.f32 %v4572, %v4700
    %v4702 = vpop.f32.mrb[0].mxu0
    %4703 = vmatprep.mubr.bf16.mxu0 0
    %4704 = vmatmul.mubr.bf16.gmra.mrb[0].mxu0 %v4610
    %v4705 = vpop.f32.mrb[0].mxu0
    %v4706 = vadd.f32 %v4577, %v4705
    %v4707 = vpop.f32.mrb[0].mxu0
    %v4708 = vpop.f32.mrb[0].mxu0
    %v4709 = vadd.f32 %v4580, %v4708
    %v4710 = vpop.f32.mrb[0].mxu0
    %4711 = vdwg.mxu0
    %v4712 = vld [vmem:[#allocation3 + $0x2] sm:$0xff]
    %v4713 = vld [vmem:[#allocation3 + $0x12] sm:$0xff]
    %v4714 = vld [vmem:[#allocation3 + $0x22] sm:$0xff]
    %v4715 = vld [vmem:[#allocation3 + $0x32] sm:$0xff]
    %v4716 = vld [vmem:[#allocation3 + $0x42] sm:$0xff]
    %v4717 = vld [vmem:[#allocation3 + $0x52] sm:$0xff]
    %v4718 = vld [vmem:[#allocation3 + $0x62] sm:$0xff]
    %v4719 = vld [vmem:[#allocation3 + $0x72] sm:$0xff]
    %v4720 = vld [vmem:[#allocation3 + $0xa2] sm:$0xff]
    %v4721 = vld [vmem:[#allocation3 + $0xb2] sm:$0xff]
    %v4722 = vld [vmem:[#allocation3 + $0xc2] sm:$0xff]
    %v4723 = vld [vmem:[#allocation3 + $0xd2] sm:$0xff]
    %v4724 = vld [vmem:[#allocation3 + $0xe2] sm:$0xff]
    %v4725 = vld [vmem:[#allocation3 + $0xf2] sm:$0xff]
    %v4726 = vld [vmem:[#allocation3 + $0x102] sm:$0xff]
    %v4727 = vld [vmem:[#allocation3 + $0x112] sm:$0xff]
    %v4728 = vpack.c.bf16 %v4713, %v4712
    %v4729 = vpack.c.bf16 %v4715, %v4714
    %v4730 = vpack.c.bf16 %v4717, %v4716
    %v4731 = vpack.c.bf16 %v4719, %v4718
    %v4732 = vpack.c.bf16 %v4721, %v4720
    %v4733 = vpack.c.bf16 %v4723, %v4722
    %v4734 = vpack.c.bf16 %v4725, %v4724
    %v4735 = vpack.c.bf16 %v4727, %v4726
    %s4736 = scalar_lea.vmem %s3, 16
    %v4737 = vld [vmem:[%s4736] sm:$0xf]
    %v4738 = vld [vmem:[%s4736 + $0x4] sm:$0x3]
    %v4741 = vunpack.c.l.b16 %v4737
    %v4742 = vunpack.c.l.b16 %v4738
    %v4743 = vpack.c.b16 %v4742, %v4741
    %v4745 = vsel %vm4341, %v4728, 0
    %v4748 = vsel %vm4341, %v4729, 0
    %v4751 = vsel %vm4341, %v4730, 0
    %v4754 = vsel %vm4341, %v4731, 0
    %v4757 = vsel %vm4341, %v4732, 0
    %v4760 = vsel %vm4341, %v4733, 0
    %v4763 = vsel %vm4341, %v4734, 0
    %v4766 = vsel %vm4341, %v4735, 0
    %v4769 = vsel %vm4482, %v4743, 0
    %4771 = vmatprep.subr.bf16.mxu0 0
    %4772 = vmatpush1.bf16.msra.mxu0 %v4769
    %4773 = vmatprep.subr.bf16.mxu0 0
    %4774 = vmatpush1.bf16.msra.mxu0 0
    %4775 = vmatprep.subr.bf16.mxu0 0
    %4776 = vmatpush1.bf16.msra.mxu0 0
    %4777 = vmatprep.subr.bf16.mxu0 0
    %4778 = vmatpush1.bf16.msra.mxu0 0
    %4779 = vmatprep.subr.bf16.mxu0 0
    %4780 = vmatpush1.bf16.msra.mxu0 0
    %4781 = vmatprep.subr.bf16.mxu0 0
    %4782 = vmatpush1.bf16.msra.mxu0 0
    %4783 = vmatprep.subr.bf16.mxu0 0
    %4784 = vmatpush1.bf16.msra.mxu0 0
    %4785 = vmatprep.subr.bf16.mxu0 0
    %4786 = vmatpush1.bf16.msra.mxu0 0
    %4787 = vmatprep.subr.bf16.mxu0 0
    %4788 = vmatpush1.bf16.msra.mxu0 0
    %4789 = vmatprep.subr.bf16.mxu0 0
    %4790 = vmatpush1.bf16.msra.mxu0 0
    %4791 = vmatprep.subr.bf16.mxu0 0
    %4792 = vmatpush1.bf16.msra.mxu0 0
    %4793 = vmatprep.subr.bf16.mxu0 0
    %4794 = vmatpush1.bf16.msra.mxu0 0
    %4795 = vmatprep.subr.bf16.mxu0 0
    %4796 = vmatpush1.bf16.msra.mxu0 0
    %4797 = vmatprep.subr.bf16.mxu0 0
    %4798 = vmatpush1.bf16.msra.mxu0 0
    %4799 = vmatprep.subr.bf16.mxu0 0
    %4800 = vmatpush1.bf16.msra.mxu0 0
    %4801 = vmatprep.subr.bf16.mxu0 0
    %4802 = vmatpush1.bf16.msra.mxu0 0
    %4803 = vmatprep.mubr.bf16.mxu0 0
    %4804 = vmatmul.mubr.bf16.gmra.mrb[0].mxu0 %v4745
    %v4805 = vpop.f32.mrb[0].mxu0
    %v4806 = vadd.f32 0.0, %v4805
    %v4807 = vpop.f32.mrb[0].mxu0
    %v4808 = vpop.f32.mrb[0].mxu0
    %v4809 = vadd.f32 0.0, %v4808
    %v4810 = vpop.f32.mrb[0].mxu0
    %4811 = vmatprep.mubr.bf16.mxu0 0
    %4812 = vmatmul.mubr.bf16.gmra.mrb[0].mxu0 %v4748
    %v4813 = vpop.f32.mrb[0].mxu0
    %v4814 = vadd.f32 0.0, %v4813
    %v4815 = vpop.f32.mrb[0].mxu0
    %v4816 = vpop.f32.mrb[0].mxu0
    %v4817 = vadd.f32 0.0, %v4816
    %v4818 = vpop.f32.mrb[0].mxu0
    %4819 = vmatprep.mubr.bf16.mxu0 0
    %4820 = vmatmul.mubr.bf16.gmra.mrb[0].mxu0 %v4751
    %v4821 = vpop.f32.mrb[0].mxu0
    %v4822 = vadd.f32 0.0, %v4821
    %v4823 = vpop.f32.mrb[0].mxu0
    %v4824 = vpop.f32.mrb[0].mxu0
    %v4825 = vadd.f32 0.0, %v4824
    %v4826 = vpop.f32.mrb[0].mxu0
    %4827 = vmatprep.mubr.bf16.mxu0 0
    %4828 = vmatmul.mubr.bf16.gmra.mrb[0].mxu0 %v4754
    %v4829 = vpop.f32.mrb[0].mxu0
    %v4830 = vadd.f32 0.0, %v4829
    %v4831 = vpop.f32.mrb[0].mxu0
    %v4832 = vpop.f32.mrb[0].mxu0
    %v4833 = vadd.f32 0.0, %v4832
    %v4834 = vpop.f32.mrb[0].mxu0
    %4835 = vmatprep.mubr.bf16.mxu0 0
    %4836 = vmatmul.mubr.bf16.gmra.mrb[0].mxu0 %v4757
    %v4837 = vpop.f32.mrb[0].mxu0
    %v4838 = vadd.f32 0.0, %v4837
    %v4839 = vpop.f32.mrb[0].mxu0
    %v4840 = vpop.f32.mrb[0].mxu0
    %v4841 = vadd.f32 0.0, %v4840
    %v4842 = vpop.f32.mrb[0].mxu0
    %4843 = vmatprep.mubr.bf16.mxu0 0
    %4844 = vmatmul.mubr.bf16.gmra.mrb[0].mxu0 %v4760
    %v4845 = vpop.f32.mrb[0].mxu0
    %v4846 = vadd.f32 0.0, %v4845
    %v4847 = vpop.f32.mrb[0].mxu0
    %v4848 = vpop.f32.mrb[0].mxu0
    %v4849 = vadd.f32 0.0, %v4848
    %v4850 = vpop.f32.mrb[0].mxu0
    %4851 = vmatprep.mubr.bf16.mxu0 0
    %4852 = vmatmul.mubr.bf16.gmra.mrb[0].mxu0 %v4763
    %v4853 = vpop.f32.mrb[0].mxu0
    %v4854 = vadd.f32 0.0, %v4853
    %v4855 = vpop.f32.mrb[0].mxu0
    %v4856 = vpop.f32.mrb[0].mxu0
    %v4857 = vadd.f32 0.0, %v4856
    %v4858 = vpop.f32.mrb[0].mxu0
    %4859 = vmatprep.mubr.bf16.mxu0 0
    %4860 = vmatmul.mubr.bf16.gmra.mrb[0].mxu0 %v4766
    %v4861 = vpop.f32.mrb[0].mxu0
    %v4862 = vadd.f32 0.0, %v4861
    %v4863 = vpop.f32.mrb[0].mxu0
    %v4864 = vpop.f32.mrb[0].mxu0
    %v4865 = vadd.f32 0.0, %v4864
    %v4866 = vpop.f32.mrb[0].mxu0
    %4867 = vdwg.mxu0
    %v4868 = vadd.f32 %v4650, %v4806
    %v4869 = vadd.f32 %v4653, %v4809
    %v4870 = vadd.f32 %v4658, %v4814
    %v4871 = vadd.f32 %v4661, %v4817
    %v4872 = vadd.f32 %v4666, %v4822
    %v4873 = vadd.f32 %v4669, %v4825
    %v4874 = vadd.f32 %v4674, %v4830
    %v4875 = vadd.f32 %v4677, %v4833
    %v4876 = vadd.f32 %v4682, %v4838
    %v4877 = vadd.f32 %v4685, %v4841
    %v4878 = vadd.f32 %v4690, %v4846
    %v4879 = vadd.f32 %v4693, %v4849
    %v4880 = vadd.f32 %v4698, %v4854
    %v4881 = vadd.f32 %v4701, %v4857
    %v4882 = vadd.f32 %v4706, %v4862
    %v4883 = vadd.f32 %v4709, %v4865
    %v4884 = vld [vmem:[%s4383] sm:$0xff]
    %v4885 = vld [vmem:[%s4383 + $0x10] sm:$0xff]
    %v4886 = vld [vmem:[%s4383 + $0x20] sm:$0xff]
    %v4887 = vld [vmem:[%s4383 + $0x30] sm:$0xff]
    %v4888 = vld [vmem:[%s4383 + $0x40] sm:$0xff]
    %v4889 = vld [vmem:[%s4383 + $0x50] sm:$0xff]
    %v4890 = vld [vmem:[%s4383 + $0x60] sm:$0xff]
    %v4891 = vld [vmem:[%s4383 + $0x70] sm:$0xff]
    %v4892 = vld [vmem:[%s4383 + $0xa0] sm:$0xff]
    %v4893 = vld [vmem:[%s4383 + $0xb0] sm:$0xff]
    %v4894 = vld [vmem:[%s4383 + $0xc0] sm:$0xff]
    %v4895 = vld [vmem:[%s4383 + $0xd0] sm:$0xff]
    %v4896 = vld [vmem:[%s4383 + $0xe0] sm:$0xff]
    %v4897 = vld [vmem:[%s4383 + $0xf0] sm:$0xff]
    %v4898 = vld [vmem:[%s4383 + $0x100] sm:$0xff]
    %v4899 = vld [vmem:[%s4383 + $0x110] sm:$0xff]
    %v4900 = vpack.c.bf16 %v4885, %v4884
    %v4901 = vpack.c.bf16 %v4887, %v4886
    %v4902 = vpack.c.bf16 %v4889, %v4888
    %v4903 = vpack.c.bf16 %v4891, %v4890
    %v4904 = vpack.c.bf16 %v4893, %v4892
    %v4905 = vpack.c.bf16 %v4895, %v4894
    %v4906 = vpack.c.bf16 %v4897, %v4896
    %v4907 = vpack.c.bf16 %v4899, %v4898
    %s4908 = scalar_lea.vmem %s3, 24
    %v4909 = vld [vmem:[%s4908] sm:$0xf]
    %v4910 = vld [vmem:[%s4908 + $0x4] sm:$0x3]
    %v4913 = vunpack.c.l.b16 %v4909
    %v4914 = vunpack.c.l.b16 %v4910
    %v4915 = vpack.c.b16 %v4914, %v4913
    %v4917 = vsel %vm4341, %v4900, 0
    %v4920 = vsel %vm4341, %v4901, 0
    %v4923 = vsel %vm4341, %v4902, 0
    %v4926 = vsel %vm4341, %v4903, 0
    %v4929 = vsel %vm4341, %v4904, 0
    %v4932 = vsel %vm4341, %v4905, 0
    %v4935 = vsel %vm4341, %v4906, 0
    %v4938 = vsel %vm4341, %v4907, 0
    %v4941 = vsel %vm4482, %v4915, 0
    %4943 = vmatprep.subr.bf16.mxu0 0
    %4944 = vmatpush1.bf16.msra.mxu0 %v4941
    %4945 = vmatprep.subr.bf16.mxu0 0
    %4946 = vmatpush1.bf16.msra.mxu0 0
    %4947 = vmatprep.subr.bf16.mxu0 0
    %4948 = vmatpush1.bf16.msra.mxu0 0
    %4949 = vmatprep.subr.bf16.mxu0 0
    %4950 = vmatpush1.bf16.msra.mxu0 0
    %4951 = vmatprep.subr.bf16.mxu0 0
    %4952 = vmatpush1.bf16.msra.mxu0 0
    %4953 = vmatprep.subr.bf16.mxu0 0
    %4954 = vmatpush1.bf16.msra.mxu0 0
    %4955 = vmatprep.subr.bf16.mxu0 0
    %4956 = vmatpush1.bf16.msra.mxu0 0
    %4957 = vmatprep.subr.bf16.mxu0 0
    %4958 = vmatpush1.bf16.msra.mxu0 0
    %4959 = vmatprep.subr.bf16.mxu0 0
    %4960 = vmatpush1.bf16.msra.mxu0 0
    %4961 = vmatprep.subr.bf16.mxu0 0
    %4962 = vmatpush1.bf16.msra.mxu0 0
    %4963 = vmatprep.subr.bf16.mxu0 0
    %4964 = vmatpush1.bf16.msra.mxu0 0
    %4965 = vmatprep.subr.bf16.mxu0 0
    %4966 = vmatpush1.bf16.msra.mxu0 0
    %4967 = vmatprep.subr.bf16.mxu0 0
    %4968 = vmatpush1.bf16.msra.mxu0 0
    %4969 = vmatprep.subr.bf16.mxu0 0
    %4970 = vmatpush1.bf16.msra.mxu0 0
    %4971 = vmatprep.subr.bf16.mxu0 0
    %4972 = vmatpush1.bf16.msra.mxu0 0
    %4973 = vmatprep.subr.bf16.mxu0 0
    %4974 = vmatpush1.bf16.msra.mxu0 0
    %4975 = vmatprep.mubr.bf16.mxu0 0
    %4976 = vmatmul.mubr.bf16.gmra.mrb[0].mxu0 %v4917
    %v4977 = vpop.f32.mrb[0].mxu0
    %v4978 = vadd.f32 0.0, %v4977
    %v4979 = vpop.f32.mrb[0].mxu0
    %v4980 = vpop.f32.mrb[0].mxu0
    %v4981 = vadd.f32 0.0, %v4980
    %v4982 = vpop.f32.mrb[0].mxu0
    %4983 = vmatprep.mubr.bf16.mxu0 0
    %4984 = vmatmul.mubr.bf16.gmra.mrb[0].mxu0 %v4920
    %v4985 = vpop.f32.mrb[0].mxu0
    %v4986 = vadd.f32 0.0, %v4985
    %v4987 = vpop.f32.mrb[0].mxu0
    %v4988 = vpop.f32.mrb[0].mxu0
    %v4989 = vadd.f32 0.0, %v4988
    %v4990 = vpop.f32.mrb[0].mxu0
    %4991 = vmatprep.mubr.bf16.mxu0 0
    %4992 = vmatmul.mubr.bf16.gmra.mrb[0].mxu0 %v4923
    %v4993 = vpop.f32.mrb[0].mxu0
    %v4994 = vadd.f32 0.0, %v4993
    %v4995 = vpop.f32.mrb[0].mxu0
    %v4996 = vpop.f32.mrb[0].mxu0
    %v4997 = vadd.f32 0.0, %v4996
    %v4998 = vpop.f32.mrb[0].mxu0
    %4999 = vmatprep.mubr.bf16.mxu0 0
    %5000 = vmatmul.mubr.bf16.gmra.mrb[0].mxu0 %v4926
    %v5001 = vpop.f32.mrb[0].mxu0
    %v5002 = vadd.f32 0.0, %v5001
    %v5003 = vpop.f32.mrb[0].mxu0
    %v5004 = vpop.f32.mrb[0].mxu0
    %v5005 = vadd.f32 0.0, %v5004
    %v5006 = vpop.f32.mrb[0].mxu0
    %5007 = vmatprep.mubr.bf16.mxu0 0
    %5008 = vmatmul.mubr.bf16.gmra.mrb[0].mxu0 %v4929
    %v5009 = vpop.f32.mrb[0].mxu0
    %v5010 = vadd.f32 0.0, %v5009
    %v5011 = vpop.f32.mrb[0].mxu0
    %v5012 = vpop.f32.mrb[0].mxu0
    %v5013 = vadd.f32 0.0, %v5012
    %v5014 = vpop.f32.mrb[0].mxu0
    %5015 = vmatprep.mubr.bf16.mxu0 0
    %5016 = vmatmul.mubr.bf16.gmra.mrb[0].mxu0 %v4932
    %v5017 = vpop.f32.mrb[0].mxu0
    %v5018 = vadd.f32 0.0, %v5017
    %v5019 = vpop.f32.mrb[0].mxu0
    %v5020 = vpop.f32.mrb[0].mxu0
    %v5021 = vadd.f32 0.0, %v5020
    %v5022 = vpop.f32.mrb[0].mxu0
    %5023 = vmatprep.mubr.bf16.mxu0 0
    %5024 = vmatmul.mubr.bf16.gmra.mrb[0].mxu0 %v4935
    %v5025 = vpop.f32.mrb[0].mxu0
    %v5026 = vadd.f32 0.0, %v5025
    %v5027 = vpop.f32.mrb[0].mxu0
    %v5028 = vpop.f32.mrb[0].mxu0
    %v5029 = vadd.f32 0.0, %v5028
    %v5030 = vpop.f32.mrb[0].mxu0
    %5031 = vmatprep.mubr.bf16.mxu0 0
    %5032 = vmatmul.mubr.bf16.gmra.mrb[0].mxu0 %v4938
    %v5033 = vpop.f32.mrb[0].mxu0
    %v5034 = vadd.f32 0.0, %v5033
    %v5035 = vpop.f32.mrb[0].mxu0
    %v5036 = vpop.f32.mrb[0].mxu0
    %v5037 = vadd.f32 0.0, %v5036
    %v5038 = vpop.f32.mrb[0].mxu0
    %5039 = vdwg.mxu0
    %v5040 = vadd.f32 %v4868, %v4978
    %v5041 = vadd.f32 %v4869, %v4981
    %v5042 = vadd.f32 %v4870, %v4986
    %v5043 = vadd.f32 %v4871, %v4989
    %v5044 = vadd.f32 %v4872, %v4994
    %v5045 = vadd.f32 %v4873, %v4997
    %v5046 = vadd.f32 %v4874, %v5002
    %v5047 = vadd.f32 %v4875, %v5005
    %v5048 = vadd.f32 %v4876, %v5010
    %v5049 = vadd.f32 %v4877, %v5013
    %v5050 = vadd.f32 %v4878, %v5018
    %v5051 = vadd.f32 %v4879, %v5021
    %v5052 = vadd.f32 %v4880, %v5026
    %v5053 = vadd.f32 %v4881, %v5029
    %v5054 = vadd.f32 %v4882, %v5034
    %v5055 = vadd.f32 %v4883, %v5037
    %v5056 = vld [vmem:[%s4383 + $0x1] sm:$0xff]
    %v5057 = vld [vmem:[%s4383 + $0x11] sm:$0xff]
    %v5058 = vld [vmem:[%s4383 + $0x21] sm:$0xff]
    %v5059 = vld [vmem:[%s4383 + $0x31] sm:$0xff]
    %v5060 = vld [vmem:[%s4383 + $0x41] sm:$0xff]
    %v5061 = vld [vmem:[%s4383 + $0x51] sm:$0xff]
    %v5062 = vld [vmem:[%s4383 + $0x61] sm:$0xff]
    %v5063 = vld [vmem:[%s4383 + $0x71] sm:$0xff]
    %v5064 = vld [vmem:[%s4383 + $0xa1] sm:$0xff]
    %v5065 = vld [vmem:[%s4383 + $0xb1] sm:$0xff]
    %v5066 = vld [vmem:[%s4383 + $0xc1] sm:$0xff]
    %v5067 = vld [vmem:[%s4383 + $0xd1] sm:$0xff]
    %v5068 = vld [vmem:[%s4383 + $0xe1] sm:$0xff]
    %v5069 = vld [vmem:[%s4383 + $0xf1] sm:$0xff]
    %v5070 = vld [vmem:[%s4383 + $0x101] sm:$0xff]
    %v5071 = vld [vmem:[%s4383 + $0x111] sm:$0xff]
    %v5072 = vpack.c.bf16 %v5057, %v5056
    %v5073 = vpack.c.bf16 %v5059, %v5058
    %v5074 = vpack.c.bf16 %v5061, %v5060
    %v5075 = vpack.c.bf16 %v5063, %v5062
    %v5076 = vpack.c.bf16 %v5065, %v5064
    %v5077 = vpack.c.bf16 %v5067, %v5066
    %v5078 = vpack.c.bf16 %v5069, %v5068
    %v5079 = vpack.c.bf16 %v5071, %v5070
    %s5080 = scalar_lea.vmem %s3, 32
    %v5081 = vld [vmem:[%s5080] sm:$0xf]
    %v5082 = vld [vmem:[%s5080 + $0x4] sm:$0x3]
    %v5085 = vunpack.c.l.b16 %v5081
    %v5086 = vunpack.c.l.b16 %v5082
    %v5087 = vpack.c.b16 %v5086, %v5085
    %v5089 = vsel %vm4341, %v5072, 0
    %v5092 = vsel %vm4341, %v5073, 0
    %v5095 = vsel %vm4341, %v5074, 0
    %v5098 = vsel %vm4341, %v5075, 0
    %v5101 = vsel %vm4341, %v5076, 0
    %v5104 = vsel %vm4341, %v5077, 0
    %v5107 = vsel %vm4341, %v5078, 0
    %v5110 = vsel %vm4341, %v5079, 0
    %v5113 = vsel %vm4482, %v5087, 0
    %5115 = vmatprep.subr.bf16.mxu0 0
    %5116 = vmatpush1.bf16.msra.mxu0 %v5113
    %5117 = vmatprep.subr.bf16.mxu0 0
    %5118 = vmatpush1.bf16.msra.mxu0 0
    %5119 = vmatprep.subr.bf16.mxu0 0
    %5120 = vmatpush1.bf16.msra.mxu0 0
    %5121 = vmatprep.subr.bf16.mxu0 0
    %5122 = vmatpush1.bf16.msra.mxu0 0
    %5123 = vmatprep.subr.bf16.mxu0 0
    %5124 = vmatpush1.bf16.msra.mxu0 0
    %5125 = vmatprep.subr.bf16.mxu0 0
    %5126 = vmatpush1.bf16.msra.mxu0 0
    %5127 = vmatprep.subr.bf16.mxu0 0
    %5128 = vmatpush1.bf16.msra.mxu0 0
    %5129 = vmatprep.subr.bf16.mxu0 0
    %5130 = vmatpush1.bf16.msra.mxu0 0
    %5131 = vmatprep.subr.bf16.mxu0 0
    %5132 = vmatpush1.bf16.msra.mxu0 0
    %5133 = vmatprep.subr.bf16.mxu0 0
    %5134 = vmatpush1.bf16.msra.mxu0 0
    %5135 = vmatprep.subr.bf16.mxu0 0
    %5136 = vmatpush1.bf16.msra.mxu0 0
    %5137 = vmatprep.subr.bf16.mxu0 0
    %5138 = vmatpush1.bf16.msra.mxu0 0
    %5139 = vmatprep.subr.bf16.mxu0 0
    %5140 = vmatpush1.bf16.msra.mxu0 0
    %5141 = vmatprep.subr.bf16.mxu0 0
    %5142 = vmatpush1.bf16.msra.mxu0 0
    %5143 = vmatprep.subr.bf16.mxu0 0
    %5144 = vmatpush1.bf16.msra.mxu0 0
    %5145 = vmatprep.subr.bf16.mxu0 0
    %5146 = vmatpush1.bf16.msra.mxu0 0
    %5147 = vmatprep.mubr.bf16.mxu0 0
    %5148 = vmatmul.mubr.bf16.gmra.mrb[0].mxu0 %v5089
    %v5149 = vpop.f32.mrb[0].mxu0
    %v5150 = vadd.f32 0.0, %v5149
    %v5151 = vpop.f32.mrb[0].mxu0
    %v5152 = vpop.f32.mrb[0].mxu0
    %v5153 = vadd.f32 0.0, %v5152
    %v5154 = vpop.f32.mrb[0].mxu0
    %5155 = vmatprep.mubr.bf16.mxu0 0
    %5156 = vmatmul.mubr.bf16.gmra.mrb[0].mxu0 %v5092
    %v5157 = vpop.f32.mrb[0].mxu0
    %v5158 = vadd.f32 0.0, %v5157
    %v5159 = vpop.f32.mrb[0].mxu0
    %v5160 = vpop.f32.mrb[0].mxu0
    %v5161 = vadd.f32 0.0, %v5160
    %v5162 = vpop.f32.mrb[0].mxu0
    %5163 = vmatprep.mubr.bf16.mxu0 0
    %5164 = vmatmul.mubr.bf16.gmra.mrb[0].mxu0 %v5095
    %v5165 = vpop.f32.mrb[0].mxu0
    %v5166 = vadd.f32 0.0, %v5165
    %v5167 = vpop.f32.mrb[0].mxu0
    %v5168 = vpop.f32.mrb[0].mxu0
    %v5169 = vadd.f32 0.0, %v5168
    %v5170 = vpop.f32.mrb[0].mxu0
    %5171 = vmatprep.mubr.bf16.mxu0 0
    %5172 = vmatmul.mubr.bf16.gmra.mrb[0].mxu0 %v5098
    %v5173 = vpop.f32.mrb[0].mxu0
    %v5174 = vadd.f32 0.0, %v5173
    %v5175 = vpop.f32.mrb[0].mxu0
    %v5176 = vpop.f32.mrb[0].mxu0
    %v5177 = vadd.f32 0.0, %v5176
    %v5178 = vpop.f32.mrb[0].mxu0
    %5179 = vmatprep.mubr.bf16.mxu0 0
    %5180 = vmatmul.mubr.bf16.gmra.mrb[0].mxu0 %v5101
    %v5181 = vpop.f32.mrb[0].mxu0
    %v5182 = vadd.f32 0.0, %v5181
    %v5183 = vpop.f32.mrb[0].mxu0
    %v5184 = vpop.f32.mrb[0].mxu0
    %v5185 = vadd.f32 0.0, %v5184
    %v5186 = vpop.f32.mrb[0].mxu0
    %5187 = vmatprep.mubr.bf16.mxu0 0
    %5188 = vmatmul.mubr.bf16.gmra.mrb[0].mxu0 %v5104
    %v5189 = vpop.f32.mrb[0].mxu0
    %v5190 = vadd.f32 0.0, %v5189
    %v5191 = vpop.f32.mrb[0].mxu0
    %v5192 = vpop.f32.mrb[0].mxu0
    %v5193 = vadd.f32 0.0, %v5192
    %v5194 = vpop.f32.mrb[0].mxu0
    %5195 = vmatprep.mubr.bf16.mxu0 0
    %5196 = vmatmul.mubr.bf16.gmra.mrb[0].mxu0 %v5107
    %v5197 = vpop.f32.mrb[0].mxu0
    %v5198 = vadd.f32 0.0, %v5197
    %v5199 = vpop.f32.mrb[0].mxu0
    %v5200 = vpop.f32.mrb[0].mxu0
    %v5201 = vadd.f32 0.0, %v5200
    %v5202 = vpop.f32.mrb[0].mxu0
    %5203 = vmatprep.mubr.bf16.mxu0 0
    %5204 = vmatmul.mubr.bf16.gmra.mrb[0].mxu0 %v5110
    %v5205 = vpop.f32.mrb[0].mxu0
    %v5206 = vadd.f32 0.0, %v5205
    %v5207 = vpop.f32.mrb[0].mxu0
    %v5208 = vpop.f32.mrb[0].mxu0
    %v5209 = vadd.f32 0.0, %v5208
    %v5210 = vpop.f32.mrb[0].mxu0
    %5211 = vdwg.mxu0
    %v5212 = vadd.f32 %v5040, %v5150
    %v5213 = vadd.f32 %v5041, %v5153
    %v5214 = vadd.f32 %v5042, %v5158
    %v5215 = vadd.f32 %v5043, %v5161
    %v5216 = vadd.f32 %v5044, %v5166
    %v5217 = vadd.f32 %v5045, %v5169
    %v5218 = vadd.f32 %v5046, %v5174
    %v5219 = vadd.f32 %v5047, %v5177
    %v5220 = vadd.f32 %v5048, %v5182
    %v5221 = vadd.f32 %v5049, %v5185
    %v5222 = vadd.f32 %v5050, %v5190
    %v5223 = vadd.f32 %v5051, %v5193
    %v5224 = vadd.f32 %v5052, %v5198
    %v5225 = vadd.f32 %v5053, %v5201
    %v5226 = vadd.f32 %v5054, %v5206
    %v5227 = vadd.f32 %v5055, %v5209
    %v5228 = vld [vmem:[%s4383 + $0x2] sm:$0xff]
    %v5229 = vld [vmem:[%s4383 + $0x12] sm:$0xff]
    %v5230 = vld [vmem:[%s4383 + $0x22] sm:$0xff]
    %v5231 = vld [vmem:[%s4383 + $0x32] sm:$0xff]
    %v5232 = vld [vmem:[%s4383 + $0x42] sm:$0xff]
    %v5233 = vld [vmem:[%s4383 + $0x52] sm:$0xff]
    %v5234 = vld [vmem:[%s4383 + $0x62] sm:$0xff]
    %v5235 = vld [vmem:[%s4383 + $0x72] sm:$0xff]
    %v5236 = vld [vmem:[%s4383 + $0xa2] sm:$0xff]
    %v5237 = vld [vmem:[%s4383 + $0xb2] sm:$0xff]
    %v5238 = vld [vmem:[%s4383 + $0xc2] sm:$0xff]
    %v5239 = vld [vmem:[%s4383 + $0xd2] sm:$0xff]
    %v5240 = vld [vmem:[%s4383 + $0xe2] sm:$0xff]
    %v5241 = vld [vmem:[%s4383 + $0xf2] sm:$0xff]
    %v5242 = vld [vmem:[%s4383 + $0x102] sm:$0xff]
    %v5243 = vld [vmem:[%s4383 + $0x112] sm:$0xff]
    %v5244 = vpack.c.bf16 %v5229, %v5228
    %v5245 = vpack.c.bf16 %v5231, %v5230
    %v5246 = vpack.c.bf16 %v5233, %v5232
    %v5247 = vpack.c.bf16 %v5235, %v5234
    %v5248 = vpack.c.bf16 %v5237, %v5236
    %v5249 = vpack.c.bf16 %v5239, %v5238
    %v5250 = vpack.c.bf16 %v5241, %v5240
    %v5251 = vpack.c.bf16 %v5243, %v5242
    %s5252 = scalar_lea.vmem %s3, 40
    %v5253 = vld [vmem:[%s5252] sm:$0xf]
    %v5254 = vld [vmem:[%s5252 + $0x4] sm:$0x3]
    %v5257 = vunpack.c.l.b16 %v5253
    %v5258 = vunpack.c.l.b16 %v5254
    %v5259 = vpack.c.b16 %v5258, %v5257
    %v5261 = vsel %vm4341, %v5244, 0
    %v5264 = vsel %vm4341, %v5245, 0
    %v5267 = vsel %vm4341, %v5246, 0
    %v5270 = vsel %vm4341, %v5247, 0
    %v5273 = vsel %vm4341, %v5248, 0
    %v5276 = vsel %vm4341, %v5249, 0
    %v5279 = vsel %vm4341, %v5250, 0
    %v5282 = vsel %vm4341, %v5251, 0
    %v5285 = vsel %vm4482, %v5259, 0
    %5287 = vmatprep.subr.bf16.mxu0 0
    %5288 = vmatpush1.bf16.msra.mxu0 %v5285
    %5289 = vmatprep.subr.bf16.mxu0 0
    %5290 = vmatpush1.bf16.msra.mxu0 0
    %5291 = vmatprep.subr.bf16.mxu0 0
    %5292 = vmatpush1.bf16.msra.mxu0 0
    %5293 = vmatprep.subr.bf16.mxu0 0
    %5294 = vmatpush1.bf16.msra.mxu0 0
    %5295 = vmatprep.subr.bf16.mxu0 0
    %5296 = vmatpush1.bf16.msra.mxu0 0
    %5297 = vmatprep.subr.bf16.mxu0 0
    %5298 = vmatpush1.bf16.msra.mxu0 0
    %5299 = vmatprep.subr.bf16.mxu0 0
    %5300 = vmatpush1.bf16.msra.mxu0 0
    %5301 = vmatprep.subr.bf16.mxu0 0
    %5302 = vmatpush1.bf16.msra.mxu0 0
    %5303 = vmatprep.subr.bf16.mxu0 0
    %5304 = vmatpush1.bf16.msra.mxu0 0
    %5305 = vmatprep.subr.bf16.mxu0 0
    %5306 = vmatpush1.bf16.msra.mxu0 0
    %5307 = vmatprep.subr.bf16.mxu0 0
    %5308 = vmatpush1.bf16.msra.mxu0 0
    %5309 = vmatprep.subr.bf16.mxu0 0
    %5310 = vmatpush1.bf16.msra.mxu0 0
    %5311 = vmatprep.subr.bf16.mxu0 0
    %5312 = vmatpush1.bf16.msra.mxu0 0
    %5313 = vmatprep.subr.bf16.mxu0 0
    %5314 = vmatpush1.bf16.msra.mxu0 0
    %5315 = vmatprep.subr.bf16.mxu0 0
    %5316 = vmatpush1.bf16.msra.mxu0 0
    %5317 = vmatprep.subr.bf16.mxu0 0
    %5318 = vmatpush1.bf16.msra.mxu0 0
    %5319 = vmatprep.mubr.bf16.mxu0 0
    %5320 = vmatmul.mubr.bf16.gmra.mrb[0].mxu0 %v5261
    %v5321 = vpop.f32.mrb[0].mxu0
    %v5322 = vadd.f32 0.0, %v5321
    %v5323 = vpop.f32.mrb[0].mxu0
    %v5324 = vpop.f32.mrb[0].mxu0
    %v5325 = vadd.f32 0.0, %v5324
    %v5326 = vpop.f32.mrb[0].mxu0
    %5327 = vmatprep.mubr.bf16.mxu0 0
    %5328 = vmatmul.mubr.bf16.gmra.mrb[0].mxu0 %v5264
    %v5329 = vpop.f32.mrb[0].mxu0
    %v5330 = vadd.f32 0.0, %v5329
    %v5331 = vpop.f32.mrb[0].mxu0
    %v5332 = vpop.f32.mrb[0].mxu0
    %v5333 = vadd.f32 0.0, %v5332
    %v5334 = vpop.f32.mrb[0].mxu0
    %5335 = vmatprep.mubr.bf16.mxu0 0
    %5336 = vmatmul.mubr.bf16.gmra.mrb[0].mxu0 %v5267
    %v5337 = vpop.f32.mrb[0].mxu0
    %v5338 = vadd.f32 0.0, %v5337
    %v5339 = vpop.f32.mrb[0].mxu0
    %v5340 = vpop.f32.mrb[0].mxu0
    %v5341 = vadd.f32 0.0, %v5340
    %v5342 = vpop.f32.mrb[0].mxu0
    %5343 = vmatprep.mubr.bf16.mxu0 0
    %5344 = vmatmul.mubr.bf16.gmra.mrb[0].mxu0 %v5270
    %v5345 = vpop.f32.mrb[0].mxu0
    %v5346 = vadd.f32 0.0, %v5345
    %v5347 = vpop.f32.mrb[0].mxu0
    %v5348 = vpop.f32.mrb[0].mxu0
    %v5349 = vadd.f32 0.0, %v5348
    %v5350 = vpop.f32.mrb[0].mxu0
    %5351 = vmatprep.mubr.bf16.mxu0 0
    %5352 = vmatmul.mubr.bf16.gmra.mrb[0].mxu0 %v5273
    %v5353 = vpop.f32.mrb[0].mxu0
    %v5354 = vadd.f32 0.0, %v5353
    %v5355 = vpop.f32.mrb[0].mxu0
    %v5356 = vpop.f32.mrb[0].mxu0
    %v5357 = vadd.f32 0.0, %v5356
    %v5358 = vpop.f32.mrb[0].mxu0
    %5359 = vmatprep.mubr.bf16.mxu0 0
    %5360 = vmatmul.mubr.bf16.gmra.mrb[0].mxu0 %v5276
    %v5361 = vpop.f32.mrb[0].mxu0
    %v5362 = vadd.f32 0.0, %v5361
    %v5363 = vpop.f32.mrb[0].mxu0
    %v5364 = vpop.f32.mrb[0].mxu0
    %v5365 = vadd.f32 0.0, %v5364
    %v5366 = vpop.f32.mrb[0].mxu0
    %5367 = vmatprep.mubr.bf16.mxu0 0
    %5368 = vmatmul.mubr.bf16.gmra.mrb[0].mxu0 %v5279
    %v5369 = vpop.f32.mrb[0].mxu0
    %v5370 = vadd.f32 0.0, %v5369
    %v5371 = vpop.f32.mrb[0].mxu0
    %v5372 = vpop.f32.mrb[0].mxu0
    %v5373 = vadd.f32 0.0, %v5372
    %v5374 = vpop.f32.mrb[0].mxu0
    %5375 = vmatprep.mubr.bf16.mxu0 0
    %5376 = vmatmul.mubr.bf16.gmra.mrb[0].mxu0 %v5282
    %v5377 = vpop.f32.mrb[0].mxu0
    %v5378 = vadd.f32 0.0, %v5377
    %v5379 = vpop.f32.mrb[0].mxu0
    %v5380 = vpop.f32.mrb[0].mxu0
    %v5381 = vadd.f32 0.0, %v5380
    %v5382 = vpop.f32.mrb[0].mxu0
    %5383 = vdwg.mxu0
    %v5384 = vadd.f32 %v5212, %v5322
    %v5385 = vadd.f32 %v5213, %v5325
    %v5386 = vadd.f32 %v5214, %v5330
    %v5387 = vadd.f32 %v5215, %v5333
    %v5388 = vadd.f32 %v5216, %v5338
    %v5389 = vadd.f32 %v5217, %v5341
    %v5390 = vadd.f32 %v5218, %v5346
    %v5391 = vadd.f32 %v5219, %v5349
    %v5392 = vadd.f32 %v5220, %v5354
    %v5393 = vadd.f32 %v5221, %v5357
    %v5394 = vadd.f32 %v5222, %v5362
    %v5395 = vadd.f32 %v5223, %v5365
    %v5396 = vadd.f32 %v5224, %v5370
    %v5397 = vadd.f32 %v5225, %v5373
    %v5398 = vadd.f32 %v5226, %v5378
    %v5399 = vadd.f32 %v5227, %v5381
    %s5400 = scalar_lea.vmem [#allocation3], 32
    %v5401 = vld [vmem:[%s5400] sm:$0xff]
    %v5402 = vld [vmem:[%s5400 + $0x10] sm:$0xff]
    %v5403 = vld [vmem:[%s5400 + $0x20] sm:$0xff]
    %v5404 = vld [vmem:[%s5400 + $0x30] sm:$0xff]
    %v5405 = vld [vmem:[%s5400 + $0x40] sm:$0xff]
    %v5406 = vld [vmem:[%s5400 + $0x50] sm:$0xff]
    %v5407 = vld [vmem:[%s5400 + $0x60] sm:$0xff]
    %v5408 = vld [vmem:[%s5400 + $0x70] sm:$0xff]
    %v5409 = vld [vmem:[%s5400 + $0xa0] sm:$0xff]
    %v5410 = vld [vmem:[%s5400 + $0xb0] sm:$0xff]
    %v5411 = vld [vmem:[%s5400 + $0xc0] sm:$0xff]
    %v5412 = vld [vmem:[%s5400 + $0xd0] sm:$0xff]
    %v5413 = vld [vmem:[%s5400 + $0xe0] sm:$0xff]
    %v5414 = vld [vmem:[%s5400 + $0xf0] sm:$0xff]
    %v5415 = vld [vmem:[%s5400 + $0x100] sm:$0xff]
    %v5416 = vld [vmem:[%s5400 + $0x110] sm:$0xff]
    %v5417 = vpack.c.bf16 %v5402, %v5401
    %v5418 = vpack.c.bf16 %v5404, %v5403
    %v5419 = vpack.c.bf16 %v5406, %v5405
    %v5420 = vpack.c.bf16 %v5408, %v5407
    %v5421 = vpack.c.bf16 %v5410, %v5409
    %v5422 = vpack.c.bf16 %v5412, %v5411
    %v5423 = vpack.c.bf16 %v5414, %v5413
    %v5424 = vpack.c.bf16 %v5416, %v5415
    %s5425 = scalar_lea.vmem %s3, 48
    %v5426 = vld [vmem:[%s5425] sm:$0xf]
    %v5427 = vld [vmem:[%s5425 + $0x4] sm:$0x3]
    %v5430 = vunpack.c.l.b16 %v5426
    %v5431 = vunpack.c.l.b16 %v5427
    %v5432 = vpack.c.b16 %v5431, %v5430
    %v5434 = vsel %vm4341, %v5417, 0
    %v5437 = vsel %vm4341, %v5418, 0
    %v5440 = vsel %vm4341, %v5419, 0
    %v5443 = vsel %vm4341, %v5420, 0
    %v5446 = vsel %vm4341, %v5421, 0
    %v5449 = vsel %vm4341, %v5422, 0
    %v5452 = vsel %vm4341, %v5423, 0
    %v5455 = vsel %vm4341, %v5424, 0
    %v5458 = vsel %vm4482, %v5432, 0
    %5460 = vmatprep.subr.bf16.mxu0 0
    %5461 = vmatpush1.bf16.msra.mxu0 %v5458
    %5462 = vmatprep.subr.bf16.mxu0 0
    %5463 = vmatpush1.bf16.msra.mxu0 0
    %5464 = vmatprep.subr.bf16.mxu0 0
    %5465 = vmatpush1.bf16.msra.mxu0 0
    %5466 = vmatprep.subr.bf16.mxu0 0
    %5467 = vmatpush1.bf16.msra.mxu0 0
    %5468 = vmatprep.subr.bf16.mxu0 0
    %5469 = vmatpush1.bf16.msra.mxu0 0
    %5470 = vmatprep.subr.bf16.mxu0 0
    %5471 = vmatpush1.bf16.msra.mxu0 0
    %5472 = vmatprep.subr.bf16.mxu0 0
    %5473 = vmatpush1.bf16.msra.mxu0 0
    %5474 = vmatprep.subr.bf16.mxu0 0
    %5475 = vmatpush1.bf16.msra.mxu0 0
    %5476 = vmatprep.subr.bf16.mxu0 0
    %5477 = vmatpush1.bf16.msra.mxu0 0
    %5478 = vmatprep.subr.bf16.mxu0 0
    %5479 = vmatpush1.bf16.msra.mxu0 0
    %5480 = vmatprep.subr.bf16.mxu0 0
    %5481 = vmatpush1.bf16.msra.mxu0 0
    %5482 = vmatprep.subr.bf16.mxu0 0
    %5483 = vmatpush1.bf16.msra.mxu0 0
    %5484 = vmatprep.subr.bf16.mxu0 0
    %5485 = vmatpush1.bf16.msra.mxu0 0
    %5486 = vmatprep.subr.bf16.mxu0 0
    %5487 = vmatpush1.bf16.msra.mxu0 0
    %5488 = vmatprep.subr.bf16.mxu0 0
    %5489 = vmatpush1.bf16.msra.mxu0 0
    %5490 = vmatprep.subr.bf16.mxu0 0
    %5491 = vmatpush1.bf16.msra.mxu0 0
    %5492 = vmatprep.mubr.bf16.mxu0 0
    %5493 = vmatmul.mubr.bf16.gmra.mrb[0].mxu0 %v5434
    %v5494 = vpop.f32.mrb[0].mxu0
    %v5495 = vadd.f32 0.0, %v5494
    %v5496 = vpop.f32.mrb[0].mxu0
    %v5497 = vpop.f32.mrb[0].mxu0
    %v5498 = vadd.f32 0.0, %v5497
    %v5499 = vpop.f32.mrb[0].mxu0
    %5500 = vmatprep.mubr.bf16.mxu0 0
    %5501 = vmatmul.mubr.bf16.gmra.mrb[0].mxu0 %v5437
    %v5502 = vpop.f32.mrb[0].mxu0
    %v5503 = vadd.f32 0.0, %v5502
    %v5504 = vpop.f32.mrb[0].mxu0
    %v5505 = vpop.f32.mrb[0].mxu0
    %v5506 = vadd.f32 0.0, %v5505
    %v5507 = vpop.f32.mrb[0].mxu0
    %5508 = vmatprep.mubr.bf16.mxu0 0
    %5509 = vmatmul.mubr.bf16.gmra.mrb[0].mxu0 %v5440
    %v5510 = vpop.f32.mrb[0].mxu0
    %v5511 = vadd.f32 0.0, %v5510
    %v5512 = vpop.f32.mrb[0].mxu0
    %v5513 = vpop.f32.mrb[0].mxu0
    %v5514 = vadd.f32 0.0, %v5513
    %v5515 = vpop.f32.mrb[0].mxu0
    %5516 = vmatprep.mubr.bf16.mxu0 0
    %5517 = vmatmul.mubr.bf16.gmra.mrb[0].mxu0 %v5443
    %v5518 = vpop.f32.mrb[0].mxu0
    %v5519 = vadd.f32 0.0, %v5518
    %v5520 = vpop.f32.mrb[0].mxu0
    %v5521 = vpop.f32.mrb[0].mxu0
    %v5522 = vadd.f32 0.0, %v5521
    %v5523 = vpop.f32.mrb[0].mxu0
    %5524 = vmatprep.mubr.bf16.mxu0 0
    %5525 = vmatmul.mubr.bf16.gmra.mrb[0].mxu0 %v5446
    %v5526 = vpop.f32.mrb[0].mxu0
    %v5527 = vadd.f32 0.0, %v5526
    %v5528 = vpop.f32.mrb[0].mxu0
    %v5529 = vpop.f32.mrb[0].mxu0
    %v5530 = vadd.f32 0.0, %v5529
    %v5531 = vpop.f32.mrb[0].mxu0
    %5532 = vmatprep.mubr.bf16.mxu0 0
    %5533 = vmatmul.mubr.bf16.gmra.mrb[0].mxu0 %v5449
    %v5534 = vpop.f32.mrb[0].mxu0
    %v5535 = vadd.f32 0.0, %v5534
    %v5536 = vpop.f32.mrb[0].mxu0
    %v5537 = vpop.f32.mrb[0].mxu0
    %v5538 = vadd.f32 0.0, %v5537
    %v5539 = vpop.f32.mrb[0].mxu0
    %5540 = vmatprep.mubr.bf16.mxu0 0
    %5541 = vmatmul.mubr.bf16.gmra.mrb[0].mxu0 %v5452
    %v5542 = vpop.f32.mrb[0].mxu0
    %v5543 = vadd.f32 0.0, %v5542
    %v5544 = vpop.f32.mrb[0].mxu0
    %v5545 = vpop.f32.mrb[0].mxu0
    %v5546 = vadd.f32 0.0, %v5545
    %v5547 = vpop.f32.mrb[0].mxu0
    %5548 = vmatprep.mubr.bf16.mxu0 0
    %5549 = vmatmul.mubr.bf16.gmra.mrb[0].mxu0 %v5455
    %v5550 = vpop.f32.mrb[0].mxu0
    %v5551 = vadd.f32 0.0, %v5550
    %v5552 = vpop.f32.mrb[0].mxu0
    %v5553 = vpop.f32.mrb[0].mxu0
    %v5554 = vadd.f32 0.0, %v5553
    %v5555 = vpop.f32.mrb[0].mxu0
    %5556 = vdwg.mxu0
    %v5557 = vadd.f32 %v5384, %v5495
    %v5558 = vadd.f32 %v5385, %v5498
    %v5559 = vadd.f32 %v5386, %v5503
    %v5560 = vadd.f32 %v5387, %v5506
    %v5561 = vadd.f32 %v5388, %v5511
    %v5562 = vadd.f32 %v5389, %v5514
    %v5563 = vadd.f32 %v5390, %v5519
    %v5564 = vadd.f32 %v5391, %v5522
    %v5565 = vadd.f32 %v5392, %v5527
    %v5566 = vadd.f32 %v5393, %v5530
    %v5567 = vadd.f32 %v5394, %v5535
    %v5568 = vadd.f32 %v5395, %v5538
    %v5569 = vadd.f32 %v5396, %v5543
    %v5570 = vadd.f32 %v5397, %v5546
    %v5571 = vadd.f32 %v5398, %v5551
    %v5572 = vadd.f32 %v5399, %v5554
    %v5573 = vld [vmem:[%s5400 + $0x1] sm:$0xff]
    %v5574 = vld [vmem:[%s5400 + $0x11] sm:$0xff]
    %v5575 = vld [vmem:[%s5400 + $0x21] sm:$0xff]
    %v5576 = vld [vmem:[%s5400 + $0x31] sm:$0xff]
    %v5577 = vld [vmem:[%s5400 + $0x41] sm:$0xff]
    %v5578 = vld [vmem:[%s5400 + $0x51] sm:$0xff]
    %v5579 = vld [vmem:[%s5400 + $0x61] sm:$0xff]
    %v5580 = vld [vmem:[%s5400 + $0x71] sm:$0xff]
    %v5581 = vld [vmem:[%s5400 + $0xa1] sm:$0xff]
    %v5582 = vld [vmem:[%s5400 + $0xb1] sm:$0xff]
    %v5583 = vld [vmem:[%s5400 + $0xc1] sm:$0xff]
    %v5584 = vld [vmem:[%s5400 + $0xd1] sm:$0xff]
    %v5585 = vld [vmem:[%s5400 + $0xe1] sm:$0xff]
    %v5586 = vld [vmem:[%s5400 + $0xf1] sm:$0xff]
    %v5587 = vld [vmem:[%s5400 + $0x101] sm:$0xff]
    %v5588 = vld [vmem:[%s5400 + $0x111] sm:$0xff]
    %v5589 = vpack.c.bf16 %v5574, %v5573
    %v5590 = vpack.c.bf16 %v5576, %v5575
    %v5591 = vpack.c.bf16 %v5578, %v5577
    %v5592 = vpack.c.bf16 %v5580, %v5579
    %v5593 = vpack.c.bf16 %v5582, %v5581
    %v5594 = vpack.c.bf16 %v5584, %v5583
    %v5595 = vpack.c.bf16 %v5586, %v5585
    %v5596 = vpack.c.bf16 %v5588, %v5587
    %s5597 = scalar_lea.vmem %s3, 56
    %v5598 = vld [vmem:[%s5597] sm:$0xf]
    %v5599 = vld [vmem:[%s5597 + $0x4] sm:$0x3]
    %v5602 = vunpack.c.l.b16 %v5598
    %v5603 = vunpack.c.l.b16 %v5599
    %v5604 = vpack.c.b16 %v5603, %v5602
    %v5606 = vsel %vm4341, %v5589, 0
    %v5609 = vsel %vm4341, %v5590, 0
    %v5612 = vsel %vm4341, %v5591, 0
    %v5615 = vsel %vm4341, %v5592, 0
    %v5618 = vsel %vm4341, %v5593, 0
    %v5621 = vsel %vm4341, %v5594, 0
    %v5624 = vsel %vm4341, %v5595, 0
    %v5627 = vsel %vm4341, %v5596, 0
    %v5630 = vsel %vm4482, %v5604, 0
    %5632 = vmatprep.subr.bf16.mxu0 0
    %5633 = vmatpush1.bf16.msra.mxu0 %v5630
    %5634 = vmatprep.subr.bf16.mxu0 0
    %5635 = vmatpush1.bf16.msra.mxu0 0
    %5636 = vmatprep.subr.bf16.mxu0 0
    %5637 = vmatpush1.bf16.msra.mxu0 0
    %5638 = vmatprep.subr.bf16.mxu0 0
    %5639 = vmatpush1.bf16.msra.mxu0 0
    %5640 = vmatprep.subr.bf16.mxu0 0
    %5641 = vmatpush1.bf16.msra.mxu0 0
    %5642 = vmatprep.subr.bf16.mxu0 0
    %5643 = vmatpush1.bf16.msra.mxu0 0
    %5644 = vmatprep.subr.bf16.mxu0 0
    %5645 = vmatpush1.bf16.msra.mxu0 0
    %5646 = vmatprep.subr.bf16.mxu0 0
    %5647 = vmatpush1.bf16.msra.mxu0 0
    %5648 = vmatprep.subr.bf16.mxu0 0
    %5649 = vmatpush1.bf16.msra.mxu0 0
    %5650 = vmatprep.subr.bf16.mxu0 0
    %5651 = vmatpush1.bf16.msra.mxu0 0
    %5652 = vmatprep.subr.bf16.mxu0 0
    %5653 = vmatpush1.bf16.msra.mxu0 0
    %5654 = vmatprep.subr.bf16.mxu0 0
    %5655 = vmatpush1.bf16.msra.mxu0 0
    %5656 = vmatprep.subr.bf16.mxu0 0
    %5657 = vmatpush1.bf16.msra.mxu0 0
    %5658 = vmatprep.subr.bf16.mxu0 0
    %5659 = vmatpush1.bf16.msra.mxu0 0
    %5660 = vmatprep.subr.bf16.mxu0 0
    %5661 = vmatpush1.bf16.msra.mxu0 0
    %5662 = vmatprep.subr.bf16.mxu0 0
    %5663 = vmatpush1.bf16.msra.mxu0 0
    %5664 = vmatprep.mubr.bf16.mxu0 0
    %5665 = vmatmul.mubr.bf16.gmra.mrb[0].mxu0 %v5606
    %v5666 = vpop.f32.mrb[0].mxu0
    %v5667 = vadd.f32 0.0, %v5666
    %v5668 = vpop.f32.mrb[0].mxu0
    %v5669 = vpop.f32.mrb[0].mxu0
    %v5670 = vadd.f32 0.0, %v5669
    %v5671 = vpop.f32.mrb[0].mxu0
    %5672 = vmatprep.mubr.bf16.mxu0 0
    %5673 = vmatmul.mubr.bf16.gmra.mrb[0].mxu0 %v5609
    %v5674 = vpop.f32.mrb[0].mxu0
    %v5675 = vadd.f32 0.0, %v5674
    %v5676 = vpop.f32.mrb[0].mxu0
    %v5677 = vpop.f32.mrb[0].mxu0
    %v5678 = vadd.f32 0.0, %v5677
    %v5679 = vpop.f32.mrb[0].mxu0
    %5680 = vmatprep.mubr.bf16.mxu0 0
    %5681 = vmatmul.mubr.bf16.gmra.mrb[0].mxu0 %v5612
    %v5682 = vpop.f32.mrb[0].mxu0
    %v5683 = vadd.f32 0.0, %v5682
    %v5684 = vpop.f32.mrb[0].mxu0
    %v5685 = vpop.f32.mrb[0].mxu0
    %v5686 = vadd.f32 0.0, %v5685
    %v5687 = vpop.f32.mrb[0].mxu0
    %5688 = vmatprep.mubr.bf16.mxu0 0
    %5689 = vmatmul.mubr.bf16.gmra.mrb[0].mxu0 %v5615
    %v5690 = vpop.f32.mrb[0].mxu0
    %v5691 = vadd.f32 0.0, %v5690
    %v5692 = vpop.f32.mrb[0].mxu0
    %v5693 = vpop.f32.mrb[0].mxu0
    %v5694 = vadd.f32 0.0, %v5693
    %v5695 = vpop.f32.mrb[0].mxu0
    %5696 = vmatprep.mubr.bf16.mxu0 0
    %5697 = vmatmul.mubr.bf16.gmra.mrb[0].mxu0 %v5618
    %v5698 = vpop.f32.mrb[0].mxu0
    %v5699 = vadd.f32 0.0, %v5698
    %v5700 = vpop.f32.mrb[0].mxu0
    %v5701 = vpop.f32.mrb[0].mxu0
    %v5702 = vadd.f32 0.0, %v5701
    %v5703 = vpop.f32.mrb[0].mxu0
    %5704 = vmatprep.mubr.bf16.mxu0 0
    %5705 = vmatmul.mubr.bf16.gmra.mrb[0].mxu0 %v5621
    %v5706 = vpop.f32.mrb[0].mxu0
    %v5707 = vadd.f32 0.0, %v5706
    %v5708 = vpop.f32.mrb[0].mxu0
    %v5709 = vpop.f32.mrb[0].mxu0
    %v5710 = vadd.f32 0.0, %v5709
    %v5711 = vpop.f32.mrb[0].mxu0
    %5712 = vmatprep.mubr.bf16.mxu0 0
    %5713 = vmatmul.mubr.bf16.gmra.mrb[0].mxu0 %v5624
    %v5714 = vpop.f32.mrb[0].mxu0
    %v5715 = vadd.f32 0.0, %v5714
    %v5716 = vpop.f32.mrb[0].mxu0
    %v5717 = vpop.f32.mrb[0].mxu0
    %v5718 = vadd.f32 0.0, %v5717
    %v5719 = vpop.f32.mrb[0].mxu0
    %5720 = vmatprep.mubr.bf16.mxu0 0
    %5721 = vmatmul.mubr.bf16.gmra.mrb[0].mxu0 %v5627
    %v5722 = vpop.f32.mrb[0].mxu0
    %v5723 = vadd.f32 0.0, %v5722
    %v5724 = vpop.f32.mrb[0].mxu0
    %v5725 = vpop.f32.mrb[0].mxu0
    %v5726 = vadd.f32 0.0, %v5725
    %v5727 = vpop.f32.mrb[0].mxu0
    %5728 = vdwg.mxu0
    %v5729 = vadd.f32 %v5557, %v5667
    %v5730 = vadd.f32 %v5558, %v5670
    %v5731 = vadd.f32 %v5559, %v5675
    %v5732 = vadd.f32 %v5560, %v5678
    %v5733 = vadd.f32 %v5561, %v5683
    %v5734 = vadd.f32 %v5562, %v5686
    %v5735 = vadd.f32 %v5563, %v5691
    %v5736 = vadd.f32 %v5564, %v5694
    %v5737 = vadd.f32 %v5565, %v5699
    %v5738 = vadd.f32 %v5566, %v5702
    %v5739 = vadd.f32 %v5567, %v5707
    %v5740 = vadd.f32 %v5568, %v5710
    %v5741 = vadd.f32 %v5569, %v5715
    %v5742 = vadd.f32 %v5570, %v5718
    %v5743 = vadd.f32 %v5571, %v5723
    %v5744 = vadd.f32 %v5572, %v5726
    %v5745 = vld [vmem:[%s5400 + $0x2] sm:$0xff]
    %v5746 = vld [vmem:[%s5400 + $0x12] sm:$0xff]
    %v5747 = vld [vmem:[%s5400 + $0x22] sm:$0xff]
    %v5748 = vld [vmem:[%s5400 + $0x32] sm:$0xff]
    %v5749 = vld [vmem:[%s5400 + $0x42] sm:$0xff]
    %v5750 = vld [vmem:[%s5400 + $0x52] sm:$0xff]
    %v5751 = vld [vmem:[%s5400 + $0x62] sm:$0xff]
    %v5752 = vld [vmem:[%s5400 + $0x72] sm:$0xff]
    %v5753 = vld [vmem:[%s5400 + $0xa2] sm:$0xff]
    %v5754 = vld [vmem:[%s5400 + $0xb2] sm:$0xff]
    %v5755 = vld [vmem:[%s5400 + $0xc2] sm:$0xff]
    %v5756 = vld [vmem:[%s5400 + $0xd2] sm:$0xff]
    %v5757 = vld [vmem:[%s5400 + $0xe2] sm:$0xff]
    %v5758 = vld [vmem:[%s5400 + $0xf2] sm:$0xff]
    %v5759 = vld [vmem:[%s5400 + $0x102] sm:$0xff]
    %v5760 = vld [vmem:[%s5400 + $0x112] sm:$0xff]
    %v5761 = vpack.c.bf16 %v5746, %v5745
    %v5762 = vpack.c.bf16 %v5748, %v5747
    %v5763 = vpack.c.bf16 %v5750, %v5749
    %v5764 = vpack.c.bf16 %v5752, %v5751
    %v5765 = vpack.c.bf16 %v5754, %v5753
    %v5766 = vpack.c.bf16 %v5756, %v5755
    %v5767 = vpack.c.bf16 %v5758, %v5757
    %v5768 = vpack.c.bf16 %v5760, %v5759
    %s5769 = scalar_lea.vmem %s3, 64
    %v5770 = vld [vmem:[%s5769] sm:$0xf]
    %v5771 = vld [vmem:[%s5769 + $0x4] sm:$0x3]
    %v5774 = vunpack.c.l.b16 %v5770
    %v5775 = vunpack.c.l.b16 %v5771
    %v5776 = vpack.c.b16 %v5775, %v5774
    %v5778 = vsel %vm4341, %v5761, 0
    %v5781 = vsel %vm4341, %v5762, 0
    %v5784 = vsel %vm4341, %v5763, 0
    %v5787 = vsel %vm4341, %v5764, 0
    %v5790 = vsel %vm4341, %v5765, 0
    %v5793 = vsel %vm4341, %v5766, 0
    %v5796 = vsel %vm4341, %v5767, 0
    %v5799 = vsel %vm4341, %v5768, 0
    %v5802 = vsel %vm4482, %v5776, 0
    %5804 = vmatprep.subr.bf16.mxu0 0
    %5805 = vmatpush1.bf16.msra.mxu0 %v5802
    %5806 = vmatprep.subr.bf16.mxu0 0
    %5807 = vmatpush1.bf16.msra.mxu0 0
    %5808 = vmatprep.subr.bf16.mxu0 0
    %5809 = vmatpush1.bf16.msra.mxu0 0
    %5810 = vmatprep.subr.bf16.mxu0 0
    %5811 = vmatpush1.bf16.msra.mxu0 0
    %5812 = vmatprep.subr.bf16.mxu0 0
    %5813 = vmatpush1.bf16.msra.mxu0 0
    %5814 = vmatprep.subr.bf16.mxu0 0
    %5815 = vmatpush1.bf16.msra.mxu0 0
    %5816 = vmatprep.subr.bf16.mxu0 0
    %5817 = vmatpush1.bf16.msra.mxu0 0
    %5818 = vmatprep.subr.bf16.mxu0 0
    %5819 = vmatpush1.bf16.msra.mxu0 0
    %5820 = vmatprep.subr.bf16.mxu0 0
    %5821 = vmatpush1.bf16.msra.mxu0 0
    %5822 = vmatprep.subr.bf16.mxu0 0
    %5823 = vmatpush1.bf16.msra.mxu0 0
    %5824 = vmatprep.subr.bf16.mxu0 0
    %5825 = vmatpush1.bf16.msra.mxu0 0
    %5826 = vmatprep.subr.bf16.mxu0 0
    %5827 = vmatpush1.bf16.msra.mxu0 0
    %5828 = vmatprep.subr.bf16.mxu0 0
    %5829 = vmatpush1.bf16.msra.mxu0 0
    %5830 = vmatprep.subr.bf16.mxu0 0
    %5831 = vmatpush1.bf16.msra.mxu0 0
    %5832 = vmatprep.subr.bf16.mxu0 0
    %5833 = vmatpush1.bf16.msra.mxu0 0
    %5834 = vmatprep.subr.bf16.mxu0 0
    %5835 = vmatpush1.bf16.msra.mxu0 0
    %5836 = vmatprep.mubr.bf16.mxu0 0
    %5837 = vmatmul.mubr.bf16.gmra.mrb[0].mxu0 %v5778
    %v5838 = vpop.f32.mrb[0].mxu0
    %v5839 = vadd.f32 0.0, %v5838
    %v5840 = vpop.f32.mrb[0].mxu0
    %v5841 = vpop.f32.mrb[0].mxu0
    %v5842 = vadd.f32 0.0, %v5841
    %v5843 = vpop.f32.mrb[0].mxu0
    %5844 = vmatprep.mubr.bf16.mxu0 0
    %5845 = vmatmul.mubr.bf16.gmra.mrb[0].mxu0 %v5781
    %v5846 = vpop.f32.mrb[0].mxu0
    %v5847 = vadd.f32 0.0, %v5846
    %v5848 = vpop.f32.mrb[0].mxu0
    %v5849 = vpop.f32.mrb[0].mxu0
    %v5850 = vadd.f32 0.0, %v5849
    %v5851 = vpop.f32.mrb[0].mxu0
    %5852 = vmatprep.mubr.bf16.mxu0 0
    %5853 = vmatmul.mubr.bf16.gmra.mrb[0].mxu0 %v5784
    %v5854 = vpop.f32.mrb[0].mxu0
    %v5855 = vadd.f32 0.0, %v5854
    %v5856 = vpop.f32.mrb[0].mxu0
    %v5857 = vpop.f32.mrb[0].mxu0
    %v5858 = vadd.f32 0.0, %v5857
    %v5859 = vpop.f32.mrb[0].mxu0
    %5860 = vmatprep.mubr.bf16.mxu0 0
    %5861 = vmatmul.mubr.bf16.gmra.mrb[0].mxu0 %v5787
    %v5862 = vpop.f32.mrb[0].mxu0
    %v5863 = vadd.f32 0.0, %v5862
    %v5864 = vpop.f32.mrb[0].mxu0
    %v5865 = vpop.f32.mrb[0].mxu0
    %v5866 = vadd.f32 0.0, %v5865
    %v5867 = vpop.f32.mrb[0].mxu0
    %5868 = vmatprep.mubr.bf16.mxu0 0
    %5869 = vmatmul.mubr.bf16.gmra.mrb[0].mxu0 %v5790
    %v5870 = vpop.f32.mrb[0].mxu0
    %v5871 = vadd.f32 0.0, %v5870
    %v5872 = vpop.f32.mrb[0].mxu0
    %v5873 = vpop.f32.mrb[0].mxu0
    %v5874 = vadd.f32 0.0, %v5873
    %v5875 = vpop.f32.mrb[0].mxu0
    %5876 = vmatprep.mubr.bf16.mxu0 0
    %5877 = vmatmul.mubr.bf16.gmra.mrb[0].mxu0 %v5793
    %v5878 = vpop.f32.mrb[0].mxu0
    %v5879 = vadd.f32 0.0, %v5878
    %v5880 = vpop.f32.mrb[0].mxu0
    %v5881 = vpop.f32.mrb[0].mxu0
    %v5882 = vadd.f32 0.0, %v5881
    %v5883 = vpop.f32.mrb[0].mxu0
    %5884 = vmatprep.mubr.bf16.mxu0 0
    %5885 = vmatmul.mubr.bf16.gmra.mrb[0].mxu0 %v5796
    %v5886 = vpop.f32.mrb[0].mxu0
    %v5887 = vadd.f32 0.0, %v5886
    %v5888 = vpop.f32.mrb[0].mxu0
    %v5889 = vpop.f32.mrb[0].mxu0
    %v5890 = vadd.f32 0.0, %v5889
    %v5891 = vpop.f32.mrb[0].mxu0
    %5892 = vmatprep.mubr.bf16.mxu0 0
    %5893 = vmatmul.mubr.bf16.gmra.mrb[0].mxu0 %v5799
    %v5894 = vpop.f32.mrb[0].mxu0
    %v5895 = vadd.f32 0.0, %v5894
    %v5896 = vpop.f32.mrb[0].mxu0
    %v5897 = vpop.f32.mrb[0].mxu0
    %v5898 = vadd.f32 0.0, %v5897
    %v5899 = vpop.f32.mrb[0].mxu0
    %5900 = vdwg.mxu0
    %v5901 = vadd.f32 %v5729, %v5839
    %v5902 = vadd.f32 %v5730, %v5842
    %v5903 = vadd.f32 %v5731, %v5847
    %v5904 = vadd.f32 %v5732, %v5850
    %v5905 = vadd.f32 %v5733, %v5855
    %v5906 = vadd.f32 %v5734, %v5858
    %v5907 = vadd.f32 %v5735, %v5863
    %v5908 = vadd.f32 %v5736, %v5866
    %v5909 = vadd.f32 %v5737, %v5871
    %v5910 = vadd.f32 %v5738, %v5874
    %v5911 = vadd.f32 %v5739, %v5879
    %v5912 = vadd.f32 %v5740, %v5882
    %v5913 = vadd.f32 %v5741, %v5887
    %v5914 = vadd.f32 %v5742, %v5890
    %v5915 = vadd.f32 %v5743, %v5895
    %v5916 = vadd.f32 %v5744, %v5898
    %v5917 = vld [vmem:[%s4] sm:$0x1]
    %v5919 = vlaneseq
    %v5920 = vshrl.u32 %v5919, 7
    %v5921 = vsub.s32 0, %v5920
    %v5922 = vrot.slane %v5917, %v5921
    %v5924 = vadd.f32 %v5901, %v5922
    %v5925 = vadd.f32 %v5902, %v5922
    %v5926 = vadd.f32 %v5903, %v5922
    %v5927 = vadd.f32 %v5904, %v5922
    %v5928 = vadd.f32 %v5905, %v5922
    %v5929 = vadd.f32 %v5906, %v5922
    %v5930 = vadd.f32 %v5907, %v5922
    %v5931 = vadd.f32 %v5908, %v5922
    %v5932 = vadd.f32 %v5909, %v5922
    %v5933 = vadd.f32 %v5910, %v5922
    %v5934 = vadd.f32 %v5911, %v5922
    %v5935 = vadd.f32 %v5912, %v5922
    %v5936 = vadd.f32 %v5913, %v5922
    %v5937 = vadd.f32 %v5914, %v5922
    %v5938 = vadd.f32 %v5915, %v5922
    %v5939 = vadd.f32 %v5916, %v5922
    %v5940 = vmax.f32 %v5924, 0.0
    %v5941 = vmax.f32 %v5925, 0.0
    %v5942 = vmax.f32 %v5926, 0.0
    %v5943 = vmax.f32 %v5927, 0.0
    %v5944 = vmax.f32 %v5928, 0.0
    %v5945 = vmax.f32 %v5929, 0.0
    %v5946 = vmax.f32 %v5930, 0.0
    %v5947 = vmax.f32 %v5931, 0.0
    %v5948 = vmax.f32 %v5932, 0.0
    %v5949 = vmax.f32 %v5933, 0.0
    %v5950 = vmax.f32 %v5934, 0.0
    %v5951 = vmax.f32 %v5935, 0.0
    %v5952 = vmax.f32 %v5936, 0.0
    %v5953 = vmax.f32 %v5937, 0.0
    %v5954 = vmax.f32 %v5938, 0.0
    %v5955 = vmax.f32 %v5939, 0.0
    %vm5956 = vcmask 261120
    %5957 = vst.msk [vmem:[#allocation4] sm:$0xff] %vm5956, 0.0
    %vm5958 = vcmask 254976
    %5959 = vst.msk [vmem:[#allocation4 + $0x8] sm:$0x3] %vm5958, 0.0
    %5960 = vst.msk [vmem:[#allocation4 + $0x10] sm:$0xff] %vm5956, 0.0
    %5961 = vst.msk [vmem:[#allocation4 + $0x18] sm:$0x3] %vm5958, 0.0
    %5962 = vst.msk [vmem:[#allocation4 + $0x20] sm:$0xff] %vm5956, 0.0
    %5963 = vst.msk [vmem:[#allocation4 + $0x28] sm:$0x3] %vm5958, 0.0
    %5964 = vst.msk [vmem:[#allocation4 + $0x30] sm:$0xff] %vm5956, 0.0
    %5965 = vst.msk [vmem:[#allocation4 + $0x38] sm:$0x3] %vm5958, 0.0
    %5966 = vst.msk [vmem:[#allocation4 + $0x40] sm:$0xff] %vm5956, 0.0
    %5967 = vst.msk [vmem:[#allocation4 + $0x48] sm:$0x3] %vm5958, 0.0
    %5968 = vst.msk [vmem:[#allocation4 + $0x50] sm:$0xff] %vm5956, 0.0
    %5969 = vst.msk [vmem:[#allocation4 + $0x58] sm:$0x3] %vm5958, 0.0
    %5970 = vst.msk [vmem:[#allocation4 + $0x60] sm:$0xff] %vm5956, 0.0
    %5971 = vst.msk [vmem:[#allocation4 + $0x68] sm:$0x3] %vm5958, 0.0
    %5972 = vst.msk [vmem:[#allocation4 + $0x70] sm:$0xff] %vm5956, 0.0
    %5973 = vst.msk [vmem:[#allocation4 + $0x78] sm:$0x3] %vm5958, 0.0
    %5974 = vst.msk [vmem:[#allocation4 + $0x80] sm:$0xff] %vm5956, 0.0
    %5975 = vst.msk [vmem:[#allocation4 + $0x88] sm:$0x3] %vm5958, 0.0
    %5976 = vst.msk [vmem:[#allocation4 + $0x90] sm:$0xff] %vm5956, 0.0
    %5977 = vst.msk [vmem:[#allocation4 + $0x98] sm:$0x3] %vm5958, 0.0
    %5978 = vst.msk [vmem:[#allocation4 + $0xa0] sm:$0xff] %vm5956, 0.0
    %5979 = vst.msk [vmem:[#allocation4 + $0xa8] sm:$0x3] %vm5958, 0.0
    %5980 = vst.msk [vmem:[#allocation4 + $0xb0] sm:$0xff] %vm5956, 0.0
    %5981 = vst.msk [vmem:[#allocation4 + $0xb8] sm:$0x3] %vm5958, 0.0
    %5982 = vst.msk [vmem:[#allocation4 + $0xc0] sm:$0xff] %vm5956, 0.0
    %5983 = vst.msk [vmem:[#allocation4 + $0xc8] sm:$0x3] %vm5958, 0.0
    %5984 = vst.msk [vmem:[#allocation4 + $0xd0] sm:$0xff] %vm5956, 0.0
    %5985 = vst.msk [vmem:[#allocation4 + $0xd8] sm:$0x3] %vm5958, 0.0
    %5986 = vst.msk [vmem:[#allocation4 + $0xe0] sm:$0xff] %vm5956, 0.0
    %5987 = vst.msk [vmem:[#allocation4 + $0xe8] sm:$0x3] %vm5958, 0.0
    %5988 = vst.msk [vmem:[#allocation4 + $0xf0] sm:$0xff] %vm5956, 0.0
    %5989 = vst.msk [vmem:[#allocation4 + $0xf8] sm:$0x3] %vm5958, 0.0
    %5990 = vst.msk [vmem:[#allocation4 + $0x100] sm:$0xff] %vm5956, 0.0
    %5991 = vst.msk [vmem:[#allocation4 + $0x108] sm:$0x3] %vm5958, 0.0
    %5992 = vst.msk [vmem:[#allocation4 + $0x110] sm:$0xff] %vm5956, 0.0
    %5993 = vst.msk [vmem:[#allocation4 + $0x118] sm:$0x3] %vm5958, 0.0
    %5994 = vst.msk [vmem:[#allocation4 + $0x120] sm:$0xff] %vm5956, 0.0
    %5995 = vst.msk [vmem:[#allocation4 + $0x128] sm:$0x3] %vm5958, 0.0
    %5996 = vst.msk [vmem:[#allocation4 + $0x130] sm:$0xff] %vm5956, 0.0
    %5997 = vst.msk [vmem:[#allocation4 + $0x138] sm:$0x3] %vm5958, 0.0
    %s5998 = scalar_lea.vmem [#allocation4], 16
    %5999 = vst.msk [vmem:[%s5998 + $0x1] sm:$0xff] %vm5956, %v5940
    %6000 = vst.msk [vmem:[%s5998 + $0x11] sm:$0xff] %vm5956, %v5941
    %6001 = vst.msk [vmem:[%s5998 + $0x21] sm:$0xff] %vm5956, %v5942
    %6002 = vst.msk [vmem:[%s5998 + $0x31] sm:$0xff] %vm5956, %v5943
    %6003 = vst.msk [vmem:[%s5998 + $0x41] sm:$0xff] %vm5956, %v5944
    %6004 = vst.msk [vmem:[%s5998 + $0x51] sm:$0xff] %vm5956, %v5945
    %6005 = vst.msk [vmem:[%s5998 + $0x61] sm:$0xff] %vm5956, %v5946
    %6006 = vst.msk [vmem:[%s5998 + $0x71] sm:$0xff] %vm5956, %v5947
    %6007 = vst.msk [vmem:[%s5998 + $0xa1] sm:$0xff] %vm5956, %v5948
    %6008 = vst.msk [vmem:[%s5998 + $0xb1] sm:$0xff] %vm5956, %v5949
    %6009 = vst.msk [vmem:[%s5998 + $0xc1] sm:$0xff] %vm5956, %v5950
    %6010 = vst.msk [vmem:[%s5998 + $0xd1] sm:$0xff] %vm5956, %v5951
    %6011 = vst.msk [vmem:[%s5998 + $0xe1] sm:$0xff] %vm5956, %v5952
    %6012 = vst.msk [vmem:[%s5998 + $0xf1] sm:$0xff] %vm5956, %v5953
    %6013 = vst.msk [vmem:[%s5998 + $0x101] sm:$0xff] %vm5956, %v5954
    %6014 = vst.msk [vmem:[%s5998 + $0x111] sm:$0xff] %vm5956, %v5955
    %v6015 = vld [vmem:[#allocation4] sm:$0xff]
    %v6016 = vld [vmem:[#allocation4 + $0x10] sm:$0xff]
    %v6017 = vld [vmem:[#allocation4 + $0x20] sm:$0xff]
    %v6018 = vld [vmem:[#allocation4 + $0x30] sm:$0xff]
    %v6019 = vld [vmem:[#allocation4 + $0x40] sm:$0xff]
    %v6020 = vld [vmem:[#allocation4 + $0x50] sm:$0xff]
    %v6021 = vld [vmem:[#allocation4 + $0x60] sm:$0xff]
    %v6022 = vld [vmem:[#allocation4 + $0x70] sm:$0xff]
    %v6023 = vld [vmem:[#allocation4 + $0xa0] sm:$0xff]
    %v6024 = vld [vmem:[#allocation4 + $0xb0] sm:$0xff]
    %v6025 = vld [vmem:[#allocation4 + $0xc0] sm:$0xff]
    %v6026 = vld [vmem:[#allocation4 + $0xd0] sm:$0xff]
    %v6027 = vld [vmem:[#allocation4 + $0xe0] sm:$0xff]
    %v6028 = vld [vmem:[#allocation4 + $0xf0] sm:$0xff]
    %v6029 = vld [vmem:[#allocation4 + $0x100] sm:$0xff]
    %v6030 = vld [vmem:[#allocation4 + $0x110] sm:$0xff]
    %v6031 = vpack.c.bf16 %v6016, %v6015
    %v6032 = vpack.c.bf16 %v6018, %v6017
    %v6033 = vpack.c.bf16 %v6020, %v6019
    %v6034 = vpack.c.bf16 %v6022, %v6021
    %v6035 = vpack.c.bf16 %v6024, %v6023
    %v6036 = vpack.c.bf16 %v6026, %v6025
    %v6037 = vpack.c.bf16 %v6028, %v6027
    %v6038 = vpack.c.bf16 %v6030, %v6029
    %v6039 = vld [vmem:[%s5] sm:$0xf]
    %v6040 = vld [vmem:[%s5 + $0x4] sm:$0xf]
    %v6041 = vld [vmem:[%s5 + $0x8] sm:$0xf]
    %v6042 = vld [vmem:[%s5 + $0xc] sm:$0xf]
    %v6043 = vld [vmem:[#allocation4 + $0x1] sm:$0xff]
    %v6044 = vld [vmem:[#allocation4 + $0x11] sm:$0xff]
    %v6045 = vld [vmem:[#allocation4 + $0x21] sm:$0xff]
    %v6046 = vld [vmem:[#allocation4 + $0x31] sm:$0xff]
    %v6047 = vld [vmem:[#allocation4 + $0x41] sm:$0xff]
    %v6048 = vld [vmem:[#allocation4 + $0x51] sm:$0xff]
    %v6049 = vld [vmem:[#allocation4 + $0x61] sm:$0xff]
    %v6050 = vld [vmem:[#allocation4 + $0x71] sm:$0xff]
    %v6051 = vld [vmem:[#allocation4 + $0xa1] sm:$0xff]
    %v6052 = vld [vmem:[#allocation4 + $0xb1] sm:$0xff]
    %v6053 = vld [vmem:[#allocation4 + $0xc1] sm:$0xff]
    %v6054 = vld [vmem:[#allocation4 + $0xd1] sm:$0xff]
    %v6055 = vld [vmem:[#allocation4 + $0xe1] sm:$0xff]
    %v6056 = vld [vmem:[#allocation4 + $0xf1] sm:$0xff]
    %v6057 = vld [vmem:[#allocation4 + $0x101] sm:$0xff]
    %v6058 = vld [vmem:[#allocation4 + $0x111] sm:$0xff]
    %v6059 = vpack.c.bf16 %v6044, %v6043
    %v6060 = vpack.c.bf16 %v6046, %v6045
    %v6061 = vpack.c.bf16 %v6048, %v6047
    %v6062 = vpack.c.bf16 %v6050, %v6049
    %v6063 = vpack.c.bf16 %v6052, %v6051
    %v6064 = vpack.c.bf16 %v6054, %v6053
    %v6065 = vpack.c.bf16 %v6056, %v6055
    %v6066 = vpack.c.bf16 %v6058, %v6057
    %s6067 = scalar_lea.vmem %s5, 16
    %v6068 = vld [vmem:[%s6067] sm:$0xf]
    %v6069 = vld [vmem:[%s6067 + $0x4] sm:$0xf]
    %v6070 = vld [vmem:[%s6067 + $0x8] sm:$0xf]
    %v6071 = vld [vmem:[%s6067 + $0xc] sm:$0xf]
    %v6076 = vunpack.c.l.b16 %v6068
    %v6077 = vunpack.c.l.b16 %v6069
    %v6078 = vunpack.c.l.b16 %v6070
    %v6079 = vunpack.c.l.b16 %v6071
    %v6080 = vpack.c.b16 %v6077, %v6076
    %v6081 = vpack.c.b16 %v6079, %v6078
    %v6085 = vsel %vm5956, %v6059, 0
    %v6088 = vsel %vm5956, %v6060, 0
    %v6091 = vsel %vm5956, %v6061, 0
    %v6094 = vsel %vm5956, %v6062, 0
    %v6097 = vsel %vm5956, %v6063, 0
    %v6100 = vsel %vm5956, %v6064, 0
    %v6103 = vsel %vm5956, %v6065, 0
    %v6106 = vsel %vm5956, %v6066, 0
    %6108 = vmatprep.subr.bf16.mxu0 0
    %6109 = vmatpush1.bf16.msra.mxu0 %v6080
    %6110 = vmatprep.subr.bf16.mxu0 0
    %6111 = vmatpush1.bf16.msra.mxu0 %v6081
    %6112 = vmatprep.subr.bf16.mxu0 0
    %6113 = vmatpush1.bf16.msra.mxu0 0
    %6114 = vmatprep.subr.bf16.mxu0 0
    %6115 = vmatpush1.bf16.msra.mxu0 0
    %6116 = vmatprep.subr.bf16.mxu0 0
    %6117 = vmatpush1.bf16.msra.mxu0 0
    %6118 = vmatprep.subr.bf16.mxu0 0
    %6119 = vmatpush1.bf16.msra.mxu0 0
    %6120 = vmatprep.subr.bf16.mxu0 0
    %6121 = vmatpush1.bf16.msra.mxu0 0
    %6122 = vmatprep.subr.bf16.mxu0 0
    %6123 = vmatpush1.bf16.msra.mxu0 0
    %6124 = vmatprep.subr.bf16.mxu0 0
    %6125 = vmatpush1.bf16.msra.mxu0 0
    %6126 = vmatprep.subr.bf16.mxu0 0
    %6127 = vmatpush1.bf16.msra.mxu0 0
    %6128 = vmatprep.subr.bf16.mxu0 0
    %6129 = vmatpush1.bf16.msra.mxu0 0
    %6130 = vmatprep.subr.bf16.mxu0 0
    %6131 = vmatpush1.bf16.msra.mxu0 0
    %6132 = vmatprep.subr.bf16.mxu0 0
    %6133 = vmatpush1.bf16.msra.mxu0 0
    %6134 = vmatprep.subr.bf16.mxu0 0
    %6135 = vmatpush1.bf16.msra.mxu0 0
    %6136 = vmatprep.subr.bf16.mxu0 0
    %6137 = vmatpush1.bf16.msra.mxu0 0
    %6138 = vmatprep.subr.bf16.mxu0 0
    %6139 = vmatpush1.bf16.msra.mxu0 0
    %6140 = vmatprep.mubr.bf16.mxu0 0
    %6141 = vmatmul.mubr.bf16.gmra.mrb[0].mxu0 %v6085
    %v6142 = vpop.f32.mrb[0].mxu0
    %v6143 = vpop.f32.mrb[0].mxu0
    %v6144 = vpop.f32.mrb[0].mxu0
    %v6145 = vpop.f32.mrb[0].mxu0
    %6146 = vmatprep.mubr.bf16.mxu0 0
    %6147 = vmatmul.mubr.bf16.gmra.mrb[0].mxu0 %v6088
    %v6148 = vpop.f32.mrb[0].mxu0
    %v6149 = vadd.f32 0.0, %v6148
    %v6150 = vpop.f32.mrb[0].mxu0
    %v6151 = vpop.f32.mrb[0].mxu0
    %v6152 = vpop.f32.mrb[0].mxu0
    %6153 = vmatprep.mubr.bf16.mxu0 0
    %6154 = vmatmul.mubr.bf16.gmra.mrb[0].mxu0 %v6091
    %v6155 = vpop.f32.mrb[0].mxu0
    %v6156 = vpop.f32.mrb[0].mxu0
    %v6157 = vpop.f32.mrb[0].mxu0
    %v6158 = vadd.f32 0.0, %v6157
    %v6159 = vpop.f32.mrb[0].mxu0
    %6160 = vmatprep.mubr.bf16.mxu0 0
    %6161 = vmatmul.mubr.bf16.gmra.mrb[0].mxu0 %v6094
    %v6162 = vpop.f32.mrb[0].mxu0
    %v6163 = vpop.f32.mrb[0].mxu0
    %v6164 = vpop.f32.mrb[0].mxu0
    %v6165 = vpop.f32.mrb[0].mxu0
    %6166 = vmatprep.mubr.bf16.mxu0 0
    %6167 = vmatmul.mubr.bf16.gmra.mrb[0].mxu0 %v6097
    %v6168 = vpop.f32.mrb[0].mxu0
    %v6169 = vpop.f32.mrb[0].mxu0
    %v6170 = vpop.f32.mrb[0].mxu0
    %v6171 = vpop.f32.mrb[0].mxu0
    %6172 = vmatprep.mubr.bf16.mxu0 0
    %6173 = vmatmul.mubr.bf16.gmra.mrb[0].mxu0 %v6100
    %v6174 = vpop.f32.mrb[0].mxu0
    %v6175 = vadd.f32 0.0, %v6174
    %v6176 = vpop.f32.mrb[0].mxu0
    %v6177 = vpop.f32.mrb[0].mxu0
    %v6178 = vpop.f32.mrb[0].mxu0
    %6179 = vmatprep.mubr.bf16.mxu0 0
    %6180 = vmatmul.mubr.bf16.gmra.mrb[0].mxu0 %v6103
    %v6181 = vpop.f32.mrb[0].mxu0
    %v6182 = vpop.f32.mrb[0].mxu0
    %v6183 = vpop.f32.mrb[0].mxu0
    %v6184 = vadd.f32 0.0, %v6183
    %v6185 = vpop.f32.mrb[0].mxu0
    %6186 = vmatprep.mubr.bf16.mxu0 0
    %6187 = vmatmul.mubr.bf16.gmra.mrb[0].mxu0 %v6106
    %v6188 = vpop.f32.mrb[0].mxu0
    %v6189 = vpop.f32.mrb[0].mxu0
    %v6190 = vpop.f32.mrb[0].mxu0
    %v6191 = vpop.f32.mrb[0].mxu0
    %6192 = vdwg.mxu0
    %v6197 = vunpack.c.l.b16 %v6039
    %v6198 = vunpack.c.l.b16 %v6040
    %v6199 = vunpack.c.l.b16 %v6041
    %v6200 = vunpack.c.l.b16 %v6042
    %v6201 = vpack.c.b16 %v6198, %v6197
    %v6202 = vpack.c.b16 %v6200, %v6199
    %v6206 = vsel %vm5956, %v6031, 0
    %v6209 = vsel %vm5956, %v6032, 0
    %v6212 = vsel %vm5956, %v6033, 0
    %v6215 = vsel %vm5956, %v6034, 0
    %v6218 = vsel %vm5956, %v6035, 0
    %v6221 = vsel %vm5956, %v6036, 0
    %v6224 = vsel %vm5956, %v6037, 0
    %v6227 = vsel %vm5956, %v6038, 0
    %6229 = vmatprep.subr.bf16.mxu0 0
    %6230 = vmatpush1.bf16.msra.mxu0 %v6201
    %6231 = vmatprep.subr.bf16.mxu0 0
    %6232 = vmatpush1.bf16.msra.mxu0 %v6202
    %6233 = vmatprep.subr.bf16.mxu0 0
    %6234 = vmatpush1.bf16.msra.mxu0 0
    %6235 = vmatprep.subr.bf16.mxu0 0
    %6236 = vmatpush1.bf16.msra.mxu0 0
    %6237 = vmatprep.subr.bf16.mxu0 0
    %6238 = vmatpush1.bf16.msra.mxu0 0
    %6239 = vmatprep.subr.bf16.mxu0 0
    %6240 = vmatpush1.bf16.msra.mxu0 0
    %6241 = vmatprep.subr.bf16.mxu0 0
    %6242 = vmatpush1.bf16.msra.mxu0 0
    %6243 = vmatprep.subr.bf16.mxu0 0
    %6244 = vmatpush1.bf16.msra.mxu0 0
    %6245 = vmatprep.subr.bf16.mxu0 0
    %6246 = vmatpush1.bf16.msra.mxu0 0
    %6247 = vmatprep.subr.bf16.mxu0 0
    %6248 = vmatpush1.bf16.msra.mxu0 0
    %6249 = vmatprep.subr.bf16.mxu0 0
    %6250 = vmatpush1.bf16.msra.mxu0 0
    %6251 = vmatprep.subr.bf16.mxu0 0
    %6252 = vmatpush1.bf16.msra.mxu0 0
    %6253 = vmatprep.subr.bf16.mxu0 0
    %6254 = vmatpush1.bf16.msra.mxu0 0
    %6255 = vmatprep.subr.bf16.mxu0 0
    %6256 = vmatpush1.bf16.msra.mxu0 0
    %6257 = vmatprep.subr.bf16.mxu0 0
    %6258 = vmatpush1.bf16.msra.mxu0 0
    %6259 = vmatprep.subr.bf16.mxu0 0
    %6260 = vmatpush1.bf16.msra.mxu0 0
    %6261 = vmatprep.mubr.bf16.mxu0 0
    %6262 = vmatmul.mubr.bf16.gmra.mrb[0].mxu0 %v6206
    %v6263 = vpop.f32.mrb[0].mxu0
    %v6264 = vpop.f32.mrb[0].mxu0
    %v6265 = vpop.f32.mrb[0].mxu0
    %v6266 = vpop.f32.mrb[0].mxu0
    %6267 = vmatprep.mubr.bf16.mxu0 0
    %6268 = vmatmul.mubr.bf16.gmra.mrb[0].mxu0 %v6209
    %v6269 = vpop.f32.mrb[0].mxu0
    %v6270 = vadd.f32 %v6149, %v6269
    %v6271 = vpop.f32.mrb[0].mxu0
    %v6272 = vpop.f32.mrb[0].mxu0
    %v6273 = vpop.f32.mrb[0].mxu0
    %6274 = vmatprep.mubr.bf16.mxu0 0
    %6275 = vmatmul.mubr.bf16.gmra.mrb[0].mxu0 %v6212
    %v6276 = vpop.f32.mrb[0].mxu0
    %v6277 = vpop.f32.mrb[0].mxu0
    %v6278 = vpop.f32.mrb[0].mxu0
    %v6279 = vadd.f32 %v6158, %v6278
    %v6280 = vpop.f32.mrb[0].mxu0
    %6281 = vmatprep.mubr.bf16.mxu0 0
    %6282 = vmatmul.mubr.bf16.gmra.mrb[0].mxu0 %v6215
    %v6283 = vpop.f32.mrb[0].mxu0
    %v6284 = vpop.f32.mrb[0].mxu0
    %v6285 = vpop.f32.mrb[0].mxu0
    %v6286 = vpop.f32.mrb[0].mxu0
    %6287 = vmatprep.mubr.bf16.mxu0 0
    %6288 = vmatmul.mubr.bf16.gmra.mrb[0].mxu0 %v6218
    %v6289 = vpop.f32.mrb[0].mxu0
    %v6290 = vpop.f32.mrb[0].mxu0
    %v6291 = vpop.f32.mrb[0].mxu0
    %v6292 = vpop.f32.mrb[0].mxu0
    %6293 = vmatprep.mubr.bf16.mxu0 0
    %6294 = vmatmul.mubr.bf16.gmra.mrb[0].mxu0 %v6221
    %v6295 = vpop.f32.mrb[0].mxu0
    %v6296 = vadd.f32 %v6175, %v6295
    %v6297 = vpop.f32.mrb[0].mxu0
    %v6298 = vpop.f32.mrb[0].mxu0
    %v6299 = vpop.f32.mrb[0].mxu0
    %6300 = vmatprep.mubr.bf16.mxu0 0
    %6301 = vmatmul.mubr.bf16.gmra.mrb[0].mxu0 %v6224
    %v6302 = vpop.f32.mrb[0].mxu0
    %v6303 = vpop.f32.mrb[0].mxu0
    %v6304 = vpop.f32.mrb[0].mxu0
    %v6305 = vadd.f32 %v6184, %v6304
    %v6306 = vpop.f32.mrb[0].mxu0
    %6307 = vmatprep.mubr.bf16.mxu0 0
    %6308 = vmatmul.mubr.bf16.gmra.mrb[0].mxu0 %v6227
    %v6309 = vpop.f32.mrb[0].mxu0
    %v6310 = vpop.f32.mrb[0].mxu0
    %v6311 = vpop.f32.mrb[0].mxu0
    %v6312 = vpop.f32.mrb[0].mxu0
    %6313 = vdwg.mxu0
    %v6314 = vld [vmem:[#allocation4 + $0x2] sm:$0xff]
    %v6315 = vld [vmem:[#allocation4 + $0x12] sm:$0xff]
    %v6316 = vld [vmem:[#allocation4 + $0x22] sm:$0xff]
    %v6317 = vld [vmem:[#allocation4 + $0x32] sm:$0xff]
    %v6318 = vld [vmem:[#allocation4 + $0x42] sm:$0xff]
    %v6319 = vld [vmem:[#allocation4 + $0x52] sm:$0xff]
    %v6320 = vld [vmem:[#allocation4 + $0x62] sm:$0xff]
    %v6321 = vld [vmem:[#allocation4 + $0x72] sm:$0xff]
    %v6322 = vld [vmem:[#allocation4 + $0xa2] sm:$0xff]
    %v6323 = vld [vmem:[#allocation4 + $0xb2] sm:$0xff]
    %v6324 = vld [vmem:[#allocation4 + $0xc2] sm:$0xff]
    %v6325 = vld [vmem:[#allocation4 + $0xd2] sm:$0xff]
    %v6326 = vld [vmem:[#allocation4 + $0xe2] sm:$0xff]
    %v6327 = vld [vmem:[#allocation4 + $0xf2] sm:$0xff]
    %v6328 = vld [vmem:[#allocation4 + $0x102] sm:$0xff]
    %v6329 = vld [vmem:[#allocation4 + $0x112] sm:$0xff]
    %v6330 = vpack.c.bf16 %v6315, %v6314
    %v6331 = vpack.c.bf16 %v6317, %v6316
    %v6332 = vpack.c.bf16 %v6319, %v6318
    %v6333 = vpack.c.bf16 %v6321, %v6320
    %v6334 = vpack.c.bf16 %v6323, %v6322
    %v6335 = vpack.c.bf16 %v6325, %v6324
    %v6336 = vpack.c.bf16 %v6327, %v6326
    %v6337 = vpack.c.bf16 %v6329, %v6328
    %s6338 = scalar_lea.vmem %s5, 32
    %v6339 = vld [vmem:[%s6338] sm:$0xf]
    %v6340 = vld [vmem:[%s6338 + $0x4] sm:$0xf]
    %v6341 = vld [vmem:[%s6338 + $0x8] sm:$0xf]
    %v6342 = vld [vmem:[%s6338 + $0xc] sm:$0xf]
    %v6347 = vunpack.c.l.b16 %v6339
    %v6348 = vunpack.c.l.b16 %v6340
    %v6349 = vunpack.c.l.b16 %v6341
    %v6350 = vunpack.c.l.b16 %v6342
    %v6351 = vpack.c.b16 %v6348, %v6347
    %v6352 = vpack.c.b16 %v6350, %v6349
    %v6356 = vsel %vm5956, %v6330, 0
    %v6359 = vsel %vm5956, %v6331, 0
    %v6362 = vsel %vm5956, %v6332, 0
    %v6365 = vsel %vm5956, %v6333, 0
    %v6368 = vsel %vm5956, %v6334, 0
    %v6371 = vsel %vm5956, %v6335, 0
    %v6374 = vsel %vm5956, %v6336, 0
    %v6377 = vsel %vm5956, %v6337, 0
    %6379 = vmatprep.subr.bf16.mxu0 0
    %6380 = vmatpush1.bf16.msra.mxu0 %v6351
    %6381 = vmatprep.subr.bf16.mxu0 0
    %6382 = vmatpush1.bf16.msra.mxu0 %v6352
    %6383 = vmatprep.subr.bf16.mxu0 0
    %6384 = vmatpush1.bf16.msra.mxu0 0
    %6385 = vmatprep.subr.bf16.mxu0 0
    %6386 = vmatpush1.bf16.msra.mxu0 0
    %6387 = vmatprep.subr.bf16.mxu0 0
    %6388 = vmatpush1.bf16.msra.mxu0 0
    %6389 = vmatprep.subr.bf16.mxu0 0
    %6390 = vmatpush1.bf16.msra.mxu0 0
    %6391 = vmatprep.subr.bf16.mxu0 0
    %6392 = vmatpush1.bf16.msra.mxu0 0
    %6393 = vmatprep.subr.bf16.mxu0 0
    %6394 = vmatpush1.bf16.msra.mxu0 0
    %6395 = vmatprep.subr.bf16.mxu0 0
    %6396 = vmatpush1.bf16.msra.mxu0 0
    %6397 = vmatprep.subr.bf16.mxu0 0
    %6398 = vmatpush1.bf16.msra.mxu0 0
    %6399 = vmatprep.subr.bf16.mxu0 0
    %6400 = vmatpush1.bf16.msra.mxu0 0
    %6401 = vmatprep.subr.bf16.mxu0 0
    %6402 = vmatpush1.bf16.msra.mxu0 0
    %6403 = vmatprep.subr.bf16.mxu0 0
    %6404 = vmatpush1.bf16.msra.mxu0 0
    %6405 = vmatprep.subr.bf16.mxu0 0
    %6406 = vmatpush1.bf16.msra.mxu0 0
    %6407 = vmatprep.subr.bf16.mxu0 0
    %6408 = vmatpush1.bf16.msra.mxu0 0
    %6409 = vmatprep.subr.bf16.mxu0 0
    %6410 = vmatpush1.bf16.msra.mxu0 0
    %6411 = vmatprep.mubr.bf16.mxu0 0
    %6412 = vmatmul.mubr.bf16.gmra.mrb[0].mxu0 %v6356
    %v6413 = vpop.f32.mrb[0].mxu0
    %v6414 = vpop.f32.mrb[0].mxu0
    %v6415 = vpop.f32.mrb[0].mxu0
    %v6416 = vpop.f32.mrb[0].mxu0
    %6417 = vmatprep.mubr.bf16.mxu0 0
    %6418 = vmatmul.mubr.bf16.gmra.mrb[0].mxu0 %v6359
    %v6419 = vpop.f32.mrb[0].mxu0
    %v6420 = vadd.f32 0.0, %v6419
    %v6421 = vpop.f32.mrb[0].mxu0
    %v6422 = vpop.f32.mrb[0].mxu0
    %v6423 = vpop.f32.mrb[0].mxu0
    %6424 = vmatprep.mubr.bf16.mxu0 0
    %6425 = vmatmul.mubr.bf16.gmra.mrb[0].mxu0 %v6362
    %v6426 = vpop.f32.mrb[0].mxu0
    %v6427 = vpop.f32.mrb[0].mxu0
    %v6428 = vpop.f32.mrb[0].mxu0
    %v6429 = vadd.f32 0.0, %v6428
    %v6430 = vpop.f32.mrb[0].mxu0
    %6431 = vmatprep.mubr.bf16.mxu0 0
    %6432 = vmatmul.mubr.bf16.gmra.mrb[0].mxu0 %v6365
    %v6433 = vpop.f32.mrb[0].mxu0
    %v6434 = vpop.f32.mrb[0].mxu0
    %v6435 = vpop.f32.mrb[0].mxu0
    %v6436 = vpop.f32.mrb[0].mxu0
    %6437 = vmatprep.mubr.bf16.mxu0 0
    %6438 = vmatmul.mubr.bf16.gmra.mrb[0].mxu0 %v6368
    %v6439 = vpop.f32.mrb[0].mxu0
    %v6440 = vpop.f32.mrb[0].mxu0
    %v6441 = vpop.f32.mrb[0].mxu0
    %v6442 = vpop.f32.mrb[0].mxu0
    %6443 = vmatprep.mubr.bf16.mxu0 0
    %6444 = vmatmul.mubr.bf16.gmra.mrb[0].mxu0 %v6371
    %v6445 = vpop.f32.mrb[0].mxu0
    %v6446 = vadd.f32 0.0, %v6445
    %v6447 = vpop.f32.mrb[0].mxu0
    %v6448 = vpop.f32.mrb[0].mxu0
    %v6449 = vpop.f32.mrb[0].mxu0
    %6450 = vmatprep.mubr.bf16.mxu0 0
    %6451 = vmatmul.mubr.bf16.gmra.mrb[0].mxu0 %v6374
    %v6452 = vpop.f32.mrb[0].mxu0
    %v6453 = vpop.f32.mrb[0].mxu0
    %v6454 = vpop.f32.mrb[0].mxu0
    %v6455 = vadd.f32 0.0, %v6454
    %v6456 = vpop.f32.mrb[0].mxu0
    %6457 = vmatprep.mubr.bf16.mxu0 0
    %6458 = vmatmul.mubr.bf16.gmra.mrb[0].mxu0 %v6377
    %v6459 = vpop.f32.mrb[0].mxu0
    %v6460 = vpop.f32.mrb[0].mxu0
    %v6461 = vpop.f32.mrb[0].mxu0
    %v6462 = vpop.f32.mrb[0].mxu0
    %6463 = vdwg.mxu0
    %v6464 = vadd.f32 %v6270, %v6420
    %v6465 = vadd.f32 %v6279, %v6429
    %v6466 = vadd.f32 %v6296, %v6446
    %v6467 = vadd.f32 %v6305, %v6455
    %v6468 = vld [vmem:[%s5998] sm:$0xff]
    %v6469 = vld [vmem:[%s5998 + $0x10] sm:$0xff]
    %v6470 = vld [vmem:[%s5998 + $0x20] sm:$0xff]
    %v6471 = vld [vmem:[%s5998 + $0x30] sm:$0xff]
    %v6472 = vld [vmem:[%s5998 + $0x40] sm:$0xff]
    %v6473 = vld [vmem:[%s5998 + $0x50] sm:$0xff]
    %v6474 = vld [vmem:[%s5998 + $0x60] sm:$0xff]
    %v6475 = vld [vmem:[%s5998 + $0x70] sm:$0xff]
    %v6476 = vld [vmem:[%s5998 + $0xa0] sm:$0xff]
    %v6477 = vld [vmem:[%s5998 + $0xb0] sm:$0xff]
    %v6478 = vld [vmem:[%s5998 + $0xc0] sm:$0xff]
    %v6479 = vld [vmem:[%s5998 + $0xd0] sm:$0xff]
    %v6480 = vld [vmem:[%s5998 + $0xe0] sm:$0xff]
    %v6481 = vld [vmem:[%s5998 + $0xf0] sm:$0xff]
    %v6482 = vld [vmem:[%s5998 + $0x100] sm:$0xff]
    %v6483 = vld [vmem:[%s5998 + $0x110] sm:$0xff]
    %v6484 = vpack.c.bf16 %v6469, %v6468
    %v6485 = vpack.c.bf16 %v6471, %v6470
    %v6486 = vpack.c.bf16 %v6473, %v6472
    %v6487 = vpack.c.bf16 %v6475, %v6474
    %v6488 = vpack.c.bf16 %v6477, %v6476
    %v6489 = vpack.c.bf16 %v6479, %v6478
    %v6490 = vpack.c.bf16 %v6481, %v6480
    %v6491 = vpack.c.bf16 %v6483, %v6482
    %s6492 = scalar_lea.vmem %s5, 48
    %v6493 = vld [vmem:[%s6492] sm:$0xf]
    %v6494 = vld [vmem:[%s6492 + $0x4] sm:$0xf]
    %v6495 = vld [vmem:[%s6492 + $0x8] sm:$0xf]
    %v6496 = vld [vmem:[%s6492 + $0xc] sm:$0xf]
    %v6501 = vunpack.c.l.b16 %v6493
    %v6502 = vunpack.c.l.b16 %v6494
    %v6503 = vunpack.c.l.b16 %v6495
    %v6504 = vunpack.c.l.b16 %v6496
    %v6505 = vpack.c.b16 %v6502, %v6501
    %v6506 = vpack.c.b16 %v6504, %v6503
    %v6510 = vsel %vm5956, %v6484, 0
    %v6513 = vsel %vm5956, %v6485, 0
    %v6516 = vsel %vm5956, %v6486, 0
    %v6519 = vsel %vm5956, %v6487, 0
    %v6522 = vsel %vm5956, %v6488, 0
    %v6525 = vsel %vm5956, %v6489, 0
    %v6528 = vsel %vm5956, %v6490, 0
    %v6531 = vsel %vm5956, %v6491, 0
    %6533 = vmatprep.subr.bf16.mxu0 0
    %6534 = vmatpush1.bf16.msra.mxu0 %v6505
    %6535 = vmatprep.subr.bf16.mxu0 0
    %6536 = vmatpush1.bf16.msra.mxu0 %v6506
    %6537 = vmatprep.subr.bf16.mxu0 0
    %6538 = vmatpush1.bf16.msra.mxu0 0
    %6539 = vmatprep.subr.bf16.mxu0 0
    %6540 = vmatpush1.bf16.msra.mxu0 0
    %6541 = vmatprep.subr.bf16.mxu0 0
    %6542 = vmatpush1.bf16.msra.mxu0 0
    %6543 = vmatprep.subr.bf16.mxu0 0
    %6544 = vmatpush1.bf16.msra.mxu0 0
    %6545 = vmatprep.subr.bf16.mxu0 0
    %6546 = vmatpush1.bf16.msra.mxu0 0
    %6547 = vmatprep.subr.bf16.mxu0 0
    %6548 = vmatpush1.bf16.msra.mxu0 0
    %6549 = vmatprep.subr.bf16.mxu0 0
    %6550 = vmatpush1.bf16.msra.mxu0 0
    %6551 = vmatprep.subr.bf16.mxu0 0
    %6552 = vmatpush1.bf16.msra.mxu0 0
    %6553 = vmatprep.subr.bf16.mxu0 0
    %6554 = vmatpush1.bf16.msra.mxu0 0
    %6555 = vmatprep.subr.bf16.mxu0 0
    %6556 = vmatpush1.bf16.msra.mxu0 0
    %6557 = vmatprep.subr.bf16.mxu0 0
    %6558 = vmatpush1.bf16.msra.mxu0 0
    %6559 = vmatprep.subr.bf16.mxu0 0
    %6560 = vmatpush1.bf16.msra.mxu0 0
    %6561 = vmatprep.subr.bf16.mxu0 0
    %6562 = vmatpush1.bf16.msra.mxu0 0
    %6563 = vmatprep.subr.bf16.mxu0 0
    %6564 = vmatpush1.bf16.msra.mxu0 0
    %6565 = vmatprep.mubr.bf16.mxu0 0
    %6566 = vmatmul.mubr.bf16.gmra.mrb[0].mxu0 %v6510
    %v6567 = vpop.f32.mrb[0].mxu0
    %v6568 = vpop.f32.mrb[0].mxu0
    %v6569 = vpop.f32.mrb[0].mxu0
    %v6570 = vpop.f32.mrb[0].mxu0
    %6571 = vmatprep.mubr.bf16.mxu0 0
    %6572 = vmatmul.mubr.bf16.gmra.mrb[0].mxu0 %v6513
    %v6573 = vpop.f32.mrb[0].mxu0
    %v6574 = vadd.f32 0.0, %v6573
    %v6575 = vpop.f32.mrb[0].mxu0
    %v6576 = vpop.f32.mrb[0].mxu0
    %v6577 = vpop.f32.mrb[0].mxu0
    %6578 = vmatprep.mubr.bf16.mxu0 0
    %6579 = vmatmul.mubr.bf16.gmra.mrb[0].mxu0 %v6516
    %v6580 = vpop.f32.mrb[0].mxu0
    %v6581 = vpop.f32.mrb[0].mxu0
    %v6582 = vpop.f32.mrb[0].mxu0
    %v6583 = vadd.f32 0.0, %v6582
    %v6584 = vpop.f32.mrb[0].mxu0
    %6585 = vmatprep.mubr.bf16.mxu0 0
    %6586 = vmatmul.mubr.bf16.gmra.mrb[0].mxu0 %v6519
    %v6587 = vpop.f32.mrb[0].mxu0
    %v6588 = vpop.f32.mrb[0].mxu0
    %v6589 = vpop.f32.mrb[0].mxu0
    %v6590 = vpop.f32.mrb[0].mxu0
    %6591 = vmatprep.mubr.bf16.mxu0 0
    %6592 = vmatmul.mubr.bf16.gmra.mrb[0].mxu0 %v6522
    %v6593 = vpop.f32.mrb[0].mxu0
    %v6594 = vpop.f32.mrb[0].mxu0
    %v6595 = vpop.f32.mrb[0].mxu0
    %v6596 = vpop.f32.mrb[0].mxu0
    %6597 = vmatprep.mubr.bf16.mxu0 0
    %6598 = vmatmul.mubr.bf16.gmra.mrb[0].mxu0 %v6525
    %v6599 = vpop.f32.mrb[0].mxu0
    %v6600 = vadd.f32 0.0, %v6599
    %v6601 = vpop.f32.mrb[0].mxu0
    %v6602 = vpop.f32.mrb[0].mxu0
    %v6603 = vpop.f32.mrb[0].mxu0
    %6604 = vmatprep.mubr.bf16.mxu0 0
    %6605 = vmatmul.mubr.bf16.gmra.mrb[0].mxu0 %v6528
    %v6606 = vpop.f32.mrb[0].mxu0
    %v6607 = vpop.f32.mrb[0].mxu0
    %v6608 = vpop.f32.mrb[0].mxu0
    %v6609 = vadd.f32 0.0, %v6608
    %v6610 = vpop.f32.mrb[0].mxu0
    %6611 = vmatprep.mubr.bf16.mxu0 0
    %6612 = vmatmul.mubr.bf16.gmra.mrb[0].mxu0 %v6531
    %v6613 = vpop.f32.mrb[0].mxu0
    %v6614 = vpop.f32.mrb[0].mxu0
    %v6615 = vpop.f32.mrb[0].mxu0
    %v6616 = vpop.f32.mrb[0].mxu0
    %6617 = vdwg.mxu0
    %v6618 = vadd.f32 %v6464, %v6574
    %v6619 = vadd.f32 %v6465, %v6583
    %v6620 = vadd.f32 %v6466, %v6600
    %v6621 = vadd.f32 %v6467, %v6609
    %v6622 = vld [vmem:[%s5998 + $0x1] sm:$0xff]
    %v6623 = vld [vmem:[%s5998 + $0x11] sm:$0xff]
    %v6624 = vld [vmem:[%s5998 + $0x21] sm:$0xff]
    %v6625 = vld [vmem:[%s5998 + $0x31] sm:$0xff]
    %v6626 = vld [vmem:[%s5998 + $0x41] sm:$0xff]
    %v6627 = vld [vmem:[%s5998 + $0x51] sm:$0xff]
    %v6628 = vld [vmem:[%s5998 + $0x61] sm:$0xff]
    %v6629 = vld [vmem:[%s5998 + $0x71] sm:$0xff]
    %v6630 = vld [vmem:[%s5998 + $0xa1] sm:$0xff]
    %v6631 = vld [vmem:[%s5998 + $0xb1] sm:$0xff]
    %v6632 = vld [vmem:[%s5998 + $0xc1] sm:$0xff]
    %v6633 = vld [vmem:[%s5998 + $0xd1] sm:$0xff]
    %v6634 = vld [vmem:[%s5998 + $0xe1] sm:$0xff]
    %v6635 = vld [vmem:[%s5998 + $0xf1] sm:$0xff]
    %v6636 = vld [vmem:[%s5998 + $0x101] sm:$0xff]
    %v6637 = vld [vmem:[%s5998 + $0x111] sm:$0xff]
    %v6638 = vpack.c.bf16 %v6623, %v6622
    %v6639 = vpack.c.bf16 %v6625, %v6624
    %v6640 = vpack.c.bf16 %v6627, %v6626
    %v6641 = vpack.c.bf16 %v6629, %v6628
    %v6642 = vpack.c.bf16 %v6631, %v6630
    %v6643 = vpack.c.bf16 %v6633, %v6632
    %v6644 = vpack.c.bf16 %v6635, %v6634
    %v6645 = vpack.c.bf16 %v6637, %v6636
    %s6646 = scalar_lea.vmem %s5, 64
    %v6647 = vld [vmem:[%s6646] sm:$0xf]
    %v6648 = vld [vmem:[%s6646 + $0x4] sm:$0xf]
    %v6649 = vld [vmem:[%s6646 + $0x8] sm:$0xf]
    %v6650 = vld [vmem:[%s6646 + $0xc] sm:$0xf]
    %v6655 = vunpack.c.l.b16 %v6647
    %v6656 = vunpack.c.l.b16 %v6648
    %v6657 = vunpack.c.l.b16 %v6649
    %v6658 = vunpack.c.l.b16 %v6650
    %v6659 = vpack.c.b16 %v6656, %v6655
    %v6660 = vpack.c.b16 %v6658, %v6657
    %v6664 = vsel %vm5956, %v6638, 0
    %v6667 = vsel %vm5956, %v6639, 0
    %v6670 = vsel %vm5956, %v6640, 0
    %v6673 = vsel %vm5956, %v6641, 0
    %v6676 = vsel %vm5956, %v6642, 0
    %v6679 = vsel %vm5956, %v6643, 0
    %v6682 = vsel %vm5956, %v6644, 0
    %v6685 = vsel %vm5956, %v6645, 0
    %6687 = vmatprep.subr.bf16.mxu0 0
    %6688 = vmatpush1.bf16.msra.mxu0 %v6659
    %6689 = vmatprep.subr.bf16.mxu0 0
    %6690 = vmatpush1.bf16.msra.mxu0 %v6660
    %6691 = vmatprep.subr.bf16.mxu0 0
    %6692 = vmatpush1.bf16.msra.mxu0 0
    %6693 = vmatprep.subr.bf16.mxu0 0
    %6694 = vmatpush1.bf16.msra.mxu0 0
    %6695 = vmatprep.subr.bf16.mxu0 0
    %6696 = vmatpush1.bf16.msra.mxu0 0
    %6697 = vmatprep.subr.bf16.mxu0 0
    %6698 = vmatpush1.bf16.msra.mxu0 0
    %6699 = vmatprep.subr.bf16.mxu0 0
    %6700 = vmatpush1.bf16.msra.mxu0 0
    %6701 = vmatprep.subr.bf16.mxu0 0
    %6702 = vmatpush1.bf16.msra.mxu0 0
    %6703 = vmatprep.subr.bf16.mxu0 0
    %6704 = vmatpush1.bf16.msra.mxu0 0
    %6705 = vmatprep.subr.bf16.mxu0 0
    %6706 = vmatpush1.bf16.msra.mxu0 0
    %6707 = vmatprep.subr.bf16.mxu0 0
    %6708 = vmatpush1.bf16.msra.mxu0 0
    %6709 = vmatprep.subr.bf16.mxu0 0
    %6710 = vmatpush1.bf16.msra.mxu0 0
    %6711 = vmatprep.subr.bf16.mxu0 0
    %6712 = vmatpush1.bf16.msra.mxu0 0
    %6713 = vmatprep.subr.bf16.mxu0 0
    %6714 = vmatpush1.bf16.msra.mxu0 0
    %6715 = vmatprep.subr.bf16.mxu0 0
    %6716 = vmatpush1.bf16.msra.mxu0 0
    %6717 = vmatprep.subr.bf16.mxu0 0
    %6718 = vmatpush1.bf16.msra.mxu0 0
    %6719 = vmatprep.mubr.bf16.mxu0 0
    %6720 = vmatmul.mubr.bf16.gmra.mrb[0].mxu0 %v6664
    %v6721 = vpop.f32.mrb[0].mxu0
    %v6722 = vpop.f32.mrb[0].mxu0
    %v6723 = vpop.f32.mrb[0].mxu0
    %v6724 = vpop.f32.mrb[0].mxu0
    %6725 = vmatprep.mubr.bf16.mxu0 0
    %6726 = vmatmul.mubr.bf16.gmra.mrb[0].mxu0 %v6667
    %v6727 = vpop.f32.mrb[0].mxu0
    %v6728 = vadd.f32 0.0, %v6727
    %v6729 = vpop.f32.mrb[0].mxu0
    %v6730 = vpop.f32.mrb[0].mxu0
    %v6731 = vpop.f32.mrb[0].mxu0
    %6732 = vmatprep.mubr.bf16.mxu0 0
    %6733 = vmatmul.mubr.bf16.gmra.mrb[0].mxu0 %v6670
    %v6734 = vpop.f32.mrb[0].mxu0
    %v6735 = vpop.f32.mrb[0].mxu0
    %v6736 = vpop.f32.mrb[0].mxu0
    %v6737 = vadd.f32 0.0, %v6736
    %v6738 = vpop.f32.mrb[0].mxu0
    %6739 = vmatprep.mubr.bf16.mxu0 0
    %6740 = vmatmul.mubr.bf16.gmra.mrb[0].mxu0 %v6673
    %v6741 = vpop.f32.mrb[0].mxu0
    %v6742 = vpop.f32.mrb[0].mxu0
    %v6743 = vpop.f32.mrb[0].mxu0
    %v6744 = vpop.f32.mrb[0].mxu0
    %6745 = vmatprep.mubr.bf16.mxu0 0
    %6746 = vmatmul.mubr.bf16.gmra.mrb[0].mxu0 %v6676
    %v6747 = vpop.f32.mrb[0].mxu0
    %v6748 = vpop.f32.mrb[0].mxu0
    %v6749 = vpop.f32.mrb[0].mxu0
    %v6750 = vpop.f32.mrb[0].mxu0
    %6751 = vmatprep.mubr.bf16.mxu0 0
    %6752 = vmatmul.mubr.bf16.gmra.mrb[0].mxu0 %v6679
    %v6753 = vpop.f32.mrb[0].mxu0
    %v6754 = vadd.f32 0.0, %v6753
    %v6755 = vpop.f32.mrb[0].mxu0
    %v6756 = vpop.f32.mrb[0].mxu0
    %v6757 = vpop.f32.mrb[0].mxu0
    %6758 = vmatprep.mubr.bf16.mxu0 0
    %6759 = vmatmul.mubr.bf16.gmra.mrb[0].mxu0 %v6682
    %v6760 = vpop.f32.mrb[0].mxu0
    %v6761 = vpop.f32.mrb[0].mxu0
    %v6762 = vpop.f32.mrb[0].mxu0
    %v6763 = vadd.f32 0.0, %v6762
    %v6764 = vpop.f32.mrb[0].mxu0
    %6765 = vmatprep.mubr.bf16.mxu0 0
    %6766 = vmatmul.mubr.bf16.gmra.mrb[0].mxu0 %v6685
    %v6767 = vpop.f32.mrb[0].mxu0
    %v6768 = vpop.f32.mrb[0].mxu0
    %v6769 = vpop.f32.mrb[0].mxu0
    %v6770 = vpop.f32.mrb[0].mxu0
    %6771 = vdwg.mxu0
    %v6772 = vadd.f32 %v6618, %v6728
    %v6773 = vadd.f32 %v6619, %v6737
    %v6774 = vadd.f32 %v6620, %v6754
    %v6775 = vadd.f32 %v6621, %v6763
    %v6776 = vld [vmem:[%s5998 + $0x2] sm:$0xff]
    %v6777 = vld [vmem:[%s5998 + $0x12] sm:$0xff]
    %v6778 = vld [vmem:[%s5998 + $0x22] sm:$0xff]
    %v6779 = vld [vmem:[%s5998 + $0x32] sm:$0xff]
    %v6780 = vld [vmem:[%s5998 + $0x42] sm:$0xff]
    %v6781 = vld [vmem:[%s5998 + $0x52] sm:$0xff]
    %v6782 = vld [vmem:[%s5998 + $0x62] sm:$0xff]
    %v6783 = vld [vmem:[%s5998 + $0x72] sm:$0xff]
    %v6784 = vld [vmem:[%s5998 + $0xa2] sm:$0xff]
    %v6785 = vld [vmem:[%s5998 + $0xb2] sm:$0xff]
    %v6786 = vld [vmem:[%s5998 + $0xc2] sm:$0xff]
    %v6787 = vld [vmem:[%s5998 + $0xd2] sm:$0xff]
    %v6788 = vld [vmem:[%s5998 + $0xe2] sm:$0xff]
    %v6789 = vld [vmem:[%s5998 + $0xf2] sm:$0xff]
    %v6790 = vld [vmem:[%s5998 + $0x102] sm:$0xff]
    %v6791 = vld [vmem:[%s5998 + $0x112] sm:$0xff]
    %v6792 = vpack.c.bf16 %v6777, %v6776
    %v6793 = vpack.c.bf16 %v6779, %v6778
    %v6794 = vpack.c.bf16 %v6781, %v6780
    %v6795 = vpack.c.bf16 %v6783, %v6782
    %v6796 = vpack.c.bf16 %v6785, %v6784
    %v6797 = vpack.c.bf16 %v6787, %v6786
    %v6798 = vpack.c.bf16 %v6789, %v6788
    %v6799 = vpack.c.bf16 %v6791, %v6790
    %s6800 = scalar_lea.vmem %s5, 80
    %v6801 = vld [vmem:[%s6800] sm:$0xf]
    %v6802 = vld [vmem:[%s6800 + $0x4] sm:$0xf]
    %v6803 = vld [vmem:[%s6800 + $0x8] sm:$0xf]
    %v6804 = vld [vmem:[%s6800 + $0xc] sm:$0xf]
    %v6809 = vunpack.c.l.b16 %v6801
    %v6810 = vunpack.c.l.b16 %v6802
    %v6811 = vunpack.c.l.b16 %v6803
    %v6812 = vunpack.c.l.b16 %v6804
    %v6813 = vpack.c.b16 %v6810, %v6809
    %v6814 = vpack.c.b16 %v6812, %v6811
    %v6818 = vsel %vm5956, %v6792, 0
    %v6821 = vsel %vm5956, %v6793, 0
    %v6824 = vsel %vm5956, %v6794, 0
    %v6827 = vsel %vm5956, %v6795, 0
    %v6830 = vsel %vm5956, %v6796, 0
    %v6833 = vsel %vm5956, %v6797, 0
    %v6836 = vsel %vm5956, %v6798, 0
    %v6839 = vsel %vm5956, %v6799, 0
    %6841 = vmatprep.subr.bf16.mxu0 0
    %6842 = vmatpush1.bf16.msra.mxu0 %v6813
    %6843 = vmatprep.subr.bf16.mxu0 0
    %6844 = vmatpush1.bf16.msra.mxu0 %v6814
    %6845 = vmatprep.subr.bf16.mxu0 0
    %6846 = vmatpush1.bf16.msra.mxu0 0
    %6847 = vmatprep.subr.bf16.mxu0 0
    %6848 = vmatpush1.bf16.msra.mxu0 0
    %6849 = vmatprep.subr.bf16.mxu0 0
    %6850 = vmatpush1.bf16.msra.mxu0 0
    %6851 = vmatprep.subr.bf16.mxu0 0
    %6852 = vmatpush1.bf16.msra.mxu0 0
    %6853 = vmatprep.subr.bf16.mxu0 0
    %6854 = vmatpush1.bf16.msra.mxu0 0
    %6855 = vmatprep.subr.bf16.mxu0 0
    %6856 = vmatpush1.bf16.msra.mxu0 0
    %6857 = vmatprep.subr.bf16.mxu0 0
    %6858 = vmatpush1.bf16.msra.mxu0 0
    %6859 = vmatprep.subr.bf16.mxu0 0
    %6860 = vmatpush1.bf16.msra.mxu0 0
    %6861 = vmatprep.subr.bf16.mxu0 0
    %6862 = vmatpush1.bf16.msra.mxu0 0
    %6863 = vmatprep.subr.bf16.mxu0 0
    %6864 = vmatpush1.bf16.msra.mxu0 0
    %6865 = vmatprep.subr.bf16.mxu0 0
    %6866 = vmatpush1.bf16.msra.mxu0 0
    %6867 = vmatprep.subr.bf16.mxu0 0
    %6868 = vmatpush1.bf16.msra.mxu0 0
    %6869 = vmatprep.subr.bf16.mxu0 0
    %6870 = vmatpush1.bf16.msra.mxu0 0
    %6871 = vmatprep.subr.bf16.mxu0 0
    %6872 = vmatpush1.bf16.msra.mxu0 0
    %6873 = vmatprep.mubr.bf16.mxu0 0
    %6874 = vmatmul.mubr.bf16.gmra.mrb[0].mxu0 %v6818
    %v6875 = vpop.f32.mrb[0].mxu0
    %v6876 = vpop.f32.mrb[0].mxu0
    %v6877 = vpop.f32.mrb[0].mxu0
    %v6878 = vpop.f32.mrb[0].mxu0
    %6879 = vmatprep.mubr.bf16.mxu0 0
    %6880 = vmatmul.mubr.bf16.gmra.mrb[0].mxu0 %v6821
    %v6881 = vpop.f32.mrb[0].mxu0
    %v6882 = vadd.f32 0.0, %v6881
    %v6883 = vpop.f32.mrb[0].mxu0
    %v6884 = vpop.f32.mrb[0].mxu0
    %v6885 = vpop.f32.mrb[0].mxu0
    %6886 = vmatprep.mubr.bf16.mxu0 0
    %6887 = vmatmul.mubr.bf16.gmra.mrb[0].mxu0 %v6824
    %v6888 = vpop.f32.mrb[0].mxu0
    %v6889 = vpop.f32.mrb[0].mxu0
    %v6890 = vpop.f32.mrb[0].mxu0
    %v6891 = vadd.f32 0.0, %v6890
    %v6892 = vpop.f32.mrb[0].mxu0
    %6893 = vmatprep.mubr.bf16.mxu0 0
    %6894 = vmatmul.mubr.bf16.gmra.mrb[0].mxu0 %v6827
    %v6895 = vpop.f32.mrb[0].mxu0
    %v6896 = vpop.f32.mrb[0].mxu0
    %v6897 = vpop.f32.mrb[0].mxu0
    %v6898 = vpop.f32.mrb[0].mxu0
    %6899 = vmatprep.mubr.bf16.mxu0 0
    %6900 = vmatmul.mubr.bf16.gmra.mrb[0].mxu0 %v6830
    %v6901 = vpop.f32.mrb[0].mxu0
    %v6902 = vpop.f32.mrb[0].mxu0
    %v6903 = vpop.f32.mrb[0].mxu0
    %v6904 = vpop.f32.mrb[0].mxu0
    %6905 = vmatprep.mubr.bf16.mxu0 0
    %6906 = vmatmul.mubr.bf16.gmra.mrb[0].mxu0 %v6833
    %v6907 = vpop.f32.mrb[0].mxu0
    %v6908 = vadd.f32 0.0, %v6907
    %v6909 = vpop.f32.mrb[0].mxu0
    %v6910 = vpop.f32.mrb[0].mxu0
    %v6911 = vpop.f32.mrb[0].mxu0
    %6912 = vmatprep.mubr.bf16.mxu0 0
    %6913 = vmatmul.mubr.bf16.gmra.mrb[0].mxu0 %v6836
    %v6914 = vpop.f32.mrb[0].mxu0
    %v6915 = vpop.f32.mrb[0].mxu0
    %v6916 = vpop.f32.mrb[0].mxu0
    %v6917 = vadd.f32 0.0, %v6916
    %v6918 = vpop.f32.mrb[0].mxu0
    %6919 = vmatprep.mubr.bf16.mxu0 0
    %6920 = vmatmul.mubr.bf16.gmra.mrb[0].mxu0 %v6839
    %v6921 = vpop.f32.mrb[0].mxu0
    %v6922 = vpop.f32.mrb[0].mxu0
    %v6923 = vpop.f32.mrb[0].mxu0
    %v6924 = vpop.f32.mrb[0].mxu0
    %6925 = vdwg.mxu0
    %v6926 = vadd.f32 %v6772, %v6882
    %v6927 = vadd.f32 %v6773, %v6891
    %v6928 = vadd.f32 %v6774, %v6908
    %v6929 = vadd.f32 %v6775, %v6917
    %s6930 = scalar_lea.vmem [#allocation4], 32
    %v6931 = vld [vmem:[%s6930] sm:$0xff]
    %v6932 = vld [vmem:[%s6930 + $0x10] sm:$0xff]
    %v6933 = vld [vmem:[%s6930 + $0x20] sm:$0xff]
    %v6934 = vld [vmem:[%s6930 + $0x30] sm:$0xff]
    %v6935 = vld [vmem:[%s6930 + $0x40] sm:$0xff]
    %v6936 = vld [vmem:[%s6930 + $0x50] sm:$0xff]
    %v6937 = vld [vmem:[%s6930 + $0x60] sm:$0xff]
    %v6938 = vld [vmem:[%s6930 + $0x70] sm:$0xff]
    %v6939 = vld [vmem:[%s6930 + $0xa0] sm:$0xff]
    %v6940 = vld [vmem:[%s6930 + $0xb0] sm:$0xff]
    %v6941 = vld [vmem:[%s6930 + $0xc0] sm:$0xff]
    %v6942 = vld [vmem:[%s6930 + $0xd0] sm:$0xff]
    %v6943 = vld [vmem:[%s6930 + $0xe0] sm:$0xff]
    %v6944 = vld [vmem:[%s6930 + $0xf0] sm:$0xff]
    %v6945 = vld [vmem:[%s6930 + $0x100] sm:$0xff]
    %v6946 = vld [vmem:[%s6930 + $0x110] sm:$0xff]
    %v6947 = vpack.c.bf16 %v6932, %v6931
    %v6948 = vpack.c.bf16 %v6934, %v6933
    %v6949 = vpack.c.bf16 %v6936, %v6935
    %v6950 = vpack.c.bf16 %v6938, %v6937
    %v6951 = vpack.c.bf16 %v6940, %v6939
    %v6952 = vpack.c.bf16 %v6942, %v6941
    %v6953 = vpack.c.bf16 %v6944, %v6943
    %v6954 = vpack.c.bf16 %v6946, %v6945
    %s6955 = scalar_lea.vmem %s5, 96
    %v6956 = vld [vmem:[%s6955] sm:$0xf]
    %v6957 = vld [vmem:[%s6955 + $0x4] sm:$0xf]
    %v6958 = vld [vmem:[%s6955 + $0x8] sm:$0xf]
    %v6959 = vld [vmem:[%s6955 + $0xc] sm:$0xf]
    %v6964 = vunpack.c.l.b16 %v6956
    %v6965 = vunpack.c.l.b16 %v6957
    %v6966 = vunpack.c.l.b16 %v6958
    %v6967 = vunpack.c.l.b16 %v6959
    %v6968 = vpack.c.b16 %v6965, %v6964
    %v6969 = vpack.c.b16 %v6967, %v6966
    %v6973 = vsel %vm5956, %v6947, 0
    %v6976 = vsel %vm5956, %v6948, 0
    %v6979 = vsel %vm5956, %v6949, 0
    %v6982 = vsel %vm5956, %v6950, 0
    %v6985 = vsel %vm5956, %v6951, 0
    %v6988 = vsel %vm5956, %v6952, 0
    %v6991 = vsel %vm5956, %v6953, 0
    %v6994 = vsel %vm5956, %v6954, 0
    %6996 = vmatprep.subr.bf16.mxu0 0
    %6997 = vmatpush1.bf16.msra.mxu0 %v6968
    %6998 = vmatprep.subr.bf16.mxu0 0
    %6999 = vmatpush1.bf16.msra.mxu0 %v6969
    %7000 = vmatprep.subr.bf16.mxu0 0
    %7001 = vmatpush1.bf16.msra.mxu0 0
    %7002 = vmatprep.subr.bf16.mxu0 0
    %7003 = vmatpush1.bf16.msra.mxu0 0
    %7004 = vmatprep.subr.bf16.mxu0 0
    %7005 = vmatpush1.bf16.msra.mxu0 0
    %7006 = vmatprep.subr.bf16.mxu0 0
    %7007 = vmatpush1.bf16.msra.mxu0 0
    %7008 = vmatprep.subr.bf16.mxu0 0
    %7009 = vmatpush1.bf16.msra.mxu0 0
    %7010 = vmatprep.subr.bf16.mxu0 0
    %7011 = vmatpush1.bf16.msra.mxu0 0
    %7012 = vmatprep.subr.bf16.mxu0 0
    %7013 = vmatpush1.bf16.msra.mxu0 0
    %7014 = vmatprep.subr.bf16.mxu0 0
    %7015 = vmatpush1.bf16.msra.mxu0 0
    %7016 = vmatprep.subr.bf16.mxu0 0
    %7017 = vmatpush1.bf16.msra.mxu0 0
    %7018 = vmatprep.subr.bf16.mxu0 0
    %7019 = vmatpush1.bf16.msra.mxu0 0
    %7020 = vmatprep.subr.bf16.mxu0 0
    %7021 = vmatpush1.bf16.msra.mxu0 0
    %7022 = vmatprep.subr.bf16.mxu0 0
    %7023 = vmatpush1.bf16.msra.mxu0 0
    %7024 = vmatprep.subr.bf16.mxu0 0
    %7025 = vmatpush1.bf16.msra.mxu0 0
    %7026 = vmatprep.subr.bf16.mxu0 0
    %7027 = vmatpush1.bf16.msra.mxu0 0
    %7028 = vmatprep.mubr.bf16.mxu0 0
    %7029 = vmatmul.mubr.bf16.gmra.mrb[0].mxu0 %v6973
    %v7030 = vpop.f32.mrb[0].mxu0
    %v7031 = vpop.f32.mrb[0].mxu0
    %v7032 = vpop.f32.mrb[0].mxu0
    %v7033 = vpop.f32.mrb[0].mxu0
    %7034 = vmatprep.mubr.bf16.mxu0 0
    %7035 = vmatmul.mubr.bf16.gmra.mrb[0].mxu0 %v6976
    %v7036 = vpop.f32.mrb[0].mxu0
    %v7037 = vadd.f32 0.0, %v7036
    %v7038 = vpop.f32.mrb[0].mxu0
    %v7039 = vpop.f32.mrb[0].mxu0
    %v7040 = vpop.f32.mrb[0].mxu0
    %7041 = vmatprep.mubr.bf16.mxu0 0
    %7042 = vmatmul.mubr.bf16.gmra.mrb[0].mxu0 %v6979
    %v7043 = vpop.f32.mrb[0].mxu0
    %v7044 = vpop.f32.mrb[0].mxu0
    %v7045 = vpop.f32.mrb[0].mxu0
    %v7046 = vadd.f32 0.0, %v7045
    %v7047 = vpop.f32.mrb[0].mxu0
    %7048 = vmatprep.mubr.bf16.mxu0 0
    %7049 = vmatmul.mubr.bf16.gmra.mrb[0].mxu0 %v6982
    %v7050 = vpop.f32.mrb[0].mxu0
    %v7051 = vpop.f32.mrb[0].mxu0
    %v7052 = vpop.f32.mrb[0].mxu0
    %v7053 = vpop.f32.mrb[0].mxu0
    %7054 = vmatprep.mubr.bf16.mxu0 0
    %7055 = vmatmul.mubr.bf16.gmra.mrb[0].mxu0 %v6985
    %v7056 = vpop.f32.mrb[0].mxu0
    %v7057 = vpop.f32.mrb[0].mxu0
    %v7058 = vpop.f32.mrb[0].mxu0
    %v7059 = vpop.f32.mrb[0].mxu0
    %7060 = vmatprep.mubr.bf16.mxu0 0
    %7061 = vmatmul.mubr.bf16.gmra.mrb[0].mxu0 %v6988
    %v7062 = vpop.f32.mrb[0].mxu0
    %v7063 = vadd.f32 0.0, %v7062
    %v7064 = vpop.f32.mrb[0].mxu0
    %v7065 = vpop.f32.mrb[0].mxu0
    %v7066 = vpop.f32.mrb[0].mxu0
    %7067 = vmatprep.mubr.bf16.mxu0 0
    %7068 = vmatmul.mubr.bf16.gmra.mrb[0].mxu0 %v6991
    %v7069 = vpop.f32.mrb[0].mxu0
    %v7070 = vpop.f32.mrb[0].mxu0
    %v7071 = vpop.f32.mrb[0].mxu0
    %v7072 = vadd.f32 0.0, %v7071
    %v7073 = vpop.f32.mrb[0].mxu0
    %7074 = vmatprep.mubr.bf16.mxu0 0
    %7075 = vmatmul.mubr.bf16.gmra.mrb[0].mxu0 %v6994
    %v7076 = vpop.f32.mrb[0].mxu0
    %v7077 = vpop.f32.mrb[0].mxu0
    %v7078 = vpop.f32.mrb[0].mxu0
    %v7079 = vpop.f32.mrb[0].mxu0
    %7080 = vdwg.mxu0
    %v7081 = vadd.f32 %v6926, %v7037
    %v7082 = vadd.f32 %v6927, %v7046
    %v7083 = vadd.f32 %v6928, %v7063
    %v7084 = vadd.f32 %v6929, %v7072
    %v7085 = vld [vmem:[%s6930 + $0x1] sm:$0xff]
    %v7086 = vld [vmem:[%s6930 + $0x11] sm:$0xff]
    %v7087 = vld [vmem:[%s6930 + $0x21] sm:$0xff]
    %v7088 = vld [vmem:[%s6930 + $0x31] sm:$0xff]
    %v7089 = vld [vmem:[%s6930 + $0x41] sm:$0xff]
    %v7090 = vld [vmem:[%s6930 + $0x51] sm:$0xff]
    %v7091 = vld [vmem:[%s6930 + $0x61] sm:$0xff]
    %v7092 = vld [vmem:[%s6930 + $0x71] sm:$0xff]
    %v7093 = vld [vmem:[%s6930 + $0xa1] sm:$0xff]
    %v7094 = vld [vmem:[%s6930 + $0xb1] sm:$0xff]
    %v7095 = vld [vmem:[%s6930 + $0xc1] sm:$0xff]
    %v7096 = vld [vmem:[%s6930 + $0xd1] sm:$0xff]
    %v7097 = vld [vmem:[%s6930 + $0xe1] sm:$0xff]
    %v7098 = vld [vmem:[%s6930 + $0xf1] sm:$0xff]
    %v7099 = vld [vmem:[%s6930 + $0x101] sm:$0xff]
    %v7100 = vld [vmem:[%s6930 + $0x111] sm:$0xff]
    %v7101 = vpack.c.bf16 %v7086, %v7085
    %v7102 = vpack.c.bf16 %v7088, %v7087
    %v7103 = vpack.c.bf16 %v7090, %v7089
    %v7104 = vpack.c.bf16 %v7092, %v7091
    %v7105 = vpack.c.bf16 %v7094, %v7093
    %v7106 = vpack.c.bf16 %v7096, %v7095
    %v7107 = vpack.c.bf16 %v7098, %v7097
    %v7108 = vpack.c.bf16 %v7100, %v7099
    %s7109 = scalar_lea.vmem %s5, 112
    %v7110 = vld [vmem:[%s7109] sm:$0xf]
    %v7111 = vld [vmem:[%s7109 + $0x4] sm:$0xf]
    %v7112 = vld [vmem:[%s7109 + $0x8] sm:$0xf]
    %v7113 = vld [vmem:[%s7109 + $0xc] sm:$0xf]
    %v7118 = vunpack.c.l.b16 %v7110
    %v7119 = vunpack.c.l.b16 %v7111
    %v7120 = vunpack.c.l.b16 %v7112
    %v7121 = vunpack.c.l.b16 %v7113
    %v7122 = vpack.c.b16 %v7119, %v7118
    %v7123 = vpack.c.b16 %v7121, %v7120
    %v7127 = vsel %vm5956, %v7101, 0
    %v7130 = vsel %vm5956, %v7102, 0
    %v7133 = vsel %vm5956, %v7103, 0
    %v7136 = vsel %vm5956, %v7104, 0
    %v7139 = vsel %vm5956, %v7105, 0
    %v7142 = vsel %vm5956, %v7106, 0
    %v7145 = vsel %vm5956, %v7107, 0
    %v7148 = vsel %vm5956, %v7108, 0
    %7150 = vmatprep.subr.bf16.mxu0 0
    %7151 = vmatpush1.bf16.msra.mxu0 %v7122
    %7152 = vmatprep.subr.bf16.mxu0 0
    %7153 = vmatpush1.bf16.msra.mxu0 %v7123
    %7154 = vmatprep.subr.bf16.mxu0 0
    %7155 = vmatpush1.bf16.msra.mxu0 0
    %7156 = vmatprep.subr.bf16.mxu0 0
    %7157 = vmatpush1.bf16.msra.mxu0 0
    %7158 = vmatprep.subr.bf16.mxu0 0
    %7159 = vmatpush1.bf16.msra.mxu0 0
    %7160 = vmatprep.subr.bf16.mxu0 0
    %7161 = vmatpush1.bf16.msra.mxu0 0
    %7162 = vmatprep.subr.bf16.mxu0 0
    %7163 = vmatpush1.bf16.msra.mxu0 0
    %7164 = vmatprep.subr.bf16.mxu0 0
    %7165 = vmatpush1.bf16.msra.mxu0 0
    %7166 = vmatprep.subr.bf16.mxu0 0
    %7167 = vmatpush1.bf16.msra.mxu0 0
    %7168 = vmatprep.subr.bf16.mxu0 0
    %7169 = vmatpush1.bf16.msra.mxu0 0
    %7170 = vmatprep.subr.bf16.mxu0 0
    %7171 = vmatpush1.bf16.msra.mxu0 0
    %7172 = vmatprep.subr.bf16.mxu0 0
    %7173 = vmatpush1.bf16.msra.mxu0 0
    %7174 = vmatprep.subr.bf16.mxu0 0
    %7175 = vmatpush1.bf16.msra.mxu0 0
    %7176 = vmatprep.subr.bf16.mxu0 0
    %7177 = vmatpush1.bf16.msra.mxu0 0
    %7178 = vmatprep.subr.bf16.mxu0 0
    %7179 = vmatpush1.bf16.msra.mxu0 0
    %7180 = vmatprep.subr.bf16.mxu0 0
    %7181 = vmatpush1.bf16.msra.mxu0 0
    %7182 = vmatprep.mubr.bf16.mxu0 0
    %7183 = vmatmul.mubr.bf16.gmra.mrb[0].mxu0 %v7127
    %v7184 = vpop.f32.mrb[0].mxu0
    %v7185 = vpop.f32.mrb[0].mxu0
    %v7186 = vpop.f32.mrb[0].mxu0
    %v7187 = vpop.f32.mrb[0].mxu0
    %7188 = vmatprep.mubr.bf16.mxu0 0
    %7189 = vmatmul.mubr.bf16.gmra.mrb[0].mxu0 %v7130
    %v7190 = vpop.f32.mrb[0].mxu0
    %v7191 = vadd.f32 0.0, %v7190
    %v7192 = vpop.f32.mrb[0].mxu0
    %v7193 = vpop.f32.mrb[0].mxu0
    %v7194 = vpop.f32.mrb[0].mxu0
    %7195 = vmatprep.mubr.bf16.mxu0 0
    %7196 = vmatmul.mubr.bf16.gmra.mrb[0].mxu0 %v7133
    %v7197 = vpop.f32.mrb[0].mxu0
    %v7198 = vpop.f32.mrb[0].mxu0
    %v7199 = vpop.f32.mrb[0].mxu0
    %v7200 = vadd.f32 0.0, %v7199
    %v7201 = vpop.f32.mrb[0].mxu0
    %7202 = vmatprep.mubr.bf16.mxu0 0
    %7203 = vmatmul.mubr.bf16.gmra.mrb[0].mxu0 %v7136
    %v7204 = vpop.f32.mrb[0].mxu0
    %v7205 = vpop.f32.mrb[0].mxu0
    %v7206 = vpop.f32.mrb[0].mxu0
    %v7207 = vpop.f32.mrb[0].mxu0
    %7208 = vmatprep.mubr.bf16.mxu0 0
    %7209 = vmatmul.mubr.bf16.gmra.mrb[0].mxu0 %v7139
    %v7210 = vpop.f32.mrb[0].mxu0
    %v7211 = vpop.f32.mrb[0].mxu0
    %v7212 = vpop.f32.mrb[0].mxu0
    %v7213 = vpop.f32.mrb[0].mxu0
    %7214 = vmatprep.mubr.bf16.mxu0 0
    %7215 = vmatmul.mubr.bf16.gmra.mrb[0].mxu0 %v7142
    %v7216 = vpop.f32.mrb[0].mxu0
    %v7217 = vadd.f32 0.0, %v7216
    %v7218 = vpop.f32.mrb[0].mxu0
    %v7219 = vpop.f32.mrb[0].mxu0
    %v7220 = vpop.f32.mrb[0].mxu0
    %7221 = vmatprep.mubr.bf16.mxu0 0
    %7222 = vmatmul.mubr.bf16.gmra.mrb[0].mxu0 %v7145
    %v7223 = vpop.f32.mrb[0].mxu0
    %v7224 = vpop.f32.mrb[0].mxu0
    %v7225 = vpop.f32.mrb[0].mxu0
    %v7226 = vadd.f32 0.0, %v7225
    %v7227 = vpop.f32.mrb[0].mxu0
    %7228 = vmatprep.mubr.bf16.mxu0 0
    %7229 = vmatmul.mubr.bf16.gmra.mrb[0].mxu0 %v7148
    %v7230 = vpop.f32.mrb[0].mxu0
    %v7231 = vpop.f32.mrb[0].mxu0
    %v7232 = vpop.f32.mrb[0].mxu0
    %v7233 = vpop.f32.mrb[0].mxu0
    %7234 = vdwg.mxu0
    %v7235 = vadd.f32 %v7081, %v7191
    %v7236 = vadd.f32 %v7082, %v7200
    %v7237 = vadd.f32 %v7083, %v7217
    %v7238 = vadd.f32 %v7084, %v7226
    %v7239 = vld [vmem:[%s6930 + $0x2] sm:$0xff]
    %v7240 = vld [vmem:[%s6930 + $0x12] sm:$0xff]
    %v7241 = vld [vmem:[%s6930 + $0x22] sm:$0xff]
    %v7242 = vld [vmem:[%s6930 + $0x32] sm:$0xff]
    %v7243 = vld [vmem:[%s6930 + $0x42] sm:$0xff]
    %v7244 = vld [vmem:[%s6930 + $0x52] sm:$0xff]
    %v7245 = vld [vmem:[%s6930 + $0x62] sm:$0xff]
    %v7246 = vld [vmem:[%s6930 + $0x72] sm:$0xff]
    %v7247 = vld [vmem:[%s6930 + $0xa2] sm:$0xff]
    %v7248 = vld [vmem:[%s6930 + $0xb2] sm:$0xff]
    %v7249 = vld [vmem:[%s6930 + $0xc2] sm:$0xff]
    %v7250 = vld [vmem:[%s6930 + $0xd2] sm:$0xff]
    %v7251 = vld [vmem:[%s6930 + $0xe2] sm:$0xff]
    %v7252 = vld [vmem:[%s6930 + $0xf2] sm:$0xff]
    %v7253 = vld [vmem:[%s6930 + $0x102] sm:$0xff]
    %v7254 = vld [vmem:[%s6930 + $0x112] sm:$0xff]
    %v7255 = vpack.c.bf16 %v7240, %v7239
    %v7256 = vpack.c.bf16 %v7242, %v7241
    %v7257 = vpack.c.bf16 %v7244, %v7243
    %v7258 = vpack.c.bf16 %v7246, %v7245
    %v7259 = vpack.c.bf16 %v7248, %v7247
    %v7260 = vpack.c.bf16 %v7250, %v7249
    %v7261 = vpack.c.bf16 %v7252, %v7251
    %v7262 = vpack.c.bf16 %v7254, %v7253
    %s7263 = scalar_lea.vmem %s5, 128
    %v7264 = vld [vmem:[%s7263] sm:$0xf]
    %v7265 = vld [vmem:[%s7263 + $0x4] sm:$0xf]
    %v7266 = vld [vmem:[%s7263 + $0x8] sm:$0xf]
    %v7267 = vld [vmem:[%s7263 + $0xc] sm:$0xf]
    %v7272 = vunpack.c.l.b16 %v7264
    %v7273 = vunpack.c.l.b16 %v7265
    %v7274 = vunpack.c.l.b16 %v7266
    %v7275 = vunpack.c.l.b16 %v7267
    %v7276 = vpack.c.b16 %v7273, %v7272
    %v7277 = vpack.c.b16 %v7275, %v7274
    %v7281 = vsel %vm5956, %v7255, 0
    %v7284 = vsel %vm5956, %v7256, 0
    %v7287 = vsel %vm5956, %v7257, 0
    %v7290 = vsel %vm5956, %v7258, 0
    %v7293 = vsel %vm5956, %v7259, 0
    %v7296 = vsel %vm5956, %v7260, 0
    %v7299 = vsel %vm5956, %v7261, 0
    %v7302 = vsel %vm5956, %v7262, 0
    %7304 = vmatprep.subr.bf16.mxu0 0
    %7305 = vmatpush1.bf16.msra.mxu0 %v7276
    %7306 = vmatprep.subr.bf16.mxu0 0
    %7307 = vmatpush1.bf16.msra.mxu0 %v7277
    %7308 = vmatprep.subr.bf16.mxu0 0
    %7309 = vmatpush1.bf16.msra.mxu0 0
    %7310 = vmatprep.subr.bf16.mxu0 0
    %7311 = vmatpush1.bf16.msra.mxu0 0
    %7312 = vmatprep.subr.bf16.mxu0 0
    %7313 = vmatpush1.bf16.msra.mxu0 0
    %7314 = vmatprep.subr.bf16.mxu0 0
    %7315 = vmatpush1.bf16.msra.mxu0 0
    %7316 = vmatprep.subr.bf16.mxu0 0
    %7317 = vmatpush1.bf16.msra.mxu0 0
    %7318 = vmatprep.subr.bf16.mxu0 0
    %7319 = vmatpush1.bf16.msra.mxu0 0
    %7320 = vmatprep.subr.bf16.mxu0 0
    %7321 = vmatpush1.bf16.msra.mxu0 0
    %7322 = vmatprep.subr.bf16.mxu0 0
    %7323 = vmatpush1.bf16.msra.mxu0 0
    %7324 = vmatprep.subr.bf16.mxu0 0
    %7325 = vmatpush1.bf16.msra.mxu0 0
    %7326 = vmatprep.subr.bf16.mxu0 0
    %7327 = vmatpush1.bf16.msra.mxu0 0
    %7328 = vmatprep.subr.bf16.mxu0 0
    %7329 = vmatpush1.bf16.msra.mxu0 0
    %7330 = vmatprep.subr.bf16.mxu0 0
    %7331 = vmatpush1.bf16.msra.mxu0 0
    %7332 = vmatprep.subr.bf16.mxu0 0
    %7333 = vmatpush1.bf16.msra.mxu0 0
    %7334 = vmatprep.subr.bf16.mxu0 0
    %7335 = vmatpush1.bf16.msra.mxu0 0
    %7336 = vmatprep.mubr.bf16.mxu0 0
    %7337 = vmatmul.mubr.bf16.gmra.mrb[0].mxu0 %v7281
    %v7338 = vpop.f32.mrb[0].mxu0
    %v7339 = vpop.f32.mrb[0].mxu0
    %v7340 = vpop.f32.mrb[0].mxu0
    %v7341 = vpop.f32.mrb[0].mxu0
    %7342 = vmatprep.mubr.bf16.mxu0 0
    %7343 = vmatmul.mubr.bf16.gmra.mrb[0].mxu0 %v7284
    %v7344 = vpop.f32.mrb[0].mxu0
    %v7345 = vadd.f32 0.0, %v7344
    %v7346 = vpop.f32.mrb[0].mxu0
    %v7347 = vpop.f32.mrb[0].mxu0
    %v7348 = vpop.f32.mrb[0].mxu0
    %7349 = vmatprep.mubr.bf16.mxu0 0
    %7350 = vmatmul.mubr.bf16.gmra.mrb[0].mxu0 %v7287
    %v7351 = vpop.f32.mrb[0].mxu0
    %v7352 = vpop.f32.mrb[0].mxu0
    %v7353 = vpop.f32.mrb[0].mxu0
    %v7354 = vadd.f32 0.0, %v7353
    %v7355 = vpop.f32.mrb[0].mxu0
    %7356 = vmatprep.mubr.bf16.mxu0 0
    %7357 = vmatmul.mubr.bf16.gmra.mrb[0].mxu0 %v7290
    %v7358 = vpop.f32.mrb[0].mxu0
    %v7359 = vpop.f32.mrb[0].mxu0
    %v7360 = vpop.f32.mrb[0].mxu0
    %v7361 = vpop.f32.mrb[0].mxu0
    %7362 = vmatprep.mubr.bf16.mxu0 0
    %7363 = vmatmul.mubr.bf16.gmra.mrb[0].mxu0 %v7293
    %v7364 = vpop.f32.mrb[0].mxu0
    %v7365 = vpop.f32.mrb[0].mxu0
    %v7366 = vpop.f32.mrb[0].mxu0
    %v7367 = vpop.f32.mrb[0].mxu0
    %7368 = vmatprep.mubr.bf16.mxu0 0
    %7369 = vmatmul.mubr.bf16.gmra.mrb[0].mxu0 %v7296
    %v7370 = vpop.f32.mrb[0].mxu0
    %v7371 = vadd.f32 0.0, %v7370
    %v7372 = vpop.f32.mrb[0].mxu0
    %v7373 = vpop.f32.mrb[0].mxu0
    %v7374 = vpop.f32.mrb[0].mxu0
    %7375 = vmatprep.mubr.bf16.mxu0 0
    %7376 = vmatmul.mubr.bf16.gmra.mrb[0].mxu0 %v7299
    %v7377 = vpop.f32.mrb[0].mxu0
    %v7378 = vpop.f32.mrb[0].mxu0
    %v7379 = vpop.f32.mrb[0].mxu0
    %v7380 = vadd.f32 0.0, %v7379
    %v7381 = vpop.f32.mrb[0].mxu0
    %7382 = vmatprep.mubr.bf16.mxu0 0
    %7383 = vmatmul.mubr.bf16.gmra.mrb[0].mxu0 %v7302
    %v7384 = vpop.f32.mrb[0].mxu0
    %v7385 = vpop.f32.mrb[0].mxu0
    %v7386 = vpop.f32.mrb[0].mxu0
    %v7387 = vpop.f32.mrb[0].mxu0
    %7388 = vdwg.mxu0
    %v7389 = vadd.f32 %v7235, %v7345
    %v7390 = vadd.f32 %v7236, %v7354
    %v7391 = vadd.f32 %v7237, %v7371
    %v7392 = vadd.f32 %v7238, %v7380
    %v7393 = vld [vmem:[%s6] sm:$0x1]
    %v7395 = vlaneseq
    %v7396 = vshrl.u32 %v7395, 7
    %v7397 = vsub.s32 0, %v7396
    %v7398 = vrot.slane %v7393, %v7397
    %v7400 = vadd.f32 %v7389, %v7398
    %v7401 = vadd.f32 %v7390, %v7398
    %v7402 = vadd.f32 %v7391, %v7398
    %v7403 = vadd.f32 %v7392, %v7398
    %v7404 = vmax.f32 %v7400, 0.0
    %v7405 = vmax.f32 %v7401, 0.0
    %v7406 = vmax.f32 %v7402, 0.0
    %v7407 = vmax.f32 %v7403, 0.0
    %v7408 = vpack.c.bf16 %v7404, %v7404
    %v7409 = vpack.c.bf16 %v7406, %v7406
    %v7410 = vpack.c.bf16 %v7405, %v7405
    %v7411 = vpack.c.bf16 %v7407, %v7407
    %s7412 = scalar_lea.vmem %s7, 64
    %v7413 = vld [vmem:[%s7412] sm:$0xf]
    %v7414 = vld [vmem:[%s7412 + $0x4] sm:$0xf]
    %v7415 = vld [vmem:[%s7412 + $0x8] sm:$0xf]
    %v7416 = vld [vmem:[%s7412 + $0xc] sm:$0xf]
    %s7417 = scalar_lea.vmem %s7, 80
    %v7418 = vld [vmem:[%s7417] sm:$0xf]
    %v7419 = vld [vmem:[%s7417 + $0x4] sm:$0xf]
    %v7420 = vld [vmem:[%s7417 + $0x8] sm:$0xf]
    %v7421 = vld [vmem:[%s7417 + $0xc] sm:$0xf]
    %v7424 = vunpack.c.l.b16 %v7408
    %v7425 = vunpack.c.l.b16 %v7409
    %v7426 = vrot.slane %v7424, 5
    %v7427 = vrot.slane %v7425, 4
    %vm7428 = vcmask 1041409
    %v7429 = vsel %vm7428, %v7427, %v7426
    %v7430 = vpack.c.b16 %v7429, %v7429
    %v7435 = vunpack.c.l.b16 %v7418
    %v7436 = vunpack.c.l.b16 %v7419
    %v7437 = vunpack.c.l.b16 %v7420
    %v7438 = vunpack.c.l.b16 %v7421
    %v7439 = vpack.c.b16 %v7436, %v7435
    %v7440 = vpack.c.b16 %v7438, %v7437
    %v7444 = vsel %vm5956, %v7430, 0
    %7446 = vmatprep.subr.bf16.mxu0 0
    %7447 = vmatpush1.bf16.msra.mxu0 %v7439
    %7448 = vmatprep.subr.bf16.mxu0 0
    %7449 = vmatpush1.bf16.msra.mxu0 %v7440
    %7450 = vmatprep.subr.bf16.mxu0 0
    %7451 = vmatpush1.bf16.msra.mxu0 0
    %7452 = vmatprep.subr.bf16.mxu0 0
    %7453 = vmatpush1.bf16.msra.mxu0 0
    %7454 = vmatprep.subr.bf16.mxu0 0
    %7455 = vmatpush1.bf16.msra.mxu0 0
    %7456 = vmatprep.subr.bf16.mxu0 0
    %7457 = vmatpush1.bf16.msra.mxu0 0
    %7458 = vmatprep.subr.bf16.mxu0 0
    %7459 = vmatpush1.bf16.msra.mxu0 0
    %7460 = vmatprep.subr.bf16.mxu0 0
    %7461 = vmatpush1.bf16.msra.mxu0 0
    %7462 = vmatprep.subr.bf16.mxu0 0
    %7463 = vmatpush1.bf16.msra.mxu0 0
    %7464 = vmatprep.subr.bf16.mxu0 0
    %7465 = vmatpush1.bf16.msra.mxu0 0
    %7466 = vmatprep.subr.bf16.mxu0 0
    %7467 = vmatpush1.bf16.msra.mxu0 0
    %7468 = vmatprep.subr.bf16.mxu0 0
    %7469 = vmatpush1.bf16.msra.mxu0 0
    %7470 = vmatprep.subr.bf16.mxu0 0
    %7471 = vmatpush1.bf16.msra.mxu0 0
    %7472 = vmatprep.subr.bf16.mxu0 0
    %7473 = vmatpush1.bf16.msra.mxu0 0
    %7474 = vmatprep.subr.bf16.mxu0 0
    %7475 = vmatpush1.bf16.msra.mxu0 0
    %7476 = vmatprep.subr.bf16.mxu0 0
    %7477 = vmatpush1.bf16.msra.mxu0 0
    %7478 = vmatprep.mubr.bf16.mxu0 0
    %7479 = vmatmul.mubr.bf16.gmra.mrb[0].mxu0 %v7444
    %v7480 = vpop.f32.mrb[0].mxu0
    %v7481 = vadd.f32 0.0, %v7480
    %v7482 = vpop.f32.mrb[0].mxu0
    %v7483 = vpop.f32.mrb[0].mxu0
    %v7484 = vpop.f32.mrb[0].mxu0
    %7485 = vdwg.mxu0
    %v7486 = vrot.slane %v7424, 2
    %v7487 = vrot.slane %v7425, 1
    %v7488 = vsel %vm7428, %v7487, %v7486
    %v7489 = vpack.c.b16 %v7488, %v7488
    %v7494 = vunpack.c.l.b16 %v7413
    %v7495 = vunpack.c.l.b16 %v7414
    %v7496 = vunpack.c.l.b16 %v7415
    %v7497 = vunpack.c.l.b16 %v7416
    %v7498 = vpack.c.b16 %v7495, %v7494
    %v7499 = vpack.c.b16 %v7497, %v7496
    %v7503 = vsel %vm5956, %v7489, 0
    %7505 = vmatprep.subr.bf16.mxu0 0
    %7506 = vmatpush1.bf16.msra.mxu0 %v7498
    %7507 = vmatprep.subr.bf16.mxu0 0
    %7508 = vmatpush1.bf16.msra.mxu0 %v7499
    %7509 = vmatprep.subr.bf16.mxu0 0
    %7510 = vmatpush1.bf16.msra.mxu0 0
    %7511 = vmatprep.subr.bf16.mxu0 0
    %7512 = vmatpush1.bf16.msra.mxu0 0
    %7513 = vmatprep.subr.bf16.mxu0 0
    %7514 = vmatpush1.bf16.msra.mxu0 0
    %7515 = vmatprep.subr.bf16.mxu0 0
    %7516 = vmatpush1.bf16.msra.mxu0 0
    %7517 = vmatprep.subr.bf16.mxu0 0
    %7518 = vmatpush1.bf16.msra.mxu0 0
    %7519 = vmatprep.subr.bf16.mxu0 0
    %7520 = vmatpush1.bf16.msra.mxu0 0
    %7521 = vmatprep.subr.bf16.mxu0 0
    %7522 = vmatpush1.bf16.msra.mxu0 0
    %7523 = vmatprep.subr.bf16.mxu0 0
    %7524 = vmatpush1.bf16.msra.mxu0 0
    %7525 = vmatprep.subr.bf16.mxu0 0
    %7526 = vmatpush1.bf16.msra.mxu0 0
    %7527 = vmatprep.subr.bf16.mxu0 0
    %7528 = vmatpush1.bf16.msra.mxu0 0
    %7529 = vmatprep.subr.bf16.mxu0 0
    %7530 = vmatpush1.bf16.msra.mxu0 0
    %7531 = vmatprep.subr.bf16.mxu0 0
    %7532 = vmatpush1.bf16.msra.mxu0 0
    %7533 = vmatprep.subr.bf16.mxu0 0
    %7534 = vmatpush1.bf16.msra.mxu0 0
    %7535 = vmatprep.subr.bf16.mxu0 0
    %7536 = vmatpush1.bf16.msra.mxu0 0
    %7537 = vmatprep.mubr.bf16.mxu0 0
    %7538 = vmatmul.mubr.bf16.gmra.mrb[0].mxu0 %v7503
    %v7539 = vpop.f32.mrb[0].mxu0
    %v7540 = vadd.f32 %v7481, %v7539
    %v7541 = vpop.f32.mrb[0].mxu0
    %v7542 = vpop.f32.mrb[0].mxu0
    %v7543 = vpop.f32.mrb[0].mxu0
    %7544 = vdwg.mxu0
    %s7545 = scalar_lea.vmem %s7, 112
    %v7546 = vld [vmem:[%s7545] sm:$0xf]
    %v7547 = vld [vmem:[%s7545 + $0x4] sm:$0xf]
    %v7548 = vld [vmem:[%s7545 + $0x8] sm:$0xf]
    %v7549 = vld [vmem:[%s7545 + $0xc] sm:$0xf]
    %v7552 = vunpack.c.l.b16 %v7410
    %v7553 = vunpack.c.l.b16 %v7411
    %v7554 = vrot.slane %v7552, 2
    %v7555 = vrot.slane %v7553, 1
    %v7556 = vsel %vm7428, %v7555, %v7554
    %v7557 = vpack.c.b16 %v7556, %v7556
    %v7562 = vunpack.c.l.b16 %v7546
    %v7563 = vunpack.c.l.b16 %v7547
    %v7564 = vunpack.c.l.b16 %v7548
    %v7565 = vunpack.c.l.b16 %v7549
    %v7566 = vpack.c.b16 %v7563, %v7562
    %v7567 = vpack.c.b16 %v7565, %v7564
    %v7571 = vsel %vm5956, %v7557, 0
    %7573 = vmatprep.subr.bf16.mxu0 0
    %7574 = vmatpush1.bf16.msra.mxu0 %v7566
    %7575 = vmatprep.subr.bf16.mxu0 0
    %7576 = vmatpush1.bf16.msra.mxu0 %v7567
    %7577 = vmatprep.subr.bf16.mxu0 0
    %7578 = vmatpush1.bf16.msra.mxu0 0
    %7579 = vmatprep.subr.bf16.mxu0 0
    %7580 = vmatpush1.bf16.msra.mxu0 0
    %7581 = vmatprep.subr.bf16.mxu0 0
    %7582 = vmatpush1.bf16.msra.mxu0 0
    %7583 = vmatprep.subr.bf16.mxu0 0
    %7584 = vmatpush1.bf16.msra.mxu0 0
    %7585 = vmatprep.subr.bf16.mxu0 0
    %7586 = vmatpush1.bf16.msra.mxu0 0
    %7587 = vmatprep.subr.bf16.mxu0 0
    %7588 = vmatpush1.bf16.msra.mxu0 0
    %7589 = vmatprep.subr.bf16.mxu0 0
    %7590 = vmatpush1.bf16.msra.mxu0 0
    %7591 = vmatprep.subr.bf16.mxu0 0
    %7592 = vmatpush1.bf16.msra.mxu0 0
    %7593 = vmatprep.subr.bf16.mxu0 0
    %7594 = vmatpush1.bf16.msra.mxu0 0
    %7595 = vmatprep.subr.bf16.mxu0 0
    %7596 = vmatpush1.bf16.msra.mxu0 0
    %7597 = vmatprep.subr.bf16.mxu0 0
    %7598 = vmatpush1.bf16.msra.mxu0 0
    %7599 = vmatprep.subr.bf16.mxu0 0
    %7600 = vmatpush1.bf16.msra.mxu0 0
    %7601 = vmatprep.subr.bf16.mxu0 0
    %7602 = vmatpush1.bf16.msra.mxu0 0
    %7603 = vmatprep.subr.bf16.mxu0 0
    %7604 = vmatpush1.bf16.msra.mxu0 0
    %7605 = vmatprep.mubr.bf16.mxu0 0
    %7606 = vmatmul.mubr.bf16.gmra.mrb[0].mxu0 %v7571
    %v7607 = vpop.f32.mrb[0].mxu0
    %v7608 = vadd.f32 0.0, %v7607
    %v7609 = vpop.f32.mrb[0].mxu0
    %v7610 = vpop.f32.mrb[0].mxu0
    %v7611 = vpop.f32.mrb[0].mxu0
    %7612 = vdwg.mxu0
    %v7613 = vadd.f32 %v7540, %v7608
    %s7614 = scalar_lea.vmem %s7, 128
    %v7615 = vld [vmem:[%s7614] sm:$0xf]
    %v7616 = vld [vmem:[%s7614 + $0x4] sm:$0xf]
    %v7617 = vld [vmem:[%s7614 + $0x8] sm:$0xf]
    %v7618 = vld [vmem:[%s7614 + $0xc] sm:$0xf]
    %v7619 = vrot.slane %v7552, 5
    %v7620 = vrot.slane %v7553, 4
    %v7621 = vsel %vm7428, %v7620, %v7619
    %v7622 = vpack.c.b16 %v7621, %v7621
    %v7627 = vunpack.c.l.b16 %v7615
    %v7628 = vunpack.c.l.b16 %v7616
    %v7629 = vunpack.c.l.b16 %v7617
    %v7630 = vunpack.c.l.b16 %v7618
    %v7631 = vpack.c.b16 %v7628, %v7627
    %v7632 = vpack.c.b16 %v7630, %v7629
    %v7636 = vsel %vm5956, %v7622, 0
    %7638 = vmatprep.subr.bf16.mxu0 0
    %7639 = vmatpush1.bf16.msra.mxu0 %v7631
    %7640 = vmatprep.subr.bf16.mxu0 0
    %7641 = vmatpush1.bf16.msra.mxu0 %v7632
    %7642 = vmatprep.subr.bf16.mxu0 0
    %7643 = vmatpush1.bf16.msra.mxu0 0
    %7644 = vmatprep.subr.bf16.mxu0 0
    %7645 = vmatpush1.bf16.msra.mxu0 0
    %7646 = vmatprep.subr.bf16.mxu0 0
    %7647 = vmatpush1.bf16.msra.mxu0 0
    %7648 = vmatprep.subr.bf16.mxu0 0
    %7649 = vmatpush1.bf16.msra.mxu0 0
    %7650 = vmatprep.subr.bf16.mxu0 0
    %7651 = vmatpush1.bf16.msra.mxu0 0
    %7652 = vmatprep.subr.bf16.mxu0 0
    %7653 = vmatpush1.bf16.msra.mxu0 0
    %7654 = vmatprep.subr.bf16.mxu0 0
    %7655 = vmatpush1.bf16.msra.mxu0 0
    %7656 = vmatprep.subr.bf16.mxu0 0
    %7657 = vmatpush1.bf16.msra.mxu0 0
    %7658 = vmatprep.subr.bf16.mxu0 0
    %7659 = vmatpush1.bf16.msra.mxu0 0
    %7660 = vmatprep.subr.bf16.mxu0 0
    %7661 = vmatpush1.bf16.msra.mxu0 0
    %7662 = vmatprep.subr.bf16.mxu0 0
    %7663 = vmatpush1.bf16.msra.mxu0 0
    %7664 = vmatprep.subr.bf16.mxu0 0
    %7665 = vmatpush1.bf16.msra.mxu0 0
    %7666 = vmatprep.subr.bf16.mxu0 0
    %7667 = vmatpush1.bf16.msra.mxu0 0
    %7668 = vmatprep.subr.bf16.mxu0 0
    %7669 = vmatpush1.bf16.msra.mxu0 0
    %7670 = vmatprep.mubr.bf16.mxu0 0
    %7671 = vmatmul.mubr.bf16.gmra.mrb[0].mxu0 %v7636
    %v7672 = vpop.f32.mrb[0].mxu0
    %v7673 = vadd.f32 0.0, %v7672
    %v7674 = vpop.f32.mrb[0].mxu0
    %v7675 = vpop.f32.mrb[0].mxu0
    %v7676 = vpop.f32.mrb[0].mxu0
    %7677 = vdwg.mxu0
    %v7678 = vadd.f32 %v7613, %v7673
    %v7679 = vld [vmem:[%s8] sm:$0x1]
    %v7681 = vlaneseq
    %v7682 = vshrl.u32 %v7681, 7
    %v7683 = vsub.s32 0, %v7682
    %v7684 = vrot.slane %v7679, %v7683
    %v7686 = vadd.f32 %v7678, %v7684
    %v7687 = vpack.c.bf16 %v7686, %v7686
    %v7688 = vld [vmem:[%s9] sm:$0xf]
    %v7689 = vld [vmem:[%s9 + $0x4] sm:$0xf]
    %v7690 = vld [vmem:[%s9 + $0x8] sm:$0xf]
    %v7691 = vld [vmem:[%s9 + $0xc] sm:$0xf]
    %s7692 = scalar_lea.vmem %s7, 48
    %v7693 = vld [vmem:[%s7692] sm:$0xf]
    %v7694 = vld [vmem:[%s7692 + $0x4] sm:$0xf]
    %v7695 = vld [vmem:[%s7692 + $0x8] sm:$0xf]
    %v7696 = vld [vmem:[%s7692 + $0xc] sm:$0xf]
    %7697 = vmatprep.subr.bf16.mxu0 0
    %7698 = vmatpush1.bf16.msra.mxu0 %v7498
    %7699 = vmatprep.subr.bf16.mxu0 0
    %7700 = vmatpush1.bf16.msra.mxu0 %v7499
    %7701 = vmatprep.subr.bf16.mxu0 0
    %7702 = vmatpush1.bf16.msra.mxu0 0
    %7703 = vmatprep.subr.bf16.mxu0 0
    %7704 = vmatpush1.bf16.msra.mxu0 0
    %7705 = vmatprep.subr.bf16.mxu0 0
    %7706 = vmatpush1.bf16.msra.mxu0 0
    %7707 = vmatprep.subr.bf16.mxu0 0
    %7708 = vmatpush1.bf16.msra.mxu0 0
    %7709 = vmatprep.subr.bf16.mxu0 0
    %7710 = vmatpush1.bf16.msra.mxu0 0
    %7711 = vmatprep.subr.bf16.mxu0 0
    %7712 = vmatpush1.bf16.msra.mxu0 0
    %7713 = vmatprep.subr.bf16.mxu0 0
    %7714 = vmatpush1.bf16.msra.mxu0 0
    %7715 = vmatprep.subr.bf16.mxu0 0
    %7716 = vmatpush1.bf16.msra.mxu0 0
    %7717 = vmatprep.subr.bf16.mxu0 0
    %7718 = vmatpush1.bf16.msra.mxu0 0
    %7719 = vmatprep.subr.bf16.mxu0 0
    %7720 = vmatpush1.bf16.msra.mxu0 0
    %7721 = vmatprep.subr.bf16.mxu0 0
    %7722 = vmatpush1.bf16.msra.mxu0 0
    %7723 = vmatprep.subr.bf16.mxu0 0
    %7724 = vmatpush1.bf16.msra.mxu0 0
    %7725 = vmatprep.subr.bf16.mxu0 0
    %7726 = vmatpush1.bf16.msra.mxu0 0
    %7727 = vmatprep.subr.bf16.mxu0 0
    %7728 = vmatpush1.bf16.msra.mxu0 0
    %7729 = vmatprep.mubr.bf16.mxu0 0
    %7730 = vmatmul.mubr.bf16.gmra.mrb[0].mxu0 %v7444
    %v7731 = vpop.f32.mrb[0].mxu0
    %v7732 = vadd.f32 0.0, %v7731
    %v7733 = vpop.f32.mrb[0].mxu0
    %v7734 = vpop.f32.mrb[0].mxu0
    %v7735 = vpop.f32.mrb[0].mxu0
    %7736 = vdwg.mxu0
    %v7741 = vunpack.c.l.b16 %v7693
    %v7742 = vunpack.c.l.b16 %v7694
    %v7743 = vunpack.c.l.b16 %v7695
    %v7744 = vunpack.c.l.b16 %v7696
    %v7745 = vpack.c.b16 %v7742, %v7741
    %v7746 = vpack.c.b16 %v7744, %v7743
    %7749 = vmatprep.subr.bf16.mxu0 0
    %7750 = vmatpush1.bf16.msra.mxu0 %v7745
    %7751 = vmatprep.subr.bf16.mxu0 0
    %7752 = vmatpush1.bf16.msra.mxu0 %v7746
    %7753 = vmatprep.subr.bf16.mxu0 0
    %7754 = vmatpush1.bf16.msra.mxu0 0
    %7755 = vmatprep.subr.bf16.mxu0 0
    %7756 = vmatpush1.bf16.msra.mxu0 0
    %7757 = vmatprep.subr.bf16.mxu0 0
    %7758 = vmatpush1.bf16.msra.mxu0 0
    %7759 = vmatprep.subr.bf16.mxu0 0
    %7760 = vmatpush1.bf16.msra.mxu0 0
    %7761 = vmatprep.subr.bf16.mxu0 0
    %7762 = vmatpush1.bf16.msra.mxu0 0
    %7763 = vmatprep.subr.bf16.mxu0 0
    %7764 = vmatpush1.bf16.msra.mxu0 0
    %7765 = vmatprep.subr.bf16.mxu0 0
    %7766 = vmatpush1.bf16.msra.mxu0 0
    %7767 = vmatprep.subr.bf16.mxu0 0
    %7768 = vmatpush1.bf16.msra.mxu0 0
    %7769 = vmatprep.subr.bf16.mxu0 0
    %7770 = vmatpush1.bf16.msra.mxu0 0
    %7771 = vmatprep.subr.bf16.mxu0 0
    %7772 = vmatpush1.bf16.msra.mxu0 0
    %7773 = vmatprep.subr.bf16.mxu0 0
    %7774 = vmatpush1.bf16.msra.mxu0 0
    %7775 = vmatprep.subr.bf16.mxu0 0
    %7776 = vmatpush1.bf16.msra.mxu0 0
    %7777 = vmatprep.subr.bf16.mxu0 0
    %7778 = vmatpush1.bf16.msra.mxu0 0
    %7779 = vmatprep.subr.bf16.mxu0 0
    %7780 = vmatpush1.bf16.msra.mxu0 0
    %7781 = vmatprep.mubr.bf16.mxu0 0
    %7782 = vmatmul.mubr.bf16.gmra.mrb[0].mxu0 %v7503
    %v7783 = vpop.f32.mrb[0].mxu0
    %v7784 = vadd.f32 %v7732, %v7783
    %v7785 = vpop.f32.mrb[0].mxu0
    %v7786 = vpop.f32.mrb[0].mxu0
    %v7787 = vpop.f32.mrb[0].mxu0
    %7788 = vdwg.mxu0
    %s7789 = scalar_lea.vmem %s7, 96
    %v7790 = vld [vmem:[%s7789] sm:$0xf]
    %v7791 = vld [vmem:[%s7789 + $0x4] sm:$0xf]
    %v7792 = vld [vmem:[%s7789 + $0x8] sm:$0xf]
    %v7793 = vld [vmem:[%s7789 + $0xc] sm:$0xf]
    %v7798 = vunpack.c.l.b16 %v7790
    %v7799 = vunpack.c.l.b16 %v7791
    %v7800 = vunpack.c.l.b16 %v7792
    %v7801 = vunpack.c.l.b16 %v7793
    %v7802 = vpack.c.b16 %v7799, %v7798
    %v7803 = vpack.c.b16 %v7801, %v7800
    %7806 = vmatprep.subr.bf16.mxu0 0
    %7807 = vmatpush1.bf16.msra.mxu0 %v7802
    %7808 = vmatprep.subr.bf16.mxu0 0
    %7809 = vmatpush1.bf16.msra.mxu0 %v7803
    %7810 = vmatprep.subr.bf16.mxu0 0
    %7811 = vmatpush1.bf16.msra.mxu0 0
    %7812 = vmatprep.subr.bf16.mxu0 0
    %7813 = vmatpush1.bf16.msra.mxu0 0
    %7814 = vmatprep.subr.bf16.mxu0 0
    %7815 = vmatpush1.bf16.msra.mxu0 0
    %7816 = vmatprep.subr.bf16.mxu0 0
    %7817 = vmatpush1.bf16.msra.mxu0 0
    %7818 = vmatprep.subr.bf16.mxu0 0
    %7819 = vmatpush1.bf16.msra.mxu0 0
    %7820 = vmatprep.subr.bf16.mxu0 0
    %7821 = vmatpush1.bf16.msra.mxu0 0
    %7822 = vmatprep.subr.bf16.mxu0 0
    %7823 = vmatpush1.bf16.msra.mxu0 0
    %7824 = vmatprep.subr.bf16.mxu0 0
    %7825 = vmatpush1.bf16.msra.mxu0 0
    %7826 = vmatprep.subr.bf16.mxu0 0
    %7827 = vmatpush1.bf16.msra.mxu0 0
    %7828 = vmatprep.subr.bf16.mxu0 0
    %7829 = vmatpush1.bf16.msra.mxu0 0
    %7830 = vmatprep.subr.bf16.mxu0 0
    %7831 = vmatpush1.bf16.msra.mxu0 0
    %7832 = vmatprep.subr.bf16.mxu0 0
    %7833 = vmatpush1.bf16.msra.mxu0 0
    %7834 = vmatprep.subr.bf16.mxu0 0
    %7835 = vmatpush1.bf16.msra.mxu0 0
    %7836 = vmatprep.subr.bf16.mxu0 0
    %7837 = vmatpush1.bf16.msra.mxu0 0
    %7838 = vmatprep.mubr.bf16.mxu0 0
    %7839 = vmatmul.mubr.bf16.gmra.mrb[0].mxu0 %v7571
    %v7840 = vpop.f32.mrb[0].mxu0
    %v7841 = vadd.f32 0.0, %v7840
    %v7842 = vpop.f32.mrb[0].mxu0
    %v7843 = vpop.f32.mrb[0].mxu0
    %v7844 = vpop.f32.mrb[0].mxu0
    %7845 = vdwg.mxu0
    %v7846 = vadd.f32 %v7784, %v7841
    %7847 = vmatprep.subr.bf16.mxu0 0
    %7848 = vmatpush1.bf16.msra.mxu0 %v7566
    %7849 = vmatprep.subr.bf16.mxu0 0
    %7850 = vmatpush1.bf16.msra.mxu0 %v7567
    %7851 = vmatprep.subr.bf16.mxu0 0
    %7852 = vmatpush1.bf16.msra.mxu0 0
    %7853 = vmatprep.subr.bf16.mxu0 0
    %7854 = vmatpush1.bf16.msra.mxu0 0
    %7855 = vmatprep.subr.bf16.mxu0 0
    %7856 = vmatpush1.bf16.msra.mxu0 0
    %7857 = vmatprep.subr.bf16.mxu0 0
    %7858 = vmatpush1.bf16.msra.mxu0 0
    %7859 = vmatprep.subr.bf16.mxu0 0
    %7860 = vmatpush1.bf16.msra.mxu0 0
    %7861 = vmatprep.subr.bf16.mxu0 0
    %7862 = vmatpush1.bf16.msra.mxu0 0
    %7863 = vmatprep.subr.bf16.mxu0 0
    %7864 = vmatpush1.bf16.msra.mxu0 0
    %7865 = vmatprep.subr.bf16.mxu0 0
    %7866 = vmatpush1.bf16.msra.mxu0 0
    %7867 = vmatprep.subr.bf16.mxu0 0
    %7868 = vmatpush1.bf16.msra.mxu0 0
    %7869 = vmatprep.subr.bf16.mxu0 0
    %7870 = vmatpush1.bf16.msra.mxu0 0
    %7871 = vmatprep.subr.bf16.mxu0 0
    %7872 = vmatpush1.bf16.msra.mxu0 0
    %7873 = vmatprep.subr.bf16.mxu0 0
    %7874 = vmatpush1.bf16.msra.mxu0 0
    %7875 = vmatprep.subr.bf16.mxu0 0
    %7876 = vmatpush1.bf16.msra.mxu0 0
    %7877 = vmatprep.subr.bf16.mxu0 0
    %7878 = vmatpush1.bf16.msra.mxu0 0
    %7879 = vmatprep.mubr.bf16.mxu0 0
    %7880 = vmatmul.mubr.bf16.gmra.mrb[0].mxu0 %v7636
    %v7881 = vpop.f32.mrb[0].mxu0
    %v7882 = vadd.f32 0.0, %v7881
    %v7883 = vpop.f32.mrb[0].mxu0
    %v7884 = vpop.f32.mrb[0].mxu0
    %v7885 = vpop.f32.mrb[0].mxu0
    %7886 = vdwg.mxu0
    %v7887 = vadd.f32 %v7846, %v7882
    %v7888 = vadd.f32 %v7887, %v7684
    %v7889 = vpack.c.bf16 %v7888, %v7888
    %s7890 = scalar_lea.vmem %s9, 16
    %v7891 = vld [vmem:[%s7890] sm:$0xf]
    %v7892 = vld [vmem:[%s7890 + $0x4] sm:$0xf]
    %v7893 = vld [vmem:[%s7890 + $0x8] sm:$0xf]
    %v7894 = vld [vmem:[%s7890 + $0xc] sm:$0xf]
    %v7899 = vunpack.c.l.b16 %v7891
    %v7900 = vunpack.c.l.b16 %v7892
    %v7901 = vunpack.c.l.b16 %v7893
    %v7902 = vunpack.c.l.b16 %v7894
    %v7903 = vpack.c.b16 %v7900, %v7899
    %v7904 = vpack.c.b16 %v7902, %v7901
    %v7908 = vsel %vm5956, %v7889, 0
    %7910 = vmatprep.subr.bf16.mxu0 0
    %7911 = vmatpush1.bf16.msra.mxu0 %v7903
    %7912 = vmatprep.subr.bf16.mxu0 0
    %7913 = vmatpush1.bf16.msra.mxu0 %v7904
    %7914 = vmatprep.subr.bf16.mxu0 0
    %7915 = vmatpush1.bf16.msra.mxu0 0
    %7916 = vmatprep.subr.bf16.mxu0 0
    %7917 = vmatpush1.bf16.msra.mxu0 0
    %7918 = vmatprep.subr.bf16.mxu0 0
    %7919 = vmatpush1.bf16.msra.mxu0 0
    %7920 = vmatprep.subr.bf16.mxu0 0
    %7921 = vmatpush1.bf16.msra.mxu0 0
    %7922 = vmatprep.subr.bf16.mxu0 0
    %7923 = vmatpush1.bf16.msra.mxu0 0
    %7924 = vmatprep.subr.bf16.mxu0 0
    %7925 = vmatpush1.bf16.msra.mxu0 0
    %7926 = vmatprep.subr.bf16.mxu0 0
    %7927 = vmatpush1.bf16.msra.mxu0 0
    %7928 = vmatprep.subr.bf16.mxu0 0
    %7929 = vmatpush1.bf16.msra.mxu0 0
    %7930 = vmatprep.subr.bf16.mxu0 0
    %7931 = vmatpush1.bf16.msra.mxu0 0
    %7932 = vmatprep.subr.bf16.mxu0 0
    %7933 = vmatpush1.bf16.msra.mxu0 0
    %7934 = vmatprep.subr.bf16.mxu0 0
    %7935 = vmatpush1.bf16.msra.mxu0 0
    %7936 = vmatprep.subr.bf16.mxu0 0
    %7937 = vmatpush1.bf16.msra.mxu0 0
    %7938 = vmatprep.subr.bf16.mxu0 0
    %7939 = vmatpush1.bf16.msra.mxu0 0
    %7940 = vmatprep.subr.bf16.mxu0 0
    %7941 = vmatpush1.bf16.msra.mxu0 0
    %7942 = vmatprep.mubr.bf16.mxu0 0
    %7943 = vmatmul.mubr.bf16.gmra.mrb[0].mxu0 %v7908
    %v7944 = vpop.f32.mrb[0].mxu0
    %v7945 = vadd.f32 0.0, %v7944
    %v7946 = vpop.f32.mrb[0].mxu0
    %v7947 = vpop.f32.mrb[0].mxu0
    %v7948 = vpop.f32.mrb[0].mxu0
    %7949 = vdwg.mxu0
    %v7954 = vunpack.c.l.b16 %v7688
    %v7955 = vunpack.c.l.b16 %v7689
    %v7956 = vunpack.c.l.b16 %v7690
    %v7957 = vunpack.c.l.b16 %v7691
    %v7958 = vpack.c.b16 %v7955, %v7954
    %v7959 = vpack.c.b16 %v7957, %v7956
    %v7963 = vsel %vm5956, %v7687, 0
    %7965 = vmatprep.subr.bf16.mxu0 0
    %7966 = vmatpush1.bf16.msra.mxu0 %v7958
    %7967 = vmatprep.subr.bf16.mxu0 0
    %7968 = vmatpush1.bf16.msra.mxu0 %v7959
    %7969 = vmatprep.subr.bf16.mxu0 0
    %7970 = vmatpush1.bf16.msra.mxu0 0
    %7971 = vmatprep.subr.bf16.mxu0 0
    %7972 = vmatpush1.bf16.msra.mxu0 0
    %7973 = vmatprep.subr.bf16.mxu0 0
    %7974 = vmatpush1.bf16.msra.mxu0 0
    %7975 = vmatprep.subr.bf16.mxu0 0
    %7976 = vmatpush1.bf16.msra.mxu0 0
    %7977 = vmatprep.subr.bf16.mxu0 0
    %7978 = vmatpush1.bf16.msra.mxu0 0
    %7979 = vmatprep.subr.bf16.mxu0 0
    %7980 = vmatpush1.bf16.msra.mxu0 0
    %7981 = vmatprep.subr.bf16.mxu0 0
    %7982 = vmatpush1.bf16.msra.mxu0 0
    %7983 = vmatprep.subr.bf16.mxu0 0
    %7984 = vmatpush1.bf16.msra.mxu0 0
    %7985 = vmatprep.subr.bf16.mxu0 0
    %7986 = vmatpush1.bf16.msra.mxu0 0
    %7987 = vmatprep.subr.bf16.mxu0 0
    %7988 = vmatpush1.bf16.msra.mxu0 0
    %7989 = vmatprep.subr.bf16.mxu0 0
    %7990 = vmatpush1.bf16.msra.mxu0 0
    %7991 = vmatprep.subr.bf16.mxu0 0
    %7992 = vmatpush1.bf16.msra.mxu0 0
    %7993 = vmatprep.subr.bf16.mxu0 0
    %7994 = vmatpush1.bf16.msra.mxu0 0
    %7995 = vmatprep.subr.bf16.mxu0 0
    %7996 = vmatpush1.bf16.msra.mxu0 0
    %7997 = vmatprep.mubr.bf16.mxu0 0
    %7998 = vmatmul.mubr.bf16.gmra.mrb[0].mxu0 %v7963
    %v7999 = vpop.f32.mrb[0].mxu0
    %v8000 = vadd.f32 %v7945, %v7999
    %v8001 = vpop.f32.mrb[0].mxu0
    %v8002 = vpop.f32.mrb[0].mxu0
    %v8003 = vpop.f32.mrb[0].mxu0
    %8004 = vdwg.mxu0
    %s8005 = scalar_lea.vmem %s7, 16
    %v8006 = vld [vmem:[%s8005] sm:$0xf]
    %v8007 = vld [vmem:[%s8005 + $0x4] sm:$0xf]
    %v8008 = vld [vmem:[%s8005 + $0x8] sm:$0xf]
    %v8009 = vld [vmem:[%s8005 + $0xc] sm:$0xf]
    %s8010 = scalar_lea.vmem %s7, 32
    %v8011 = vld [vmem:[%s8010] sm:$0xf]
    %v8012 = vld [vmem:[%s8010 + $0x4] sm:$0xf]
    %v8013 = vld [vmem:[%s8010 + $0x8] sm:$0xf]
    %v8014 = vld [vmem:[%s8010 + $0xc] sm:$0xf]
    %v8019 = vunpack.c.l.b16 %v8011
    %v8020 = vunpack.c.l.b16 %v8012
    %v8021 = vunpack.c.l.b16 %v8013
    %v8022 = vunpack.c.l.b16 %v8014
    %v8023 = vpack.c.b16 %v8020, %v8019
    %v8024 = vpack.c.b16 %v8022, %v8021
    %8027 = vmatprep.subr.bf16.mxu0 0
    %8028 = vmatpush1.bf16.msra.mxu0 %v8023
    %8029 = vmatprep.subr.bf16.mxu0 0
    %8030 = vmatpush1.bf16.msra.mxu0 %v8024
    %8031 = vmatprep.subr.bf16.mxu0 0
    %8032 = vmatpush1.bf16.msra.mxu0 0
    %8033 = vmatprep.subr.bf16.mxu0 0
    %8034 = vmatpush1.bf16.msra.mxu0 0
    %8035 = vmatprep.subr.bf16.mxu0 0
    %8036 = vmatpush1.bf16.msra.mxu0 0
    %8037 = vmatprep.subr.bf16.mxu0 0
    %8038 = vmatpush1.bf16.msra.mxu0 0
    %8039 = vmatprep.subr.bf16.mxu0 0
    %8040 = vmatpush1.bf16.msra.mxu0 0
    %8041 = vmatprep.subr.bf16.mxu0 0
    %8042 = vmatpush1.bf16.msra.mxu0 0
    %8043 = vmatprep.subr.bf16.mxu0 0
    %8044 = vmatpush1.bf16.msra.mxu0 0
    %8045 = vmatprep.subr.bf16.mxu0 0
    %8046 = vmatpush1.bf16.msra.mxu0 0
    %8047 = vmatprep.subr.bf16.mxu0 0
    %8048 = vmatpush1.bf16.msra.mxu0 0
    %8049 = vmatprep.subr.bf16.mxu0 0
    %8050 = vmatpush1.bf16.msra.mxu0 0
    %8051 = vmatprep.subr.bf16.mxu0 0
    %8052 = vmatpush1.bf16.msra.mxu0 0
    %8053 = vmatprep.subr.bf16.mxu0 0
    %8054 = vmatpush1.bf16.msra.mxu0 0
    %8055 = vmatprep.subr.bf16.mxu0 0
    %8056 = vmatpush1.bf16.msra.mxu0 0
    %8057 = vmatprep.subr.bf16.mxu0 0
    %8058 = vmatpush1.bf16.msra.mxu0 0
    %8059 = vmatprep.mubr.bf16.mxu0 0
    %8060 = vmatmul.mubr.bf16.gmra.mrb[0].mxu0 %v7444
    %v8061 = vpop.f32.mrb[0].mxu0
    %v8062 = vadd.f32 0.0, %v8061
    %v8063 = vpop.f32.mrb[0].mxu0
    %v8064 = vpop.f32.mrb[0].mxu0
    %v8065 = vpop.f32.mrb[0].mxu0
    %8066 = vdwg.mxu0
    %v8071 = vunpack.c.l.b16 %v8006
    %v8072 = vunpack.c.l.b16 %v8007
    %v8073 = vunpack.c.l.b16 %v8008
    %v8074 = vunpack.c.l.b16 %v8009
    %v8075 = vpack.c.b16 %v8072, %v8071
    %v8076 = vpack.c.b16 %v8074, %v8073
    %8079 = vmatprep.subr.bf16.mxu0 0
    %8080 = vmatpush1.bf16.msra.mxu0 %v8075
    %8081 = vmatprep.subr.bf16.mxu0 0
    %8082 = vmatpush1.bf16.msra.mxu0 %v8076
    %8083 = vmatprep.subr.bf16.mxu0 0
    %8084 = vmatpush1.bf16.msra.mxu0 0
    %8085 = vmatprep.subr.bf16.mxu0 0
    %8086 = vmatpush1.bf16.msra.mxu0 0
    %8087 = vmatprep.subr.bf16.mxu0 0
    %8088 = vmatpush1.bf16.msra.mxu0 0
    %8089 = vmatprep.subr.bf16.mxu0 0
    %8090 = vmatpush1.bf16.msra.mxu0 0
    %8091 = vmatprep.subr.bf16.mxu0 0
    %8092 = vmatpush1.bf16.msra.mxu0 0
    %8093 = vmatprep.subr.bf16.mxu0 0
    %8094 = vmatpush1.bf16.msra.mxu0 0
    %8095 = vmatprep.subr.bf16.mxu0 0
    %8096 = vmatpush1.bf16.msra.mxu0 0
    %8097 = vmatprep.subr.bf16.mxu0 0
    %8098 = vmatpush1.bf16.msra.mxu0 0
    %8099 = vmatprep.subr.bf16.mxu0 0
    %8100 = vmatpush1.bf16.msra.mxu0 0
    %8101 = vmatprep.subr.bf16.mxu0 0
    %8102 = vmatpush1.bf16.msra.mxu0 0
    %8103 = vmatprep.subr.bf16.mxu0 0
    %8104 = vmatpush1.bf16.msra.mxu0 0
    %8105 = vmatprep.subr.bf16.mxu0 0
    %8106 = vmatpush1.bf16.msra.mxu0 0
    %8107 = vmatprep.subr.bf16.mxu0 0
    %8108 = vmatpush1.bf16.msra.mxu0 0
    %8109 = vmatprep.subr.bf16.mxu0 0
    %8110 = vmatpush1.bf16.msra.mxu0 0
    %8111 = vmatprep.mubr.bf16.mxu0 0
    %8112 = vmatmul.mubr.bf16.gmra.mrb[0].mxu0 %v7503
    %v8113 = vpop.f32.mrb[0].mxu0
    %v8114 = vadd.f32 %v8062, %v8113
    %v8115 = vpop.f32.mrb[0].mxu0
    %v8116 = vpop.f32.mrb[0].mxu0
    %v8117 = vpop.f32.mrb[0].mxu0
    %8118 = vdwg.mxu0
    %8119 = vmatprep.subr.bf16.mxu0 0
    %8120 = vmatpush1.bf16.msra.mxu0 %v7498
    %8121 = vmatprep.subr.bf16.mxu0 0
    %8122 = vmatpush1.bf16.msra.mxu0 %v7499
    %8123 = vmatprep.subr.bf16.mxu0 0
    %8124 = vmatpush1.bf16.msra.mxu0 0
    %8125 = vmatprep.subr.bf16.mxu0 0
    %8126 = vmatpush1.bf16.msra.mxu0 0
    %8127 = vmatprep.subr.bf16.mxu0 0
    %8128 = vmatpush1.bf16.msra.mxu0 0
    %8129 = vmatprep.subr.bf16.mxu0 0
    %8130 = vmatpush1.bf16.msra.mxu0 0
    %8131 = vmatprep.subr.bf16.mxu0 0
    %8132 = vmatpush1.bf16.msra.mxu0 0
    %8133 = vmatprep.subr.bf16.mxu0 0
    %8134 = vmatpush1.bf16.msra.mxu0 0
    %8135 = vmatprep.subr.bf16.mxu0 0
    %8136 = vmatpush1.bf16.msra.mxu0 0
    %8137 = vmatprep.subr.bf16.mxu0 0
    %8138 = vmatpush1.bf16.msra.mxu0 0
    %8139 = vmatprep.subr.bf16.mxu0 0
    %8140 = vmatpush1.bf16.msra.mxu0 0
    %8141 = vmatprep.subr.bf16.mxu0 0
    %8142 = vmatpush1.bf16.msra.mxu0 0
    %8143 = vmatprep.subr.bf16.mxu0 0
    %8144 = vmatpush1.bf16.msra.mxu0 0
    %8145 = vmatprep.subr.bf16.mxu0 0
    %8146 = vmatpush1.bf16.msra.mxu0 0
    %8147 = vmatprep.subr.bf16.mxu0 0
    %8148 = vmatpush1.bf16.msra.mxu0 0
    %8149 = vmatprep.subr.bf16.mxu0 0
    %8150 = vmatpush1.bf16.msra.mxu0 0
    %8151 = vmatprep.mubr.bf16.mxu0 0
    %8152 = vmatmul.mubr.bf16.gmra.mrb[0].mxu0 %v7571
    %v8153 = vpop.f32.mrb[0].mxu0
    %v8154 = vadd.f32 0.0, %v8153
    %v8155 = vpop.f32.mrb[0].mxu0
    %v8156 = vpop.f32.mrb[0].mxu0
    %v8157 = vpop.f32.mrb[0].mxu0
    %8158 = vdwg.mxu0
    %v8159 = vadd.f32 %v8114, %v8154
    %8160 = vmatprep.subr.bf16.mxu0 0
    %8161 = vmatpush1.bf16.msra.mxu0 %v7439
    %8162 = vmatprep.subr.bf16.mxu0 0
    %8163 = vmatpush1.bf16.msra.mxu0 %v7440
    %8164 = vmatprep.subr.bf16.mxu0 0
    %8165 = vmatpush1.bf16.msra.mxu0 0
    %8166 = vmatprep.subr.bf16.mxu0 0
    %8167 = vmatpush1.bf16.msra.mxu0 0
    %8168 = vmatprep.subr.bf16.mxu0 0
    %8169 = vmatpush1.bf16.msra.mxu0 0
    %8170 = vmatprep.subr.bf16.mxu0 0
    %8171 = vmatpush1.bf16.msra.mxu0 0
    %8172 = vmatprep.subr.bf16.mxu0 0
    %8173 = vmatpush1.bf16.msra.mxu0 0
    %8174 = vmatprep.subr.bf16.mxu0 0
    %8175 = vmatpush1.bf16.msra.mxu0 0
    %8176 = vmatprep.subr.bf16.mxu0 0
    %8177 = vmatpush1.bf16.msra.mxu0 0
    %8178 = vmatprep.subr.bf16.mxu0 0
    %8179 = vmatpush1.bf16.msra.mxu0 0
    %8180 = vmatprep.subr.bf16.mxu0 0
    %8181 = vmatpush1.bf16.msra.mxu0 0
    %8182 = vmatprep.subr.bf16.mxu0 0
    %8183 = vmatpush1.bf16.msra.mxu0 0
    %8184 = vmatprep.subr.bf16.mxu0 0
    %8185 = vmatpush1.bf16.msra.mxu0 0
    %8186 = vmatprep.subr.bf16.mxu0 0
    %8187 = vmatpush1.bf16.msra.mxu0 0
    %8188 = vmatprep.subr.bf16.mxu0 0
    %8189 = vmatpush1.bf16.msra.mxu0 0
    %8190 = vmatprep.subr.bf16.mxu0 0
    %8191 = vmatpush1.bf16.msra.mxu0 0
    %8192 = vmatprep.mubr.bf16.mxu0 0
    %8193 = vmatmul.mubr.bf16.gmra.mrb[0].mxu0 %v7636
    %v8194 = vpop.f32.mrb[0].mxu0
    %v8195 = vadd.f32 0.0, %v8194
    %v8196 = vpop.f32.mrb[0].mxu0
    %v8197 = vpop.f32.mrb[0].mxu0
    %v8198 = vpop.f32.mrb[0].mxu0
    %8199 = vdwg.mxu0
    %v8200 = vadd.f32 %v8159, %v8195
    %v8201 = vadd.f32 %v8200, %v7684
    %v8202 = vpack.c.bf16 %v8201, %v8201
    %s8203 = scalar_lea.vmem %s9, 32
    %v8204 = vld [vmem:[%s8203] sm:$0xf]
    %v8205 = vld [vmem:[%s8203 + $0x4] sm:$0xf]
    %v8206 = vld [vmem:[%s8203 + $0x8] sm:$0xf]
    %v8207 = vld [vmem:[%s8203 + $0xc] sm:$0xf]
    %v8212 = vunpack.c.l.b16 %v8204
    %v8213 = vunpack.c.l.b16 %v8205
    %v8214 = vunpack.c.l.b16 %v8206
    %v8215 = vunpack.c.l.b16 %v8207
    %v8216 = vpack.c.b16 %v8213, %v8212
    %v8217 = vpack.c.b16 %v8215, %v8214
    %v8221 = vsel %vm5956, %v8202, 0
    %8223 = vmatprep.subr.bf16.mxu0 0
    %8224 = vmatpush1.bf16.msra.mxu0 %v8216
    %8225 = vmatprep.subr.bf16.mxu0 0
    %8226 = vmatpush1.bf16.msra.mxu0 %v8217
    %8227 = vmatprep.subr.bf16.mxu0 0
    %8228 = vmatpush1.bf16.msra.mxu0 0
    %8229 = vmatprep.subr.bf16.mxu0 0
    %8230 = vmatpush1.bf16.msra.mxu0 0
    %8231 = vmatprep.subr.bf16.mxu0 0
    %8232 = vmatpush1.bf16.msra.mxu0 0
    %8233 = vmatprep.subr.bf16.mxu0 0
    %8234 = vmatpush1.bf16.msra.mxu0 0
    %8235 = vmatprep.subr.bf16.mxu0 0
    %8236 = vmatpush1.bf16.msra.mxu0 0
    %8237 = vmatprep.subr.bf16.mxu0 0
    %8238 = vmatpush1.bf16.msra.mxu0 0
    %8239 = vmatprep.subr.bf16.mxu0 0
    %8240 = vmatpush1.bf16.msra.mxu0 0
    %8241 = vmatprep.subr.bf16.mxu0 0
    %8242 = vmatpush1.bf16.msra.mxu0 0
    %8243 = vmatprep.subr.bf16.mxu0 0
    %8244 = vmatpush1.bf16.msra.mxu0 0
    %8245 = vmatprep.subr.bf16.mxu0 0
    %8246 = vmatpush1.bf16.msra.mxu0 0
    %8247 = vmatprep.subr.bf16.mxu0 0
    %8248 = vmatpush1.bf16.msra.mxu0 0
    %8249 = vmatprep.subr.bf16.mxu0 0
    %8250 = vmatpush1.bf16.msra.mxu0 0
    %8251 = vmatprep.subr.bf16.mxu0 0
    %8252 = vmatpush1.bf16.msra.mxu0 0
    %8253 = vmatprep.subr.bf16.mxu0 0
    %8254 = vmatpush1.bf16.msra.mxu0 0
    %8255 = vmatprep.mubr.bf16.mxu0 0
    %8256 = vmatmul.mubr.bf16.gmra.mrb[0].mxu0 %v8221
    %v8257 = vpop.f32.mrb[0].mxu0
    %v8258 = vadd.f32 0.0, %v8257
    %v8259 = vpop.f32.mrb[0].mxu0
    %v8260 = vpop.f32.mrb[0].mxu0
    %v8261 = vpop.f32.mrb[0].mxu0
    %8262 = vdwg.mxu0
    %v8263 = vadd.f32 %v8000, %v8258
    %v8264 = vld [vmem:[%s7] sm:$0xf]
    %v8265 = vld [vmem:[%s7 + $0x4] sm:$0xf]
    %v8266 = vld [vmem:[%s7 + $0x8] sm:$0xf]
    %v8267 = vld [vmem:[%s7 + $0xc] sm:$0xf]
    %8268 = vmatprep.subr.bf16.mxu0 0
    %8269 = vmatpush1.bf16.msra.mxu0 %v8075
    %8270 = vmatprep.subr.bf16.mxu0 0
    %8271 = vmatpush1.bf16.msra.mxu0 %v8076
    %8272 = vmatprep.subr.bf16.mxu0 0
    %8273 = vmatpush1.bf16.msra.mxu0 0
    %8274 = vmatprep.subr.bf16.mxu0 0
    %8275 = vmatpush1.bf16.msra.mxu0 0
    %8276 = vmatprep.subr.bf16.mxu0 0
    %8277 = vmatpush1.bf16.msra.mxu0 0
    %8278 = vmatprep.subr.bf16.mxu0 0
    %8279 = vmatpush1.bf16.msra.mxu0 0
    %8280 = vmatprep.subr.bf16.mxu0 0
    %8281 = vmatpush1.bf16.msra.mxu0 0
    %8282 = vmatprep.subr.bf16.mxu0 0
    %8283 = vmatpush1.bf16.msra.mxu0 0
    %8284 = vmatprep.subr.bf16.mxu0 0
    %8285 = vmatpush1.bf16.msra.mxu0 0
    %8286 = vmatprep.subr.bf16.mxu0 0
    %8287 = vmatpush1.bf16.msra.mxu0 0
    %8288 = vmatprep.subr.bf16.mxu0 0
    %8289 = vmatpush1.bf16.msra.mxu0 0
    %8290 = vmatprep.subr.bf16.mxu0 0
    %8291 = vmatpush1.bf16.msra.mxu0 0
    %8292 = vmatprep.subr.bf16.mxu0 0
    %8293 = vmatpush1.bf16.msra.mxu0 0
    %8294 = vmatprep.subr.bf16.mxu0 0
    %8295 = vmatpush1.bf16.msra.mxu0 0
    %8296 = vmatprep.subr.bf16.mxu0 0
    %8297 = vmatpush1.bf16.msra.mxu0 0
    %8298 = vmatprep.subr.bf16.mxu0 0
    %8299 = vmatpush1.bf16.msra.mxu0 0
    %8300 = vmatprep.mubr.bf16.mxu0 0
    %8301 = vmatmul.mubr.bf16.gmra.mrb[0].mxu0 %v7444
    %v8302 = vpop.f32.mrb[0].mxu0
    %v8303 = vadd.f32 0.0, %v8302
    %v8304 = vpop.f32.mrb[0].mxu0
    %v8305 = vpop.f32.mrb[0].mxu0
    %v8306 = vpop.f32.mrb[0].mxu0
    %8307 = vdwg.mxu0
    %v8312 = vunpack.c.l.b16 %v8264
    %v8313 = vunpack.c.l.b16 %v8265
    %v8314 = vunpack.c.l.b16 %v8266
    %v8315 = vunpack.c.l.b16 %v8267
    %v8316 = vpack.c.b16 %v8313, %v8312
    %v8317 = vpack.c.b16 %v8315, %v8314
    %8320 = vmatprep.subr.bf16.mxu0 0
    %8321 = vmatpush1.bf16.msra.mxu0 %v8316
    %8322 = vmatprep.subr.bf16.mxu0 0
    %8323 = vmatpush1.bf16.msra.mxu0 %v8317
    %8324 = vmatprep.subr.bf16.mxu0 0
    %8325 = vmatpush1.bf16.msra.mxu0 0
    %8326 = vmatprep.subr.bf16.mxu0 0
    %8327 = vmatpush1.bf16.msra.mxu0 0
    %8328 = vmatprep.subr.bf16.mxu0 0
    %8329 = vmatpush1.bf16.msra.mxu0 0
    %8330 = vmatprep.subr.bf16.mxu0 0
    %8331 = vmatpush1.bf16.msra.mxu0 0
    %8332 = vmatprep.subr.bf16.mxu0 0
    %8333 = vmatpush1.bf16.msra.mxu0 0
    %8334 = vmatprep.subr.bf16.mxu0 0
    %8335 = vmatpush1.bf16.msra.mxu0 0
    %8336 = vmatprep.subr.bf16.mxu0 0
    %8337 = vmatpush1.bf16.msra.mxu0 0
    %8338 = vmatprep.subr.bf16.mxu0 0
    %8339 = vmatpush1.bf16.msra.mxu0 0
    %8340 = vmatprep.subr.bf16.mxu0 0
    %8341 = vmatpush1.bf16.msra.mxu0 0
    %8342 = vmatprep.subr.bf16.mxu0 0
    %8343 = vmatpush1.bf16.msra.mxu0 0
    %8344 = vmatprep.subr.bf16.mxu0 0
    %8345 = vmatpush1.bf16.msra.mxu0 0
    %8346 = vmatprep.subr.bf16.mxu0 0
    %8347 = vmatpush1.bf16.msra.mxu0 0
    %8348 = vmatprep.subr.bf16.mxu0 0
    %8349 = vmatpush1.bf16.msra.mxu0 0
    %8350 = vmatprep.subr.bf16.mxu0 0
    %8351 = vmatpush1.bf16.msra.mxu0 0
    %8352 = vmatprep.mubr.bf16.mxu0 0
    %8353 = vmatmul.mubr.bf16.gmra.mrb[0].mxu0 %v7503
    %v8354 = vpop.f32.mrb[0].mxu0
    %v8355 = vadd.f32 %v8303, %v8354
    %v8356 = vpop.f32.mrb[0].mxu0
    %v8357 = vpop.f32.mrb[0].mxu0
    %v8358 = vpop.f32.mrb[0].mxu0
    %8359 = vdwg.mxu0
    %8360 = vmatprep.subr.bf16.mxu0 0
    %8361 = vmatpush1.bf16.msra.mxu0 %v7745
    %8362 = vmatprep.subr.bf16.mxu0 0
    %8363 = vmatpush1.bf16.msra.mxu0 %v7746
    %8364 = vmatprep.subr.bf16.mxu0 0
    %8365 = vmatpush1.bf16.msra.mxu0 0
    %8366 = vmatprep.subr.bf16.mxu0 0
    %8367 = vmatpush1.bf16.msra.mxu0 0
    %8368 = vmatprep.subr.bf16.mxu0 0
    %8369 = vmatpush1.bf16.msra.mxu0 0
    %8370 = vmatprep.subr.bf16.mxu0 0
    %8371 = vmatpush1.bf16.msra.mxu0 0
    %8372 = vmatprep.subr.bf16.mxu0 0
    %8373 = vmatpush1.bf16.msra.mxu0 0
    %8374 = vmatprep.subr.bf16.mxu0 0
    %8375 = vmatpush1.bf16.msra.mxu0 0
    %8376 = vmatprep.subr.bf16.mxu0 0
    %8377 = vmatpush1.bf16.msra.mxu0 0
    %8378 = vmatprep.subr.bf16.mxu0 0
    %8379 = vmatpush1.bf16.msra.mxu0 0
    %8380 = vmatprep.subr.bf16.mxu0 0
    %8381 = vmatpush1.bf16.msra.mxu0 0
    %8382 = vmatprep.subr.bf16.mxu0 0
    %8383 = vmatpush1.bf16.msra.mxu0 0
    %8384 = vmatprep.subr.bf16.mxu0 0
    %8385 = vmatpush1.bf16.msra.mxu0 0
    %8386 = vmatprep.subr.bf16.mxu0 0
    %8387 = vmatpush1.bf16.msra.mxu0 0
    %8388 = vmatprep.subr.bf16.mxu0 0
    %8389 = vmatpush1.bf16.msra.mxu0 0
    %8390 = vmatprep.subr.bf16.mxu0 0
    %8391 = vmatpush1.bf16.msra.mxu0 0
    %8392 = vmatprep.mubr.bf16.mxu0 0
    %8393 = vmatmul.mubr.bf16.gmra.mrb[0].mxu0 %v7571
    %v8394 = vpop.f32.mrb[0].mxu0
    %v8395 = vadd.f32 0.0, %v8394
    %v8396 = vpop.f32.mrb[0].mxu0
    %v8397 = vpop.f32.mrb[0].mxu0
    %v8398 = vpop.f32.mrb[0].mxu0
    %8399 = vdwg.mxu0
    %v8400 = vadd.f32 %v8355, %v8395
    %8401 = vmatprep.subr.bf16.mxu0 0
    %8402 = vmatpush1.bf16.msra.mxu0 %v7498
    %8403 = vmatprep.subr.bf16.mxu0 0
    %8404 = vmatpush1.bf16.msra.mxu0 %v7499
    %8405 = vmatprep.subr.bf16.mxu0 0
    %8406 = vmatpush1.bf16.msra.mxu0 0
    %8407 = vmatprep.subr.bf16.mxu0 0
    %8408 = vmatpush1.bf16.msra.mxu0 0
    %8409 = vmatprep.subr.bf16.mxu0 0
    %8410 = vmatpush1.bf16.msra.mxu0 0
    %8411 = vmatprep.subr.bf16.mxu0 0
    %8412 = vmatpush1.bf16.msra.mxu0 0
    %8413 = vmatprep.subr.bf16.mxu0 0
    %8414 = vmatpush1.bf16.msra.mxu0 0
    %8415 = vmatprep.subr.bf16.mxu0 0
    %8416 = vmatpush1.bf16.msra.mxu0 0
    %8417 = vmatprep.subr.bf16.mxu0 0
    %8418 = vmatpush1.bf16.msra.mxu0 0
    %8419 = vmatprep.subr.bf16.mxu0 0
    %8420 = vmatpush1.bf16.msra.mxu0 0
    %8421 = vmatprep.subr.bf16.mxu0 0
    %8422 = vmatpush1.bf16.msra.mxu0 0
    %8423 = vmatprep.subr.bf16.mxu0 0
    %8424 = vmatpush1.bf16.msra.mxu0 0
    %8425 = vmatprep.subr.bf16.mxu0 0
    %8426 = vmatpush1.bf16.msra.mxu0 0
    %8427 = vmatprep.subr.bf16.mxu0 0
    %8428 = vmatpush1.bf16.msra.mxu0 0
    %8429 = vmatprep.subr.bf16.mxu0 0
    %8430 = vmatpush1.bf16.msra.mxu0 0
    %8431 = vmatprep.subr.bf16.mxu0 0
    %8432 = vmatpush1.bf16.msra.mxu0 0
    %8433 = vmatprep.mubr.bf16.mxu0 0
    %8434 = vmatmul.mubr.bf16.gmra.mrb[0].mxu0 %v7636
    %v8435 = vpop.f32.mrb[0].mxu0
    %v8436 = vadd.f32 0.0, %v8435
    %v8437 = vpop.f32.mrb[0].mxu0
    %v8438 = vpop.f32.mrb[0].mxu0
    %v8439 = vpop.f32.mrb[0].mxu0
    %8440 = vdwg.mxu0
    %v8441 = vadd.f32 %v8400, %v8436
    %v8442 = vadd.f32 %v8441, %v7684
    %v8443 = vpack.c.bf16 %v8442, %v8442
    %s8444 = scalar_lea.vmem %s9, 48
    %v8445 = vld [vmem:[%s8444] sm:$0xf]
    %v8446 = vld [vmem:[%s8444 + $0x4] sm:$0xf]
    %v8447 = vld [vmem:[%s8444 + $0x8] sm:$0xf]
    %v8448 = vld [vmem:[%s8444 + $0xc] sm:$0xf]
    %v8453 = vunpack.c.l.b16 %v8445
    %v8454 = vunpack.c.l.b16 %v8446
    %v8455 = vunpack.c.l.b16 %v8447
    %v8456 = vunpack.c.l.b16 %v8448
    %v8457 = vpack.c.b16 %v8454, %v8453
    %v8458 = vpack.c.b16 %v8456, %v8455
    %v8462 = vsel %vm5956, %v8443, 0
    %8464 = vmatprep.subr.bf16.mxu0 0
    %8465 = vmatpush1.bf16.msra.mxu0 %v8457
    %8466 = vmatprep.subr.bf16.mxu0 0
    %8467 = vmatpush1.bf16.msra.mxu0 %v8458
    %8468 = vmatprep.subr.bf16.mxu0 0
    %8469 = vmatpush1.bf16.msra.mxu0 0
    %8470 = vmatprep.subr.bf16.mxu0 0
    %8471 = vmatpush1.bf16.msra.mxu0 0
    %8472 = vmatprep.subr.bf16.mxu0 0
    %8473 = vmatpush1.bf16.msra.mxu0 0
    %8474 = vmatprep.subr.bf16.mxu0 0
    %8475 = vmatpush1.bf16.msra.mxu0 0
    %8476 = vmatprep.subr.bf16.mxu0 0
    %8477 = vmatpush1.bf16.msra.mxu0 0
    %8478 = vmatprep.subr.bf16.mxu0 0
    %8479 = vmatpush1.bf16.msra.mxu0 0
    %8480 = vmatprep.subr.bf16.mxu0 0
    %8481 = vmatpush1.bf16.msra.mxu0 0
    %8482 = vmatprep.subr.bf16.mxu0 0
    %8483 = vmatpush1.bf16.msra.mxu0 0
    %8484 = vmatprep.subr.bf16.mxu0 0
    %8485 = vmatpush1.bf16.msra.mxu0 0
    %8486 = vmatprep.subr.bf16.mxu0 0
    %8487 = vmatpush1.bf16.msra.mxu0 0
    %8488 = vmatprep.subr.bf16.mxu0 0
    %8489 = vmatpush1.bf16.msra.mxu0 0
    %8490 = vmatprep.subr.bf16.mxu0 0
    %8491 = vmatpush1.bf16.msra.mxu0 0
    %8492 = vmatprep.subr.bf16.mxu0 0
    %8493 = vmatpush1.bf16.msra.mxu0 0
    %8494 = vmatprep.subr.bf16.mxu0 0
    %8495 = vmatpush1.bf16.msra.mxu0 0
    %8496 = vmatprep.mubr.bf16.mxu0 0
    %8497 = vmatmul.mubr.bf16.gmra.mrb[0].mxu0 %v8462
    %v8498 = vpop.f32.mrb[0].mxu0
    %v8499 = vadd.f32 0.0, %v8498
    %v8500 = vpop.f32.mrb[0].mxu0
    %v8501 = vpop.f32.mrb[0].mxu0
    %v8502 = vpop.f32.mrb[0].mxu0
    %8503 = vdwg.mxu0
    %v8504 = vadd.f32 %v8263, %v8499
    %v8505 = vld [vmem:[%s10] sm:$0x1]
    %v8507 = vlaneseq
    %v8508 = vshrl.u32 %v8507, 7
    %v8509 = vsub.s32 0, %v8508
    %v8510 = vrot.slane %v8505, %v8509
    %v8512 = vadd.f32 %v8504, %v8510
    %v8513 = vmax.f32 %v8512, 0.0
    %v8514 = vpack.c.bf16 %v8513, %v8513
    %v8515 = vld [vmem:[%s11] sm:$0xf]
    %v8516 = vld [vmem:[%s11 + $0x4] sm:$0xf]
    %v8517 = vld [vmem:[%s11 + $0x8] sm:$0xf]
    %v8518 = vld [vmem:[%s11 + $0xc] sm:$0xf]
    %v8519 = vld [vmem:[%s11 + $0x10] sm:$0xf]
    %v8520 = vld [vmem:[%s11 + $0x14] sm:$0xf]
    %v8521 = vld [vmem:[%s11 + $0x18] sm:$0x1]
    %v8522 = vld [vmem:[%s12] sm:$0x1]
    %v8524 = vlaneseq
    %v8525 = vshrl.u32 %v8524, 7
    %v8526 = vsub.s32 0, %v8525
    %v8527 = vrot.slane %v8522, %v8526
    %v8536 = vunpack.c.l.b16 %v8515
    %v8537 = vunpack.c.l.b16 %v8516
    %v8538 = vunpack.c.l.b16 %v8517
    %v8539 = vunpack.c.l.b16 %v8518
    %v8540 = vunpack.c.l.b16 %v8519
    %v8541 = vunpack.c.l.b16 %v8520
    %v8542 = vunpack.c.l.b16 %v8521
    %v8543 = vpack.c.b16 %v8537, %v8536
    %v8544 = vpack.c.b16 %v8539, %v8538
    %v8545 = vpack.c.b16 %v8541, %v8540
    %v8546 = vpack.c.b16 %v8542, %v8542
    %vm8550 = vcmask 408576
    %v8552 = vsel %vm8550, %v8514, 0
    %v8555 = vsel %vm253, %v8546, 0
    %8557 = vmatprep.subr.bf16.mxu0 0
    %8558 = vmatpush1.bf16.msra.mxu0 %v8543
    %8559 = vmatprep.subr.bf16.mxu0 0
    %8560 = vmatpush1.bf16.msra.mxu0 %v8544
    %8561 = vmatprep.subr.bf16.mxu0 0
    %8562 = vmatpush1.bf16.msra.mxu0 %v8545
    %8563 = vmatprep.subr.bf16.mxu0 0
    %8564 = vmatpush1.bf16.msra.mxu0 %v8555
    %8565 = vmatprep.subr.bf16.mxu0 0
    %8566 = vmatpush1.bf16.msra.mxu0 0
    %8567 = vmatprep.subr.bf16.mxu0 0
    %8568 = vmatpush1.bf16.msra.mxu0 0
    %8569 = vmatprep.subr.bf16.mxu0 0
    %8570 = vmatpush1.bf16.msra.mxu0 0
    %8571 = vmatprep.subr.bf16.mxu0 0
    %8572 = vmatpush1.bf16.msra.mxu0 0
    %8573 = vmatprep.subr.bf16.mxu0 0
    %8574 = vmatpush1.bf16.msra.mxu0 0
    %8575 = vmatprep.subr.bf16.mxu0 0
    %8576 = vmatpush1.bf16.msra.mxu0 0
    %8577 = vmatprep.subr.bf16.mxu0 0
    %8578 = vmatpush1.bf16.msra.mxu0 0
    %8579 = vmatprep.subr.bf16.mxu0 0
    %8580 = vmatpush1.bf16.msra.mxu0 0
    %8581 = vmatprep.subr.bf16.mxu0 0
    %8582 = vmatpush1.bf16.msra.mxu0 0
    %8583 = vmatprep.subr.bf16.mxu0 0
    %8584 = vmatpush1.bf16.msra.mxu0 0
    %8585 = vmatprep.subr.bf16.mxu0 0
    %8586 = vmatpush1.bf16.msra.mxu0 0
    %8587 = vmatprep.subr.bf16.mxu0 0
    %8588 = vmatpush1.bf16.msra.mxu0 0
    %8589 = vmatprep.mubr.bf16.mxu0 0
    %8590 = vmatmul.mubr.bf16.gmra.mrb[0].mxu0 %v8552
    %v8591 = vpop.f32.mrb[0].mxu0
    %v8592 = vadd.f32 %v8527, %v8591
    %v8593 = vpop.f32.mrb[0].mxu0
    %v8594 = vpop.f32.mrb[0].mxu0
    %v8595 = vpop.f32.mrb[0].mxu0
    %8596 = vdwg.mxu0
    %vm8597 = vcmask 74752
    %8598 = vst.msk [vmem:[#allocation5] sm:$0x3] %vm8597, %v8592
    // Predicated region
    $region54: #{basicnet_forward.1} parent=1 // pred_check
      _
    $region55: #{basicnet_forward.1} parent=1 // pred_check_branch
      %8600 = sbr.rel (0) target = $region57
    $region56: #{basicnet_forward.1} parent=1 // pred_region
      %s8602 = ssub.s32 32, 32
      %8603 = vsyncadd [#allocation6], %s8602
      %s8605 = sshll.u32 [#allocation5], 4
      %s8606 = int_to_ptr.vmem [resolvable:$true] %s8605
      %8608 = dma.vmem_to_hbm [thread:$0]  %s8606, 32, %s13, [#allocation6]
    $region57: #{basicnet_forward.1} parent=1 // pred_fallthru
      _
    // Predicated region
    $region58: #{basicnet_forward.1} parent=1 // pred_check
      _
    $region59: #{basicnet_forward.1} parent=1 // pred_check_branch
      %8610 = sbr.rel (0) target = $region61
    $region60: #{basicnet_forward.1} parent=1 // pred_region
      %8611 = dma.done [#allocation6], 32
    $region61: #{basicnet_forward.1} parent=1 // pred_fallthru
      _
    %8612 = vsyncpa [#allocation6], 1

</llo_original>
